<compile_context>
chip_gen: v7x
topology: tpu7x:2x2x1
jax: 0.10.0
libtpu: 0.0.40
codegen_flags: <defaults>
</compile_context>

<pallas_src>
import functools

import numpy as np
import jax
import jax.numpy as jnp
from jax import lax
from jax.experimental import pallas as pl
from jax.experimental.pallas import tpu as pltpu


# ---------------------------------------------------------------------------
# Fused Pallas kernel: whole LeNet forward for one batch tile.
# ---------------------------------------------------------------------------
def _lenet_kernel(x_ref, a1_ref, b1_ref, a2_ref, b2_ref,
                  wf1_ref, c1_ref, wf2_ref, c2_ref, wf3_ref, c3_ref, o_ref):
    f32 = jnp.float32
    x = x_ref[...]                                   # (TB, 784) f32, lanes = h*28+w

    # ---- conv1 + bias + ReLU -------------------------------------------------
    # One banded matmul per output-row parity; both parities share A1 -- the
    # odd-parity pass simply feeds a one-row-shifted view of the image.
    # Output lanes of each pass: (w-parity, 12, 12, 6) padded to 2*896.
    a1 = a1_ref[...].astype(f32)                     # bf16 weights -> f32 (weights-only rounding)
    g0 = jnp.dot(x[:, 0:756], a1, preferred_element_type=f32) + b1_ref[...]
    g1 = jnp.dot(x[:, 28:784], a1, preferred_element_type=f32) + b1_ref[...]
    g0 = jnp.maximum(g0, 0.0)
    g1 = jnp.maximum(g1, 0.0)

    # 2x2 / stride-2 max-pool == max over the two row parities (g0/g1) and the
    # two column-parity lane halves.  Result lanes: (t*12+u)*6+c, zero padded
    # to 896.
    p1 = jnp.maximum(jnp.maximum(g0[:, 0:896], g0[:, 896:1792]),
                     jnp.maximum(g1[:, 0:896], g1[:, 896:1792]))     # (TB, 896)

    # ---- conv2 + bias + ReLU ---------------------------------------------------
    # Single banded matmul; output lanes = (h-parity, w-parity, 4, 4, 16) = 4*256.
    h2 = jnp.dot(p1, a2_ref[...].astype(f32), preferred_element_type=f32) + b2_ref[...]
    h2 = jnp.maximum(h2, 0.0)
    p2 = jnp.maximum(jnp.maximum(h2[:, 0:256], h2[:, 256:512]),
                     jnp.maximum(h2[:, 512:768], h2[:, 768:1024]))   # (TB, 256)

    # ---- fc1 / fc2 / fc3 ------------------------------------------------------
    # Weights were pre-permuted to this flatten order and padded to 128 lanes,
    # so every matmul N-dim and the final store are lane-dense.
    y = jnp.maximum(jnp.dot(p2, wf1_ref[...], preferred_element_type=f32) + c1_ref[...], 0.0)
    y = jnp.maximum(jnp.dot(y, wf2_ref[...], preferred_element_type=f32) + c2_ref[...], 0.0)
    o_ref[...] = jnp.dot(y, wf3_ref[...], preferred_element_type=f32) + c3_ref[...]


# ---------------------------------------------------------------------------
# Host-side (one-time) weight preprocessing: build the banded conv matrices,
# expanded biases and permuted / lane-padded FC weights.
# ---------------------------------------------------------------------------
def prepare_params(params, num_classes):
    w1 = np.asarray(params["w1"], np.float32)    # (6, 1, 5, 5)
    b1 = np.asarray(params["b1"], np.float32)
    w2 = np.asarray(params["w2"], np.float32)    # (16, 6, 5, 5)
    b2 = np.asarray(params["b2"], np.float32)
    wf1 = np.asarray(params["wf1"], np.float32)  # (120, 256)
    bf1 = np.asarray(params["bf1"], np.float32)
    wf2 = np.asarray(params["wf2"], np.float32)  # (84, 120)
    bf2 = np.asarray(params["bf2"], np.float32)
    wf3 = np.asarray(params["wf3"], np.float32)  # (nc, 84)
    bf3 = np.asarray(params["bf3"], np.float32)

    # conv1 banded matrix: rows = flattened 28x28 image (only rows < 756 used),
    # cols = p*896 + ((t*12+u)*6 + c); lanes [864,896) of each half are padding.
    A1 = np.zeros((756, 1792), np.float32)
    p_, t_, u_, c_, kh_, kw_ = np.meshgrid(
        np.arange(2), np.arange(12), np.arange(12), np.arange(6),
        np.arange(5), np.arange(5), indexing="ij")
    rows = (2 * t_ + kh_) * 28 + (2 * u_ + p_ + kw_)
    cols = p_ * 896 + (t_ * 12 + u_) * 6 + c_
    A1[rows.ravel(), cols.ravel()] = w1[c_.ravel(), 0, kh_.ravel(), kw_.ravel()]
    half = np.concatenate([np.tile(b1, 144), np.zeros(32, np.float32)])
    b1e = np.tile(half, 2)[None, :]                                   # (1, 1792)

    # conv2 banded matrix: rows = pool1 lanes (t*12+u)*6+c (rows [864,896) = 0),
    # cols = s2*512 + p2*256 + ((t2*4+u2)*16 + d).
    A2 = np.zeros((896, 1024), np.float32)
    s2_, p2_, t2_, u2_, d_, c_, kh_, kw_ = np.meshgrid(
        np.arange(2), np.arange(2), np.arange(4), np.arange(4),
        np.arange(16), np.arange(6), np.arange(5), np.arange(5), indexing="ij")
    rows = ((2 * t2_ + s2_ + kh_) * 12 + (2 * u2_ + p2_ + kw_)) * 6 + c_
    cols = s2_ * 512 + p2_ * 256 + (t2_ * 4 + u2_) * 16 + d_
    A2[rows.ravel(), cols.ravel()] = w2[d_.ravel(), c_.ravel(), kh_.ravel(), kw_.ravel()]
    b2e = np.tile(np.tile(b2, 16), 4)[None, :]                        # (1, 1024)

    # fc1: permute columns from PyTorch's (C,H,W) flatten to our (t2,u2,d) lane
    # order; pad all FC feature dims to 128 lanes (zero rows/cols/bias).
    L = np.arange(256)
    d = L % 16
    u2 = (L // 16) % 4
    t2 = L // 64
    perm = d * 16 + t2 * 4 + u2
    Wf1 = np.zeros((256, 128), np.float32); Wf1[:, :120] = wf1[:, perm].T
    c1 = np.zeros((1, 128), np.float32);    c1[0, :120] = bf1
    Wf2 = np.zeros((128, 128), np.float32); Wf2[:120, :84] = wf2.T
    c2 = np.zeros((1, 128), np.float32);    c2[0, :84] = bf2
    Wf3 = np.zeros((128, 128), np.float32); Wf3[:84, :num_classes] = wf3.T
    c3 = np.zeros((1, 128), np.float32);    c3[0, :num_classes] = bf3

    return dict(
        A1=jnp.asarray(A1, jnp.bfloat16), b1=jnp.asarray(b1e),
        A2=jnp.asarray(A2, jnp.bfloat16), b2=jnp.asarray(b2e),
        Wf1=jnp.asarray(Wf1), c1=jnp.asarray(c1),
        Wf2=jnp.asarray(Wf2), c2=jnp.asarray(c2),
        Wf3=jnp.asarray(Wf3), c3=jnp.asarray(c3),
    )


# ---------------------------------------------------------------------------
# Forward pass wrapper: one fused pallas_call, batch tiled on a parallel grid.
# ---------------------------------------------------------------------------
@functools.partial(jax.jit, static_argnames=("num_classes",))
def lenet_forward(prep, x_nchw, *, num_classes):
    B = x_nchw.shape[0]
    assert x_nchw.shape[1:] == (1, 28, 28), x_nchw.shape
    x2 = jnp.asarray(x_nchw, jnp.float32).reshape(B, 784)

    TB = 128 if B >= 128 else 8                # rows (images) per grid step
    Bp = ((B + TB - 1) // TB) * TB
    if Bp != B:
        x2 = jnp.pad(x2, ((0, Bp - B), (0, 0)))

    def _full(shape):
        return pl.BlockSpec(shape, lambda i: (0, 0))

    out = pl.pallas_call(
        _lenet_kernel,
        out_shape=jax.ShapeDtypeStruct((Bp, 128), jnp.float32),
        grid=(Bp // TB,),
        in_specs=[
            pl.BlockSpec((TB, 784), lambda i: (i, 0)),   # images
            _full((756, 1792)), _full((1, 1792)),        # conv1 matrix + bias
            _full((896, 1024)), _full((1, 1024)),        # conv2 matrix + bias
            _full((256, 128)), _full((1, 128)),          # fc1
            _full((128, 128)), _full((1, 128)),          # fc2
            _full((128, 128)), _full((1, 128)),          # fc3 (lane-padded)
        ],
        out_specs=pl.BlockSpec((TB, 128), lambda i: (i, 0)),
        compiler_params=pltpu.CompilerParams(
            dimension_semantics=("parallel",),
            vmem_limit_bytes=32 * 1024 * 1024,
        ),
    )(x2, prep["A1"], prep["b1"], prep["A2"], prep["b2"],
      prep["Wf1"], prep["c1"], prep["Wf2"], prep["c2"], prep["Wf3"], prep["c3"])

    return out[:B, :num_classes]


# ---------------------------------------------------------------------------
# Parameters (deterministic synthetic init) and a pure-JAX reference.
# ---------------------------------------------------------------------------
def init_params(key, num_classes):
    ks = jax.random.split(key, 10)

    def rnd(k, shape, scale=0.1):
        return scale * jax.random.normal(k, shape, jnp.float32)

    return dict(
        w1=rnd(ks[0], (6, 1, 5, 5)),        b1=rnd(ks[1], (6,)),
        w2=rnd(ks[2], (16, 6, 5, 5)),       b2=rnd(ks[3], (16,)),
        wf1=rnd(ks[4], (120, 256)),         bf1=rnd(ks[5], (120,)),
        wf2=rnd(ks[6], (84, 120)),          bf2=rnd(ks[7], (84,)),
        wf3=rnd(ks[8], (num_classes, 84)),  bf3=rnd(ks[9], (num_classes,)),
    )


def lenet_reference(params, x_nchw):
    """Pure-JAX f32 reference (mirrors the PyTorch forward)."""
    dn = ("NCHW", "OIHW", "NCHW")
    y = lax.conv_general_dilated(x_nchw, params["w1"], (1, 1), "VALID",
                                 dimension_numbers=dn)
    y = jax.nn.relu(y + params["b1"][None, :, None, None])
    y = lax.reduce_window(y, -jnp.inf, lax.max, (1, 1, 2, 2), (1, 1, 2, 2), "VALID")
    y = lax.conv_general_dilated(y, params["w2"], (1, 1), "VALID",
                                 dimension_numbers=dn)
    y = jax.nn.relu(y + params["b2"][None, :, None, None])
    y = lax.reduce_window(y, -jnp.inf, lax.max, (1, 1, 2, 2), (1, 1, 2, 2), "VALID")
    y = y.reshape(y.shape[0], -1)
    y = jax.nn.relu(y @ params["wf1"].T + params["bf1"])
    y = jax.nn.relu(y @ params["wf2"].T + params["bf2"])
    return y @ params["wf3"].T + params["bf3"]


if __name__ == "__main__":
    num_classes = 10   # len(classes)
    key = jax.random.PRNGKey(0)
    pkey, xkey = jax.random.split(key)
    params = init_params(pkey, num_classes)
    prep = prepare_params(params, num_classes)      # one-time weight preprocessing

    # 28x28 input is required by the architecture (fc1 expects 16*4*4 = 256).
    x = jax.random.normal(xkey, (2, 1, 28, 28), jnp.float32)

    out = jax.block_until_ready(lenet_forward(prep, x, num_classes=num_classes))
    assert out.shape == (2, num_classes), out.shape

    ref = jax.block_until_ready(lenet_reference(params, x))
    if not np.allclose(np.asarray(out), np.asarray(ref), rtol=1e-2, atol=1e-2):
        err = float(np.max(np.abs(np.asarray(out) - np.asarray(ref))))
        raise AssertionError(
            f"Pallas LeNet output does not match JAX reference (max abs err {err})")

    print("KERNEL_OK")
</pallas_src>

<mosaic_0001>
module attributes {stable_mosaic.version = 11 : i64} {
  func.func @_lenet_kernel(%arg0: i32, %arg1: memref<8x784xf32, #tpu.memory_space<vmem>>, %arg2: memref<756x1792xbf16, #tpu.memory_space<vmem>>, %arg3: memref<1x1792xf32, #tpu.memory_space<vmem>>, %arg4: memref<896x1024xbf16, #tpu.memory_space<vmem>>, %arg5: memref<1x1024xf32, #tpu.memory_space<vmem>>, %arg6: memref<256x128xf32, #tpu.memory_space<vmem>>, %arg7: memref<1x128xf32, #tpu.memory_space<vmem>>, %arg8: memref<128x128xf32, #tpu.memory_space<vmem>>, %arg9: memref<1x128xf32, #tpu.memory_space<vmem>>, %arg10: memref<128x128xf32, #tpu.memory_space<vmem>>, %arg11: memref<1x128xf32, #tpu.memory_space<vmem>>, %arg12: memref<8x128xf32, #tpu.memory_space<vmem>>) attributes {dimension_semantics = [#tpu.dimension_semantics<parallel>], iteration_bounds = array<i64: 1>, scalar_prefetch = 0 : i64, scratch_operands = 0 : i64, tpu.core_type = #tpu.core_type<tc>, window_params = [{transform_indices = @transform_0, window_bounds = array<i64: 8, 784>}, {pipeline_mode = #tpu.pipeline_mode<synchronous>, transform_indices = @transform_1, window_bounds = array<i64: 756, 1792>}, {pipeline_mode = #tpu.pipeline_mode<synchronous>, transform_indices = @transform_2, window_bounds = array<i64: 1, 1792>}, {pipeline_mode = #tpu.pipeline_mode<synchronous>, transform_indices = @transform_3, window_bounds = array<i64: 896, 1024>}, {pipeline_mode = #tpu.pipeline_mode<synchronous>, transform_indices = @transform_4, window_bounds = array<i64: 1, 1024>}, {pipeline_mode = #tpu.pipeline_mode<synchronous>, transform_indices = @transform_5, window_bounds = array<i64: 256, 128>}, {pipeline_mode = #tpu.pipeline_mode<synchronous>, transform_indices = @transform_6, window_bounds = array<i64: 1, 128>}, {pipeline_mode = #tpu.pipeline_mode<synchronous>, transform_indices = @transform_7, window_bounds = array<i64: 128, 128>}, {pipeline_mode = #tpu.pipeline_mode<synchronous>, transform_indices = @transform_8, window_bounds = array<i64: 1, 128>}, {pipeline_mode = #tpu.pipeline_mode<synchronous>, transform_indices = @transform_9, window_bounds = array<i64: 128, 128>}, {pipeline_mode = #tpu.pipeline_mode<synchronous>, transform_indices = @transform_10, window_bounds = array<i64: 1, 128>}, {transform_indices = @transform_11, window_bounds = array<i64: 8, 128>}]} {
    %c0 = arith.constant 0 : index
    %c0_0 = arith.constant 0 : index
    %0 = vector.load %arg1[%c0, %c0_0] : memref<8x784xf32, #tpu.memory_space<vmem>>, vector<8x784xf32>
    %c0_1 = arith.constant 0 : index
    %c0_2 = arith.constant 0 : index
    %1 = vector.load %arg2[%c0_1, %c0_2] : memref<756x1792xbf16, #tpu.memory_space<vmem>>, vector<756x1792xbf16>
    %2 = arith.extf %1 : vector<756x1792xbf16> to vector<756x1792xf32>
    %3 = vector.extract_strided_slice %0 {offsets = [0, 0], sizes = [8, 756], strides = [1, 1]} : vector<8x784xf32> to vector<8x756xf32>
    %cst = arith.constant dense<0.000000e+00> : vector<8x1792xf32>
    %4 = tpu.matmul %3, %2, %cst {dimension_numbers = #tpu.dot_dimension_numbers<[1], [0], [0], [1], [0, 0, 1, 1], [], []>} : vector<8x756xf32>, vector<756x1792xf32>, vector<8x1792xf32> -> vector<8x1792xf32>
    %c0_3 = arith.constant 0 : index
    %c0_4 = arith.constant 0 : index
    %5 = vector.load %arg3[%c0_3, %c0_4] : memref<1x1792xf32, #tpu.memory_space<vmem>>, vector<1x1792xf32>
    %6 = vector.broadcast %5 : vector<1x1792xf32> to vector<8x1792xf32>
    %7 = arith.addf %4, %6 : vector<8x1792xf32>
    %8 = vector.extract_strided_slice %0 {offsets = [0, 28], sizes = [8, 756], strides = [1, 1]} : vector<8x784xf32> to vector<8x756xf32>
    %cst_5 = arith.constant dense<0.000000e+00> : vector<8x1792xf32>
    %9 = tpu.matmul %8, %2, %cst_5 {dimension_numbers = #tpu.dot_dimension_numbers<[1], [0], [0], [1], [0, 0, 1, 1], [], []>} : vector<8x756xf32>, vector<756x1792xf32>, vector<8x1792xf32> -> vector<8x1792xf32>
    %c0_6 = arith.constant 0 : index
    %c0_7 = arith.constant 0 : index
    %10 = vector.load %arg3[%c0_6, %c0_7] : memref<1x1792xf32, #tpu.memory_space<vmem>>, vector<1x1792xf32>
    %11 = vector.broadcast %10 : vector<1x1792xf32> to vector<8x1792xf32>
    %12 = arith.addf %9, %11 : vector<8x1792xf32>
    %cst_8 = arith.constant 0.000000e+00 : f32
    %13 = vector.broadcast %cst_8 : f32 to vector<8x1792xf32>
    %14 = arith.maximumf %7, %13 : vector<8x1792xf32>
    %cst_9 = arith.constant 0.000000e+00 : f32
    %15 = vector.broadcast %cst_9 : f32 to vector<8x1792xf32>
    %16 = arith.maximumf %12, %15 : vector<8x1792xf32>
    %17 = vector.extract_strided_slice %14 {offsets = [0, 0], sizes = [8, 896], strides = [1, 1]} : vector<8x1792xf32> to vector<8x896xf32>
    %18 = vector.extract_strided_slice %14 {offsets = [0, 896], sizes = [8, 896], strides = [1, 1]} : vector<8x1792xf32> to vector<8x896xf32>
    %19 = arith.maximumf %17, %18 : vector<8x896xf32>
    %20 = vector.extract_strided_slice %16 {offsets = [0, 0], sizes = [8, 896], strides = [1, 1]} : vector<8x1792xf32> to vector<8x896xf32>
    %21 = vector.extract_strided_slice %16 {offsets = [0, 896], sizes = [8, 896], strides = [1, 1]} : vector<8x1792xf32> to vector<8x896xf32>
    %22 = arith.maximumf %20, %21 : vector<8x896xf32>
    %23 = arith.maximumf %19, %22 : vector<8x896xf32>
    %c0_10 = arith.constant 0 : index
    %c0_11 = arith.constant 0 : index
    %24 = vector.load %arg4[%c0_10, %c0_11] : memref<896x1024xbf16, #tpu.memory_space<vmem>>, vector<896x1024xbf16>
    %25 = arith.extf %24 : vector<896x1024xbf16> to vector<896x1024xf32>
    %cst_12 = arith.constant dense<0.000000e+00> : vector<8x1024xf32>
    %26 = tpu.matmul %23, %25, %cst_12 {dimension_numbers = #tpu.dot_dimension_numbers<[1], [0], [0], [1], [0, 0, 1, 1], [], []>} : vector<8x896xf32>, vector<896x1024xf32>, vector<8x1024xf32> -> vector<8x1024xf32>
    %c0_13 = arith.constant 0 : index
    %c0_14 = arith.constant 0 : index
    %27 = vector.load %arg5[%c0_13, %c0_14] : memref<1x1024xf32, #tpu.memory_space<vmem>>, vector<1x1024xf32>
    %28 = vector.broadcast %27 : vector<1x1024xf32> to vector<8x1024xf32>
    %29 = arith.addf %26, %28 : vector<8x1024xf32>
    %cst_15 = arith.constant 0.000000e+00 : f32
    %30 = vector.broadcast %cst_15 : f32 to vector<8x1024xf32>
    %31 = arith.maximumf %29, %30 : vector<8x1024xf32>
    %32 = vector.extract_strided_slice %31 {offsets = [0, 0], sizes = [8, 256], strides = [1, 1]} : vector<8x1024xf32> to vector<8x256xf32>
    %33 = vector.extract_strided_slice %31 {offsets = [0, 256], sizes = [8, 256], strides = [1, 1]} : vector<8x1024xf32> to vector<8x256xf32>
    %34 = arith.maximumf %32, %33 : vector<8x256xf32>
    %35 = vector.extract_strided_slice %31 {offsets = [0, 512], sizes = [8, 256], strides = [1, 1]} : vector<8x1024xf32> to vector<8x256xf32>
    %36 = vector.extract_strided_slice %31 {offsets = [0, 768], sizes = [8, 256], strides = [1, 1]} : vector<8x1024xf32> to vector<8x256xf32>
    %37 = arith.maximumf %35, %36 : vector<8x256xf32>
    %38 = arith.maximumf %34, %37 : vector<8x256xf32>
    %c0_16 = arith.constant 0 : index
    %c0_17 = arith.constant 0 : index
    %39 = vector.load %arg6[%c0_16, %c0_17] : memref<256x128xf32, #tpu.memory_space<vmem>>, vector<256x128xf32>
    %cst_18 = arith.constant dense<0.000000e+00> : vector<8x128xf32>
    %40 = tpu.matmul %38, %39, %cst_18 {dimension_numbers = #tpu.dot_dimension_numbers<[1], [0], [0], [1], [0, 0, 1, 1], [], []>} : vector<8x256xf32>, vector<256x128xf32>, vector<8x128xf32> -> vector<8x128xf32>
    %c0_19 = arith.constant 0 : index
    %c0_20 = arith.constant 0 : index
    %41 = vector.load %arg7[%c0_19, %c0_20] : memref<1x128xf32, #tpu.memory_space<vmem>>, vector<1x128xf32>
    %42 = vector.broadcast %41 : vector<1x128xf32> to vector<8x128xf32>
    %43 = arith.addf %40, %42 : vector<8x128xf32>
    %cst_21 = arith.constant 0.000000e+00 : f32
    %44 = vector.broadcast %cst_21 : f32 to vector<8x128xf32>
    %45 = arith.maximumf %43, %44 : vector<8x128xf32>
    %c0_22 = arith.constant 0 : index
    %c0_23 = arith.constant 0 : index
    %46 = vector.load %arg8[%c0_22, %c0_23] : memref<128x128xf32, #tpu.memory_space<vmem>>, vector<128x128xf32>
    %cst_24 = arith.constant dense<0.000000e+00> : vector<8x128xf32>
    %47 = tpu.matmul %45, %46, %cst_24 {dimension_numbers = #tpu.dot_dimension_numbers<[1], [0], [0], [1], [0, 0, 1, 1], [], []>} : vector<8x128xf32>, vector<128x128xf32>, vector<8x128xf32> -> vector<8x128xf32>
    %c0_25 = arith.constant 0 : index
    %c0_26 = arith.constant 0 : index
    %48 = vector.load %arg9[%c0_25, %c0_26] : memref<1x128xf32, #tpu.memory_space<vmem>>, vector<1x128xf32>
    %49 = vector.broadcast %48 : vector<1x128xf32> to vector<8x128xf32>
    %50 = arith.addf %47, %49 : vector<8x128xf32>
    %cst_27 = arith.constant 0.000000e+00 : f32
    %51 = vector.broadcast %cst_27 : f32 to vector<8x128xf32>
    %52 = arith.maximumf %50, %51 : vector<8x128xf32>
    %c0_28 = arith.constant 0 : index
    %c0_29 = arith.constant 0 : index
    %53 = vector.load %arg10[%c0_28, %c0_29] : memref<128x128xf32, #tpu.memory_space<vmem>>, vector<128x128xf32>
    %cst_30 = arith.constant dense<0.000000e+00> : vector<8x128xf32>
    %54 = tpu.matmul %52, %53, %cst_30 {dimension_numbers = #tpu.dot_dimension_numbers<[1], [0], [0], [1], [0, 0, 1, 1], [], []>} : vector<8x128xf32>, vector<128x128xf32>, vector<8x128xf32> -> vector<8x128xf32>
    %c0_31 = arith.constant 0 : index
    %c0_32 = arith.constant 0 : index
    %55 = vector.load %arg11[%c0_31, %c0_32] : memref<1x128xf32, #tpu.memory_space<vmem>>, vector<1x128xf32>
    %56 = vector.broadcast %55 : vector<1x128xf32> to vector<8x128xf32>
    %57 = arith.addf %54, %56 : vector<8x128xf32>
    %c0_33 = arith.constant 0 : index
    %c0_34 = arith.constant 0 : index
    %58 = vector.load %arg12[%c0_33, %c0_34] : memref<8x128xf32, #tpu.memory_space<vmem>>, vector<8x128xf32>
    tpu.vector_store %arg12[%c0_33, %c0_34], %57 {strides = array<i32>} : memref<8x128xf32, #tpu.memory_space<vmem>>, vector<8x128xf32>,
    return
  }
  func.func @transform_0(%arg0: i32) -> (i32, i32) {
    %c0_i32 = arith.constant 0 : i32
    %c0_i32_0 = arith.constant 0 : i32
    return %arg0, %c0_i32 : i32, i32
  }
  func.func @transform_1(%arg0: i32) -> (i32, i32) {
    %c0_i32 = arith.constant 0 : i32
    %c0_i32_0 = arith.constant 0 : i32
    %c0_i32_1 = arith.constant 0 : i32
    return %c0_i32, %c0_i32_0 : i32, i32
  }
  func.func @transform_2(%arg0: i32) -> (i32, i32) {
    %c0_i32 = arith.constant 0 : i32
    %c0_i32_0 = arith.constant 0 : i32
    %c0_i32_1 = arith.constant 0 : i32
    return %c0_i32, %c0_i32_0 : i32, i32
  }
  func.func @transform_3(%arg0: i32) -> (i32, i32) {
    %c0_i32 = arith.constant 0 : i32
    %c0_i32_0 = arith.constant 0 : i32
    %c0_i32_1 = arith.constant 0 : i32
    return %c0_i32, %c0_i32_0 : i32, i32
  }
  func.func @transform_4(%arg0: i32) -> (i32, i32) {
    %c0_i32 = arith.constant 0 : i32
    %c0_i32_0 = arith.constant 0 : i32
    %c0_i32_1 = arith.constant 0 : i32
    return %c0_i32, %c0_i32_0 : i32, i32
  }
  func.func @transform_5(%arg0: i32) -> (i32, i32) {
    %c0_i32 = arith.constant 0 : i32
    %c0_i32_0 = arith.constant 0 : i32
    %c0_i32_1 = arith.constant 0 : i32
    return %c0_i32, %c0_i32_0 : i32, i32
  }
  func.func @transform_6(%arg0: i32) -> (i32, i32) {
    %c0_i32 = arith.constant 0 : i32
    %c0_i32_0 = arith.constant 0 : i32
    %c0_i32_1 = arith.constant 0 : i32
    return %c0_i32, %c0_i32_0 : i32, i32
  }
  func.func @transform_7(%arg0: i32) -> (i32, i32) {
    %c0_i32 = arith.constant 0 : i32
    %c0_i32_0 = arith.constant 0 : i32
    %c0_i32_1 = arith.constant 0 : i32
    return %c0_i32, %c0_i32_0 : i32, i32
  }
  func.func @transform_8(%arg0: i32) -> (i32, i32) {
    %c0_i32 = arith.constant 0 : i32
    %c0_i32_0 = arith.constant 0 : i32
    %c0_i32_1 = arith.constant 0 : i32
    return %c0_i32, %c0_i32_0 : i32, i32
  }
  func.func @transform_9(%arg0: i32) -> (i32, i32) {
    %c0_i32 = arith.constant 0 : i32
    %c0_i32_0 = arith.constant 0 : i32
    %c0_i32_1 = arith.constant 0 : i32
    return %c0_i32, %c0_i32_0 : i32, i32
  }
  func.func @transform_10(%arg0: i32) -> (i32, i32) {
    %c0_i32 = arith.constant 0 : i32
    %c0_i32_0 = arith.constant 0 : i32
    %c0_i32_1 = arith.constant 0 : i32
    return %c0_i32, %c0_i32_0 : i32, i32
  }
  func.func @transform_11(%arg0: i32) -> (i32, i32) {
    %c0_i32 = arith.constant 0 : i32
    %c0_i32_0 = arith.constant 0 : i32
    return %arg0, %c0_i32 : i32, i32
  }
}

</mosaic_0001>

<llo_original>
// kernel: lenet_forward.1
$region0: #{lenet_forward.1}
  #allocation0 [shape = 'u32[]', space=smem, size = 0x4, offset = 0x4, fixed_abs, tag = 'smem constant byte address 0x4 - core index']
  #allocation1 [shape = 'u32[144,128]{1,0:T(1,128)}', space=vmem, size = 0x12000, scoped, tag = 'internal scratch']
  %s0 = inlined_call_operand.vmem [shape: f32[8,784], index: 0, kind: input, shape index: {}]
  %s1 = inlined_call_operand.hbm [shape: bf16[756,1792], index: 1, kind: input, shape index: {}]
  %s2 = inlined_call_operand.hbm [shape: f32[1,1792], index: 2, kind: input, shape index: {}]
  %s3 = inlined_call_operand.hbm [shape: bf16[896,1024], index: 3, kind: input, shape index: {}]
  %s4 = inlined_call_operand.hbm [shape: f32[1,1024], index: 4, kind: input, shape index: {}]
  %s5 = inlined_call_operand.hbm [shape: f32[256,128], index: 5, kind: input, shape index: {}]
  %s6 = inlined_call_operand.hbm [shape: f32[1,128], index: 6, kind: input, shape index: {}]
  %s7 = inlined_call_operand.hbm [shape: f32[128,128], index: 7, kind: input, shape index: {}]
  %s8 = inlined_call_operand.hbm [shape: f32[1,128], index: 8, kind: input, shape index: {}]
  %s9 = inlined_call_operand.hbm [shape: f32[128,128], index: 9, kind: input, shape index: {}]
  %s10 = inlined_call_operand.hbm [shape: f32[1,128], index: 10, kind: input, shape index: {}]
  %s11 = inlined_call_operand.vmem [shape: f32[8,128], index: 11, kind: output, shape index: {}]
  %s12 = sld [smem:[#allocation0]]
  $region94: #{lenet_forward.1} parent=0
    _
  %s14 = ssub.s32 1, %s12
  %s15 = scalar_select 0, %s14, %s12
  $region1: #{lenet_forward.1} parent=0
    #allocation2 [shape = 'u8[2723840]{0}', space=vmem, size = 0x299000, scoped, tag = 'input window, operand 1, single buffered']
    #allocation3 [shape = 's32[1]{0}', space=sflag, size = 0x4, scoped, tag = 'scoped memory for lenet_forward.1']
    #allocation4 [shape = 'u8[7168]{0}', space=vmem, size = 0x1c00, scoped, tag = 'input window, operand 2, single buffered']
    #allocation5 [shape = 's32[1]{0}', space=sflag, size = 0x4, scoped, tag = 'scoped memory for lenet_forward.1']
    #allocation6 [shape = 'u8[1835008]{0}', space=vmem, size = 0x1c0000, scoped, tag = 'input window, operand 3, single buffered']
    #allocation7 [shape = 'u8[4096]{0}', space=vmem, size = 0x1000, scoped, tag = 'input window, operand 4, single buffered']
    #allocation8 [shape = 's32[1]{0}', space=sflag, size = 0x4, scoped, tag = 'scoped memory for lenet_forward.1']
    #allocation9 [shape = 'u8[131072]{0}', space=vmem, size = 0x20000, scoped, tag = 'input window, operand 5, single buffered']
    #allocation10 [shape = 'u8[512]{0}', space=vmem, size = 0x400, scoped, tag = 'input window, operand 6, single buffered']
    #allocation11 [shape = 's32[1]{0}', space=sflag, size = 0x4, scoped, tag = 'scoped memory for lenet_forward.1']
    #allocation12 [shape = 'u8[65536]{0}', space=vmem, size = 0x10000, scoped, tag = 'input window, operand 7, single buffered']
    #allocation13 [shape = 'u8[512]{0}', space=vmem, size = 0x400, scoped, tag = 'input window, operand 8, single buffered']
    #allocation14 [shape = 's32[1]{0}', space=sflag, size = 0x4, scoped, tag = 'scoped memory for lenet_forward.1']
    #allocation15 [shape = 'u8[65536]{0}', space=vmem, size = 0x10000, scoped, tag = 'input window, operand 9, single buffered']
    #allocation16 [shape = 'u8[512]{0}', space=vmem, size = 0x400, scoped, tag = 'input window, operand 10, single buffered']
    #allocation17 [shape = 's32[1]{0}', space=sflag, size = 0x4, scoped, tag = 'scoped memory for lenet_forward.1']
    %16 = vsyncpa [#allocation3], 0
    %17 = vsyncpa [#allocation5], 0
    %18 = vsyncpa [#allocation8], 0
    %19 = vsyncpa [#allocation11], 0
    %20 = vsyncpa [#allocation14], 0
    %21 = vsyncpa [#allocation17], 0
    // Predicated region
    $region2: #{lenet_forward.1} parent=1 // pred_check
      _
    $region3: #{lenet_forward.1} parent=1 // pred_check_branch
      %23 = sbr.rel (0) target = $region5
    $region4: #{lenet_forward.1} parent=1 // pred_region
      _
    $region5: #{lenet_forward.1} parent=1 // pred_fallthru
      _
    // Predicated region
    $region6: #{lenet_forward.1} parent=1 // pred_check
      _
    $region7: #{lenet_forward.1} parent=1 // pred_check_branch
      %25 = sbr.rel (0) target = $region9
    $region8: #{lenet_forward.1} parent=1 // pred_region
      %s27 = ssub.s32 85120, 85120
      %28 = vsyncadd [#allocation3], %s27
      %s29 = sshll.u32 [#allocation2], 4
      %s30 = int_to_ptr.vmem [resolvable:$true] %s29
      %35 = dma.hbm_to_vmem [thread:$0]  %s1, 85120, %s30, [#allocation3], 896, 896, 56
    $region9: #{lenet_forward.1} parent=1 // pred_fallthru
      _
    // Predicated region
    $region10: #{lenet_forward.1} parent=1 // pred_check
      _
    $region11: #{lenet_forward.1} parent=1 // pred_check_branch
      %37 = sbr.rel (0) target = $region13
    $region12: #{lenet_forward.1} parent=1 // pred_region
      %s39 = ssub.s32 224, 224
      %40 = vsyncadd [#allocation5], %s39
      %s42 = sshll.u32 [#allocation4], 4
      %s43 = int_to_ptr.vmem [resolvable:$true] %s42
      %45 = dma.hbm_to_vmem [thread:$0]  %s2, 224, %s43, [#allocation5]
    $region13: #{lenet_forward.1} parent=1 // pred_fallthru
      _
    // Predicated region
    $region14: #{lenet_forward.1} parent=1 // pred_check
      _
    $region15: #{lenet_forward.1} parent=1 // pred_check_branch
      %47 = sbr.rel (0) target = $region17
    $region16: #{lenet_forward.1} parent=1 // pred_region
      %s49 = ssub.s32 57344, 57344
      %50 = vsyncadd [#allocation5], %s49
      %s51 = sshll.u32 [#allocation6], 4
      %s52 = int_to_ptr.vmem [resolvable:$true] %s51
      %57 = dma.hbm_to_vmem [thread:$0]  %s3, 57344, %s52, [#allocation5], 512, 512, 32
    $region17: #{lenet_forward.1} parent=1 // pred_fallthru
      _
    // Predicated region
    $region18: #{lenet_forward.1} parent=1 // pred_check
      _
    $region19: #{lenet_forward.1} parent=1 // pred_check_branch
      %59 = sbr.rel (0) target = $region21
    $region20: #{lenet_forward.1} parent=1 // pred_region
      %s61 = ssub.s32 128, 128
      %62 = vsyncadd [#allocation8], %s61
      %s64 = sshll.u32 [#allocation7], 4
      %s65 = int_to_ptr.vmem [resolvable:$true] %s64
      %67 = dma.hbm_to_vmem [thread:$0]  %s4, 128, %s65, [#allocation8]
    $region21: #{lenet_forward.1} parent=1 // pred_fallthru
      _
    // Predicated region
    $region22: #{lenet_forward.1} parent=1 // pred_check
      _
    $region23: #{lenet_forward.1} parent=1 // pred_check_branch
      %69 = sbr.rel (0) target = $region25
    $region24: #{lenet_forward.1} parent=1 // pred_region
      %s71 = ssub.s32 4096, 4096
      %72 = vsyncadd [#allocation8], %s71
      %s73 = sshll.u32 [#allocation9], 4
      %s74 = int_to_ptr.vmem [resolvable:$true] %s73
      %79 = dma.hbm_to_vmem [thread:$0]  %s5, 4096, %s74, [#allocation8], 128, 128, 8
    $region25: #{lenet_forward.1} parent=1 // pred_fallthru
      _
    // Predicated region
    $region26: #{lenet_forward.1} parent=1 // pred_check
      _
    $region27: #{lenet_forward.1} parent=1 // pred_check_branch
      %81 = sbr.rel (0) target = $region29
    $region28: #{lenet_forward.1} parent=1 // pred_region
      %s83 = ssub.s32 16, 16
      %84 = vsyncadd [#allocation11], %s83
      %s86 = sshll.u32 [#allocation10], 4
      %s87 = int_to_ptr.vmem [resolvable:$true] %s86
      %89 = dma.hbm_to_vmem [thread:$0]  %s6, 16, %s87, [#allocation11]
    $region29: #{lenet_forward.1} parent=1 // pred_fallthru
      _
    // Predicated region
    $region30: #{lenet_forward.1} parent=1 // pred_check
      _
    $region31: #{lenet_forward.1} parent=1 // pred_check_branch
      %91 = sbr.rel (0) target = $region33
    $region32: #{lenet_forward.1} parent=1 // pred_region
      %s93 = ssub.s32 2048, 2048
      %94 = vsyncadd [#allocation11], %s93
      %s95 = sshll.u32 [#allocation12], 4
      %s96 = int_to_ptr.vmem [resolvable:$true] %s95
      %101 = dma.hbm_to_vmem [thread:$0]  %s7, 2048, %s96, [#allocation11], 128, 128, 8
    $region33: #{lenet_forward.1} parent=1 // pred_fallthru
      _
    // Predicated region
    $region34: #{lenet_forward.1} parent=1 // pred_check
      _
    $region35: #{lenet_forward.1} parent=1 // pred_check_branch
      %103 = sbr.rel (0) target = $region37
    $region36: #{lenet_forward.1} parent=1 // pred_region
      %s105 = ssub.s32 16, 16
      %106 = vsyncadd [#allocation14], %s105
      %s108 = sshll.u32 [#allocation13], 4
      %s109 = int_to_ptr.vmem [resolvable:$true] %s108
      %111 = dma.hbm_to_vmem [thread:$0]  %s8, 16, %s109, [#allocation14]
    $region37: #{lenet_forward.1} parent=1 // pred_fallthru
      _
    // Predicated region
    $region38: #{lenet_forward.1} parent=1 // pred_check
      _
    $region39: #{lenet_forward.1} parent=1 // pred_check_branch
      %113 = sbr.rel (0) target = $region41
    $region40: #{lenet_forward.1} parent=1 // pred_region
      %s115 = ssub.s32 2048, 2048
      %116 = vsyncadd [#allocation14], %s115
      %s117 = sshll.u32 [#allocation15], 4
      %s118 = int_to_ptr.vmem [resolvable:$true] %s117
      %123 = dma.hbm_to_vmem [thread:$0]  %s9, 2048, %s118, [#allocation14], 128, 128, 8
    $region41: #{lenet_forward.1} parent=1 // pred_fallthru
      _
    // Predicated region
    $region42: #{lenet_forward.1} parent=1 // pred_check
      _
    $region43: #{lenet_forward.1} parent=1 // pred_check_branch
      %125 = sbr.rel (0) target = $region45
    $region44: #{lenet_forward.1} parent=1 // pred_region
      %s127 = ssub.s32 16, 16
      %128 = vsyncadd [#allocation17], %s127
      %s130 = sshll.u32 [#allocation16], 4
      %s131 = int_to_ptr.vmem [resolvable:$true] %s130
      %133 = dma.hbm_to_vmem [thread:$0]  %s10, 16, %s131, [#allocation17]
    $region45: #{lenet_forward.1} parent=1 // pred_fallthru
      _
    // Predicated region
    $region46: #{lenet_forward.1} parent=1 // pred_check
      _
    $region47: #{lenet_forward.1} parent=1 // pred_check_branch
      %135 = sbr.rel (0) target = $region49
    $region48: #{lenet_forward.1} parent=1 // pred_region
      %136 = dma.done [#allocation3], 85120
    $region49: #{lenet_forward.1} parent=1 // pred_fallthru
      _
    // Predicated region
    $region50: #{lenet_forward.1} parent=1 // pred_check
      _
    $region51: #{lenet_forward.1} parent=1 // pred_check_branch
      %138 = sbr.rel (0) target = $region53
    $region52: #{lenet_forward.1} parent=1 // pred_region
      %139 = dma.done [#allocation5], 224
    $region53: #{lenet_forward.1} parent=1 // pred_fallthru
      _
    // Predicated region
    $region54: #{lenet_forward.1} parent=1 // pred_check
      _
    $region55: #{lenet_forward.1} parent=1 // pred_check_branch
      %141 = sbr.rel (0) target = $region57
    $region56: #{lenet_forward.1} parent=1 // pred_region
      %142 = dma.done [#allocation5], 57344
    $region57: #{lenet_forward.1} parent=1 // pred_fallthru
      _
    // Predicated region
    $region58: #{lenet_forward.1} parent=1 // pred_check
      _
    $region59: #{lenet_forward.1} parent=1 // pred_check_branch
      %144 = sbr.rel (0) target = $region61
    $region60: #{lenet_forward.1} parent=1 // pred_region
      %145 = dma.done [#allocation8], 128
    $region61: #{lenet_forward.1} parent=1 // pred_fallthru
      _
    // Predicated region
    $region62: #{lenet_forward.1} parent=1 // pred_check
      _
    $region63: #{lenet_forward.1} parent=1 // pred_check_branch
      %147 = sbr.rel (0) target = $region65
    $region64: #{lenet_forward.1} parent=1 // pred_region
      %148 = dma.done [#allocation8], 4096
    $region65: #{lenet_forward.1} parent=1 // pred_fallthru
      _
    // Predicated region
    $region66: #{lenet_forward.1} parent=1 // pred_check
      _
    $region67: #{lenet_forward.1} parent=1 // pred_check_branch
      %150 = sbr.rel (0) target = $region69
    $region68: #{lenet_forward.1} parent=1 // pred_region
      %151 = dma.done [#allocation11], 16
    $region69: #{lenet_forward.1} parent=1 // pred_fallthru
      _
    // Predicated region
    $region70: #{lenet_forward.1} parent=1 // pred_check
      _
    $region71: #{lenet_forward.1} parent=1 // pred_check_branch
      %153 = sbr.rel (0) target = $region73
    $region72: #{lenet_forward.1} parent=1 // pred_region
      %154 = dma.done [#allocation11], 2048
    $region73: #{lenet_forward.1} parent=1 // pred_fallthru
      _
    // Predicated region
    $region74: #{lenet_forward.1} parent=1 // pred_check
      _
    $region75: #{lenet_forward.1} parent=1 // pred_check_branch
      %156 = sbr.rel (0) target = $region77
    $region76: #{lenet_forward.1} parent=1 // pred_region
      %157 = dma.done [#allocation14], 16
    $region77: #{lenet_forward.1} parent=1 // pred_fallthru
      _
    // Predicated region
    $region78: #{lenet_forward.1} parent=1 // pred_check
      _
    $region79: #{lenet_forward.1} parent=1 // pred_check_branch
      %159 = sbr.rel (0) target = $region81
    $region80: #{lenet_forward.1} parent=1 // pred_region
      %160 = dma.done [#allocation14], 2048
    $region81: #{lenet_forward.1} parent=1 // pred_fallthru
      _
    // Predicated region
    $region82: #{lenet_forward.1} parent=1 // pred_check
      _
    $region83: #{lenet_forward.1} parent=1 // pred_check_branch
      %162 = sbr.rel (0) target = $region85
    $region84: #{lenet_forward.1} parent=1 // pred_region
      %163 = dma.done [#allocation17], 16
    $region85: #{lenet_forward.1} parent=1 // pred_fallthru
      _
    %v164 = vld [vmem:[%s0] sm:$0xff]
    %v165 = vld [vmem:[%s0 + $0x8] sm:$0xff]
    %v166 = vld [vmem:[%s0 + $0x10] sm:$0xff]
    %v167 = vld [vmem:[%s0 + $0x18] sm:$0xff]
    %v168 = vld [vmem:[%s0 + $0x20] sm:$0xff]
    %v169 = vld [vmem:[%s0 + $0x28] sm:$0xff]
    %v170 = vld [vmem:[%s0 + $0x30] sm:$0xff]
    %v171 = vld [vmem:[#allocation2] sm:$0xff]
    %v172 = vld [vmem:[#allocation2 + $0x8] sm:$0xff]
    %v173 = vld [vmem:[#allocation2 + $0x10] sm:$0xff]
    %v174 = vld [vmem:[#allocation2 + $0x18] sm:$0xff]
    %v175 = vld [vmem:[#allocation2 + $0x20] sm:$0xff]
    %v176 = vld [vmem:[#allocation2 + $0x28] sm:$0xff]
    %v177 = vld [vmem:[#allocation2 + $0x30] sm:$0xff]
    %v178 = vld [vmem:[#allocation2 + $0x38] sm:$0xff]
    %v179 = vld [vmem:[#allocation2 + $0x40] sm:$0xff]
    %v180 = vld [vmem:[#allocation2 + $0x48] sm:$0xff]
    %v181 = vld [vmem:[#allocation2 + $0x50] sm:$0xff]
    %v182 = vld [vmem:[#allocation2 + $0x58] sm:$0xff]
    %v183 = vld [vmem:[#allocation2 + $0x60] sm:$0xff]
    %v184 = vld [vmem:[#allocation2 + $0x68] sm:$0xff]
    %v185 = vld [vmem:[#allocation2 + $0x70] sm:$0xff]
    %v186 = vld [vmem:[#allocation2 + $0x78] sm:$0xff]
    %v187 = vld [vmem:[#allocation2 + $0x80] sm:$0xff]
    %v188 = vld [vmem:[#allocation2 + $0x88] sm:$0xff]
    %v189 = vld [vmem:[#allocation2 + $0x90] sm:$0xff]
    %v190 = vld [vmem:[#allocation2 + $0x98] sm:$0xff]
    %v191 = vld [vmem:[#allocation2 + $0xa0] sm:$0xff]
    %v192 = vld [vmem:[#allocation2 + $0xa8] sm:$0xff]
    %v193 = vld [vmem:[#allocation2 + $0xb0] sm:$0xff]
    %v194 = vld [vmem:[#allocation2 + $0xb8] sm:$0xff]
    %v195 = vld [vmem:[#allocation2 + $0xc0] sm:$0xff]
    %v196 = vld [vmem:[#allocation2 + $0xc8] sm:$0xff]
    %v197 = vld [vmem:[#allocation2 + $0xd0] sm:$0xff]
    %v198 = vld [vmem:[#allocation2 + $0xd8] sm:$0xff]
    %v199 = vld [vmem:[#allocation2 + $0xe0] sm:$0xff]
    %v200 = vld [vmem:[#allocation2 + $0xe8] sm:$0xff]
    %v201 = vld [vmem:[#allocation2 + $0xf0] sm:$0xff]
    %v202 = vld [vmem:[#allocation2 + $0xf8] sm:$0xff]
    %v203 = vld [vmem:[#allocation2 + $0x100] sm:$0xff]
    %v204 = vld [vmem:[#allocation2 + $0x108] sm:$0xff]
    %v205 = vld [vmem:[#allocation2 + $0x110] sm:$0xff]
    %v206 = vld [vmem:[#allocation2 + $0x118] sm:$0xff]
    %v207 = vld [vmem:[#allocation2 + $0x120] sm:$0xff]
    %v208 = vld [vmem:[#allocation2 + $0x128] sm:$0xff]
    %v209 = vld [vmem:[#allocation2 + $0x130] sm:$0xff]
    %v210 = vld [vmem:[#allocation2 + $0x138] sm:$0xff]
    %v211 = vld [vmem:[#allocation2 + $0x140] sm:$0xff]
    %v212 = vld [vmem:[#allocation2 + $0x148] sm:$0xff]
    %v213 = vld [vmem:[#allocation2 + $0x150] sm:$0xff]
    %v214 = vld [vmem:[#allocation2 + $0x158] sm:$0xff]
    %v215 = vld [vmem:[#allocation2 + $0x160] sm:$0xff]
    %v216 = vld [vmem:[#allocation2 + $0x168] sm:$0xff]
    %v217 = vld [vmem:[#allocation2 + $0x170] sm:$0xff]
    %v218 = vld [vmem:[#allocation2 + $0x178] sm:$0xff]
    %v219 = vld [vmem:[#allocation2 + $0x180] sm:$0xff]
    %v220 = vld [vmem:[#allocation2 + $0x188] sm:$0xff]
    %v221 = vld [vmem:[#allocation2 + $0x190] sm:$0xff]
    %v222 = vld [vmem:[#allocation2 + $0x198] sm:$0xff]
    %v223 = vld [vmem:[#allocation2 + $0x1a0] sm:$0xff]
    %v224 = vld [vmem:[#allocation2 + $0x1a8] sm:$0xff]
    %v225 = vld [vmem:[#allocation2 + $0x1b0] sm:$0xff]
    %v226 = vld [vmem:[#allocation2 + $0x1b8] sm:$0xff]
    %v227 = vld [vmem:[#allocation2 + $0x1c0] sm:$0xff]
    %v228 = vld [vmem:[#allocation2 + $0x1c8] sm:$0xff]
    %v229 = vld [vmem:[#allocation2 + $0x1d0] sm:$0xff]
    %v230 = vld [vmem:[#allocation2 + $0x1d8] sm:$0xff]
    %v231 = vld [vmem:[#allocation2 + $0x1e0] sm:$0xff]
    %v232 = vld [vmem:[#allocation2 + $0x1e8] sm:$0xff]
    %v233 = vld [vmem:[#allocation2 + $0x1f0] sm:$0xff]
    %v234 = vld [vmem:[#allocation2 + $0x1f8] sm:$0xff]
    %v235 = vld [vmem:[#allocation2 + $0x200] sm:$0xff]
    %v236 = vld [vmem:[#allocation2 + $0x208] sm:$0xff]
    %v237 = vld [vmem:[#allocation2 + $0x210] sm:$0xff]
    %v238 = vld [vmem:[#allocation2 + $0x218] sm:$0xff]
    %v239 = vld [vmem:[#allocation2 + $0x220] sm:$0xff]
    %v240 = vld [vmem:[#allocation2 + $0x228] sm:$0xff]
    %v241 = vld [vmem:[#allocation2 + $0x230] sm:$0xff]
    %v242 = vld [vmem:[#allocation2 + $0x238] sm:$0xff]
    %v243 = vld [vmem:[#allocation2 + $0x240] sm:$0xff]
    %v244 = vld [vmem:[#allocation2 + $0x248] sm:$0xff]
    %v245 = vld [vmem:[#allocation2 + $0x250] sm:$0xff]
    %v246 = vld [vmem:[#allocation2 + $0x258] sm:$0xff]
    %v247 = vld [vmem:[#allocation2 + $0x260] sm:$0xff]
    %v248 = vld [vmem:[#allocation2 + $0x268] sm:$0xff]
    %v249 = vld [vmem:[#allocation2 + $0x270] sm:$0xff]
    %v250 = vld [vmem:[#allocation2 + $0x278] sm:$0xff]
    %v251 = vld [vmem:[#allocation2 + $0x280] sm:$0xff]
    %v252 = vld [vmem:[#allocation2 + $0x288] sm:$0xff]
    %v253 = vld [vmem:[#allocation2 + $0x290] sm:$0xff]
    %v254 = vld [vmem:[#allocation2 + $0x298] sm:$0xff]
    %v255 = vld [vmem:[#allocation2 + $0x2a0] sm:$0xff]
    %v256 = vld [vmem:[#allocation2 + $0x2a8] sm:$0xff]
    %v257 = vld [vmem:[#allocation2 + $0x2b0] sm:$0xff]
    %v258 = vld [vmem:[#allocation2 + $0x2b8] sm:$0xff]
    %v259 = vld [vmem:[#allocation2 + $0x2c0] sm:$0xff]
    %v260 = vld [vmem:[#allocation2 + $0x2c8] sm:$0xff]
    %v261 = vld [vmem:[#allocation2 + $0x2d0] sm:$0xff]
    %v262 = vld [vmem:[#allocation2 + $0x2d8] sm:$0xff]
    %v263 = vld [vmem:[#allocation2 + $0x2e0] sm:$0xff]
    %v264 = vld [vmem:[#allocation2 + $0x2e8] sm:$0xff]
    %v265 = vld [vmem:[#allocation2 + $0x2f0] sm:$0xff]
    %v266 = vld [vmem:[#allocation2 + $0x2f8] sm:$0xff]
    %v267 = vld [vmem:[#allocation2 + $0x300] sm:$0xff]
    %v268 = vld [vmem:[#allocation2 + $0x308] sm:$0xff]
    %v269 = vld [vmem:[#allocation2 + $0x310] sm:$0xff]
    %v270 = vld [vmem:[#allocation2 + $0x318] sm:$0xff]
    %v271 = vld [vmem:[#allocation2 + $0x320] sm:$0xff]
    %v272 = vld [vmem:[#allocation2 + $0x328] sm:$0xff]
    %v273 = vld [vmem:[#allocation2 + $0x330] sm:$0xff]
    %v274 = vld [vmem:[#allocation2 + $0x338] sm:$0xff]
    %v275 = vld [vmem:[#allocation2 + $0x340] sm:$0xff]
    %v276 = vld [vmem:[#allocation2 + $0x348] sm:$0xff]
    %v277 = vld [vmem:[#allocation2 + $0x350] sm:$0xff]
    %v278 = vld [vmem:[#allocation2 + $0x358] sm:$0xff]
    %v279 = vld [vmem:[#allocation2 + $0x360] sm:$0xff]
    %v280 = vld [vmem:[#allocation2 + $0x368] sm:$0xff]
    %v281 = vld [vmem:[#allocation2 + $0x370] sm:$0xff]
    %v282 = vld [vmem:[#allocation2 + $0x378] sm:$0xff]
    %v283 = vld [vmem:[#allocation2 + $0x380] sm:$0xff]
    %v284 = vld [vmem:[#allocation2 + $0x388] sm:$0xff]
    %v285 = vld [vmem:[#allocation2 + $0x390] sm:$0xff]
    %v286 = vld [vmem:[#allocation2 + $0x398] sm:$0xff]
    %v287 = vld [vmem:[#allocation2 + $0x3a0] sm:$0xff]
    %v288 = vld [vmem:[#allocation2 + $0x3a8] sm:$0xff]
    %v289 = vld [vmem:[#allocation2 + $0x3b0] sm:$0xff]
    %v290 = vld [vmem:[#allocation2 + $0x3b8] sm:$0xff]
    %v291 = vld [vmem:[#allocation2 + $0x3c0] sm:$0xff]
    %v292 = vld [vmem:[#allocation2 + $0x3c8] sm:$0xff]
    %v293 = vld [vmem:[#allocation2 + $0x3d0] sm:$0xff]
    %v294 = vld [vmem:[#allocation2 + $0x3d8] sm:$0xff]
    %v295 = vld [vmem:[#allocation2 + $0x3e0] sm:$0xff]
    %v296 = vld [vmem:[#allocation2 + $0x3e8] sm:$0xff]
    %v297 = vld [vmem:[#allocation2 + $0x3f0] sm:$0xff]
    %v298 = vld [vmem:[#allocation2 + $0x3f8] sm:$0xff]
    %v299 = vld [vmem:[#allocation2 + $0x400] sm:$0xff]
    %v300 = vld [vmem:[#allocation2 + $0x408] sm:$0xff]
    %v301 = vld [vmem:[#allocation2 + $0x410] sm:$0xff]
    %v302 = vld [vmem:[#allocation2 + $0x418] sm:$0xff]
    %v303 = vld [vmem:[#allocation2 + $0x420] sm:$0xff]
    %v304 = vld [vmem:[#allocation2 + $0x428] sm:$0xff]
    %v305 = vld [vmem:[#allocation2 + $0x430] sm:$0xff]
    %v306 = vld [vmem:[#allocation2 + $0x438] sm:$0xff]
    %v307 = vld [vmem:[#allocation2 + $0x440] sm:$0xff]
    %v308 = vld [vmem:[#allocation2 + $0x448] sm:$0xff]
    %v309 = vld [vmem:[#allocation2 + $0x450] sm:$0xff]
    %v310 = vld [vmem:[#allocation2 + $0x458] sm:$0xff]
    %v311 = vld [vmem:[#allocation2 + $0x460] sm:$0xff]
    %v312 = vld [vmem:[#allocation2 + $0x468] sm:$0xff]
    %v313 = vld [vmem:[#allocation2 + $0x470] sm:$0xff]
    %v314 = vld [vmem:[#allocation2 + $0x478] sm:$0xff]
    %v315 = vld [vmem:[#allocation2 + $0x480] sm:$0xff]
    %v316 = vld [vmem:[#allocation2 + $0x488] sm:$0xff]
    %v317 = vld [vmem:[#allocation2 + $0x490] sm:$0xff]
    %v318 = vld [vmem:[#allocation2 + $0x498] sm:$0xff]
    %v319 = vld [vmem:[#allocation2 + $0x4a0] sm:$0xff]
    %v320 = vld [vmem:[#allocation2 + $0x4a8] sm:$0xff]
    %v321 = vld [vmem:[#allocation2 + $0x4b0] sm:$0xff]
    %v322 = vld [vmem:[#allocation2 + $0x4b8] sm:$0xff]
    %v323 = vld [vmem:[#allocation2 + $0x4c0] sm:$0xff]
    %v324 = vld [vmem:[#allocation2 + $0x4c8] sm:$0xff]
    %v325 = vld [vmem:[#allocation2 + $0x4d0] sm:$0xff]
    %v326 = vld [vmem:[#allocation2 + $0x4d8] sm:$0xff]
    %v327 = vld [vmem:[#allocation2 + $0x4e0] sm:$0xff]
    %v328 = vld [vmem:[#allocation2 + $0x4e8] sm:$0xff]
    %v329 = vld [vmem:[#allocation2 + $0x4f0] sm:$0xff]
    %v330 = vld [vmem:[#allocation2 + $0x4f8] sm:$0xff]
    %v331 = vld [vmem:[#allocation2 + $0x500] sm:$0xff]
    %v332 = vld [vmem:[#allocation2 + $0x508] sm:$0xff]
    %v333 = vld [vmem:[#allocation2 + $0x510] sm:$0xff]
    %v334 = vld [vmem:[#allocation2 + $0x518] sm:$0xff]
    %v335 = vld [vmem:[#allocation2 + $0x520] sm:$0xff]
    %v336 = vld [vmem:[#allocation2 + $0x528] sm:$0xff]
    %v337 = vld [vmem:[#allocation2 + $0x530] sm:$0xff]
    %v338 = vld [vmem:[#allocation2 + $0x538] sm:$0xff]
    %v339 = vld [vmem:[#allocation2 + $0x540] sm:$0xff]
    %v340 = vld [vmem:[#allocation2 + $0x548] sm:$0xff]
    %v341 = vld [vmem:[#allocation2 + $0x550] sm:$0xff]
    %v342 = vld [vmem:[#allocation2 + $0x558] sm:$0xff]
    %v343 = vld [vmem:[#allocation2 + $0x560] sm:$0xff]
    %v344 = vld [vmem:[#allocation2 + $0x568] sm:$0xff]
    %v345 = vld [vmem:[#allocation2 + $0x570] sm:$0xff]
    %v346 = vld [vmem:[#allocation2 + $0x578] sm:$0xff]
    %v347 = vld [vmem:[#allocation2 + $0x580] sm:$0xff]
    %v348 = vld [vmem:[#allocation2 + $0x588] sm:$0xff]
    %v349 = vld [vmem:[#allocation2 + $0x590] sm:$0xff]
    %v350 = vld [vmem:[#allocation2 + $0x598] sm:$0xff]
    %v351 = vld [vmem:[#allocation2 + $0x5a0] sm:$0xff]
    %v352 = vld [vmem:[#allocation2 + $0x5a8] sm:$0xff]
    %v353 = vld [vmem:[#allocation2 + $0x5b0] sm:$0xff]
    %v354 = vld [vmem:[#allocation2 + $0x5b8] sm:$0xff]
    %v355 = vld [vmem:[#allocation2 + $0x5c0] sm:$0xff]
    %v356 = vld [vmem:[#allocation2 + $0x5c8] sm:$0xff]
    %v357 = vld [vmem:[#allocation2 + $0x5d0] sm:$0xff]
    %v358 = vld [vmem:[#allocation2 + $0x5d8] sm:$0xff]
    %v359 = vld [vmem:[#allocation2 + $0x5e0] sm:$0xff]
    %v360 = vld [vmem:[#allocation2 + $0x5e8] sm:$0xff]
    %v361 = vld [vmem:[#allocation2 + $0x5f0] sm:$0xff]
    %v362 = vld [vmem:[#allocation2 + $0x5f8] sm:$0xff]
    %v363 = vld [vmem:[#allocation2 + $0x600] sm:$0xff]
    %v364 = vld [vmem:[#allocation2 + $0x608] sm:$0xff]
    %v365 = vld [vmem:[#allocation2 + $0x610] sm:$0xff]
    %v366 = vld [vmem:[#allocation2 + $0x618] sm:$0xff]
    %v367 = vld [vmem:[#allocation2 + $0x620] sm:$0xff]
    %v368 = vld [vmem:[#allocation2 + $0x628] sm:$0xff]
    %v369 = vld [vmem:[#allocation2 + $0x630] sm:$0xff]
    %v370 = vld [vmem:[#allocation2 + $0x638] sm:$0xff]
    %v371 = vld [vmem:[#allocation2 + $0x640] sm:$0xff]
    %v372 = vld [vmem:[#allocation2 + $0x648] sm:$0xff]
    %v373 = vld [vmem:[#allocation2 + $0x650] sm:$0xff]
    %v374 = vld [vmem:[#allocation2 + $0x658] sm:$0xff]
    %v375 = vld [vmem:[#allocation2 + $0x660] sm:$0xff]
    %v376 = vld [vmem:[#allocation2 + $0x668] sm:$0xff]
    %v377 = vld [vmem:[#allocation2 + $0x670] sm:$0xff]
    %v378 = vld [vmem:[#allocation2 + $0x678] sm:$0xff]
    %v379 = vld [vmem:[#allocation2 + $0x680] sm:$0xff]
    %v380 = vld [vmem:[#allocation2 + $0x688] sm:$0xff]
    %v381 = vld [vmem:[#allocation2 + $0x690] sm:$0xff]
    %v382 = vld [vmem:[#allocation2 + $0x698] sm:$0xff]
    %v383 = vld [vmem:[#allocation2 + $0x6a0] sm:$0xff]
    %v384 = vld [vmem:[#allocation2 + $0x6a8] sm:$0xff]
    %v385 = vld [vmem:[#allocation2 + $0x6b0] sm:$0xff]
    %v386 = vld [vmem:[#allocation2 + $0x6b8] sm:$0xff]
    %v387 = vld [vmem:[#allocation2 + $0x6c0] sm:$0xff]
    %v388 = vld [vmem:[#allocation2 + $0x6c8] sm:$0xff]
    %v389 = vld [vmem:[#allocation2 + $0x6d0] sm:$0xff]
    %v390 = vld [vmem:[#allocation2 + $0x6d8] sm:$0xff]
    %v391 = vld [vmem:[#allocation2 + $0x6e0] sm:$0xff]
    %v392 = vld [vmem:[#allocation2 + $0x6e8] sm:$0xff]
    %v393 = vld [vmem:[#allocation2 + $0x6f0] sm:$0xff]
    %v394 = vld [vmem:[#allocation2 + $0x6f8] sm:$0xff]
    %v395 = vld [vmem:[#allocation2 + $0x700] sm:$0xff]
    %v396 = vld [vmem:[#allocation2 + $0x708] sm:$0xff]
    %v397 = vld [vmem:[#allocation2 + $0x710] sm:$0xff]
    %v398 = vld [vmem:[#allocation2 + $0x718] sm:$0xff]
    %v399 = vld [vmem:[#allocation2 + $0x720] sm:$0xff]
    %v400 = vld [vmem:[#allocation2 + $0x728] sm:$0xff]
    %v401 = vld [vmem:[#allocation2 + $0x730] sm:$0xff]
    %v402 = vld [vmem:[#allocation2 + $0x738] sm:$0xff]
    %v403 = vld [vmem:[#allocation2 + $0x740] sm:$0xff]
    %v404 = vld [vmem:[#allocation2 + $0x748] sm:$0xff]
    %v405 = vld [vmem:[#allocation2 + $0x750] sm:$0xff]
    %v406 = vld [vmem:[#allocation2 + $0x758] sm:$0xff]
    %v407 = vld [vmem:[#allocation2 + $0x760] sm:$0xff]
    %v408 = vld [vmem:[#allocation2 + $0x768] sm:$0xff]
    %v409 = vld [vmem:[#allocation2 + $0x770] sm:$0xff]
    %v410 = vld [vmem:[#allocation2 + $0x778] sm:$0xff]
    %v411 = vld [vmem:[#allocation2 + $0x780] sm:$0xff]
    %v412 = vld [vmem:[#allocation2 + $0x788] sm:$0xff]
    %v413 = vld [vmem:[#allocation2 + $0x790] sm:$0xff]
    %v414 = vld [vmem:[#allocation2 + $0x798] sm:$0xff]
    %v415 = vld [vmem:[#allocation2 + $0x7a0] sm:$0xff]
    %v416 = vld [vmem:[#allocation2 + $0x7a8] sm:$0xff]
    %v417 = vld [vmem:[#allocation2 + $0x7b0] sm:$0xff]
    %v418 = vld [vmem:[#allocation2 + $0x7b8] sm:$0xff]
    %v419 = vld [vmem:[#allocation2 + $0x7c0] sm:$0xff]
    %v420 = vld [vmem:[#allocation2 + $0x7c8] sm:$0xff]
    %v421 = vld [vmem:[#allocation2 + $0x7d0] sm:$0xff]
    %v422 = vld [vmem:[#allocation2 + $0x7d8] sm:$0xff]
    %v423 = vld [vmem:[#allocation2 + $0x7e0] sm:$0xff]
    %v424 = vld [vmem:[#allocation2 + $0x7e8] sm:$0xff]
    %v425 = vld [vmem:[#allocation2 + $0x7f0] sm:$0xff]
    %v426 = vld [vmem:[#allocation2 + $0x7f8] sm:$0xff]
    %v427 = vld [vmem:[#allocation2 + $0x800] sm:$0xff]
    %v428 = vld [vmem:[#allocation2 + $0x808] sm:$0xff]
    %v429 = vld [vmem:[#allocation2 + $0x810] sm:$0xff]
    %v430 = vld [vmem:[#allocation2 + $0x818] sm:$0xff]
    %v431 = vld [vmem:[#allocation2 + $0x820] sm:$0xff]
    %v432 = vld [vmem:[#allocation2 + $0x828] sm:$0xff]
    %v433 = vld [vmem:[#allocation2 + $0x830] sm:$0xff]
    %v434 = vld [vmem:[#allocation2 + $0x838] sm:$0xff]
    %v435 = vld [vmem:[#allocation2 + $0x840] sm:$0xff]
    %v436 = vld [vmem:[#allocation2 + $0x848] sm:$0xff]
    %v437 = vld [vmem:[#allocation2 + $0x850] sm:$0xff]
    %v438 = vld [vmem:[#allocation2 + $0x858] sm:$0xff]
    %v439 = vld [vmem:[#allocation2 + $0x860] sm:$0xff]
    %v440 = vld [vmem:[#allocation2 + $0x868] sm:$0xff]
    %v441 = vld [vmem:[#allocation2 + $0x870] sm:$0xff]
    %v442 = vld [vmem:[#allocation2 + $0x878] sm:$0xff]
    %v443 = vld [vmem:[#allocation2 + $0x880] sm:$0xff]
    %v444 = vld [vmem:[#allocation2 + $0x888] sm:$0xff]
    %v445 = vld [vmem:[#allocation2 + $0x890] sm:$0xff]
    %v446 = vld [vmem:[#allocation2 + $0x898] sm:$0xff]
    %v447 = vld [vmem:[#allocation2 + $0x8a0] sm:$0xff]
    %v448 = vld [vmem:[#allocation2 + $0x8a8] sm:$0xff]
    %v449 = vld [vmem:[#allocation2 + $0x8b0] sm:$0xff]
    %v450 = vld [vmem:[#allocation2 + $0x8b8] sm:$0xff]
    %v451 = vld [vmem:[#allocation2 + $0x8c0] sm:$0xff]
    %v452 = vld [vmem:[#allocation2 + $0x8c8] sm:$0xff]
    %v453 = vld [vmem:[#allocation2 + $0x8d0] sm:$0xff]
    %v454 = vld [vmem:[#allocation2 + $0x8d8] sm:$0xff]
    %v455 = vld [vmem:[#allocation2 + $0x8e0] sm:$0xff]
    %v456 = vld [vmem:[#allocation2 + $0x8e8] sm:$0xff]
    %v457 = vld [vmem:[#allocation2 + $0x8f0] sm:$0xff]
    %v458 = vld [vmem:[#allocation2 + $0x8f8] sm:$0xff]
    %v459 = vld [vmem:[#allocation2 + $0x900] sm:$0xff]
    %v460 = vld [vmem:[#allocation2 + $0x908] sm:$0xff]
    %v461 = vld [vmem:[#allocation2 + $0x910] sm:$0xff]
    %v462 = vld [vmem:[#allocation2 + $0x918] sm:$0xff]
    %v463 = vld [vmem:[#allocation2 + $0x920] sm:$0xff]
    %v464 = vld [vmem:[#allocation2 + $0x928] sm:$0xff]
    %v465 = vld [vmem:[#allocation2 + $0x930] sm:$0xff]
    %v466 = vld [vmem:[#allocation2 + $0x938] sm:$0xff]
    %v467 = vld [vmem:[#allocation2 + $0x940] sm:$0xff]
    %v468 = vld [vmem:[#allocation2 + $0x948] sm:$0xff]
    %v469 = vld [vmem:[#allocation2 + $0x950] sm:$0xff]
    %v470 = vld [vmem:[#allocation2 + $0x958] sm:$0xff]
    %v471 = vld [vmem:[#allocation2 + $0x960] sm:$0xff]
    %v472 = vld [vmem:[#allocation2 + $0x968] sm:$0xff]
    %v473 = vld [vmem:[#allocation2 + $0x970] sm:$0xff]
    %v474 = vld [vmem:[#allocation2 + $0x978] sm:$0xff]
    %v475 = vld [vmem:[#allocation2 + $0x980] sm:$0xff]
    %v476 = vld [vmem:[#allocation2 + $0x988] sm:$0xff]
    %v477 = vld [vmem:[#allocation2 + $0x990] sm:$0xff]
    %v478 = vld [vmem:[#allocation2 + $0x998] sm:$0xff]
    %v479 = vld [vmem:[#allocation2 + $0x9a0] sm:$0xff]
    %v480 = vld [vmem:[#allocation2 + $0x9a8] sm:$0xff]
    %v481 = vld [vmem:[#allocation2 + $0x9b0] sm:$0xff]
    %v482 = vld [vmem:[#allocation2 + $0x9b8] sm:$0xff]
    %v483 = vld [vmem:[#allocation2 + $0x9c0] sm:$0xff]
    %v484 = vld [vmem:[#allocation2 + $0x9c8] sm:$0xff]
    %v485 = vld [vmem:[#allocation2 + $0x9d0] sm:$0xff]
    %v486 = vld [vmem:[#allocation2 + $0x9d8] sm:$0xff]
    %v487 = vld [vmem:[#allocation2 + $0x9e0] sm:$0xff]
    %v488 = vld [vmem:[#allocation2 + $0x9e8] sm:$0xff]
    %v489 = vld [vmem:[#allocation2 + $0x9f0] sm:$0xff]
    %v490 = vld [vmem:[#allocation2 + $0x9f8] sm:$0xff]
    %v491 = vld [vmem:[#allocation2 + $0xa00] sm:$0xff]
    %v492 = vld [vmem:[#allocation2 + $0xa08] sm:$0xff]
    %v493 = vld [vmem:[#allocation2 + $0xa10] sm:$0xff]
    %v494 = vld [vmem:[#allocation2 + $0xa18] sm:$0xff]
    %v495 = vld [vmem:[#allocation2 + $0xa20] sm:$0xff]
    %v496 = vld [vmem:[#allocation2 + $0xa28] sm:$0xff]
    %v497 = vld [vmem:[#allocation2 + $0xa30] sm:$0xff]
    %v498 = vld [vmem:[#allocation2 + $0xa38] sm:$0xff]
    %v499 = vld [vmem:[#allocation2 + $0xa40] sm:$0xff]
    %v500 = vld [vmem:[#allocation2 + $0xa48] sm:$0xff]
    %v501 = vld [vmem:[#allocation2 + $0xa50] sm:$0xff]
    %v502 = vld [vmem:[#allocation2 + $0xa58] sm:$0xff]
    %v503 = vld [vmem:[#allocation2 + $0xa60] sm:$0xff]
    %v504 = vld [vmem:[#allocation2 + $0xa68] sm:$0xff]
    %v505 = vld [vmem:[#allocation2 + $0xa70] sm:$0xff]
    %v506 = vld [vmem:[#allocation2 + $0xa78] sm:$0xff]
    %v507 = vld [vmem:[#allocation2 + $0xa80] sm:$0xff]
    %v508 = vld [vmem:[#allocation2 + $0xa88] sm:$0xff]
    %v509 = vld [vmem:[#allocation2 + $0xa90] sm:$0xff]
    %v510 = vld [vmem:[#allocation2 + $0xa98] sm:$0xff]
    %v511 = vld [vmem:[#allocation2 + $0xaa0] sm:$0xff]
    %v512 = vld [vmem:[#allocation2 + $0xaa8] sm:$0xff]
    %v513 = vld [vmem:[#allocation2 + $0xab0] sm:$0xff]
    %v514 = vld [vmem:[#allocation2 + $0xab8] sm:$0xff]
    %v515 = vld [vmem:[#allocation2 + $0xac0] sm:$0xff]
    %v516 = vld [vmem:[#allocation2 + $0xac8] sm:$0xff]
    %v517 = vld [vmem:[#allocation2 + $0xad0] sm:$0xff]
    %v518 = vld [vmem:[#allocation2 + $0xad8] sm:$0xff]
    %v519 = vld [vmem:[#allocation2 + $0xae0] sm:$0xff]
    %v520 = vld [vmem:[#allocation2 + $0xae8] sm:$0xff]
    %v521 = vld [vmem:[#allocation2 + $0xaf0] sm:$0xff]
    %v522 = vld [vmem:[#allocation2 + $0xaf8] sm:$0xff]
    %v523 = vld [vmem:[#allocation2 + $0xb00] sm:$0xff]
    %v524 = vld [vmem:[#allocation2 + $0xb08] sm:$0xff]
    %v525 = vld [vmem:[#allocation2 + $0xb10] sm:$0xff]
    %v526 = vld [vmem:[#allocation2 + $0xb18] sm:$0xff]
    %v527 = vld [vmem:[#allocation2 + $0xb20] sm:$0xff]
    %v528 = vld [vmem:[#allocation2 + $0xb28] sm:$0xff]
    %v529 = vld [vmem:[#allocation2 + $0xb30] sm:$0xff]
    %v530 = vld [vmem:[#allocation2 + $0xb38] sm:$0xff]
    %v531 = vld [vmem:[#allocation2 + $0xb40] sm:$0xff]
    %v532 = vld [vmem:[#allocation2 + $0xb48] sm:$0xff]
    %v533 = vld [vmem:[#allocation2 + $0xb50] sm:$0xff]
    %v534 = vld [vmem:[#allocation2 + $0xb58] sm:$0xff]
    %v535 = vld [vmem:[#allocation2 + $0xb60] sm:$0xff]
    %v536 = vld [vmem:[#allocation2 + $0xb68] sm:$0xff]
    %v537 = vld [vmem:[#allocation2 + $0xb70] sm:$0xff]
    %v538 = vld [vmem:[#allocation2 + $0xb78] sm:$0xff]
    %v539 = vld [vmem:[#allocation2 + $0xb80] sm:$0xff]
    %v540 = vld [vmem:[#allocation2 + $0xb88] sm:$0xff]
    %v541 = vld [vmem:[#allocation2 + $0xb90] sm:$0xff]
    %v542 = vld [vmem:[#allocation2 + $0xb98] sm:$0xff]
    %v543 = vld [vmem:[#allocation2 + $0xba0] sm:$0xff]
    %v544 = vld [vmem:[#allocation2 + $0xba8] sm:$0xff]
    %v545 = vld [vmem:[#allocation2 + $0xbb0] sm:$0xff]
    %v546 = vld [vmem:[#allocation2 + $0xbb8] sm:$0xff]
    %v547 = vld [vmem:[#allocation2 + $0xbc0] sm:$0xff]
    %v548 = vld [vmem:[#allocation2 + $0xbc8] sm:$0xff]
    %v549 = vld [vmem:[#allocation2 + $0xbd0] sm:$0xff]
    %v550 = vld [vmem:[#allocation2 + $0xbd8] sm:$0xff]
    %v551 = vld [vmem:[#allocation2 + $0xbe0] sm:$0xff]
    %v552 = vld [vmem:[#allocation2 + $0xbe8] sm:$0xff]
    %v553 = vld [vmem:[#allocation2 + $0xbf0] sm:$0xff]
    %v554 = vld [vmem:[#allocation2 + $0xbf8] sm:$0xff]
    %v555 = vld [vmem:[#allocation2 + $0xc00] sm:$0xff]
    %v556 = vld [vmem:[#allocation2 + $0xc08] sm:$0xff]
    %v557 = vld [vmem:[#allocation2 + $0xc10] sm:$0xff]
    %v558 = vld [vmem:[#allocation2 + $0xc18] sm:$0xff]
    %v559 = vld [vmem:[#allocation2 + $0xc20] sm:$0xff]
    %v560 = vld [vmem:[#allocation2 + $0xc28] sm:$0xff]
    %v561 = vld [vmem:[#allocation2 + $0xc30] sm:$0xff]
    %v562 = vld [vmem:[#allocation2 + $0xc38] sm:$0xff]
    %v563 = vld [vmem:[#allocation2 + $0xc40] sm:$0xff]
    %v564 = vld [vmem:[#allocation2 + $0xc48] sm:$0xff]
    %v565 = vld [vmem:[#allocation2 + $0xc50] sm:$0xff]
    %v566 = vld [vmem:[#allocation2 + $0xc58] sm:$0xff]
    %v567 = vld [vmem:[#allocation2 + $0xc60] sm:$0xff]
    %v568 = vld [vmem:[#allocation2 + $0xc68] sm:$0xff]
    %v569 = vld [vmem:[#allocation2 + $0xc70] sm:$0xff]
    %v570 = vld [vmem:[#allocation2 + $0xc78] sm:$0xff]
    %v571 = vld [vmem:[#allocation2 + $0xc80] sm:$0xff]
    %v572 = vld [vmem:[#allocation2 + $0xc88] sm:$0xff]
    %v573 = vld [vmem:[#allocation2 + $0xc90] sm:$0xff]
    %v574 = vld [vmem:[#allocation2 + $0xc98] sm:$0xff]
    %v575 = vld [vmem:[#allocation2 + $0xca0] sm:$0xff]
    %v576 = vld [vmem:[#allocation2 + $0xca8] sm:$0xff]
    %v577 = vld [vmem:[#allocation2 + $0xcb0] sm:$0xff]
    %v578 = vld [vmem:[#allocation2 + $0xcb8] sm:$0xff]
    %v579 = vld [vmem:[#allocation2 + $0xcc0] sm:$0xff]
    %v580 = vld [vmem:[#allocation2 + $0xcc8] sm:$0xff]
    %v581 = vld [vmem:[#allocation2 + $0xcd0] sm:$0xff]
    %v582 = vld [vmem:[#allocation2 + $0xcd8] sm:$0xff]
    %v583 = vld [vmem:[#allocation2 + $0xce0] sm:$0xff]
    %v584 = vld [vmem:[#allocation2 + $0xce8] sm:$0xff]
    %v585 = vld [vmem:[#allocation2 + $0xcf0] sm:$0xff]
    %v586 = vld [vmem:[#allocation2 + $0xcf8] sm:$0xff]
    %v587 = vld [vmem:[#allocation2 + $0xd00] sm:$0xff]
    %v588 = vld [vmem:[#allocation2 + $0xd08] sm:$0xff]
    %v589 = vld [vmem:[#allocation2 + $0xd10] sm:$0xff]
    %v590 = vld [vmem:[#allocation2 + $0xd18] sm:$0xff]
    %v591 = vld [vmem:[#allocation2 + $0xd20] sm:$0xff]
    %v592 = vld [vmem:[#allocation2 + $0xd28] sm:$0xff]
    %v593 = vld [vmem:[#allocation2 + $0xd30] sm:$0xff]
    %v594 = vld [vmem:[#allocation2 + $0xd38] sm:$0xff]
    %v595 = vld [vmem:[#allocation2 + $0xd40] sm:$0xff]
    %v596 = vld [vmem:[#allocation2 + $0xd48] sm:$0xff]
    %v597 = vld [vmem:[#allocation2 + $0xd50] sm:$0xff]
    %v598 = vld [vmem:[#allocation2 + $0xd58] sm:$0xff]
    %v599 = vld [vmem:[#allocation2 + $0xd60] sm:$0xff]
    %v600 = vld [vmem:[#allocation2 + $0xd68] sm:$0xff]
    %v601 = vld [vmem:[#allocation2 + $0xd70] sm:$0xff]
    %v602 = vld [vmem:[#allocation2 + $0xd78] sm:$0xff]
    %v603 = vld [vmem:[#allocation2 + $0xd80] sm:$0xff]
    %v604 = vld [vmem:[#allocation2 + $0xd88] sm:$0xff]
    %v605 = vld [vmem:[#allocation2 + $0xd90] sm:$0xff]
    %v606 = vld [vmem:[#allocation2 + $0xd98] sm:$0xff]
    %v607 = vld [vmem:[#allocation2 + $0xda0] sm:$0xff]
    %v608 = vld [vmem:[#allocation2 + $0xda8] sm:$0xff]
    %v609 = vld [vmem:[#allocation2 + $0xdb0] sm:$0xff]
    %v610 = vld [vmem:[#allocation2 + $0xdb8] sm:$0xff]
    %v611 = vld [vmem:[#allocation2 + $0xdc0] sm:$0xff]
    %v612 = vld [vmem:[#allocation2 + $0xdc8] sm:$0xff]
    %v613 = vld [vmem:[#allocation2 + $0xdd0] sm:$0xff]
    %v614 = vld [vmem:[#allocation2 + $0xdd8] sm:$0xff]
    %v615 = vld [vmem:[#allocation2 + $0xde0] sm:$0xff]
    %v616 = vld [vmem:[#allocation2 + $0xde8] sm:$0xff]
    %v617 = vld [vmem:[#allocation2 + $0xdf0] sm:$0xff]
    %v618 = vld [vmem:[#allocation2 + $0xdf8] sm:$0xff]
    %v619 = vld [vmem:[#allocation2 + $0xe00] sm:$0xff]
    %v620 = vld [vmem:[#allocation2 + $0xe08] sm:$0xff]
    %v621 = vld [vmem:[#allocation2 + $0xe10] sm:$0xff]
    %v622 = vld [vmem:[#allocation2 + $0xe18] sm:$0xff]
    %v623 = vld [vmem:[#allocation2 + $0xe20] sm:$0xff]
    %v624 = vld [vmem:[#allocation2 + $0xe28] sm:$0xff]
    %v625 = vld [vmem:[#allocation2 + $0xe30] sm:$0xff]
    %v626 = vld [vmem:[#allocation2 + $0xe38] sm:$0xff]
    %v627 = vld [vmem:[#allocation2 + $0xe40] sm:$0xff]
    %v628 = vld [vmem:[#allocation2 + $0xe48] sm:$0xff]
    %v629 = vld [vmem:[#allocation2 + $0xe50] sm:$0xff]
    %v630 = vld [vmem:[#allocation2 + $0xe58] sm:$0xff]
    %v631 = vld [vmem:[#allocation2 + $0xe60] sm:$0xff]
    %v632 = vld [vmem:[#allocation2 + $0xe68] sm:$0xff]
    %v633 = vld [vmem:[#allocation2 + $0xe70] sm:$0xff]
    %v634 = vld [vmem:[#allocation2 + $0xe78] sm:$0xff]
    %v635 = vld [vmem:[#allocation2 + $0xe80] sm:$0xff]
    %v636 = vld [vmem:[#allocation2 + $0xe88] sm:$0xff]
    %v637 = vld [vmem:[#allocation2 + $0xe90] sm:$0xff]
    %v638 = vld [vmem:[#allocation2 + $0xe98] sm:$0xff]
    %v639 = vld [vmem:[#allocation2 + $0xea0] sm:$0xff]
    %v640 = vld [vmem:[#allocation2 + $0xea8] sm:$0xff]
    %v641 = vld [vmem:[#allocation2 + $0xeb0] sm:$0xff]
    %v642 = vld [vmem:[#allocation2 + $0xeb8] sm:$0xff]
    %v643 = vld [vmem:[#allocation2 + $0xec0] sm:$0xff]
    %v644 = vld [vmem:[#allocation2 + $0xec8] sm:$0xff]
    %v645 = vld [vmem:[#allocation2 + $0xed0] sm:$0xff]
    %v646 = vld [vmem:[#allocation2 + $0xed8] sm:$0xff]
    %v647 = vld [vmem:[#allocation2 + $0xee0] sm:$0xff]
    %v648 = vld [vmem:[#allocation2 + $0xee8] sm:$0xff]
    %v649 = vld [vmem:[#allocation2 + $0xef0] sm:$0xff]
    %v650 = vld [vmem:[#allocation2 + $0xef8] sm:$0xff]
    %v651 = vld [vmem:[#allocation2 + $0xf00] sm:$0xff]
    %v652 = vld [vmem:[#allocation2 + $0xf08] sm:$0xff]
    %v653 = vld [vmem:[#allocation2 + $0xf10] sm:$0xff]
    %v654 = vld [vmem:[#allocation2 + $0xf18] sm:$0xff]
    %v655 = vld [vmem:[#allocation2 + $0xf20] sm:$0xff]
    %v656 = vld [vmem:[#allocation2 + $0xf28] sm:$0xff]
    %v657 = vld [vmem:[#allocation2 + $0xf30] sm:$0xff]
    %v658 = vld [vmem:[#allocation2 + $0xf38] sm:$0xff]
    %v659 = vld [vmem:[#allocation2 + $0xf40] sm:$0xff]
    %v660 = vld [vmem:[#allocation2 + $0xf48] sm:$0xff]
    %v661 = vld [vmem:[#allocation2 + $0xf50] sm:$0xff]
    %v662 = vld [vmem:[#allocation2 + $0xf58] sm:$0xff]
    %v663 = vld [vmem:[#allocation2 + $0xf60] sm:$0xff]
    %v664 = vld [vmem:[#allocation2 + $0xf68] sm:$0xff]
    %v665 = vld [vmem:[#allocation2 + $0xf70] sm:$0xff]
    %v666 = vld [vmem:[#allocation2 + $0xf78] sm:$0xff]
    %v667 = vld [vmem:[#allocation2 + $0xf80] sm:$0xff]
    %v668 = vld [vmem:[#allocation2 + $0xf88] sm:$0xff]
    %v669 = vld [vmem:[#allocation2 + $0xf90] sm:$0xff]
    %v670 = vld [vmem:[#allocation2 + $0xf98] sm:$0xff]
    %v671 = vld [vmem:[#allocation2 + $0xfa0] sm:$0xff]
    %v672 = vld [vmem:[#allocation2 + $0xfa8] sm:$0xff]
    %v673 = vld [vmem:[#allocation2 + $0xfb0] sm:$0xff]
    %v674 = vld [vmem:[#allocation2 + $0xfb8] sm:$0xff]
    %v675 = vld [vmem:[#allocation2 + $0xfc0] sm:$0xff]
    %v676 = vld [vmem:[#allocation2 + $0xfc8] sm:$0xff]
    %v677 = vld [vmem:[#allocation2 + $0xfd0] sm:$0xff]
    %v678 = vld [vmem:[#allocation2 + $0xfd8] sm:$0xff]
    %v679 = vld [vmem:[#allocation2 + $0xfe0] sm:$0xff]
    %v680 = vld [vmem:[#allocation2 + $0xfe8] sm:$0xff]
    %v681 = vld [vmem:[#allocation2 + $0xff0] sm:$0xff]
    %v682 = vld [vmem:[#allocation2 + $0xff8] sm:$0xff]
    %v683 = vld [vmem:[#allocation2 + $0x1000] sm:$0xff]
    %v684 = vld [vmem:[#allocation2 + $0x1008] sm:$0xff]
    %v685 = vld [vmem:[#allocation2 + $0x1010] sm:$0xff]
    %v686 = vld [vmem:[#allocation2 + $0x1018] sm:$0xff]
    %v687 = vld [vmem:[#allocation2 + $0x1020] sm:$0xff]
    %v688 = vld [vmem:[#allocation2 + $0x1028] sm:$0xff]
    %v689 = vld [vmem:[#allocation2 + $0x1030] sm:$0xff]
    %v690 = vld [vmem:[#allocation2 + $0x1038] sm:$0xff]
    %v691 = vld [vmem:[#allocation2 + $0x1040] sm:$0xff]
    %v692 = vld [vmem:[#allocation2 + $0x1048] sm:$0xff]
    %v693 = vld [vmem:[#allocation2 + $0x1050] sm:$0xff]
    %v694 = vld [vmem:[#allocation2 + $0x1058] sm:$0xff]
    %v695 = vld [vmem:[#allocation2 + $0x1060] sm:$0xff]
    %v696 = vld [vmem:[#allocation2 + $0x1068] sm:$0xff]
    %v697 = vld [vmem:[#allocation2 + $0x1070] sm:$0xff]
    %v698 = vld [vmem:[#allocation2 + $0x1078] sm:$0xff]
    %v699 = vld [vmem:[#allocation2 + $0x1080] sm:$0xff]
    %v700 = vld [vmem:[#allocation2 + $0x1088] sm:$0xff]
    %v701 = vld [vmem:[#allocation2 + $0x1090] sm:$0xff]
    %v702 = vld [vmem:[#allocation2 + $0x1098] sm:$0xff]
    %v703 = vld [vmem:[#allocation2 + $0x10a0] sm:$0xff]
    %v704 = vld [vmem:[#allocation2 + $0x10a8] sm:$0xff]
    %v705 = vld [vmem:[#allocation2 + $0x10b0] sm:$0xff]
    %v706 = vld [vmem:[#allocation2 + $0x10b8] sm:$0xff]
    %v707 = vld [vmem:[#allocation2 + $0x10c0] sm:$0xff]
    %v708 = vld [vmem:[#allocation2 + $0x10c8] sm:$0xff]
    %v709 = vld [vmem:[#allocation2 + $0x10d0] sm:$0xff]
    %v710 = vld [vmem:[#allocation2 + $0x10d8] sm:$0xff]
    %v711 = vld [vmem:[#allocation2 + $0x10e0] sm:$0xff]
    %v712 = vld [vmem:[#allocation2 + $0x10e8] sm:$0xff]
    %v713 = vld [vmem:[#allocation2 + $0x10f0] sm:$0xff]
    %v714 = vld [vmem:[#allocation2 + $0x10f8] sm:$0xff]
    %v715 = vld [vmem:[#allocation2 + $0x1100] sm:$0xff]
    %v716 = vld [vmem:[#allocation2 + $0x1108] sm:$0xff]
    %v717 = vld [vmem:[#allocation2 + $0x1110] sm:$0xff]
    %v718 = vld [vmem:[#allocation2 + $0x1118] sm:$0xff]
    %v719 = vld [vmem:[#allocation2 + $0x1120] sm:$0xff]
    %v720 = vld [vmem:[#allocation2 + $0x1128] sm:$0xff]
    %v721 = vld [vmem:[#allocation2 + $0x1130] sm:$0xff]
    %v722 = vld [vmem:[#allocation2 + $0x1138] sm:$0xff]
    %v723 = vld [vmem:[#allocation2 + $0x1140] sm:$0xff]
    %v724 = vld [vmem:[#allocation2 + $0x1148] sm:$0xff]
    %v725 = vld [vmem:[#allocation2 + $0x1150] sm:$0xff]
    %v726 = vld [vmem:[#allocation2 + $0x1158] sm:$0xff]
    %v727 = vld [vmem:[#allocation2 + $0x1160] sm:$0xff]
    %v728 = vld [vmem:[#allocation2 + $0x1168] sm:$0xff]
    %v729 = vld [vmem:[#allocation2 + $0x1170] sm:$0xff]
    %v730 = vld [vmem:[#allocation2 + $0x1178] sm:$0xff]
    %v731 = vld [vmem:[#allocation2 + $0x1180] sm:$0xff]
    %v732 = vld [vmem:[#allocation2 + $0x1188] sm:$0xff]
    %v733 = vld [vmem:[#allocation2 + $0x1190] sm:$0xff]
    %v734 = vld [vmem:[#allocation2 + $0x1198] sm:$0xff]
    %v735 = vld [vmem:[#allocation2 + $0x11a0] sm:$0xff]
    %v736 = vld [vmem:[#allocation2 + $0x11a8] sm:$0xff]
    %v737 = vld [vmem:[#allocation2 + $0x11b0] sm:$0xff]
    %v738 = vld [vmem:[#allocation2 + $0x11b8] sm:$0xff]
    %v739 = vld [vmem:[#allocation2 + $0x11c0] sm:$0xff]
    %v740 = vld [vmem:[#allocation2 + $0x11c8] sm:$0xff]
    %v741 = vld [vmem:[#allocation2 + $0x11d0] sm:$0xff]
    %v742 = vld [vmem:[#allocation2 + $0x11d8] sm:$0xff]
    %v743 = vld [vmem:[#allocation2 + $0x11e0] sm:$0xff]
    %v744 = vld [vmem:[#allocation2 + $0x11e8] sm:$0xff]
    %v745 = vld [vmem:[#allocation2 + $0x11f0] sm:$0xff]
    %v746 = vld [vmem:[#allocation2 + $0x11f8] sm:$0xff]
    %v747 = vld [vmem:[#allocation2 + $0x1200] sm:$0xff]
    %v748 = vld [vmem:[#allocation2 + $0x1208] sm:$0xff]
    %v749 = vld [vmem:[#allocation2 + $0x1210] sm:$0xff]
    %v750 = vld [vmem:[#allocation2 + $0x1218] sm:$0xff]
    %v751 = vld [vmem:[#allocation2 + $0x1220] sm:$0xff]
    %v752 = vld [vmem:[#allocation2 + $0x1228] sm:$0xff]
    %v753 = vld [vmem:[#allocation2 + $0x1230] sm:$0xff]
    %v754 = vld [vmem:[#allocation2 + $0x1238] sm:$0xff]
    %v755 = vld [vmem:[#allocation2 + $0x1240] sm:$0xff]
    %v756 = vld [vmem:[#allocation2 + $0x1248] sm:$0xff]
    %v757 = vld [vmem:[#allocation2 + $0x1250] sm:$0xff]
    %v758 = vld [vmem:[#allocation2 + $0x1258] sm:$0xff]
    %v759 = vld [vmem:[#allocation2 + $0x1260] sm:$0xff]
    %v760 = vld [vmem:[#allocation2 + $0x1268] sm:$0xff]
    %v761 = vld [vmem:[#allocation2 + $0x1270] sm:$0xff]
    %v762 = vld [vmem:[#allocation2 + $0x1278] sm:$0xff]
    %v763 = vld [vmem:[#allocation2 + $0x1280] sm:$0xff]
    %v764 = vld [vmem:[#allocation2 + $0x1288] sm:$0xff]
    %v765 = vld [vmem:[#allocation2 + $0x1290] sm:$0xff]
    %v766 = vld [vmem:[#allocation2 + $0x1298] sm:$0xff]
    %v767 = vld [vmem:[#allocation2 + $0x12a0] sm:$0xff]
    %v768 = vld [vmem:[#allocation2 + $0x12a8] sm:$0xff]
    %v769 = vld [vmem:[#allocation2 + $0x12b0] sm:$0xff]
    %v770 = vld [vmem:[#allocation2 + $0x12b8] sm:$0xff]
    %v771 = vld [vmem:[#allocation2 + $0x12c0] sm:$0xff]
    %v772 = vld [vmem:[#allocation2 + $0x12c8] sm:$0xff]
    %v773 = vld [vmem:[#allocation2 + $0x12d0] sm:$0xff]
    %v774 = vld [vmem:[#allocation2 + $0x12d8] sm:$0xff]
    %v775 = vld [vmem:[#allocation2 + $0x12e0] sm:$0xff]
    %v776 = vld [vmem:[#allocation2 + $0x12e8] sm:$0xff]
    %v777 = vld [vmem:[#allocation2 + $0x12f0] sm:$0xff]
    %v778 = vld [vmem:[#allocation2 + $0x12f8] sm:$0xff]
    %v779 = vld [vmem:[#allocation2 + $0x1300] sm:$0xff]
    %v780 = vld [vmem:[#allocation2 + $0x1308] sm:$0xff]
    %v781 = vld [vmem:[#allocation2 + $0x1310] sm:$0xff]
    %v782 = vld [vmem:[#allocation2 + $0x1318] sm:$0xff]
    %v783 = vld [vmem:[#allocation2 + $0x1320] sm:$0xff]
    %v784 = vld [vmem:[#allocation2 + $0x1328] sm:$0xff]
    %v785 = vld [vmem:[#allocation2 + $0x1330] sm:$0xff]
    %v786 = vld [vmem:[#allocation2 + $0x1338] sm:$0xff]
    %v787 = vld [vmem:[#allocation2 + $0x1340] sm:$0xff]
    %v788 = vld [vmem:[#allocation2 + $0x1348] sm:$0xff]
    %v789 = vld [vmem:[#allocation2 + $0x1350] sm:$0xff]
    %v790 = vld [vmem:[#allocation2 + $0x1358] sm:$0xff]
    %v791 = vld [vmem:[#allocation2 + $0x1360] sm:$0xff]
    %v792 = vld [vmem:[#allocation2 + $0x1368] sm:$0xff]
    %v793 = vld [vmem:[#allocation2 + $0x1370] sm:$0xff]
    %v794 = vld [vmem:[#allocation2 + $0x1378] sm:$0xff]
    %v795 = vld [vmem:[#allocation2 + $0x1380] sm:$0xff]
    %v796 = vld [vmem:[#allocation2 + $0x1388] sm:$0xff]
    %v797 = vld [vmem:[#allocation2 + $0x1390] sm:$0xff]
    %v798 = vld [vmem:[#allocation2 + $0x1398] sm:$0xff]
    %v799 = vld [vmem:[#allocation2 + $0x13a0] sm:$0xff]
    %v800 = vld [vmem:[#allocation2 + $0x13a8] sm:$0xff]
    %v801 = vld [vmem:[#allocation2 + $0x13b0] sm:$0xff]
    %v802 = vld [vmem:[#allocation2 + $0x13b8] sm:$0xff]
    %v803 = vld [vmem:[#allocation2 + $0x13c0] sm:$0xff]
    %v804 = vld [vmem:[#allocation2 + $0x13c8] sm:$0xff]
    %v805 = vld [vmem:[#allocation2 + $0x13d0] sm:$0xff]
    %v806 = vld [vmem:[#allocation2 + $0x13d8] sm:$0xff]
    %v807 = vld [vmem:[#allocation2 + $0x13e0] sm:$0xff]
    %v808 = vld [vmem:[#allocation2 + $0x13e8] sm:$0xff]
    %v809 = vld [vmem:[#allocation2 + $0x13f0] sm:$0xff]
    %v810 = vld [vmem:[#allocation2 + $0x13f8] sm:$0xff]
    %v811 = vld [vmem:[#allocation2 + $0x1400] sm:$0xff]
    %v812 = vld [vmem:[#allocation2 + $0x1408] sm:$0xff]
    %v813 = vld [vmem:[#allocation2 + $0x1410] sm:$0xff]
    %v814 = vld [vmem:[#allocation2 + $0x1418] sm:$0xff]
    %v815 = vld [vmem:[#allocation2 + $0x1420] sm:$0xff]
    %v816 = vld [vmem:[#allocation2 + $0x1428] sm:$0xff]
    %v817 = vld [vmem:[#allocation2 + $0x1430] sm:$0xff]
    %v818 = vld [vmem:[#allocation2 + $0x1438] sm:$0xff]
    %v819 = vld [vmem:[#allocation2 + $0x1440] sm:$0xff]
    %v820 = vld [vmem:[#allocation2 + $0x1448] sm:$0xff]
    %v821 = vld [vmem:[#allocation2 + $0x1450] sm:$0xff]
    %v822 = vld [vmem:[#allocation2 + $0x1458] sm:$0xff]
    %v823 = vld [vmem:[#allocation2 + $0x1460] sm:$0xff]
    %v824 = vld [vmem:[#allocation2 + $0x1468] sm:$0xff]
    %v825 = vld [vmem:[#allocation2 + $0x1470] sm:$0xff]
    %v826 = vld [vmem:[#allocation2 + $0x1478] sm:$0xff]
    %v827 = vld [vmem:[#allocation2 + $0x1480] sm:$0xff]
    %v828 = vld [vmem:[#allocation2 + $0x1488] sm:$0xff]
    %v829 = vld [vmem:[#allocation2 + $0x1490] sm:$0x33]
    %v830 = vld [vmem:[#allocation2 + $0x1498] sm:$0x33]
    %v831 = vld [vmem:[#allocation2 + $0x14a0] sm:$0x33]
    %v832 = vld [vmem:[#allocation2 + $0x14a8] sm:$0x33]
    %v833 = vld [vmem:[#allocation2 + $0x14b0] sm:$0x33]
    %v834 = vld [vmem:[#allocation2 + $0x14b8] sm:$0x33]
    %v835 = vld [vmem:[#allocation2 + $0x14c0] sm:$0x33]
    %v836 = vunpack.c.l.bf16 %v171
    %v837 = vunpack.c.h.bf16 %v171
    %v838 = vunpack.c.l.bf16 %v172
    %v839 = vunpack.c.h.bf16 %v172
    %v840 = vunpack.c.l.bf16 %v173
    %v841 = vunpack.c.h.bf16 %v173
    %v842 = vunpack.c.l.bf16 %v174
    %v843 = vunpack.c.h.bf16 %v174
    %v844 = vunpack.c.l.bf16 %v175
    %v845 = vunpack.c.h.bf16 %v175
    %v846 = vunpack.c.l.bf16 %v176
    %v847 = vunpack.c.h.bf16 %v176
    %v848 = vunpack.c.l.bf16 %v177
    %v849 = vunpack.c.h.bf16 %v177
    %v850 = vunpack.c.l.bf16 %v178
    %v851 = vunpack.c.h.bf16 %v178
    %v852 = vunpack.c.l.bf16 %v179
    %v853 = vunpack.c.h.bf16 %v179
    %v854 = vunpack.c.l.bf16 %v180
    %v855 = vunpack.c.h.bf16 %v180
    %v856 = vunpack.c.l.bf16 %v181
    %v857 = vunpack.c.h.bf16 %v181
    %v858 = vunpack.c.l.bf16 %v182
    %v859 = vunpack.c.h.bf16 %v182
    %v860 = vunpack.c.l.bf16 %v183
    %v861 = vunpack.c.h.bf16 %v183
    %v862 = vunpack.c.l.bf16 %v184
    %v863 = vunpack.c.h.bf16 %v184
    %v864 = vunpack.c.l.bf16 %v185
    %v865 = vunpack.c.h.bf16 %v185
    %v866 = vunpack.c.l.bf16 %v186
    %v867 = vunpack.c.h.bf16 %v186
    %v868 = vunpack.c.l.bf16 %v187
    %v869 = vunpack.c.h.bf16 %v187
    %v870 = vunpack.c.l.bf16 %v188
    %v871 = vunpack.c.h.bf16 %v188
    %v872 = vunpack.c.l.bf16 %v189
    %v873 = vunpack.c.h.bf16 %v189
    %v874 = vunpack.c.l.bf16 %v190
    %v875 = vunpack.c.h.bf16 %v190
    %v876 = vunpack.c.l.bf16 %v191
    %v877 = vunpack.c.h.bf16 %v191
    %v878 = vunpack.c.l.bf16 %v192
    %v879 = vunpack.c.h.bf16 %v192
    %v880 = vunpack.c.l.bf16 %v193
    %v881 = vunpack.c.h.bf16 %v193
    %v882 = vunpack.c.l.bf16 %v194
    %v883 = vunpack.c.h.bf16 %v194
    %v884 = vunpack.c.l.bf16 %v195
    %v885 = vunpack.c.h.bf16 %v195
    %v886 = vunpack.c.l.bf16 %v196
    %v887 = vunpack.c.h.bf16 %v196
    %v888 = vunpack.c.l.bf16 %v197
    %v889 = vunpack.c.h.bf16 %v197
    %v890 = vunpack.c.l.bf16 %v198
    %v891 = vunpack.c.h.bf16 %v198
    %v892 = vunpack.c.l.bf16 %v199
    %v893 = vunpack.c.h.bf16 %v199
    %v894 = vunpack.c.l.bf16 %v200
    %v895 = vunpack.c.h.bf16 %v200
    %v896 = vunpack.c.l.bf16 %v201
    %v897 = vunpack.c.h.bf16 %v201
    %v898 = vunpack.c.l.bf16 %v202
    %v899 = vunpack.c.h.bf16 %v202
    %v900 = vunpack.c.l.bf16 %v203
    %v901 = vunpack.c.h.bf16 %v203
    %v902 = vunpack.c.l.bf16 %v204
    %v903 = vunpack.c.h.bf16 %v204
    %v904 = vunpack.c.l.bf16 %v205
    %v905 = vunpack.c.h.bf16 %v205
    %v906 = vunpack.c.l.bf16 %v206
    %v907 = vunpack.c.h.bf16 %v206
    %v908 = vunpack.c.l.bf16 %v207
    %v909 = vunpack.c.h.bf16 %v207
    %v910 = vunpack.c.l.bf16 %v208
    %v911 = vunpack.c.h.bf16 %v208
    %v912 = vunpack.c.l.bf16 %v209
    %v913 = vunpack.c.h.bf16 %v209
    %v914 = vunpack.c.l.bf16 %v210
    %v915 = vunpack.c.h.bf16 %v210
    %v916 = vunpack.c.l.bf16 %v211
    %v917 = vunpack.c.h.bf16 %v211
    %v918 = vunpack.c.l.bf16 %v212
    %v919 = vunpack.c.h.bf16 %v212
    %v920 = vunpack.c.l.bf16 %v213
    %v921 = vunpack.c.h.bf16 %v213
    %v922 = vunpack.c.l.bf16 %v214
    %v923 = vunpack.c.h.bf16 %v214
    %v924 = vunpack.c.l.bf16 %v215
    %v925 = vunpack.c.h.bf16 %v215
    %v926 = vunpack.c.l.bf16 %v216
    %v927 = vunpack.c.h.bf16 %v216
    %v928 = vunpack.c.l.bf16 %v217
    %v929 = vunpack.c.h.bf16 %v217
    %v930 = vunpack.c.l.bf16 %v218
    %v931 = vunpack.c.h.bf16 %v218
    %v932 = vunpack.c.l.bf16 %v219
    %v933 = vunpack.c.h.bf16 %v219
    %v934 = vunpack.c.l.bf16 %v220
    %v935 = vunpack.c.h.bf16 %v220
    %v936 = vunpack.c.l.bf16 %v221
    %v937 = vunpack.c.h.bf16 %v221
    %v938 = vunpack.c.l.bf16 %v222
    %v939 = vunpack.c.h.bf16 %v222
    %v940 = vunpack.c.l.bf16 %v223
    %v941 = vunpack.c.h.bf16 %v223
    %v942 = vunpack.c.l.bf16 %v224
    %v943 = vunpack.c.h.bf16 %v224
    %v944 = vunpack.c.l.bf16 %v225
    %v945 = vunpack.c.h.bf16 %v225
    %v946 = vunpack.c.l.bf16 %v226
    %v947 = vunpack.c.h.bf16 %v226
    %v948 = vunpack.c.l.bf16 %v227
    %v949 = vunpack.c.h.bf16 %v227
    %v950 = vunpack.c.l.bf16 %v228
    %v951 = vunpack.c.h.bf16 %v228
    %v952 = vunpack.c.l.bf16 %v229
    %v953 = vunpack.c.h.bf16 %v229
    %v954 = vunpack.c.l.bf16 %v230
    %v955 = vunpack.c.h.bf16 %v230
    %v956 = vunpack.c.l.bf16 %v231
    %v957 = vunpack.c.h.bf16 %v231
    %v958 = vunpack.c.l.bf16 %v232
    %v959 = vunpack.c.h.bf16 %v232
    %v960 = vunpack.c.l.bf16 %v233
    %v961 = vunpack.c.h.bf16 %v233
    %v962 = vunpack.c.l.bf16 %v234
    %v963 = vunpack.c.h.bf16 %v234
    %v964 = vunpack.c.l.bf16 %v235
    %v965 = vunpack.c.h.bf16 %v235
    %v966 = vunpack.c.l.bf16 %v236
    %v967 = vunpack.c.h.bf16 %v236
    %v968 = vunpack.c.l.bf16 %v237
    %v969 = vunpack.c.h.bf16 %v237
    %v970 = vunpack.c.l.bf16 %v238
    %v971 = vunpack.c.h.bf16 %v238
    %v972 = vunpack.c.l.bf16 %v239
    %v973 = vunpack.c.h.bf16 %v239
    %v974 = vunpack.c.l.bf16 %v240
    %v975 = vunpack.c.h.bf16 %v240
    %v976 = vunpack.c.l.bf16 %v241
    %v977 = vunpack.c.h.bf16 %v241
    %v978 = vunpack.c.l.bf16 %v242
    %v979 = vunpack.c.h.bf16 %v242
    %v980 = vunpack.c.l.bf16 %v243
    %v981 = vunpack.c.h.bf16 %v243
    %v982 = vunpack.c.l.bf16 %v244
    %v983 = vunpack.c.h.bf16 %v244
    %v984 = vunpack.c.l.bf16 %v245
    %v985 = vunpack.c.h.bf16 %v245
    %v986 = vunpack.c.l.bf16 %v246
    %v987 = vunpack.c.h.bf16 %v246
    %v988 = vunpack.c.l.bf16 %v247
    %v989 = vunpack.c.h.bf16 %v247
    %v990 = vunpack.c.l.bf16 %v248
    %v991 = vunpack.c.h.bf16 %v248
    %v992 = vunpack.c.l.bf16 %v249
    %v993 = vunpack.c.h.bf16 %v249
    %v994 = vunpack.c.l.bf16 %v250
    %v995 = vunpack.c.h.bf16 %v250
    %v996 = vunpack.c.l.bf16 %v251
    %v997 = vunpack.c.h.bf16 %v251
    %v998 = vunpack.c.l.bf16 %v252
    %v999 = vunpack.c.h.bf16 %v252
    %v1000 = vunpack.c.l.bf16 %v253
    %v1001 = vunpack.c.h.bf16 %v253
    %v1002 = vunpack.c.l.bf16 %v254
    %v1003 = vunpack.c.h.bf16 %v254
    %v1004 = vunpack.c.l.bf16 %v255
    %v1005 = vunpack.c.h.bf16 %v255
    %v1006 = vunpack.c.l.bf16 %v256
    %v1007 = vunpack.c.h.bf16 %v256
    %v1008 = vunpack.c.l.bf16 %v257
    %v1009 = vunpack.c.h.bf16 %v257
    %v1010 = vunpack.c.l.bf16 %v258
    %v1011 = vunpack.c.h.bf16 %v258
    %v1012 = vunpack.c.l.bf16 %v259
    %v1013 = vunpack.c.h.bf16 %v259
    %v1014 = vunpack.c.l.bf16 %v260
    %v1015 = vunpack.c.h.bf16 %v260
    %v1016 = vunpack.c.l.bf16 %v261
    %v1017 = vunpack.c.h.bf16 %v261
    %v1018 = vunpack.c.l.bf16 %v262
    %v1019 = vunpack.c.h.bf16 %v262
    %v1020 = vunpack.c.l.bf16 %v263
    %v1021 = vunpack.c.h.bf16 %v263
    %v1022 = vunpack.c.l.bf16 %v264
    %v1023 = vunpack.c.h.bf16 %v264
    %v1024 = vunpack.c.l.bf16 %v265
    %v1025 = vunpack.c.h.bf16 %v265
    %v1026 = vunpack.c.l.bf16 %v266
    %v1027 = vunpack.c.h.bf16 %v266
    %v1028 = vunpack.c.l.bf16 %v267
    %v1029 = vunpack.c.h.bf16 %v267
    %v1030 = vunpack.c.l.bf16 %v268
    %v1031 = vunpack.c.h.bf16 %v268
    %v1032 = vunpack.c.l.bf16 %v269
    %v1033 = vunpack.c.h.bf16 %v269
    %v1034 = vunpack.c.l.bf16 %v270
    %v1035 = vunpack.c.h.bf16 %v270
    %v1036 = vunpack.c.l.bf16 %v271
    %v1037 = vunpack.c.h.bf16 %v271
    %v1038 = vunpack.c.l.bf16 %v272
    %v1039 = vunpack.c.h.bf16 %v272
    %v1040 = vunpack.c.l.bf16 %v273
    %v1041 = vunpack.c.h.bf16 %v273
    %v1042 = vunpack.c.l.bf16 %v274
    %v1043 = vunpack.c.h.bf16 %v274
    %v1044 = vunpack.c.l.bf16 %v275
    %v1045 = vunpack.c.h.bf16 %v275
    %v1046 = vunpack.c.l.bf16 %v276
    %v1047 = vunpack.c.h.bf16 %v276
    %v1048 = vunpack.c.l.bf16 %v277
    %v1049 = vunpack.c.h.bf16 %v277
    %v1050 = vunpack.c.l.bf16 %v278
    %v1051 = vunpack.c.h.bf16 %v278
    %v1052 = vunpack.c.l.bf16 %v279
    %v1053 = vunpack.c.h.bf16 %v279
    %v1054 = vunpack.c.l.bf16 %v280
    %v1055 = vunpack.c.h.bf16 %v280
    %v1056 = vunpack.c.l.bf16 %v281
    %v1057 = vunpack.c.h.bf16 %v281
    %v1058 = vunpack.c.l.bf16 %v282
    %v1059 = vunpack.c.h.bf16 %v282
    %v1060 = vunpack.c.l.bf16 %v283
    %v1061 = vunpack.c.h.bf16 %v283
    %v1062 = vunpack.c.l.bf16 %v284
    %v1063 = vunpack.c.h.bf16 %v284
    %v1064 = vunpack.c.l.bf16 %v285
    %v1065 = vunpack.c.h.bf16 %v285
    %v1066 = vunpack.c.l.bf16 %v286
    %v1067 = vunpack.c.h.bf16 %v286
    %v1068 = vunpack.c.l.bf16 %v287
    %v1069 = vunpack.c.h.bf16 %v287
    %v1070 = vunpack.c.l.bf16 %v288
    %v1071 = vunpack.c.h.bf16 %v288
    %v1072 = vunpack.c.l.bf16 %v289
    %v1073 = vunpack.c.h.bf16 %v289
    %v1074 = vunpack.c.l.bf16 %v290
    %v1075 = vunpack.c.h.bf16 %v290
    %v1076 = vunpack.c.l.bf16 %v291
    %v1077 = vunpack.c.h.bf16 %v291
    %v1078 = vunpack.c.l.bf16 %v292
    %v1079 = vunpack.c.h.bf16 %v292
    %v1080 = vunpack.c.l.bf16 %v293
    %v1081 = vunpack.c.h.bf16 %v293
    %v1082 = vunpack.c.l.bf16 %v294
    %v1083 = vunpack.c.h.bf16 %v294
    %v1084 = vunpack.c.l.bf16 %v295
    %v1085 = vunpack.c.h.bf16 %v295
    %v1086 = vunpack.c.l.bf16 %v296
    %v1087 = vunpack.c.h.bf16 %v296
    %v1088 = vunpack.c.l.bf16 %v297
    %v1089 = vunpack.c.h.bf16 %v297
    %v1090 = vunpack.c.l.bf16 %v298
    %v1091 = vunpack.c.h.bf16 %v298
    %v1092 = vunpack.c.l.bf16 %v299
    %v1093 = vunpack.c.h.bf16 %v299
    %v1094 = vunpack.c.l.bf16 %v300
    %v1095 = vunpack.c.h.bf16 %v300
    %v1096 = vunpack.c.l.bf16 %v301
    %v1097 = vunpack.c.h.bf16 %v301
    %v1098 = vunpack.c.l.bf16 %v302
    %v1099 = vunpack.c.h.bf16 %v302
    %v1100 = vunpack.c.l.bf16 %v303
    %v1101 = vunpack.c.h.bf16 %v303
    %v1102 = vunpack.c.l.bf16 %v304
    %v1103 = vunpack.c.h.bf16 %v304
    %v1104 = vunpack.c.l.bf16 %v305
    %v1105 = vunpack.c.h.bf16 %v305
    %v1106 = vunpack.c.l.bf16 %v306
    %v1107 = vunpack.c.h.bf16 %v306
    %v1108 = vunpack.c.l.bf16 %v307
    %v1109 = vunpack.c.h.bf16 %v307
    %v1110 = vunpack.c.l.bf16 %v308
    %v1111 = vunpack.c.h.bf16 %v308
    %v1112 = vunpack.c.l.bf16 %v309
    %v1113 = vunpack.c.h.bf16 %v309
    %v1114 = vunpack.c.l.bf16 %v310
    %v1115 = vunpack.c.h.bf16 %v310
    %v1116 = vunpack.c.l.bf16 %v311
    %v1117 = vunpack.c.h.bf16 %v311
    %v1118 = vunpack.c.l.bf16 %v312
    %v1119 = vunpack.c.h.bf16 %v312
    %v1120 = vunpack.c.l.bf16 %v313
    %v1121 = vunpack.c.h.bf16 %v313
    %v1122 = vunpack.c.l.bf16 %v314
    %v1123 = vunpack.c.h.bf16 %v314
    %v1124 = vunpack.c.l.bf16 %v315
    %v1125 = vunpack.c.h.bf16 %v315
    %v1126 = vunpack.c.l.bf16 %v316
    %v1127 = vunpack.c.h.bf16 %v316
    %v1128 = vunpack.c.l.bf16 %v317
    %v1129 = vunpack.c.h.bf16 %v317
    %v1130 = vunpack.c.l.bf16 %v318
    %v1131 = vunpack.c.h.bf16 %v318
    %v1132 = vunpack.c.l.bf16 %v319
    %v1133 = vunpack.c.h.bf16 %v319
    %v1134 = vunpack.c.l.bf16 %v320
    %v1135 = vunpack.c.h.bf16 %v320
    %v1136 = vunpack.c.l.bf16 %v321
    %v1137 = vunpack.c.h.bf16 %v321
    %v1138 = vunpack.c.l.bf16 %v322
    %v1139 = vunpack.c.h.bf16 %v322
    %v1140 = vunpack.c.l.bf16 %v323
    %v1141 = vunpack.c.h.bf16 %v323
    %v1142 = vunpack.c.l.bf16 %v324
    %v1143 = vunpack.c.h.bf16 %v324
    %v1144 = vunpack.c.l.bf16 %v325
    %v1145 = vunpack.c.h.bf16 %v325
    %v1146 = vunpack.c.l.bf16 %v326
    %v1147 = vunpack.c.h.bf16 %v326
    %v1148 = vunpack.c.l.bf16 %v327
    %v1149 = vunpack.c.h.bf16 %v327
    %v1150 = vunpack.c.l.bf16 %v328
    %v1151 = vunpack.c.h.bf16 %v328
    %v1152 = vunpack.c.l.bf16 %v329
    %v1153 = vunpack.c.h.bf16 %v329
    %v1154 = vunpack.c.l.bf16 %v330
    %v1155 = vunpack.c.h.bf16 %v330
    %v1156 = vunpack.c.l.bf16 %v331
    %v1157 = vunpack.c.h.bf16 %v331
    %v1158 = vunpack.c.l.bf16 %v332
    %v1159 = vunpack.c.h.bf16 %v332
    %v1160 = vunpack.c.l.bf16 %v333
    %v1161 = vunpack.c.h.bf16 %v333
    %v1162 = vunpack.c.l.bf16 %v334
    %v1163 = vunpack.c.h.bf16 %v334
    %v1164 = vunpack.c.l.bf16 %v335
    %v1165 = vunpack.c.h.bf16 %v335
    %v1166 = vunpack.c.l.bf16 %v336
    %v1167 = vunpack.c.h.bf16 %v336
    %v1168 = vunpack.c.l.bf16 %v337
    %v1169 = vunpack.c.h.bf16 %v337
    %v1170 = vunpack.c.l.bf16 %v338
    %v1171 = vunpack.c.h.bf16 %v338
    %v1172 = vunpack.c.l.bf16 %v339
    %v1173 = vunpack.c.h.bf16 %v339
    %v1174 = vunpack.c.l.bf16 %v340
    %v1175 = vunpack.c.h.bf16 %v340
    %v1176 = vunpack.c.l.bf16 %v341
    %v1177 = vunpack.c.h.bf16 %v341
    %v1178 = vunpack.c.l.bf16 %v342
    %v1179 = vunpack.c.h.bf16 %v342
    %v1180 = vunpack.c.l.bf16 %v343
    %v1181 = vunpack.c.h.bf16 %v343
    %v1182 = vunpack.c.l.bf16 %v344
    %v1183 = vunpack.c.h.bf16 %v344
    %v1184 = vunpack.c.l.bf16 %v345
    %v1185 = vunpack.c.h.bf16 %v345
    %v1186 = vunpack.c.l.bf16 %v346
    %v1187 = vunpack.c.h.bf16 %v346
    %v1188 = vunpack.c.l.bf16 %v347
    %v1189 = vunpack.c.h.bf16 %v347
    %v1190 = vunpack.c.l.bf16 %v348
    %v1191 = vunpack.c.h.bf16 %v348
    %v1192 = vunpack.c.l.bf16 %v349
    %v1193 = vunpack.c.h.bf16 %v349
    %v1194 = vunpack.c.l.bf16 %v350
    %v1195 = vunpack.c.h.bf16 %v350
    %v1196 = vunpack.c.l.bf16 %v351
    %v1197 = vunpack.c.h.bf16 %v351
    %v1198 = vunpack.c.l.bf16 %v352
    %v1199 = vunpack.c.h.bf16 %v352
    %v1200 = vunpack.c.l.bf16 %v353
    %v1201 = vunpack.c.h.bf16 %v353
    %v1202 = vunpack.c.l.bf16 %v354
    %v1203 = vunpack.c.h.bf16 %v354
    %v1204 = vunpack.c.l.bf16 %v355
    %v1205 = vunpack.c.h.bf16 %v355
    %v1206 = vunpack.c.l.bf16 %v356
    %v1207 = vunpack.c.h.bf16 %v356
    %v1208 = vunpack.c.l.bf16 %v357
    %v1209 = vunpack.c.h.bf16 %v357
    %v1210 = vunpack.c.l.bf16 %v358
    %v1211 = vunpack.c.h.bf16 %v358
    %v1212 = vunpack.c.l.bf16 %v359
    %v1213 = vunpack.c.h.bf16 %v359
    %v1214 = vunpack.c.l.bf16 %v360
    %v1215 = vunpack.c.h.bf16 %v360
    %v1216 = vunpack.c.l.bf16 %v361
    %v1217 = vunpack.c.h.bf16 %v361
    %v1218 = vunpack.c.l.bf16 %v362
    %v1219 = vunpack.c.h.bf16 %v362
    %v1220 = vunpack.c.l.bf16 %v363
    %v1221 = vunpack.c.h.bf16 %v363
    %v1222 = vunpack.c.l.bf16 %v364
    %v1223 = vunpack.c.h.bf16 %v364
    %v1224 = vunpack.c.l.bf16 %v365
    %v1225 = vunpack.c.h.bf16 %v365
    %v1226 = vunpack.c.l.bf16 %v366
    %v1227 = vunpack.c.h.bf16 %v366
    %v1228 = vunpack.c.l.bf16 %v367
    %v1229 = vunpack.c.h.bf16 %v367
    %v1230 = vunpack.c.l.bf16 %v368
    %v1231 = vunpack.c.h.bf16 %v368
    %v1232 = vunpack.c.l.bf16 %v369
    %v1233 = vunpack.c.h.bf16 %v369
    %v1234 = vunpack.c.l.bf16 %v370
    %v1235 = vunpack.c.h.bf16 %v370
    %v1236 = vunpack.c.l.bf16 %v371
    %v1237 = vunpack.c.h.bf16 %v371
    %v1238 = vunpack.c.l.bf16 %v372
    %v1239 = vunpack.c.h.bf16 %v372
    %v1240 = vunpack.c.l.bf16 %v373
    %v1241 = vunpack.c.h.bf16 %v373
    %v1242 = vunpack.c.l.bf16 %v374
    %v1243 = vunpack.c.h.bf16 %v374
    %v1244 = vunpack.c.l.bf16 %v375
    %v1245 = vunpack.c.h.bf16 %v375
    %v1246 = vunpack.c.l.bf16 %v376
    %v1247 = vunpack.c.h.bf16 %v376
    %v1248 = vunpack.c.l.bf16 %v377
    %v1249 = vunpack.c.h.bf16 %v377
    %v1250 = vunpack.c.l.bf16 %v378
    %v1251 = vunpack.c.h.bf16 %v378
    %v1252 = vunpack.c.l.bf16 %v379
    %v1253 = vunpack.c.h.bf16 %v379
    %v1254 = vunpack.c.l.bf16 %v380
    %v1255 = vunpack.c.h.bf16 %v380
    %v1256 = vunpack.c.l.bf16 %v381
    %v1257 = vunpack.c.h.bf16 %v381
    %v1258 = vunpack.c.l.bf16 %v382
    %v1259 = vunpack.c.h.bf16 %v382
    %v1260 = vunpack.c.l.bf16 %v383
    %v1261 = vunpack.c.h.bf16 %v383
    %v1262 = vunpack.c.l.bf16 %v384
    %v1263 = vunpack.c.h.bf16 %v384
    %v1264 = vunpack.c.l.bf16 %v385
    %v1265 = vunpack.c.h.bf16 %v385
    %v1266 = vunpack.c.l.bf16 %v386
    %v1267 = vunpack.c.h.bf16 %v386
    %v1268 = vunpack.c.l.bf16 %v387
    %v1269 = vunpack.c.h.bf16 %v387
    %v1270 = vunpack.c.l.bf16 %v388
    %v1271 = vunpack.c.h.bf16 %v388
    %v1272 = vunpack.c.l.bf16 %v389
    %v1273 = vunpack.c.h.bf16 %v389
    %v1274 = vunpack.c.l.bf16 %v390
    %v1275 = vunpack.c.h.bf16 %v390
    %v1276 = vunpack.c.l.bf16 %v391
    %v1277 = vunpack.c.h.bf16 %v391
    %v1278 = vunpack.c.l.bf16 %v392
    %v1279 = vunpack.c.h.bf16 %v392
    %v1280 = vunpack.c.l.bf16 %v393
    %v1281 = vunpack.c.h.bf16 %v393
    %v1282 = vunpack.c.l.bf16 %v394
    %v1283 = vunpack.c.h.bf16 %v394
    %v1284 = vunpack.c.l.bf16 %v395
    %v1285 = vunpack.c.h.bf16 %v395
    %v1286 = vunpack.c.l.bf16 %v396
    %v1287 = vunpack.c.h.bf16 %v396
    %v1288 = vunpack.c.l.bf16 %v397
    %v1289 = vunpack.c.h.bf16 %v397
    %v1290 = vunpack.c.l.bf16 %v398
    %v1291 = vunpack.c.h.bf16 %v398
    %v1292 = vunpack.c.l.bf16 %v399
    %v1293 = vunpack.c.h.bf16 %v399
    %v1294 = vunpack.c.l.bf16 %v400
    %v1295 = vunpack.c.h.bf16 %v400
    %v1296 = vunpack.c.l.bf16 %v401
    %v1297 = vunpack.c.h.bf16 %v401
    %v1298 = vunpack.c.l.bf16 %v402
    %v1299 = vunpack.c.h.bf16 %v402
    %v1300 = vunpack.c.l.bf16 %v403
    %v1301 = vunpack.c.h.bf16 %v403
    %v1302 = vunpack.c.l.bf16 %v404
    %v1303 = vunpack.c.h.bf16 %v404
    %v1304 = vunpack.c.l.bf16 %v405
    %v1305 = vunpack.c.h.bf16 %v405
    %v1306 = vunpack.c.l.bf16 %v406
    %v1307 = vunpack.c.h.bf16 %v406
    %v1308 = vunpack.c.l.bf16 %v407
    %v1309 = vunpack.c.h.bf16 %v407
    %v1310 = vunpack.c.l.bf16 %v408
    %v1311 = vunpack.c.h.bf16 %v408
    %v1312 = vunpack.c.l.bf16 %v409
    %v1313 = vunpack.c.h.bf16 %v409
    %v1314 = vunpack.c.l.bf16 %v410
    %v1315 = vunpack.c.h.bf16 %v410
    %v1316 = vunpack.c.l.bf16 %v411
    %v1317 = vunpack.c.h.bf16 %v411
    %v1318 = vunpack.c.l.bf16 %v412
    %v1319 = vunpack.c.h.bf16 %v412
    %v1320 = vunpack.c.l.bf16 %v413
    %v1321 = vunpack.c.h.bf16 %v413
    %v1322 = vunpack.c.l.bf16 %v414
    %v1323 = vunpack.c.h.bf16 %v414
    %v1324 = vunpack.c.l.bf16 %v415
    %v1325 = vunpack.c.h.bf16 %v415
    %v1326 = vunpack.c.l.bf16 %v416
    %v1327 = vunpack.c.h.bf16 %v416
    %v1328 = vunpack.c.l.bf16 %v417
    %v1329 = vunpack.c.h.bf16 %v417
    %v1330 = vunpack.c.l.bf16 %v418
    %v1331 = vunpack.c.h.bf16 %v418
    %v1332 = vunpack.c.l.bf16 %v419
    %v1333 = vunpack.c.h.bf16 %v419
    %v1334 = vunpack.c.l.bf16 %v420
    %v1335 = vunpack.c.h.bf16 %v420
    %v1336 = vunpack.c.l.bf16 %v421
    %v1337 = vunpack.c.h.bf16 %v421
    %v1338 = vunpack.c.l.bf16 %v422
    %v1339 = vunpack.c.h.bf16 %v422
    %v1340 = vunpack.c.l.bf16 %v423
    %v1341 = vunpack.c.h.bf16 %v423
    %v1342 = vunpack.c.l.bf16 %v424
    %v1343 = vunpack.c.h.bf16 %v424
    %v1344 = vunpack.c.l.bf16 %v425
    %v1345 = vunpack.c.h.bf16 %v425
    %v1346 = vunpack.c.l.bf16 %v426
    %v1347 = vunpack.c.h.bf16 %v426
    %v1348 = vunpack.c.l.bf16 %v427
    %v1349 = vunpack.c.h.bf16 %v427
    %v1350 = vunpack.c.l.bf16 %v428
    %v1351 = vunpack.c.h.bf16 %v428
    %v1352 = vunpack.c.l.bf16 %v429
    %v1353 = vunpack.c.h.bf16 %v429
    %v1354 = vunpack.c.l.bf16 %v430
    %v1355 = vunpack.c.h.bf16 %v430
    %v1356 = vunpack.c.l.bf16 %v431
    %v1357 = vunpack.c.h.bf16 %v431
    %v1358 = vunpack.c.l.bf16 %v432
    %v1359 = vunpack.c.h.bf16 %v432
    %v1360 = vunpack.c.l.bf16 %v433
    %v1361 = vunpack.c.h.bf16 %v433
    %v1362 = vunpack.c.l.bf16 %v434
    %v1363 = vunpack.c.h.bf16 %v434
    %v1364 = vunpack.c.l.bf16 %v435
    %v1365 = vunpack.c.h.bf16 %v435
    %v1366 = vunpack.c.l.bf16 %v436
    %v1367 = vunpack.c.h.bf16 %v436
    %v1368 = vunpack.c.l.bf16 %v437
    %v1369 = vunpack.c.h.bf16 %v437
    %v1370 = vunpack.c.l.bf16 %v438
    %v1371 = vunpack.c.h.bf16 %v438
    %v1372 = vunpack.c.l.bf16 %v439
    %v1373 = vunpack.c.h.bf16 %v439
    %v1374 = vunpack.c.l.bf16 %v440
    %v1375 = vunpack.c.h.bf16 %v440
    %v1376 = vunpack.c.l.bf16 %v441
    %v1377 = vunpack.c.h.bf16 %v441
    %v1378 = vunpack.c.l.bf16 %v442
    %v1379 = vunpack.c.h.bf16 %v442
    %v1380 = vunpack.c.l.bf16 %v443
    %v1381 = vunpack.c.h.bf16 %v443
    %v1382 = vunpack.c.l.bf16 %v444
    %v1383 = vunpack.c.h.bf16 %v444
    %v1384 = vunpack.c.l.bf16 %v445
    %v1385 = vunpack.c.h.bf16 %v445
    %v1386 = vunpack.c.l.bf16 %v446
    %v1387 = vunpack.c.h.bf16 %v446
    %v1388 = vunpack.c.l.bf16 %v447
    %v1389 = vunpack.c.h.bf16 %v447
    %v1390 = vunpack.c.l.bf16 %v448
    %v1391 = vunpack.c.h.bf16 %v448
    %v1392 = vunpack.c.l.bf16 %v449
    %v1393 = vunpack.c.h.bf16 %v449
    %v1394 = vunpack.c.l.bf16 %v450
    %v1395 = vunpack.c.h.bf16 %v450
    %v1396 = vunpack.c.l.bf16 %v451
    %v1397 = vunpack.c.h.bf16 %v451
    %v1398 = vunpack.c.l.bf16 %v452
    %v1399 = vunpack.c.h.bf16 %v452
    %v1400 = vunpack.c.l.bf16 %v453
    %v1401 = vunpack.c.h.bf16 %v453
    %v1402 = vunpack.c.l.bf16 %v454
    %v1403 = vunpack.c.h.bf16 %v454
    %v1404 = vunpack.c.l.bf16 %v455
    %v1405 = vunpack.c.h.bf16 %v455
    %v1406 = vunpack.c.l.bf16 %v456
    %v1407 = vunpack.c.h.bf16 %v456
    %v1408 = vunpack.c.l.bf16 %v457
    %v1409 = vunpack.c.h.bf16 %v457
    %v1410 = vunpack.c.l.bf16 %v458
    %v1411 = vunpack.c.h.bf16 %v458
    %v1412 = vunpack.c.l.bf16 %v459
    %v1413 = vunpack.c.h.bf16 %v459
    %v1414 = vunpack.c.l.bf16 %v460
    %v1415 = vunpack.c.h.bf16 %v460
    %v1416 = vunpack.c.l.bf16 %v461
    %v1417 = vunpack.c.h.bf16 %v461
    %v1418 = vunpack.c.l.bf16 %v462
    %v1419 = vunpack.c.h.bf16 %v462
    %v1420 = vunpack.c.l.bf16 %v463
    %v1421 = vunpack.c.h.bf16 %v463
    %v1422 = vunpack.c.l.bf16 %v464
    %v1423 = vunpack.c.h.bf16 %v464
    %v1424 = vunpack.c.l.bf16 %v465
    %v1425 = vunpack.c.h.bf16 %v465
    %v1426 = vunpack.c.l.bf16 %v466
    %v1427 = vunpack.c.h.bf16 %v466
    %v1428 = vunpack.c.l.bf16 %v467
    %v1429 = vunpack.c.h.bf16 %v467
    %v1430 = vunpack.c.l.bf16 %v468
    %v1431 = vunpack.c.h.bf16 %v468
    %v1432 = vunpack.c.l.bf16 %v469
    %v1433 = vunpack.c.h.bf16 %v469
    %v1434 = vunpack.c.l.bf16 %v470
    %v1435 = vunpack.c.h.bf16 %v470
    %v1436 = vunpack.c.l.bf16 %v471
    %v1437 = vunpack.c.h.bf16 %v471
    %v1438 = vunpack.c.l.bf16 %v472
    %v1439 = vunpack.c.h.bf16 %v472
    %v1440 = vunpack.c.l.bf16 %v473
    %v1441 = vunpack.c.h.bf16 %v473
    %v1442 = vunpack.c.l.bf16 %v474
    %v1443 = vunpack.c.h.bf16 %v474
    %v1444 = vunpack.c.l.bf16 %v475
    %v1445 = vunpack.c.h.bf16 %v475
    %v1446 = vunpack.c.l.bf16 %v476
    %v1447 = vunpack.c.h.bf16 %v476
    %v1448 = vunpack.c.l.bf16 %v477
    %v1449 = vunpack.c.h.bf16 %v477
    %v1450 = vunpack.c.l.bf16 %v478
    %v1451 = vunpack.c.h.bf16 %v478
    %v1452 = vunpack.c.l.bf16 %v479
    %v1453 = vunpack.c.h.bf16 %v479
    %v1454 = vunpack.c.l.bf16 %v480
    %v1455 = vunpack.c.h.bf16 %v480
    %v1456 = vunpack.c.l.bf16 %v481
    %v1457 = vunpack.c.h.bf16 %v481
    %v1458 = vunpack.c.l.bf16 %v482
    %v1459 = vunpack.c.h.bf16 %v482
    %v1460 = vunpack.c.l.bf16 %v483
    %v1461 = vunpack.c.h.bf16 %v483
    %v1462 = vunpack.c.l.bf16 %v484
    %v1463 = vunpack.c.h.bf16 %v484
    %v1464 = vunpack.c.l.bf16 %v485
    %v1465 = vunpack.c.h.bf16 %v485
    %v1466 = vunpack.c.l.bf16 %v486
    %v1467 = vunpack.c.h.bf16 %v486
    %v1468 = vunpack.c.l.bf16 %v487
    %v1469 = vunpack.c.h.bf16 %v487
    %v1470 = vunpack.c.l.bf16 %v488
    %v1471 = vunpack.c.h.bf16 %v488
    %v1472 = vunpack.c.l.bf16 %v489
    %v1473 = vunpack.c.h.bf16 %v489
    %v1474 = vunpack.c.l.bf16 %v490
    %v1475 = vunpack.c.h.bf16 %v490
    %v1476 = vunpack.c.l.bf16 %v491
    %v1477 = vunpack.c.h.bf16 %v491
    %v1478 = vunpack.c.l.bf16 %v492
    %v1479 = vunpack.c.h.bf16 %v492
    %v1480 = vunpack.c.l.bf16 %v493
    %v1481 = vunpack.c.h.bf16 %v493
    %v1482 = vunpack.c.l.bf16 %v494
    %v1483 = vunpack.c.h.bf16 %v494
    %v1484 = vunpack.c.l.bf16 %v495
    %v1485 = vunpack.c.h.bf16 %v495
    %v1486 = vunpack.c.l.bf16 %v496
    %v1487 = vunpack.c.h.bf16 %v496
    %v1488 = vunpack.c.l.bf16 %v497
    %v1489 = vunpack.c.h.bf16 %v497
    %v1490 = vunpack.c.l.bf16 %v498
    %v1491 = vunpack.c.h.bf16 %v498
    %v1492 = vunpack.c.l.bf16 %v499
    %v1493 = vunpack.c.h.bf16 %v499
    %v1494 = vunpack.c.l.bf16 %v500
    %v1495 = vunpack.c.h.bf16 %v500
    %v1496 = vunpack.c.l.bf16 %v501
    %v1497 = vunpack.c.h.bf16 %v501
    %v1498 = vunpack.c.l.bf16 %v502
    %v1499 = vunpack.c.h.bf16 %v502
    %v1500 = vunpack.c.l.bf16 %v503
    %v1501 = vunpack.c.h.bf16 %v503
    %v1502 = vunpack.c.l.bf16 %v504
    %v1503 = vunpack.c.h.bf16 %v504
    %v1504 = vunpack.c.l.bf16 %v505
    %v1505 = vunpack.c.h.bf16 %v505
    %v1506 = vunpack.c.l.bf16 %v506
    %v1507 = vunpack.c.h.bf16 %v506
    %v1508 = vunpack.c.l.bf16 %v507
    %v1509 = vunpack.c.h.bf16 %v507
    %v1510 = vunpack.c.l.bf16 %v508
    %v1511 = vunpack.c.h.bf16 %v508
    %v1512 = vunpack.c.l.bf16 %v509
    %v1513 = vunpack.c.h.bf16 %v509
    %v1514 = vunpack.c.l.bf16 %v510
    %v1515 = vunpack.c.h.bf16 %v510
    %v1516 = vunpack.c.l.bf16 %v511
    %v1517 = vunpack.c.h.bf16 %v511
    %v1518 = vunpack.c.l.bf16 %v512
    %v1519 = vunpack.c.h.bf16 %v512
    %v1520 = vunpack.c.l.bf16 %v513
    %v1521 = vunpack.c.h.bf16 %v513
    %v1522 = vunpack.c.l.bf16 %v514
    %v1523 = vunpack.c.h.bf16 %v514
    %v1524 = vunpack.c.l.bf16 %v515
    %v1525 = vunpack.c.h.bf16 %v515
    %v1526 = vunpack.c.l.bf16 %v516
    %v1527 = vunpack.c.h.bf16 %v516
    %v1528 = vunpack.c.l.bf16 %v517
    %v1529 = vunpack.c.h.bf16 %v517
    %v1530 = vunpack.c.l.bf16 %v518
    %v1531 = vunpack.c.h.bf16 %v518
    %v1532 = vunpack.c.l.bf16 %v519
    %v1533 = vunpack.c.h.bf16 %v519
    %v1534 = vunpack.c.l.bf16 %v520
    %v1535 = vunpack.c.h.bf16 %v520
    %v1536 = vunpack.c.l.bf16 %v521
    %v1537 = vunpack.c.h.bf16 %v521
    %v1538 = vunpack.c.l.bf16 %v522
    %v1539 = vunpack.c.h.bf16 %v522
    %v1540 = vunpack.c.l.bf16 %v523
    %v1541 = vunpack.c.h.bf16 %v523
    %v1542 = vunpack.c.l.bf16 %v524
    %v1543 = vunpack.c.h.bf16 %v524
    %v1544 = vunpack.c.l.bf16 %v525
    %v1545 = vunpack.c.h.bf16 %v525
    %v1546 = vunpack.c.l.bf16 %v526
    %v1547 = vunpack.c.h.bf16 %v526
    %v1548 = vunpack.c.l.bf16 %v527
    %v1549 = vunpack.c.h.bf16 %v527
    %v1550 = vunpack.c.l.bf16 %v528
    %v1551 = vunpack.c.h.bf16 %v528
    %v1552 = vunpack.c.l.bf16 %v529
    %v1553 = vunpack.c.h.bf16 %v529
    %v1554 = vunpack.c.l.bf16 %v530
    %v1555 = vunpack.c.h.bf16 %v530
    %v1556 = vunpack.c.l.bf16 %v531
    %v1557 = vunpack.c.h.bf16 %v531
    %v1558 = vunpack.c.l.bf16 %v532
    %v1559 = vunpack.c.h.bf16 %v532
    %v1560 = vunpack.c.l.bf16 %v533
    %v1561 = vunpack.c.h.bf16 %v533
    %v1562 = vunpack.c.l.bf16 %v534
    %v1563 = vunpack.c.h.bf16 %v534
    %v1564 = vunpack.c.l.bf16 %v535
    %v1565 = vunpack.c.h.bf16 %v535
    %v1566 = vunpack.c.l.bf16 %v536
    %v1567 = vunpack.c.h.bf16 %v536
    %v1568 = vunpack.c.l.bf16 %v537
    %v1569 = vunpack.c.h.bf16 %v537
    %v1570 = vunpack.c.l.bf16 %v538
    %v1571 = vunpack.c.h.bf16 %v538
    %v1572 = vunpack.c.l.bf16 %v539
    %v1573 = vunpack.c.h.bf16 %v539
    %v1574 = vunpack.c.l.bf16 %v540
    %v1575 = vunpack.c.h.bf16 %v540
    %v1576 = vunpack.c.l.bf16 %v541
    %v1577 = vunpack.c.h.bf16 %v541
    %v1578 = vunpack.c.l.bf16 %v542
    %v1579 = vunpack.c.h.bf16 %v542
    %v1580 = vunpack.c.l.bf16 %v543
    %v1581 = vunpack.c.h.bf16 %v543
    %v1582 = vunpack.c.l.bf16 %v544
    %v1583 = vunpack.c.h.bf16 %v544
    %v1584 = vunpack.c.l.bf16 %v545
    %v1585 = vunpack.c.h.bf16 %v545
    %v1586 = vunpack.c.l.bf16 %v546
    %v1587 = vunpack.c.h.bf16 %v546
    %v1588 = vunpack.c.l.bf16 %v547
    %v1589 = vunpack.c.h.bf16 %v547
    %v1590 = vunpack.c.l.bf16 %v548
    %v1591 = vunpack.c.h.bf16 %v548
    %v1592 = vunpack.c.l.bf16 %v549
    %v1593 = vunpack.c.h.bf16 %v549
    %v1594 = vunpack.c.l.bf16 %v550
    %v1595 = vunpack.c.h.bf16 %v550
    %v1596 = vunpack.c.l.bf16 %v551
    %v1597 = vunpack.c.h.bf16 %v551
    %v1598 = vunpack.c.l.bf16 %v552
    %v1599 = vunpack.c.h.bf16 %v552
    %v1600 = vunpack.c.l.bf16 %v553
    %v1601 = vunpack.c.h.bf16 %v553
    %v1602 = vunpack.c.l.bf16 %v554
    %v1603 = vunpack.c.h.bf16 %v554
    %v1604 = vunpack.c.l.bf16 %v555
    %v1605 = vunpack.c.h.bf16 %v555
    %v1606 = vunpack.c.l.bf16 %v556
    %v1607 = vunpack.c.h.bf16 %v556
    %v1608 = vunpack.c.l.bf16 %v557
    %v1609 = vunpack.c.h.bf16 %v557
    %v1610 = vunpack.c.l.bf16 %v558
    %v1611 = vunpack.c.h.bf16 %v558
    %v1612 = vunpack.c.l.bf16 %v559
    %v1613 = vunpack.c.h.bf16 %v559
    %v1614 = vunpack.c.l.bf16 %v560
    %v1615 = vunpack.c.h.bf16 %v560
    %v1616 = vunpack.c.l.bf16 %v561
    %v1617 = vunpack.c.h.bf16 %v561
    %v1618 = vunpack.c.l.bf16 %v562
    %v1619 = vunpack.c.h.bf16 %v562
    %v1620 = vunpack.c.l.bf16 %v563
    %v1621 = vunpack.c.h.bf16 %v563
    %v1622 = vunpack.c.l.bf16 %v564
    %v1623 = vunpack.c.h.bf16 %v564
    %v1624 = vunpack.c.l.bf16 %v565
    %v1625 = vunpack.c.h.bf16 %v565
    %v1626 = vunpack.c.l.bf16 %v566
    %v1627 = vunpack.c.h.bf16 %v566
    %v1628 = vunpack.c.l.bf16 %v567
    %v1629 = vunpack.c.h.bf16 %v567
    %v1630 = vunpack.c.l.bf16 %v568
    %v1631 = vunpack.c.h.bf16 %v568
    %v1632 = vunpack.c.l.bf16 %v569
    %v1633 = vunpack.c.h.bf16 %v569
    %v1634 = vunpack.c.l.bf16 %v570
    %v1635 = vunpack.c.h.bf16 %v570
    %v1636 = vunpack.c.l.bf16 %v571
    %v1637 = vunpack.c.h.bf16 %v571
    %v1638 = vunpack.c.l.bf16 %v572
    %v1639 = vunpack.c.h.bf16 %v572
    %v1640 = vunpack.c.l.bf16 %v573
    %v1641 = vunpack.c.h.bf16 %v573
    %v1642 = vunpack.c.l.bf16 %v574
    %v1643 = vunpack.c.h.bf16 %v574
    %v1644 = vunpack.c.l.bf16 %v575
    %v1645 = vunpack.c.h.bf16 %v575
    %v1646 = vunpack.c.l.bf16 %v576
    %v1647 = vunpack.c.h.bf16 %v576
    %v1648 = vunpack.c.l.bf16 %v577
    %v1649 = vunpack.c.h.bf16 %v577
    %v1650 = vunpack.c.l.bf16 %v578
    %v1651 = vunpack.c.h.bf16 %v578
    %v1652 = vunpack.c.l.bf16 %v579
    %v1653 = vunpack.c.h.bf16 %v579
    %v1654 = vunpack.c.l.bf16 %v580
    %v1655 = vunpack.c.h.bf16 %v580
    %v1656 = vunpack.c.l.bf16 %v581
    %v1657 = vunpack.c.h.bf16 %v581
    %v1658 = vunpack.c.l.bf16 %v582
    %v1659 = vunpack.c.h.bf16 %v582
    %v1660 = vunpack.c.l.bf16 %v583
    %v1661 = vunpack.c.h.bf16 %v583
    %v1662 = vunpack.c.l.bf16 %v584
    %v1663 = vunpack.c.h.bf16 %v584
    %v1664 = vunpack.c.l.bf16 %v585
    %v1665 = vunpack.c.h.bf16 %v585
    %v1666 = vunpack.c.l.bf16 %v586
    %v1667 = vunpack.c.h.bf16 %v586
    %v1668 = vunpack.c.l.bf16 %v587
    %v1669 = vunpack.c.h.bf16 %v587
    %v1670 = vunpack.c.l.bf16 %v588
    %v1671 = vunpack.c.h.bf16 %v588
    %v1672 = vunpack.c.l.bf16 %v589
    %v1673 = vunpack.c.h.bf16 %v589
    %v1674 = vunpack.c.l.bf16 %v590
    %v1675 = vunpack.c.h.bf16 %v590
    %v1676 = vunpack.c.l.bf16 %v591
    %v1677 = vunpack.c.h.bf16 %v591
    %v1678 = vunpack.c.l.bf16 %v592
    %v1679 = vunpack.c.h.bf16 %v592
    %v1680 = vunpack.c.l.bf16 %v593
    %v1681 = vunpack.c.h.bf16 %v593
    %v1682 = vunpack.c.l.bf16 %v594
    %v1683 = vunpack.c.h.bf16 %v594
    %v1684 = vunpack.c.l.bf16 %v595
    %v1685 = vunpack.c.h.bf16 %v595
    %v1686 = vunpack.c.l.bf16 %v596
    %v1687 = vunpack.c.h.bf16 %v596
    %v1688 = vunpack.c.l.bf16 %v597
    %v1689 = vunpack.c.h.bf16 %v597
    %v1690 = vunpack.c.l.bf16 %v598
    %v1691 = vunpack.c.h.bf16 %v598
    %v1692 = vunpack.c.l.bf16 %v599
    %v1693 = vunpack.c.h.bf16 %v599
    %v1694 = vunpack.c.l.bf16 %v600
    %v1695 = vunpack.c.h.bf16 %v600
    %v1696 = vunpack.c.l.bf16 %v601
    %v1697 = vunpack.c.h.bf16 %v601
    %v1698 = vunpack.c.l.bf16 %v602
    %v1699 = vunpack.c.h.bf16 %v602
    %v1700 = vunpack.c.l.bf16 %v603
    %v1701 = vunpack.c.h.bf16 %v603
    %v1702 = vunpack.c.l.bf16 %v604
    %v1703 = vunpack.c.h.bf16 %v604
    %v1704 = vunpack.c.l.bf16 %v605
    %v1705 = vunpack.c.h.bf16 %v605
    %v1706 = vunpack.c.l.bf16 %v606
    %v1707 = vunpack.c.h.bf16 %v606
    %v1708 = vunpack.c.l.bf16 %v607
    %v1709 = vunpack.c.h.bf16 %v607
    %v1710 = vunpack.c.l.bf16 %v608
    %v1711 = vunpack.c.h.bf16 %v608
    %v1712 = vunpack.c.l.bf16 %v609
    %v1713 = vunpack.c.h.bf16 %v609
    %v1714 = vunpack.c.l.bf16 %v610
    %v1715 = vunpack.c.h.bf16 %v610
    %v1716 = vunpack.c.l.bf16 %v611
    %v1717 = vunpack.c.h.bf16 %v611
    %v1718 = vunpack.c.l.bf16 %v612
    %v1719 = vunpack.c.h.bf16 %v612
    %v1720 = vunpack.c.l.bf16 %v613
    %v1721 = vunpack.c.h.bf16 %v613
    %v1722 = vunpack.c.l.bf16 %v614
    %v1723 = vunpack.c.h.bf16 %v614
    %v1724 = vunpack.c.l.bf16 %v615
    %v1725 = vunpack.c.h.bf16 %v615
    %v1726 = vunpack.c.l.bf16 %v616
    %v1727 = vunpack.c.h.bf16 %v616
    %v1728 = vunpack.c.l.bf16 %v617
    %v1729 = vunpack.c.h.bf16 %v617
    %v1730 = vunpack.c.l.bf16 %v618
    %v1731 = vunpack.c.h.bf16 %v618
    %v1732 = vunpack.c.l.bf16 %v619
    %v1733 = vunpack.c.h.bf16 %v619
    %v1734 = vunpack.c.l.bf16 %v620
    %v1735 = vunpack.c.h.bf16 %v620
    %v1736 = vunpack.c.l.bf16 %v621
    %v1737 = vunpack.c.h.bf16 %v621
    %v1738 = vunpack.c.l.bf16 %v622
    %v1739 = vunpack.c.h.bf16 %v622
    %v1740 = vunpack.c.l.bf16 %v623
    %v1741 = vunpack.c.h.bf16 %v623
    %v1742 = vunpack.c.l.bf16 %v624
    %v1743 = vunpack.c.h.bf16 %v624
    %v1744 = vunpack.c.l.bf16 %v625
    %v1745 = vunpack.c.h.bf16 %v625
    %v1746 = vunpack.c.l.bf16 %v626
    %v1747 = vunpack.c.h.bf16 %v626
    %v1748 = vunpack.c.l.bf16 %v627
    %v1749 = vunpack.c.h.bf16 %v627
    %v1750 = vunpack.c.l.bf16 %v628
    %v1751 = vunpack.c.h.bf16 %v628
    %v1752 = vunpack.c.l.bf16 %v629
    %v1753 = vunpack.c.h.bf16 %v629
    %v1754 = vunpack.c.l.bf16 %v630
    %v1755 = vunpack.c.h.bf16 %v630
    %v1756 = vunpack.c.l.bf16 %v631
    %v1757 = vunpack.c.h.bf16 %v631
    %v1758 = vunpack.c.l.bf16 %v632
    %v1759 = vunpack.c.h.bf16 %v632
    %v1760 = vunpack.c.l.bf16 %v633
    %v1761 = vunpack.c.h.bf16 %v633
    %v1762 = vunpack.c.l.bf16 %v634
    %v1763 = vunpack.c.h.bf16 %v634
    %v1764 = vunpack.c.l.bf16 %v635
    %v1765 = vunpack.c.h.bf16 %v635
    %v1766 = vunpack.c.l.bf16 %v636
    %v1767 = vunpack.c.h.bf16 %v636
    %v1768 = vunpack.c.l.bf16 %v637
    %v1769 = vunpack.c.h.bf16 %v637
    %v1770 = vunpack.c.l.bf16 %v638
    %v1771 = vunpack.c.h.bf16 %v638
    %v1772 = vunpack.c.l.bf16 %v639
    %v1773 = vunpack.c.h.bf16 %v639
    %v1774 = vunpack.c.l.bf16 %v640
    %v1775 = vunpack.c.h.bf16 %v640
    %v1776 = vunpack.c.l.bf16 %v641
    %v1777 = vunpack.c.h.bf16 %v641
    %v1778 = vunpack.c.l.bf16 %v642
    %v1779 = vunpack.c.h.bf16 %v642
    %v1780 = vunpack.c.l.bf16 %v643
    %v1781 = vunpack.c.h.bf16 %v643
    %v1782 = vunpack.c.l.bf16 %v644
    %v1783 = vunpack.c.h.bf16 %v644
    %v1784 = vunpack.c.l.bf16 %v645
    %v1785 = vunpack.c.h.bf16 %v645
    %v1786 = vunpack.c.l.bf16 %v646
    %v1787 = vunpack.c.h.bf16 %v646
    %v1788 = vunpack.c.l.bf16 %v647
    %v1789 = vunpack.c.h.bf16 %v647
    %v1790 = vunpack.c.l.bf16 %v648
    %v1791 = vunpack.c.h.bf16 %v648
    %v1792 = vunpack.c.l.bf16 %v649
    %v1793 = vunpack.c.h.bf16 %v649
    %v1794 = vunpack.c.l.bf16 %v650
    %v1795 = vunpack.c.h.bf16 %v650
    %v1796 = vunpack.c.l.bf16 %v651
    %v1797 = vunpack.c.h.bf16 %v651
    %v1798 = vunpack.c.l.bf16 %v652
    %v1799 = vunpack.c.h.bf16 %v652
    %v1800 = vunpack.c.l.bf16 %v653
    %v1801 = vunpack.c.h.bf16 %v653
    %v1802 = vunpack.c.l.bf16 %v654
    %v1803 = vunpack.c.h.bf16 %v654
    %v1804 = vunpack.c.l.bf16 %v655
    %v1805 = vunpack.c.h.bf16 %v655
    %v1806 = vunpack.c.l.bf16 %v656
    %v1807 = vunpack.c.h.bf16 %v656
    %v1808 = vunpack.c.l.bf16 %v657
    %v1809 = vunpack.c.h.bf16 %v657
    %v1810 = vunpack.c.l.bf16 %v658
    %v1811 = vunpack.c.h.bf16 %v658
    %v1812 = vunpack.c.l.bf16 %v659
    %v1813 = vunpack.c.h.bf16 %v659
    %v1814 = vunpack.c.l.bf16 %v660
    %v1815 = vunpack.c.h.bf16 %v660
    %v1816 = vunpack.c.l.bf16 %v661
    %v1817 = vunpack.c.h.bf16 %v661
    %v1818 = vunpack.c.l.bf16 %v662
    %v1819 = vunpack.c.h.bf16 %v662
    %v1820 = vunpack.c.l.bf16 %v663
    %v1821 = vunpack.c.h.bf16 %v663
    %v1822 = vunpack.c.l.bf16 %v664
    %v1823 = vunpack.c.h.bf16 %v664
    %v1824 = vunpack.c.l.bf16 %v665
    %v1825 = vunpack.c.h.bf16 %v665
    %v1826 = vunpack.c.l.bf16 %v666
    %v1827 = vunpack.c.h.bf16 %v666
    %v1828 = vunpack.c.l.bf16 %v667
    %v1829 = vunpack.c.h.bf16 %v667
    %v1830 = vunpack.c.l.bf16 %v668
    %v1831 = vunpack.c.h.bf16 %v668
    %v1832 = vunpack.c.l.bf16 %v669
    %v1833 = vunpack.c.h.bf16 %v669
    %v1834 = vunpack.c.l.bf16 %v670
    %v1835 = vunpack.c.h.bf16 %v670
    %v1836 = vunpack.c.l.bf16 %v671
    %v1837 = vunpack.c.h.bf16 %v671
    %v1838 = vunpack.c.l.bf16 %v672
    %v1839 = vunpack.c.h.bf16 %v672
    %v1840 = vunpack.c.l.bf16 %v673
    %v1841 = vunpack.c.h.bf16 %v673
    %v1842 = vunpack.c.l.bf16 %v674
    %v1843 = vunpack.c.h.bf16 %v674
    %v1844 = vunpack.c.l.bf16 %v675
    %v1845 = vunpack.c.h.bf16 %v675
    %v1846 = vunpack.c.l.bf16 %v676
    %v1847 = vunpack.c.h.bf16 %v676
    %v1848 = vunpack.c.l.bf16 %v677
    %v1849 = vunpack.c.h.bf16 %v677
    %v1850 = vunpack.c.l.bf16 %v678
    %v1851 = vunpack.c.h.bf16 %v678
    %v1852 = vunpack.c.l.bf16 %v679
    %v1853 = vunpack.c.h.bf16 %v679
    %v1854 = vunpack.c.l.bf16 %v680
    %v1855 = vunpack.c.h.bf16 %v680
    %v1856 = vunpack.c.l.bf16 %v681
    %v1857 = vunpack.c.h.bf16 %v681
    %v1858 = vunpack.c.l.bf16 %v682
    %v1859 = vunpack.c.h.bf16 %v682
    %v1860 = vunpack.c.l.bf16 %v683
    %v1861 = vunpack.c.h.bf16 %v683
    %v1862 = vunpack.c.l.bf16 %v684
    %v1863 = vunpack.c.h.bf16 %v684
    %v1864 = vunpack.c.l.bf16 %v685
    %v1865 = vunpack.c.h.bf16 %v685
    %v1866 = vunpack.c.l.bf16 %v686
    %v1867 = vunpack.c.h.bf16 %v686
    %v1868 = vunpack.c.l.bf16 %v687
    %v1869 = vunpack.c.h.bf16 %v687
    %v1870 = vunpack.c.l.bf16 %v688
    %v1871 = vunpack.c.h.bf16 %v688
    %v1872 = vunpack.c.l.bf16 %v689
    %v1873 = vunpack.c.h.bf16 %v689
    %v1874 = vunpack.c.l.bf16 %v690
    %v1875 = vunpack.c.h.bf16 %v690
    %v1876 = vunpack.c.l.bf16 %v691
    %v1877 = vunpack.c.h.bf16 %v691
    %v1878 = vunpack.c.l.bf16 %v692
    %v1879 = vunpack.c.h.bf16 %v692
    %v1880 = vunpack.c.l.bf16 %v693
    %v1881 = vunpack.c.h.bf16 %v693
    %v1882 = vunpack.c.l.bf16 %v694
    %v1883 = vunpack.c.h.bf16 %v694
    %v1884 = vunpack.c.l.bf16 %v695
    %v1885 = vunpack.c.h.bf16 %v695
    %v1886 = vunpack.c.l.bf16 %v696
    %v1887 = vunpack.c.h.bf16 %v696
    %v1888 = vunpack.c.l.bf16 %v697
    %v1889 = vunpack.c.h.bf16 %v697
    %v1890 = vunpack.c.l.bf16 %v698
    %v1891 = vunpack.c.h.bf16 %v698
    %v1892 = vunpack.c.l.bf16 %v699
    %v1893 = vunpack.c.h.bf16 %v699
    %v1894 = vunpack.c.l.bf16 %v700
    %v1895 = vunpack.c.h.bf16 %v700
    %v1896 = vunpack.c.l.bf16 %v701
    %v1897 = vunpack.c.h.bf16 %v701
    %v1898 = vunpack.c.l.bf16 %v702
    %v1899 = vunpack.c.h.bf16 %v702
    %v1900 = vunpack.c.l.bf16 %v703
    %v1901 = vunpack.c.h.bf16 %v703
    %v1902 = vunpack.c.l.bf16 %v704
    %v1903 = vunpack.c.h.bf16 %v704
    %v1904 = vunpack.c.l.bf16 %v705
    %v1905 = vunpack.c.h.bf16 %v705
    %v1906 = vunpack.c.l.bf16 %v706
    %v1907 = vunpack.c.h.bf16 %v706
    %v1908 = vunpack.c.l.bf16 %v707
    %v1909 = vunpack.c.h.bf16 %v707
    %v1910 = vunpack.c.l.bf16 %v708
    %v1911 = vunpack.c.h.bf16 %v708
    %v1912 = vunpack.c.l.bf16 %v709
    %v1913 = vunpack.c.h.bf16 %v709
    %v1914 = vunpack.c.l.bf16 %v710
    %v1915 = vunpack.c.h.bf16 %v710
    %v1916 = vunpack.c.l.bf16 %v711
    %v1917 = vunpack.c.h.bf16 %v711
    %v1918 = vunpack.c.l.bf16 %v712
    %v1919 = vunpack.c.h.bf16 %v712
    %v1920 = vunpack.c.l.bf16 %v713
    %v1921 = vunpack.c.h.bf16 %v713
    %v1922 = vunpack.c.l.bf16 %v714
    %v1923 = vunpack.c.h.bf16 %v714
    %v1924 = vunpack.c.l.bf16 %v715
    %v1925 = vunpack.c.h.bf16 %v715
    %v1926 = vunpack.c.l.bf16 %v716
    %v1927 = vunpack.c.h.bf16 %v716
    %v1928 = vunpack.c.l.bf16 %v717
    %v1929 = vunpack.c.h.bf16 %v717
    %v1930 = vunpack.c.l.bf16 %v718
    %v1931 = vunpack.c.h.bf16 %v718
    %v1932 = vunpack.c.l.bf16 %v719
    %v1933 = vunpack.c.h.bf16 %v719
    %v1934 = vunpack.c.l.bf16 %v720
    %v1935 = vunpack.c.h.bf16 %v720
    %v1936 = vunpack.c.l.bf16 %v721
    %v1937 = vunpack.c.h.bf16 %v721
    %v1938 = vunpack.c.l.bf16 %v722
    %v1939 = vunpack.c.h.bf16 %v722
    %v1940 = vunpack.c.l.bf16 %v723
    %v1941 = vunpack.c.h.bf16 %v723
    %v1942 = vunpack.c.l.bf16 %v724
    %v1943 = vunpack.c.h.bf16 %v724
    %v1944 = vunpack.c.l.bf16 %v725
    %v1945 = vunpack.c.h.bf16 %v725
    %v1946 = vunpack.c.l.bf16 %v726
    %v1947 = vunpack.c.h.bf16 %v726
    %v1948 = vunpack.c.l.bf16 %v727
    %v1949 = vunpack.c.h.bf16 %v727
    %v1950 = vunpack.c.l.bf16 %v728
    %v1951 = vunpack.c.h.bf16 %v728
    %v1952 = vunpack.c.l.bf16 %v729
    %v1953 = vunpack.c.h.bf16 %v729
    %v1954 = vunpack.c.l.bf16 %v730
    %v1955 = vunpack.c.h.bf16 %v730
    %v1956 = vunpack.c.l.bf16 %v731
    %v1957 = vunpack.c.h.bf16 %v731
    %v1958 = vunpack.c.l.bf16 %v732
    %v1959 = vunpack.c.h.bf16 %v732
    %v1960 = vunpack.c.l.bf16 %v733
    %v1961 = vunpack.c.h.bf16 %v733
    %v1962 = vunpack.c.l.bf16 %v734
    %v1963 = vunpack.c.h.bf16 %v734
    %v1964 = vunpack.c.l.bf16 %v735
    %v1965 = vunpack.c.h.bf16 %v735
    %v1966 = vunpack.c.l.bf16 %v736
    %v1967 = vunpack.c.h.bf16 %v736
    %v1968 = vunpack.c.l.bf16 %v737
    %v1969 = vunpack.c.h.bf16 %v737
    %v1970 = vunpack.c.l.bf16 %v738
    %v1971 = vunpack.c.h.bf16 %v738
    %v1972 = vunpack.c.l.bf16 %v739
    %v1973 = vunpack.c.h.bf16 %v739
    %v1974 = vunpack.c.l.bf16 %v740
    %v1975 = vunpack.c.h.bf16 %v740
    %v1976 = vunpack.c.l.bf16 %v741
    %v1977 = vunpack.c.h.bf16 %v741
    %v1978 = vunpack.c.l.bf16 %v742
    %v1979 = vunpack.c.h.bf16 %v742
    %v1980 = vunpack.c.l.bf16 %v743
    %v1981 = vunpack.c.h.bf16 %v743
    %v1982 = vunpack.c.l.bf16 %v744
    %v1983 = vunpack.c.h.bf16 %v744
    %v1984 = vunpack.c.l.bf16 %v745
    %v1985 = vunpack.c.h.bf16 %v745
    %v1986 = vunpack.c.l.bf16 %v746
    %v1987 = vunpack.c.h.bf16 %v746
    %v1988 = vunpack.c.l.bf16 %v747
    %v1989 = vunpack.c.h.bf16 %v747
    %v1990 = vunpack.c.l.bf16 %v748
    %v1991 = vunpack.c.h.bf16 %v748
    %v1992 = vunpack.c.l.bf16 %v749
    %v1993 = vunpack.c.h.bf16 %v749
    %v1994 = vunpack.c.l.bf16 %v750
    %v1995 = vunpack.c.h.bf16 %v750
    %v1996 = vunpack.c.l.bf16 %v751
    %v1997 = vunpack.c.h.bf16 %v751
    %v1998 = vunpack.c.l.bf16 %v752
    %v1999 = vunpack.c.h.bf16 %v752
    %v2000 = vunpack.c.l.bf16 %v753
    %v2001 = vunpack.c.h.bf16 %v753
    %v2002 = vunpack.c.l.bf16 %v754
    %v2003 = vunpack.c.h.bf16 %v754
    %v2004 = vunpack.c.l.bf16 %v755
    %v2005 = vunpack.c.h.bf16 %v755
    %v2006 = vunpack.c.l.bf16 %v756
    %v2007 = vunpack.c.h.bf16 %v756
    %v2008 = vunpack.c.l.bf16 %v757
    %v2009 = vunpack.c.h.bf16 %v757
    %v2010 = vunpack.c.l.bf16 %v758
    %v2011 = vunpack.c.h.bf16 %v758
    %v2012 = vunpack.c.l.bf16 %v759
    %v2013 = vunpack.c.h.bf16 %v759
    %v2014 = vunpack.c.l.bf16 %v760
    %v2015 = vunpack.c.h.bf16 %v760
    %v2016 = vunpack.c.l.bf16 %v761
    %v2017 = vunpack.c.h.bf16 %v761
    %v2018 = vunpack.c.l.bf16 %v762
    %v2019 = vunpack.c.h.bf16 %v762
    %v2020 = vunpack.c.l.bf16 %v763
    %v2021 = vunpack.c.h.bf16 %v763
    %v2022 = vunpack.c.l.bf16 %v764
    %v2023 = vunpack.c.h.bf16 %v764
    %v2024 = vunpack.c.l.bf16 %v765
    %v2025 = vunpack.c.h.bf16 %v765
    %v2026 = vunpack.c.l.bf16 %v766
    %v2027 = vunpack.c.h.bf16 %v766
    %v2028 = vunpack.c.l.bf16 %v767
    %v2029 = vunpack.c.h.bf16 %v767
    %v2030 = vunpack.c.l.bf16 %v768
    %v2031 = vunpack.c.h.bf16 %v768
    %v2032 = vunpack.c.l.bf16 %v769
    %v2033 = vunpack.c.h.bf16 %v769
    %v2034 = vunpack.c.l.bf16 %v770
    %v2035 = vunpack.c.h.bf16 %v770
    %v2036 = vunpack.c.l.bf16 %v771
    %v2037 = vunpack.c.h.bf16 %v771
    %v2038 = vunpack.c.l.bf16 %v772
    %v2039 = vunpack.c.h.bf16 %v772
    %v2040 = vunpack.c.l.bf16 %v773
    %v2041 = vunpack.c.h.bf16 %v773
    %v2042 = vunpack.c.l.bf16 %v774
    %v2043 = vunpack.c.h.bf16 %v774
    %v2044 = vunpack.c.l.bf16 %v775
    %v2045 = vunpack.c.h.bf16 %v775
    %v2046 = vunpack.c.l.bf16 %v776
    %v2047 = vunpack.c.h.bf16 %v776
    %v2048 = vunpack.c.l.bf16 %v777
    %v2049 = vunpack.c.h.bf16 %v777
    %v2050 = vunpack.c.l.bf16 %v778
    %v2051 = vunpack.c.h.bf16 %v778
    %v2052 = vunpack.c.l.bf16 %v779
    %v2053 = vunpack.c.h.bf16 %v779
    %v2054 = vunpack.c.l.bf16 %v780
    %v2055 = vunpack.c.h.bf16 %v780
    %v2056 = vunpack.c.l.bf16 %v781
    %v2057 = vunpack.c.h.bf16 %v781
    %v2058 = vunpack.c.l.bf16 %v782
    %v2059 = vunpack.c.h.bf16 %v782
    %v2060 = vunpack.c.l.bf16 %v783
    %v2061 = vunpack.c.h.bf16 %v783
    %v2062 = vunpack.c.l.bf16 %v784
    %v2063 = vunpack.c.h.bf16 %v784
    %v2064 = vunpack.c.l.bf16 %v785
    %v2065 = vunpack.c.h.bf16 %v785
    %v2066 = vunpack.c.l.bf16 %v786
    %v2067 = vunpack.c.h.bf16 %v786
    %v2068 = vunpack.c.l.bf16 %v787
    %v2069 = vunpack.c.h.bf16 %v787
    %v2070 = vunpack.c.l.bf16 %v788
    %v2071 = vunpack.c.h.bf16 %v788
    %v2072 = vunpack.c.l.bf16 %v789
    %v2073 = vunpack.c.h.bf16 %v789
    %v2074 = vunpack.c.l.bf16 %v790
    %v2075 = vunpack.c.h.bf16 %v790
    %v2076 = vunpack.c.l.bf16 %v791
    %v2077 = vunpack.c.h.bf16 %v791
    %v2078 = vunpack.c.l.bf16 %v792
    %v2079 = vunpack.c.h.bf16 %v792
    %v2080 = vunpack.c.l.bf16 %v793
    %v2081 = vunpack.c.h.bf16 %v793
    %v2082 = vunpack.c.l.bf16 %v794
    %v2083 = vunpack.c.h.bf16 %v794
    %v2084 = vunpack.c.l.bf16 %v795
    %v2085 = vunpack.c.h.bf16 %v795
    %v2086 = vunpack.c.l.bf16 %v796
    %v2087 = vunpack.c.h.bf16 %v796
    %v2088 = vunpack.c.l.bf16 %v797
    %v2089 = vunpack.c.h.bf16 %v797
    %v2090 = vunpack.c.l.bf16 %v798
    %v2091 = vunpack.c.h.bf16 %v798
    %v2092 = vunpack.c.l.bf16 %v799
    %v2093 = vunpack.c.h.bf16 %v799
    %v2094 = vunpack.c.l.bf16 %v800
    %v2095 = vunpack.c.h.bf16 %v800
    %v2096 = vunpack.c.l.bf16 %v801
    %v2097 = vunpack.c.h.bf16 %v801
    %v2098 = vunpack.c.l.bf16 %v802
    %v2099 = vunpack.c.h.bf16 %v802
    %v2100 = vunpack.c.l.bf16 %v803
    %v2101 = vunpack.c.h.bf16 %v803
    %v2102 = vunpack.c.l.bf16 %v804
    %v2103 = vunpack.c.h.bf16 %v804
    %v2104 = vunpack.c.l.bf16 %v805
    %v2105 = vunpack.c.h.bf16 %v805
    %v2106 = vunpack.c.l.bf16 %v806
    %v2107 = vunpack.c.h.bf16 %v806
    %v2108 = vunpack.c.l.bf16 %v807
    %v2109 = vunpack.c.h.bf16 %v807
    %v2110 = vunpack.c.l.bf16 %v808
    %v2111 = vunpack.c.h.bf16 %v808
    %v2112 = vunpack.c.l.bf16 %v809
    %v2113 = vunpack.c.h.bf16 %v809
    %v2114 = vunpack.c.l.bf16 %v810
    %v2115 = vunpack.c.h.bf16 %v810
    %v2116 = vunpack.c.l.bf16 %v811
    %v2117 = vunpack.c.h.bf16 %v811
    %v2118 = vunpack.c.l.bf16 %v812
    %v2119 = vunpack.c.h.bf16 %v812
    %v2120 = vunpack.c.l.bf16 %v813
    %v2121 = vunpack.c.h.bf16 %v813
    %v2122 = vunpack.c.l.bf16 %v814
    %v2123 = vunpack.c.h.bf16 %v814
    %v2124 = vunpack.c.l.bf16 %v815
    %v2125 = vunpack.c.h.bf16 %v815
    %v2126 = vunpack.c.l.bf16 %v816
    %v2127 = vunpack.c.h.bf16 %v816
    %v2128 = vunpack.c.l.bf16 %v817
    %v2129 = vunpack.c.h.bf16 %v817
    %v2130 = vunpack.c.l.bf16 %v818
    %v2131 = vunpack.c.h.bf16 %v818
    %v2132 = vunpack.c.l.bf16 %v819
    %v2133 = vunpack.c.h.bf16 %v819
    %v2134 = vunpack.c.l.bf16 %v820
    %v2135 = vunpack.c.h.bf16 %v820
    %v2136 = vunpack.c.l.bf16 %v821
    %v2137 = vunpack.c.h.bf16 %v821
    %v2138 = vunpack.c.l.bf16 %v822
    %v2139 = vunpack.c.h.bf16 %v822
    %v2140 = vunpack.c.l.bf16 %v823
    %v2141 = vunpack.c.h.bf16 %v823
    %v2142 = vunpack.c.l.bf16 %v824
    %v2143 = vunpack.c.h.bf16 %v824
    %v2144 = vunpack.c.l.bf16 %v825
    %v2145 = vunpack.c.h.bf16 %v825
    %v2146 = vunpack.c.l.bf16 %v826
    %v2147 = vunpack.c.h.bf16 %v826
    %v2148 = vunpack.c.l.bf16 %v827
    %v2149 = vunpack.c.h.bf16 %v827
    %v2150 = vunpack.c.l.bf16 %v828
    %v2151 = vunpack.c.h.bf16 %v828
    %v2152 = vunpack.c.l.bf16 %v829
    %v2153 = vunpack.c.h.bf16 %v829
    %v2154 = vunpack.c.l.bf16 %v830
    %v2155 = vunpack.c.h.bf16 %v830
    %v2156 = vunpack.c.l.bf16 %v831
    %v2157 = vunpack.c.h.bf16 %v831
    %v2158 = vunpack.c.l.bf16 %v832
    %v2159 = vunpack.c.h.bf16 %v832
    %v2160 = vunpack.c.l.bf16 %v833
    %v2161 = vunpack.c.h.bf16 %v833
    %v2162 = vunpack.c.l.bf16 %v834
    %v2163 = vunpack.c.h.bf16 %v834
    %v2164 = vunpack.c.l.bf16 %v835
    %v2165 = vunpack.c.h.bf16 %v835
    %v2166 = vld [vmem:[#allocation4] sm:$0xff]
    %v2167 = vld [vmem:[#allocation4 + $0x8] sm:$0x3f]
    %v2170 = vlaneseq
    %v2171 = vshrl.u32 %v2170, 7
    %v2172 = vsub.s32 0, %v2171
    %v2173 = vrot.slane %v2166, %v2172
    %v2174 = vlaneseq
    %v2175 = vshrl.u32 %v2174, 7
    %v2176 = vsub.s32 1, %v2175
    %v2177 = vrot.slane %v2166, %v2176
    %v2178 = vlaneseq
    %v2179 = vshrl.u32 %v2178, 7
    %v2180 = vsub.s32 2, %v2179
    %v2181 = vrot.slane %v2166, %v2180
    %v2182 = vlaneseq
    %v2183 = vshrl.u32 %v2182, 7
    %v2184 = vsub.s32 3, %v2183
    %v2185 = vrot.slane %v2166, %v2184
    %v2186 = vlaneseq
    %v2187 = vshrl.u32 %v2186, 7
    %v2188 = vsub.s32 4, %v2187
    %v2189 = vrot.slane %v2166, %v2188
    %v2190 = vlaneseq
    %v2191 = vshrl.u32 %v2190, 7
    %v2192 = vsub.s32 5, %v2191
    %v2193 = vrot.slane %v2166, %v2192
    %v2194 = vlaneseq
    %v2195 = vshrl.u32 %v2194, 7
    %v2196 = vsub.s32 6, %v2195
    %v2197 = vrot.slane %v2166, %v2196
    %v2198 = vlaneseq
    %v2199 = vshrl.u32 %v2198, 7
    %v2200 = vsub.s32 7, %v2199
    %v2201 = vrot.slane %v2166, %v2200
    %v2202 = vlaneseq
    %v2203 = vshrl.u32 %v2202, 7
    %v2204 = vsub.s32 0, %v2203
    %v2205 = vrot.slane %v2167, %v2204
    %v2206 = vlaneseq
    %v2207 = vshrl.u32 %v2206, 7
    %v2208 = vsub.s32 1, %v2207
    %v2209 = vrot.slane %v2167, %v2208
    %v2210 = vlaneseq
    %v2211 = vshrl.u32 %v2210, 7
    %v2212 = vsub.s32 2, %v2211
    %v2213 = vrot.slane %v2167, %v2212
    %v2214 = vlaneseq
    %v2215 = vshrl.u32 %v2214, 7
    %v2216 = vsub.s32 3, %v2215
    %v2217 = vrot.slane %v2167, %v2216
    %v2218 = vlaneseq
    %v2219 = vshrl.u32 %v2218, 7
    %v2220 = vsub.s32 4, %v2219
    %v2221 = vrot.slane %v2167, %v2220
    %v2222 = vlaneseq
    %v2223 = vshrl.u32 %v2222, 7
    %v2224 = vsub.s32 5, %v2223
    %v2225 = vrot.slane %v2167, %v2224
    %vm2240 = vcmask 949248
    %v2242 = vsel %vm2240, %v169, 0
    %vm2244 = vcmask 1043456
    %v2246 = vsel %vm2244, %v2152, 0
    %v2249 = vsel %vm2244, %v2153, 0
    %v2252 = vsel %vm2244, %v2154, 0
    %v2255 = vsel %vm2244, %v2155, 0
    %v2258 = vsel %vm2244, %v2156, 0
    %v2261 = vsel %vm2244, %v2157, 0
    %v2264 = vsel %vm2244, %v2158, 0
    %v2267 = vsel %vm2244, %v2159, 0
    %v2270 = vsel %vm2244, %v2160, 0
    %v2273 = vsel %vm2244, %v2161, 0
    %v2276 = vsel %vm2244, %v2162, 0
    %v2279 = vsel %vm2244, %v2163, 0
    %v2282 = vsel %vm2244, %v2164, 0
    %v2285 = vsel %vm2244, %v2165, 0
    %2287 = vmatprep.subr.mxu0 %v837
    %2288 = vmatpush1.msra.mxu0 %v836
    %2289 = vmatprep.subr.mxu0 %v851
    %2290 = vmatpush1.msra.mxu0 %v850
    %2291 = vmatprep.subr.mxu0 %v865
    %2292 = vmatpush1.msra.mxu0 %v864
    %2293 = vmatprep.subr.mxu0 %v879
    %2294 = vmatpush1.msra.mxu0 %v878
    %2295 = vmatprep.subr.mxu0 %v893
    %2296 = vmatpush1.msra.mxu0 %v892
    %2297 = vmatprep.subr.mxu0 %v907
    %2298 = vmatpush1.msra.mxu0 %v906
    %2299 = vmatprep.subr.mxu0 %v921
    %2300 = vmatpush1.msra.mxu0 %v920
    %2301 = vmatprep.subr.mxu0 %v935
    %2302 = vmatpush1.msra.mxu0 %v934
    %2303 = vmatprep.subr.mxu0 %v949
    %2304 = vmatpush1.msra.mxu0 %v948
    %2305 = vmatprep.subr.mxu0 %v963
    %2306 = vmatpush1.msra.mxu0 %v962
    %2307 = vmatprep.subr.mxu0 %v977
    %2308 = vmatpush1.msra.mxu0 %v976
    %2309 = vmatprep.subr.mxu0 %v991
    %2310 = vmatpush1.msra.mxu0 %v990
    %2311 = vmatprep.subr.mxu0 %v1005
    %2312 = vmatpush1.msra.mxu0 %v1004
    %2313 = vmatprep.subr.mxu0 %v1019
    %2314 = vmatpush1.msra.mxu0 %v1018
    %2315 = vmatprep.subr.mxu0 %v1033
    %2316 = vmatpush1.msra.mxu0 %v1032
    %2317 = vmatprep.subr.mxu0 %v1047
    %2318 = vmatpush1.msra.mxu0 %v1046
    %2319 = vmatprep.subr.mxu0 %v1061
    %2320 = vmatpush1.msra.mxu0 %v1060
    %2321 = vmatprep.subr.mxu0 %v1075
    %2322 = vmatpush1.msra.mxu0 %v1074
    %2323 = vmatprep.subr.mxu0 %v1089
    %2324 = vmatpush1.msra.mxu0 %v1088
    %2325 = vmatprep.subr.mxu0 %v1103
    %2326 = vmatpush1.msra.mxu0 %v1102
    %2327 = vmatprep.subr.mxu0 %v1117
    %2328 = vmatpush1.msra.mxu0 %v1116
    %2329 = vmatprep.subr.mxu0 %v1131
    %2330 = vmatpush1.msra.mxu0 %v1130
    %2331 = vmatprep.subr.mxu0 %v1145
    %2332 = vmatpush1.msra.mxu0 %v1144
    %2333 = vmatprep.subr.mxu0 %v1159
    %2334 = vmatpush1.msra.mxu0 %v1158
    %2335 = vmatprep.subr.mxu0 %v1173
    %2336 = vmatpush1.msra.mxu0 %v1172
    %2337 = vmatprep.subr.mxu0 %v1187
    %2338 = vmatpush1.msra.mxu0 %v1186
    %2339 = vmatprep.subr.mxu0 %v1201
    %2340 = vmatpush1.msra.mxu0 %v1200
    %2341 = vmatprep.subr.mxu0 %v1215
    %2342 = vmatpush1.msra.mxu0 %v1214
    %2343 = vmatprep.subr.mxu0 %v1229
    %2344 = vmatpush1.msra.mxu0 %v1228
    %2345 = vmatprep.subr.mxu0 %v1243
    %2346 = vmatpush1.msra.mxu0 %v1242
    %2347 = vmatprep.subr.mxu0 %v1257
    %2348 = vmatpush1.msra.mxu0 %v1256
    %2349 = vmatprep.subr.mxu0 %v1271
    %2350 = vmatpush1.msra.mxu0 %v1270
    %2351 = vmatprep.mubr.f32.mxu0 %v165
    %2352 = vmatmul.mubr.f32.gmra.mrb[0].mxu0 %v164
    %v2353 = vpop.f32.mrb[0].mxu0
    %v2354 = vadd.f32 %v2173, %v2353
    %v2355 = vpop.f32.mrb[0].mxu0
    %v2356 = vadd.f32 %v2177, %v2355
    %2357 = vdwg.mxu0
    %2358 = vmatprep.subr.mxu0 %v1285
    %2359 = vmatpush1.msra.mxu0 %v1284
    %2360 = vmatprep.subr.mxu0 %v1299
    %2361 = vmatpush1.msra.mxu0 %v1298
    %2362 = vmatprep.subr.mxu0 %v1313
    %2363 = vmatpush1.msra.mxu0 %v1312
    %2364 = vmatprep.subr.mxu0 %v1327
    %2365 = vmatpush1.msra.mxu0 %v1326
    %2366 = vmatprep.subr.mxu0 %v1341
    %2367 = vmatpush1.msra.mxu0 %v1340
    %2368 = vmatprep.subr.mxu0 %v1355
    %2369 = vmatpush1.msra.mxu0 %v1354
    %2370 = vmatprep.subr.mxu0 %v1369
    %2371 = vmatpush1.msra.mxu0 %v1368
    %2372 = vmatprep.subr.mxu0 %v1383
    %2373 = vmatpush1.msra.mxu0 %v1382
    %2374 = vmatprep.subr.mxu0 %v1397
    %2375 = vmatpush1.msra.mxu0 %v1396
    %2376 = vmatprep.subr.mxu0 %v1411
    %2377 = vmatpush1.msra.mxu0 %v1410
    %2378 = vmatprep.subr.mxu0 %v1425
    %2379 = vmatpush1.msra.mxu0 %v1424
    %2380 = vmatprep.subr.mxu0 %v1439
    %2381 = vmatpush1.msra.mxu0 %v1438
    %2382 = vmatprep.subr.mxu0 %v1453
    %2383 = vmatpush1.msra.mxu0 %v1452
    %2384 = vmatprep.subr.mxu0 %v1467
    %2385 = vmatpush1.msra.mxu0 %v1466
    %2386 = vmatprep.subr.mxu0 %v1481
    %2387 = vmatpush1.msra.mxu0 %v1480
    %2388 = vmatprep.subr.mxu0 %v1495
    %2389 = vmatpush1.msra.mxu0 %v1494
    %2390 = vmatprep.subr.mxu0 %v1509
    %2391 = vmatpush1.msra.mxu0 %v1508
    %2392 = vmatprep.subr.mxu0 %v1523
    %2393 = vmatpush1.msra.mxu0 %v1522
    %2394 = vmatprep.subr.mxu0 %v1537
    %2395 = vmatpush1.msra.mxu0 %v1536
    %2396 = vmatprep.subr.mxu0 %v1551
    %2397 = vmatpush1.msra.mxu0 %v1550
    %2398 = vmatprep.subr.mxu0 %v1565
    %2399 = vmatpush1.msra.mxu0 %v1564
    %2400 = vmatprep.subr.mxu0 %v1579
    %2401 = vmatpush1.msra.mxu0 %v1578
    %2402 = vmatprep.subr.mxu0 %v1593
    %2403 = vmatpush1.msra.mxu0 %v1592
    %2404 = vmatprep.subr.mxu0 %v1607
    %2405 = vmatpush1.msra.mxu0 %v1606
    %2406 = vmatprep.subr.mxu0 %v1621
    %2407 = vmatpush1.msra.mxu0 %v1620
    %2408 = vmatprep.subr.mxu0 %v1635
    %2409 = vmatpush1.msra.mxu0 %v1634
    %2410 = vmatprep.subr.mxu0 %v1649
    %2411 = vmatpush1.msra.mxu0 %v1648
    %2412 = vmatprep.subr.mxu0 %v1663
    %2413 = vmatpush1.msra.mxu0 %v1662
    %2414 = vmatprep.subr.mxu0 %v1677
    %2415 = vmatpush1.msra.mxu0 %v1676
    %2416 = vmatprep.subr.mxu0 %v1691
    %2417 = vmatpush1.msra.mxu0 %v1690
    %2418 = vmatprep.subr.mxu0 %v1705
    %2419 = vmatpush1.msra.mxu0 %v1704
    %2420 = vmatprep.subr.mxu0 %v1719
    %2421 = vmatpush1.msra.mxu0 %v1718
    %2422 = vmatprep.mubr.f32.mxu0 %v167
    %2423 = vmatmul.mubr.f32.gmra.mrb[0].mxu0 %v166
    %v2424 = vpop.f32.mrb[0].mxu0
    %v2425 = vadd.f32 %v2354, %v2424
    %v2426 = vpop.f32.mrb[0].mxu0
    %v2427 = vadd.f32 %v2356, %v2426
    %2428 = vdwg.mxu0
    %2429 = vmatprep.subr.mxu0 %v1733
    %2430 = vmatpush1.msra.mxu0 %v1732
    %2431 = vmatprep.subr.mxu0 %v1747
    %2432 = vmatpush1.msra.mxu0 %v1746
    %2433 = vmatprep.subr.mxu0 %v1761
    %2434 = vmatpush1.msra.mxu0 %v1760
    %2435 = vmatprep.subr.mxu0 %v1775
    %2436 = vmatpush1.msra.mxu0 %v1774
    %2437 = vmatprep.subr.mxu0 %v1789
    %2438 = vmatpush1.msra.mxu0 %v1788
    %2439 = vmatprep.subr.mxu0 %v1803
    %2440 = vmatpush1.msra.mxu0 %v1802
    %2441 = vmatprep.subr.mxu0 %v1817
    %2442 = vmatpush1.msra.mxu0 %v1816
    %2443 = vmatprep.subr.mxu0 %v1831
    %2444 = vmatpush1.msra.mxu0 %v1830
    %2445 = vmatprep.subr.mxu0 %v1845
    %2446 = vmatpush1.msra.mxu0 %v1844
    %2447 = vmatprep.subr.mxu0 %v1859
    %2448 = vmatpush1.msra.mxu0 %v1858
    %2449 = vmatprep.subr.mxu0 %v1873
    %2450 = vmatpush1.msra.mxu0 %v1872
    %2451 = vmatprep.subr.mxu0 %v1887
    %2452 = vmatpush1.msra.mxu0 %v1886
    %2453 = vmatprep.subr.mxu0 %v1901
    %2454 = vmatpush1.msra.mxu0 %v1900
    %2455 = vmatprep.subr.mxu0 %v1915
    %2456 = vmatpush1.msra.mxu0 %v1914
    %2457 = vmatprep.subr.mxu0 %v1929
    %2458 = vmatpush1.msra.mxu0 %v1928
    %2459 = vmatprep.subr.mxu0 %v1943
    %2460 = vmatpush1.msra.mxu0 %v1942
    %2461 = vmatprep.subr.mxu0 %v1957
    %2462 = vmatpush1.msra.mxu0 %v1956
    %2463 = vmatprep.subr.mxu0 %v1971
    %2464 = vmatpush1.msra.mxu0 %v1970
    %2465 = vmatprep.subr.mxu0 %v1985
    %2466 = vmatpush1.msra.mxu0 %v1984
    %2467 = vmatprep.subr.mxu0 %v1999
    %2468 = vmatpush1.msra.mxu0 %v1998
    %2469 = vmatprep.subr.mxu0 %v2013
    %2470 = vmatpush1.msra.mxu0 %v2012
    %2471 = vmatprep.subr.mxu0 %v2027
    %2472 = vmatpush1.msra.mxu0 %v2026
    %2473 = vmatprep.subr.mxu0 %v2041
    %2474 = vmatpush1.msra.mxu0 %v2040
    %2475 = vmatprep.subr.mxu0 %v2055
    %2476 = vmatpush1.msra.mxu0 %v2054
    %2477 = vmatprep.subr.mxu0 %v2069
    %2478 = vmatpush1.msra.mxu0 %v2068
    %2479 = vmatprep.subr.mxu0 %v2083
    %2480 = vmatpush1.msra.mxu0 %v2082
    %2481 = vmatprep.subr.mxu0 %v2097
    %2482 = vmatpush1.msra.mxu0 %v2096
    %2483 = vmatprep.subr.mxu0 %v2111
    %2484 = vmatpush1.msra.mxu0 %v2110
    %2485 = vmatprep.subr.mxu0 %v2125
    %2486 = vmatpush1.msra.mxu0 %v2124
    %2487 = vmatprep.subr.mxu0 %v2139
    %2488 = vmatpush1.msra.mxu0 %v2138
    %2489 = vmatprep.subr.mxu0 %v2249
    %2490 = vmatpush1.msra.mxu0 %v2246
    %2491 = vmatprep.subr.mxu0 0.0
    %2492 = vmatpush1.msra.mxu0 0.0
    %2493 = vmatprep.mubr.f32.mxu0 %v2242
    %2494 = vmatmul.mubr.f32.gmra.mrb[0].mxu0 %v168
    %v2495 = vpop.f32.mrb[0].mxu0
    %v2496 = vadd.f32 %v2425, %v2495
    %v2497 = vpop.f32.mrb[0].mxu0
    %v2498 = vadd.f32 %v2427, %v2497
    %2499 = vdwg.mxu0
    %2500 = vmatprep.subr.mxu0 %v839
    %2501 = vmatpush1.msra.mxu0 %v838
    %2502 = vmatprep.subr.mxu0 %v853
    %2503 = vmatpush1.msra.mxu0 %v852
    %2504 = vmatprep.subr.mxu0 %v867
    %2505 = vmatpush1.msra.mxu0 %v866
    %2506 = vmatprep.subr.mxu0 %v881
    %2507 = vmatpush1.msra.mxu0 %v880
    %2508 = vmatprep.subr.mxu0 %v895
    %2509 = vmatpush1.msra.mxu0 %v894
    %2510 = vmatprep.subr.mxu0 %v909
    %2511 = vmatpush1.msra.mxu0 %v908
    %2512 = vmatprep.subr.mxu0 %v923
    %2513 = vmatpush1.msra.mxu0 %v922
    %2514 = vmatprep.subr.mxu0 %v937
    %2515 = vmatpush1.msra.mxu0 %v936
    %2516 = vmatprep.subr.mxu0 %v951
    %2517 = vmatpush1.msra.mxu0 %v950
    %2518 = vmatprep.subr.mxu0 %v965
    %2519 = vmatpush1.msra.mxu0 %v964
    %2520 = vmatprep.subr.mxu0 %v979
    %2521 = vmatpush1.msra.mxu0 %v978
    %2522 = vmatprep.subr.mxu0 %v993
    %2523 = vmatpush1.msra.mxu0 %v992
    %2524 = vmatprep.subr.mxu0 %v1007
    %2525 = vmatpush1.msra.mxu0 %v1006
    %2526 = vmatprep.subr.mxu0 %v1021
    %2527 = vmatpush1.msra.mxu0 %v1020
    %2528 = vmatprep.subr.mxu0 %v1035
    %2529 = vmatpush1.msra.mxu0 %v1034
    %2530 = vmatprep.subr.mxu0 %v1049
    %2531 = vmatpush1.msra.mxu0 %v1048
    %2532 = vmatprep.subr.mxu0 %v1063
    %2533 = vmatpush1.msra.mxu0 %v1062
    %2534 = vmatprep.subr.mxu0 %v1077
    %2535 = vmatpush1.msra.mxu0 %v1076
    %2536 = vmatprep.subr.mxu0 %v1091
    %2537 = vmatpush1.msra.mxu0 %v1090
    %2538 = vmatprep.subr.mxu0 %v1105
    %2539 = vmatpush1.msra.mxu0 %v1104
    %2540 = vmatprep.subr.mxu0 %v1119
    %2541 = vmatpush1.msra.mxu0 %v1118
    %2542 = vmatprep.subr.mxu0 %v1133
    %2543 = vmatpush1.msra.mxu0 %v1132
    %2544 = vmatprep.subr.mxu0 %v1147
    %2545 = vmatpush1.msra.mxu0 %v1146
    %2546 = vmatprep.subr.mxu0 %v1161
    %2547 = vmatpush1.msra.mxu0 %v1160
    %2548 = vmatprep.subr.mxu0 %v1175
    %2549 = vmatpush1.msra.mxu0 %v1174
    %2550 = vmatprep.subr.mxu0 %v1189
    %2551 = vmatpush1.msra.mxu0 %v1188
    %2552 = vmatprep.subr.mxu0 %v1203
    %2553 = vmatpush1.msra.mxu0 %v1202
    %2554 = vmatprep.subr.mxu0 %v1217
    %2555 = vmatpush1.msra.mxu0 %v1216
    %2556 = vmatprep.subr.mxu0 %v1231
    %2557 = vmatpush1.msra.mxu0 %v1230
    %2558 = vmatprep.subr.mxu0 %v1245
    %2559 = vmatpush1.msra.mxu0 %v1244
    %2560 = vmatprep.subr.mxu0 %v1259
    %2561 = vmatpush1.msra.mxu0 %v1258
    %2562 = vmatprep.subr.mxu0 %v1273
    %2563 = vmatpush1.msra.mxu0 %v1272
    %2564 = vmatprep.mubr.f32.mxu0 %v165
    %2565 = vmatmul.mubr.f32.gmra.mrb[0].mxu0 %v164
    %v2566 = vpop.f32.mrb[0].mxu0
    %v2567 = vadd.f32 %v2181, %v2566
    %v2568 = vpop.f32.mrb[0].mxu0
    %v2569 = vadd.f32 %v2185, %v2568
    %2570 = vdwg.mxu0
    %2571 = vmatprep.subr.mxu0 %v1287
    %2572 = vmatpush1.msra.mxu0 %v1286
    %2573 = vmatprep.subr.mxu0 %v1301
    %2574 = vmatpush1.msra.mxu0 %v1300
    %2575 = vmatprep.subr.mxu0 %v1315
    %2576 = vmatpush1.msra.mxu0 %v1314
    %2577 = vmatprep.subr.mxu0 %v1329
    %2578 = vmatpush1.msra.mxu0 %v1328
    %2579 = vmatprep.subr.mxu0 %v1343
    %2580 = vmatpush1.msra.mxu0 %v1342
    %2581 = vmatprep.subr.mxu0 %v1357
    %2582 = vmatpush1.msra.mxu0 %v1356
    %2583 = vmatprep.subr.mxu0 %v1371
    %2584 = vmatpush1.msra.mxu0 %v1370
    %2585 = vmatprep.subr.mxu0 %v1385
    %2586 = vmatpush1.msra.mxu0 %v1384
    %2587 = vmatprep.subr.mxu0 %v1399
    %2588 = vmatpush1.msra.mxu0 %v1398
    %2589 = vmatprep.subr.mxu0 %v1413
    %2590 = vmatpush1.msra.mxu0 %v1412
    %2591 = vmatprep.subr.mxu0 %v1427
    %2592 = vmatpush1.msra.mxu0 %v1426
    %2593 = vmatprep.subr.mxu0 %v1441
    %2594 = vmatpush1.msra.mxu0 %v1440
    %2595 = vmatprep.subr.mxu0 %v1455
    %2596 = vmatpush1.msra.mxu0 %v1454
    %2597 = vmatprep.subr.mxu0 %v1469
    %2598 = vmatpush1.msra.mxu0 %v1468
    %2599 = vmatprep.subr.mxu0 %v1483
    %2600 = vmatpush1.msra.mxu0 %v1482
    %2601 = vmatprep.subr.mxu0 %v1497
    %2602 = vmatpush1.msra.mxu0 %v1496
    %2603 = vmatprep.subr.mxu0 %v1511
    %2604 = vmatpush1.msra.mxu0 %v1510
    %2605 = vmatprep.subr.mxu0 %v1525
    %2606 = vmatpush1.msra.mxu0 %v1524
    %2607 = vmatprep.subr.mxu0 %v1539
    %2608 = vmatpush1.msra.mxu0 %v1538
    %2609 = vmatprep.subr.mxu0 %v1553
    %2610 = vmatpush1.msra.mxu0 %v1552
    %2611 = vmatprep.subr.mxu0 %v1567
    %2612 = vmatpush1.msra.mxu0 %v1566
    %2613 = vmatprep.subr.mxu0 %v1581
    %2614 = vmatpush1.msra.mxu0 %v1580
    %2615 = vmatprep.subr.mxu0 %v1595
    %2616 = vmatpush1.msra.mxu0 %v1594
    %2617 = vmatprep.subr.mxu0 %v1609
    %2618 = vmatpush1.msra.mxu0 %v1608
    %2619 = vmatprep.subr.mxu0 %v1623
    %2620 = vmatpush1.msra.mxu0 %v1622
    %2621 = vmatprep.subr.mxu0 %v1637
    %2622 = vmatpush1.msra.mxu0 %v1636
    %2623 = vmatprep.subr.mxu0 %v1651
    %2624 = vmatpush1.msra.mxu0 %v1650
    %2625 = vmatprep.subr.mxu0 %v1665
    %2626 = vmatpush1.msra.mxu0 %v1664
    %2627 = vmatprep.subr.mxu0 %v1679
    %2628 = vmatpush1.msra.mxu0 %v1678
    %2629 = vmatprep.subr.mxu0 %v1693
    %2630 = vmatpush1.msra.mxu0 %v1692
    %2631 = vmatprep.subr.mxu0 %v1707
    %2632 = vmatpush1.msra.mxu0 %v1706
    %2633 = vmatprep.subr.mxu0 %v1721
    %2634 = vmatpush1.msra.mxu0 %v1720
    %2635 = vmatprep.mubr.f32.mxu0 %v167
    %2636 = vmatmul.mubr.f32.gmra.mrb[0].mxu0 %v166
    %v2637 = vpop.f32.mrb[0].mxu0
    %v2638 = vadd.f32 %v2567, %v2637
    %v2639 = vpop.f32.mrb[0].mxu0
    %v2640 = vadd.f32 %v2569, %v2639
    %2641 = vdwg.mxu0
    %2642 = vmatprep.subr.mxu0 %v1735
    %2643 = vmatpush1.msra.mxu0 %v1734
    %2644 = vmatprep.subr.mxu0 %v1749
    %2645 = vmatpush1.msra.mxu0 %v1748
    %2646 = vmatprep.subr.mxu0 %v1763
    %2647 = vmatpush1.msra.mxu0 %v1762
    %2648 = vmatprep.subr.mxu0 %v1777
    %2649 = vmatpush1.msra.mxu0 %v1776
    %2650 = vmatprep.subr.mxu0 %v1791
    %2651 = vmatpush1.msra.mxu0 %v1790
    %2652 = vmatprep.subr.mxu0 %v1805
    %2653 = vmatpush1.msra.mxu0 %v1804
    %2654 = vmatprep.subr.mxu0 %v1819
    %2655 = vmatpush1.msra.mxu0 %v1818
    %2656 = vmatprep.subr.mxu0 %v1833
    %2657 = vmatpush1.msra.mxu0 %v1832
    %2658 = vmatprep.subr.mxu0 %v1847
    %2659 = vmatpush1.msra.mxu0 %v1846
    %2660 = vmatprep.subr.mxu0 %v1861
    %2661 = vmatpush1.msra.mxu0 %v1860
    %2662 = vmatprep.subr.mxu0 %v1875
    %2663 = vmatpush1.msra.mxu0 %v1874
    %2664 = vmatprep.subr.mxu0 %v1889
    %2665 = vmatpush1.msra.mxu0 %v1888
    %2666 = vmatprep.subr.mxu0 %v1903
    %2667 = vmatpush1.msra.mxu0 %v1902
    %2668 = vmatprep.subr.mxu0 %v1917
    %2669 = vmatpush1.msra.mxu0 %v1916
    %2670 = vmatprep.subr.mxu0 %v1931
    %2671 = vmatpush1.msra.mxu0 %v1930
    %2672 = vmatprep.subr.mxu0 %v1945
    %2673 = vmatpush1.msra.mxu0 %v1944
    %2674 = vmatprep.subr.mxu0 %v1959
    %2675 = vmatpush1.msra.mxu0 %v1958
    %2676 = vmatprep.subr.mxu0 %v1973
    %2677 = vmatpush1.msra.mxu0 %v1972
    %2678 = vmatprep.subr.mxu0 %v1987
    %2679 = vmatpush1.msra.mxu0 %v1986
    %2680 = vmatprep.subr.mxu0 %v2001
    %2681 = vmatpush1.msra.mxu0 %v2000
    %2682 = vmatprep.subr.mxu0 %v2015
    %2683 = vmatpush1.msra.mxu0 %v2014
    %2684 = vmatprep.subr.mxu0 %v2029
    %2685 = vmatpush1.msra.mxu0 %v2028
    %2686 = vmatprep.subr.mxu0 %v2043
    %2687 = vmatpush1.msra.mxu0 %v2042
    %2688 = vmatprep.subr.mxu0 %v2057
    %2689 = vmatpush1.msra.mxu0 %v2056
    %2690 = vmatprep.subr.mxu0 %v2071
    %2691 = vmatpush1.msra.mxu0 %v2070
    %2692 = vmatprep.subr.mxu0 %v2085
    %2693 = vmatpush1.msra.mxu0 %v2084
    %2694 = vmatprep.subr.mxu0 %v2099
    %2695 = vmatpush1.msra.mxu0 %v2098
    %2696 = vmatprep.subr.mxu0 %v2113
    %2697 = vmatpush1.msra.mxu0 %v2112
    %2698 = vmatprep.subr.mxu0 %v2127
    %2699 = vmatpush1.msra.mxu0 %v2126
    %2700 = vmatprep.subr.mxu0 %v2141
    %2701 = vmatpush1.msra.mxu0 %v2140
    %2702 = vmatprep.subr.mxu0 %v2255
    %2703 = vmatpush1.msra.mxu0 %v2252
    %2704 = vmatprep.subr.mxu0 0.0
    %2705 = vmatpush1.msra.mxu0 0.0
    %2706 = vmatprep.mubr.f32.mxu0 %v2242
    %2707 = vmatmul.mubr.f32.gmra.mrb[0].mxu0 %v168
    %v2708 = vpop.f32.mrb[0].mxu0
    %v2709 = vadd.f32 %v2638, %v2708
    %v2710 = vpop.f32.mrb[0].mxu0
    %v2711 = vadd.f32 %v2640, %v2710
    %2712 = vdwg.mxu0
    %2713 = vmatprep.subr.mxu0 %v841
    %2714 = vmatpush1.msra.mxu0 %v840
    %2715 = vmatprep.subr.mxu0 %v855
    %2716 = vmatpush1.msra.mxu0 %v854
    %2717 = vmatprep.subr.mxu0 %v869
    %2718 = vmatpush1.msra.mxu0 %v868
    %2719 = vmatprep.subr.mxu0 %v883
    %2720 = vmatpush1.msra.mxu0 %v882
    %2721 = vmatprep.subr.mxu0 %v897
    %2722 = vmatpush1.msra.mxu0 %v896
    %2723 = vmatprep.subr.mxu0 %v911
    %2724 = vmatpush1.msra.mxu0 %v910
    %2725 = vmatprep.subr.mxu0 %v925
    %2726 = vmatpush1.msra.mxu0 %v924
    %2727 = vmatprep.subr.mxu0 %v939
    %2728 = vmatpush1.msra.mxu0 %v938
    %2729 = vmatprep.subr.mxu0 %v953
    %2730 = vmatpush1.msra.mxu0 %v952
    %2731 = vmatprep.subr.mxu0 %v967
    %2732 = vmatpush1.msra.mxu0 %v966
    %2733 = vmatprep.subr.mxu0 %v981
    %2734 = vmatpush1.msra.mxu0 %v980
    %2735 = vmatprep.subr.mxu0 %v995
    %2736 = vmatpush1.msra.mxu0 %v994
    %2737 = vmatprep.subr.mxu0 %v1009
    %2738 = vmatpush1.msra.mxu0 %v1008
    %2739 = vmatprep.subr.mxu0 %v1023
    %2740 = vmatpush1.msra.mxu0 %v1022
    %2741 = vmatprep.subr.mxu0 %v1037
    %2742 = vmatpush1.msra.mxu0 %v1036
    %2743 = vmatprep.subr.mxu0 %v1051
    %2744 = vmatpush1.msra.mxu0 %v1050
    %2745 = vmatprep.subr.mxu0 %v1065
    %2746 = vmatpush1.msra.mxu0 %v1064
    %2747 = vmatprep.subr.mxu0 %v1079
    %2748 = vmatpush1.msra.mxu0 %v1078
    %2749 = vmatprep.subr.mxu0 %v1093
    %2750 = vmatpush1.msra.mxu0 %v1092
    %2751 = vmatprep.subr.mxu0 %v1107
    %2752 = vmatpush1.msra.mxu0 %v1106
    %2753 = vmatprep.subr.mxu0 %v1121
    %2754 = vmatpush1.msra.mxu0 %v1120
    %2755 = vmatprep.subr.mxu0 %v1135
    %2756 = vmatpush1.msra.mxu0 %v1134
    %2757 = vmatprep.subr.mxu0 %v1149
    %2758 = vmatpush1.msra.mxu0 %v1148
    %2759 = vmatprep.subr.mxu0 %v1163
    %2760 = vmatpush1.msra.mxu0 %v1162
    %2761 = vmatprep.subr.mxu0 %v1177
    %2762 = vmatpush1.msra.mxu0 %v1176
    %2763 = vmatprep.subr.mxu0 %v1191
    %2764 = vmatpush1.msra.mxu0 %v1190
    %2765 = vmatprep.subr.mxu0 %v1205
    %2766 = vmatpush1.msra.mxu0 %v1204
    %2767 = vmatprep.subr.mxu0 %v1219
    %2768 = vmatpush1.msra.mxu0 %v1218
    %2769 = vmatprep.subr.mxu0 %v1233
    %2770 = vmatpush1.msra.mxu0 %v1232
    %2771 = vmatprep.subr.mxu0 %v1247
    %2772 = vmatpush1.msra.mxu0 %v1246
    %2773 = vmatprep.subr.mxu0 %v1261
    %2774 = vmatpush1.msra.mxu0 %v1260
    %2775 = vmatprep.subr.mxu0 %v1275
    %2776 = vmatpush1.msra.mxu0 %v1274
    %2777 = vmatprep.mubr.f32.mxu0 %v165
    %2778 = vmatmul.mubr.f32.gmra.mrb[0].mxu0 %v164
    %v2779 = vpop.f32.mrb[0].mxu0
    %v2780 = vadd.f32 %v2189, %v2779
    %v2781 = vpop.f32.mrb[0].mxu0
    %v2782 = vadd.f32 %v2193, %v2781
    %2783 = vdwg.mxu0
    %2784 = vmatprep.subr.mxu0 %v1289
    %2785 = vmatpush1.msra.mxu0 %v1288
    %2786 = vmatprep.subr.mxu0 %v1303
    %2787 = vmatpush1.msra.mxu0 %v1302
    %2788 = vmatprep.subr.mxu0 %v1317
    %2789 = vmatpush1.msra.mxu0 %v1316
    %2790 = vmatprep.subr.mxu0 %v1331
    %2791 = vmatpush1.msra.mxu0 %v1330
    %2792 = vmatprep.subr.mxu0 %v1345
    %2793 = vmatpush1.msra.mxu0 %v1344
    %2794 = vmatprep.subr.mxu0 %v1359
    %2795 = vmatpush1.msra.mxu0 %v1358
    %2796 = vmatprep.subr.mxu0 %v1373
    %2797 = vmatpush1.msra.mxu0 %v1372
    %2798 = vmatprep.subr.mxu0 %v1387
    %2799 = vmatpush1.msra.mxu0 %v1386
    %2800 = vmatprep.subr.mxu0 %v1401
    %2801 = vmatpush1.msra.mxu0 %v1400
    %2802 = vmatprep.subr.mxu0 %v1415
    %2803 = vmatpush1.msra.mxu0 %v1414
    %2804 = vmatprep.subr.mxu0 %v1429
    %2805 = vmatpush1.msra.mxu0 %v1428
    %2806 = vmatprep.subr.mxu0 %v1443
    %2807 = vmatpush1.msra.mxu0 %v1442
    %2808 = vmatprep.subr.mxu0 %v1457
    %2809 = vmatpush1.msra.mxu0 %v1456
    %2810 = vmatprep.subr.mxu0 %v1471
    %2811 = vmatpush1.msra.mxu0 %v1470
    %2812 = vmatprep.subr.mxu0 %v1485
    %2813 = vmatpush1.msra.mxu0 %v1484
    %2814 = vmatprep.subr.mxu0 %v1499
    %2815 = vmatpush1.msra.mxu0 %v1498
    %2816 = vmatprep.subr.mxu0 %v1513
    %2817 = vmatpush1.msra.mxu0 %v1512
    %2818 = vmatprep.subr.mxu0 %v1527
    %2819 = vmatpush1.msra.mxu0 %v1526
    %2820 = vmatprep.subr.mxu0 %v1541
    %2821 = vmatpush1.msra.mxu0 %v1540
    %2822 = vmatprep.subr.mxu0 %v1555
    %2823 = vmatpush1.msra.mxu0 %v1554
    %2824 = vmatprep.subr.mxu0 %v1569
    %2825 = vmatpush1.msra.mxu0 %v1568
    %2826 = vmatprep.subr.mxu0 %v1583
    %2827 = vmatpush1.msra.mxu0 %v1582
    %2828 = vmatprep.subr.mxu0 %v1597
    %2829 = vmatpush1.msra.mxu0 %v1596
    %2830 = vmatprep.subr.mxu0 %v1611
    %2831 = vmatpush1.msra.mxu0 %v1610
    %2832 = vmatprep.subr.mxu0 %v1625
    %2833 = vmatpush1.msra.mxu0 %v1624
    %2834 = vmatprep.subr.mxu0 %v1639
    %2835 = vmatpush1.msra.mxu0 %v1638
    %2836 = vmatprep.subr.mxu0 %v1653
    %2837 = vmatpush1.msra.mxu0 %v1652
    %2838 = vmatprep.subr.mxu0 %v1667
    %2839 = vmatpush1.msra.mxu0 %v1666
    %2840 = vmatprep.subr.mxu0 %v1681
    %2841 = vmatpush1.msra.mxu0 %v1680
    %2842 = vmatprep.subr.mxu0 %v1695
    %2843 = vmatpush1.msra.mxu0 %v1694
    %2844 = vmatprep.subr.mxu0 %v1709
    %2845 = vmatpush1.msra.mxu0 %v1708
    %2846 = vmatprep.subr.mxu0 %v1723
    %2847 = vmatpush1.msra.mxu0 %v1722
    %2848 = vmatprep.mubr.f32.mxu0 %v167
    %2849 = vmatmul.mubr.f32.gmra.mrb[0].mxu0 %v166
    %v2850 = vpop.f32.mrb[0].mxu0
    %v2851 = vadd.f32 %v2780, %v2850
    %v2852 = vpop.f32.mrb[0].mxu0
    %v2853 = vadd.f32 %v2782, %v2852
    %2854 = vdwg.mxu0
    %2855 = vmatprep.subr.mxu0 %v1737
    %2856 = vmatpush1.msra.mxu0 %v1736
    %2857 = vmatprep.subr.mxu0 %v1751
    %2858 = vmatpush1.msra.mxu0 %v1750
    %2859 = vmatprep.subr.mxu0 %v1765
    %2860 = vmatpush1.msra.mxu0 %v1764
    %2861 = vmatprep.subr.mxu0 %v1779
    %2862 = vmatpush1.msra.mxu0 %v1778
    %2863 = vmatprep.subr.mxu0 %v1793
    %2864 = vmatpush1.msra.mxu0 %v1792
    %2865 = vmatprep.subr.mxu0 %v1807
    %2866 = vmatpush1.msra.mxu0 %v1806
    %2867 = vmatprep.subr.mxu0 %v1821
    %2868 = vmatpush1.msra.mxu0 %v1820
    %2869 = vmatprep.subr.mxu0 %v1835
    %2870 = vmatpush1.msra.mxu0 %v1834
    %2871 = vmatprep.subr.mxu0 %v1849
    %2872 = vmatpush1.msra.mxu0 %v1848
    %2873 = vmatprep.subr.mxu0 %v1863
    %2874 = vmatpush1.msra.mxu0 %v1862
    %2875 = vmatprep.subr.mxu0 %v1877
    %2876 = vmatpush1.msra.mxu0 %v1876
    %2877 = vmatprep.subr.mxu0 %v1891
    %2878 = vmatpush1.msra.mxu0 %v1890
    %2879 = vmatprep.subr.mxu0 %v1905
    %2880 = vmatpush1.msra.mxu0 %v1904
    %2881 = vmatprep.subr.mxu0 %v1919
    %2882 = vmatpush1.msra.mxu0 %v1918
    %2883 = vmatprep.subr.mxu0 %v1933
    %2884 = vmatpush1.msra.mxu0 %v1932
    %2885 = vmatprep.subr.mxu0 %v1947
    %2886 = vmatpush1.msra.mxu0 %v1946
    %2887 = vmatprep.subr.mxu0 %v1961
    %2888 = vmatpush1.msra.mxu0 %v1960
    %2889 = vmatprep.subr.mxu0 %v1975
    %2890 = vmatpush1.msra.mxu0 %v1974
    %2891 = vmatprep.subr.mxu0 %v1989
    %2892 = vmatpush1.msra.mxu0 %v1988
    %2893 = vmatprep.subr.mxu0 %v2003
    %2894 = vmatpush1.msra.mxu0 %v2002
    %2895 = vmatprep.subr.mxu0 %v2017
    %2896 = vmatpush1.msra.mxu0 %v2016
    %2897 = vmatprep.subr.mxu0 %v2031
    %2898 = vmatpush1.msra.mxu0 %v2030
    %2899 = vmatprep.subr.mxu0 %v2045
    %2900 = vmatpush1.msra.mxu0 %v2044
    %2901 = vmatprep.subr.mxu0 %v2059
    %2902 = vmatpush1.msra.mxu0 %v2058
    %2903 = vmatprep.subr.mxu0 %v2073
    %2904 = vmatpush1.msra.mxu0 %v2072
    %2905 = vmatprep.subr.mxu0 %v2087
    %2906 = vmatpush1.msra.mxu0 %v2086
    %2907 = vmatprep.subr.mxu0 %v2101
    %2908 = vmatpush1.msra.mxu0 %v2100
    %2909 = vmatprep.subr.mxu0 %v2115
    %2910 = vmatpush1.msra.mxu0 %v2114
    %2911 = vmatprep.subr.mxu0 %v2129
    %2912 = vmatpush1.msra.mxu0 %v2128
    %2913 = vmatprep.subr.mxu0 %v2143
    %2914 = vmatpush1.msra.mxu0 %v2142
    %2915 = vmatprep.subr.mxu0 %v2261
    %2916 = vmatpush1.msra.mxu0 %v2258
    %2917 = vmatprep.subr.mxu0 0.0
    %2918 = vmatpush1.msra.mxu0 0.0
    %2919 = vmatprep.mubr.f32.mxu0 %v2242
    %2920 = vmatmul.mubr.f32.gmra.mrb[0].mxu0 %v168
    %v2921 = vpop.f32.mrb[0].mxu0
    %v2922 = vadd.f32 %v2851, %v2921
    %v2923 = vpop.f32.mrb[0].mxu0
    %v2924 = vadd.f32 %v2853, %v2923
    %2925 = vdwg.mxu0
    %2926 = vmatprep.subr.mxu0 %v843
    %2927 = vmatpush1.msra.mxu0 %v842
    %2928 = vmatprep.subr.mxu0 %v857
    %2929 = vmatpush1.msra.mxu0 %v856
    %2930 = vmatprep.subr.mxu0 %v871
    %2931 = vmatpush1.msra.mxu0 %v870
    %2932 = vmatprep.subr.mxu0 %v885
    %2933 = vmatpush1.msra.mxu0 %v884
    %2934 = vmatprep.subr.mxu0 %v899
    %2935 = vmatpush1.msra.mxu0 %v898
    %2936 = vmatprep.subr.mxu0 %v913
    %2937 = vmatpush1.msra.mxu0 %v912
    %2938 = vmatprep.subr.mxu0 %v927
    %2939 = vmatpush1.msra.mxu0 %v926
    %2940 = vmatprep.subr.mxu0 %v941
    %2941 = vmatpush1.msra.mxu0 %v940
    %2942 = vmatprep.subr.mxu0 %v955
    %2943 = vmatpush1.msra.mxu0 %v954
    %2944 = vmatprep.subr.mxu0 %v969
    %2945 = vmatpush1.msra.mxu0 %v968
    %2946 = vmatprep.subr.mxu0 %v983
    %2947 = vmatpush1.msra.mxu0 %v982
    %2948 = vmatprep.subr.mxu0 %v997
    %2949 = vmatpush1.msra.mxu0 %v996
    %2950 = vmatprep.subr.mxu0 %v1011
    %2951 = vmatpush1.msra.mxu0 %v1010
    %2952 = vmatprep.subr.mxu0 %v1025
    %2953 = vmatpush1.msra.mxu0 %v1024
    %2954 = vmatprep.subr.mxu0 %v1039
    %2955 = vmatpush1.msra.mxu0 %v1038
    %2956 = vmatprep.subr.mxu0 %v1053
    %2957 = vmatpush1.msra.mxu0 %v1052
    %2958 = vmatprep.subr.mxu0 %v1067
    %2959 = vmatpush1.msra.mxu0 %v1066
    %2960 = vmatprep.subr.mxu0 %v1081
    %2961 = vmatpush1.msra.mxu0 %v1080
    %2962 = vmatprep.subr.mxu0 %v1095
    %2963 = vmatpush1.msra.mxu0 %v1094
    %2964 = vmatprep.subr.mxu0 %v1109
    %2965 = vmatpush1.msra.mxu0 %v1108
    %2966 = vmatprep.subr.mxu0 %v1123
    %2967 = vmatpush1.msra.mxu0 %v1122
    %2968 = vmatprep.subr.mxu0 %v1137
    %2969 = vmatpush1.msra.mxu0 %v1136
    %2970 = vmatprep.subr.mxu0 %v1151
    %2971 = vmatpush1.msra.mxu0 %v1150
    %2972 = vmatprep.subr.mxu0 %v1165
    %2973 = vmatpush1.msra.mxu0 %v1164
    %2974 = vmatprep.subr.mxu0 %v1179
    %2975 = vmatpush1.msra.mxu0 %v1178
    %2976 = vmatprep.subr.mxu0 %v1193
    %2977 = vmatpush1.msra.mxu0 %v1192
    %2978 = vmatprep.subr.mxu0 %v1207
    %2979 = vmatpush1.msra.mxu0 %v1206
    %2980 = vmatprep.subr.mxu0 %v1221
    %2981 = vmatpush1.msra.mxu0 %v1220
    %2982 = vmatprep.subr.mxu0 %v1235
    %2983 = vmatpush1.msra.mxu0 %v1234
    %2984 = vmatprep.subr.mxu0 %v1249
    %2985 = vmatpush1.msra.mxu0 %v1248
    %2986 = vmatprep.subr.mxu0 %v1263
    %2987 = vmatpush1.msra.mxu0 %v1262
    %2988 = vmatprep.subr.mxu0 %v1277
    %2989 = vmatpush1.msra.mxu0 %v1276
    %2990 = vmatprep.mubr.f32.mxu0 %v165
    %2991 = vmatmul.mubr.f32.gmra.mrb[0].mxu0 %v164
    %v2992 = vpop.f32.mrb[0].mxu0
    %v2993 = vadd.f32 %v2197, %v2992
    %v2994 = vpop.f32.mrb[0].mxu0
    %v2995 = vadd.f32 %v2201, %v2994
    %2996 = vdwg.mxu0
    %2997 = vmatprep.subr.mxu0 %v1291
    %2998 = vmatpush1.msra.mxu0 %v1290
    %2999 = vmatprep.subr.mxu0 %v1305
    %3000 = vmatpush1.msra.mxu0 %v1304
    %3001 = vmatprep.subr.mxu0 %v1319
    %3002 = vmatpush1.msra.mxu0 %v1318
    %3003 = vmatprep.subr.mxu0 %v1333
    %3004 = vmatpush1.msra.mxu0 %v1332
    %3005 = vmatprep.subr.mxu0 %v1347
    %3006 = vmatpush1.msra.mxu0 %v1346
    %3007 = vmatprep.subr.mxu0 %v1361
    %3008 = vmatpush1.msra.mxu0 %v1360
    %3009 = vmatprep.subr.mxu0 %v1375
    %3010 = vmatpush1.msra.mxu0 %v1374
    %3011 = vmatprep.subr.mxu0 %v1389
    %3012 = vmatpush1.msra.mxu0 %v1388
    %3013 = vmatprep.subr.mxu0 %v1403
    %3014 = vmatpush1.msra.mxu0 %v1402
    %3015 = vmatprep.subr.mxu0 %v1417
    %3016 = vmatpush1.msra.mxu0 %v1416
    %3017 = vmatprep.subr.mxu0 %v1431
    %3018 = vmatpush1.msra.mxu0 %v1430
    %3019 = vmatprep.subr.mxu0 %v1445
    %3020 = vmatpush1.msra.mxu0 %v1444
    %3021 = vmatprep.subr.mxu0 %v1459
    %3022 = vmatpush1.msra.mxu0 %v1458
    %3023 = vmatprep.subr.mxu0 %v1473
    %3024 = vmatpush1.msra.mxu0 %v1472
    %3025 = vmatprep.subr.mxu0 %v1487
    %3026 = vmatpush1.msra.mxu0 %v1486
    %3027 = vmatprep.subr.mxu0 %v1501
    %3028 = vmatpush1.msra.mxu0 %v1500
    %3029 = vmatprep.subr.mxu0 %v1515
    %3030 = vmatpush1.msra.mxu0 %v1514
    %3031 = vmatprep.subr.mxu0 %v1529
    %3032 = vmatpush1.msra.mxu0 %v1528
    %3033 = vmatprep.subr.mxu0 %v1543
    %3034 = vmatpush1.msra.mxu0 %v1542
    %3035 = vmatprep.subr.mxu0 %v1557
    %3036 = vmatpush1.msra.mxu0 %v1556
    %3037 = vmatprep.subr.mxu0 %v1571
    %3038 = vmatpush1.msra.mxu0 %v1570
    %3039 = vmatprep.subr.mxu0 %v1585
    %3040 = vmatpush1.msra.mxu0 %v1584
    %3041 = vmatprep.subr.mxu0 %v1599
    %3042 = vmatpush1.msra.mxu0 %v1598
    %3043 = vmatprep.subr.mxu0 %v1613
    %3044 = vmatpush1.msra.mxu0 %v1612
    %3045 = vmatprep.subr.mxu0 %v1627
    %3046 = vmatpush1.msra.mxu0 %v1626
    %3047 = vmatprep.subr.mxu0 %v1641
    %3048 = vmatpush1.msra.mxu0 %v1640
    %3049 = vmatprep.subr.mxu0 %v1655
    %3050 = vmatpush1.msra.mxu0 %v1654
    %3051 = vmatprep.subr.mxu0 %v1669
    %3052 = vmatpush1.msra.mxu0 %v1668
    %3053 = vmatprep.subr.mxu0 %v1683
    %3054 = vmatpush1.msra.mxu0 %v1682
    %3055 = vmatprep.subr.mxu0 %v1697
    %3056 = vmatpush1.msra.mxu0 %v1696
    %3057 = vmatprep.subr.mxu0 %v1711
    %3058 = vmatpush1.msra.mxu0 %v1710
    %3059 = vmatprep.subr.mxu0 %v1725
    %3060 = vmatpush1.msra.mxu0 %v1724
    %3061 = vmatprep.mubr.f32.mxu0 %v167
    %3062 = vmatmul.mubr.f32.gmra.mrb[0].mxu0 %v166
    %v3063 = vpop.f32.mrb[0].mxu0
    %v3064 = vadd.f32 %v2993, %v3063
    %v3065 = vpop.f32.mrb[0].mxu0
    %v3066 = vadd.f32 %v2995, %v3065
    %3067 = vdwg.mxu0
    %3068 = vmatprep.subr.mxu0 %v1739
    %3069 = vmatpush1.msra.mxu0 %v1738
    %3070 = vmatprep.subr.mxu0 %v1753
    %3071 = vmatpush1.msra.mxu0 %v1752
    %3072 = vmatprep.subr.mxu0 %v1767
    %3073 = vmatpush1.msra.mxu0 %v1766
    %3074 = vmatprep.subr.mxu0 %v1781
    %3075 = vmatpush1.msra.mxu0 %v1780
    %3076 = vmatprep.subr.mxu0 %v1795
    %3077 = vmatpush1.msra.mxu0 %v1794
    %3078 = vmatprep.subr.mxu0 %v1809
    %3079 = vmatpush1.msra.mxu0 %v1808
    %3080 = vmatprep.subr.mxu0 %v1823
    %3081 = vmatpush1.msra.mxu0 %v1822
    %3082 = vmatprep.subr.mxu0 %v1837
    %3083 = vmatpush1.msra.mxu0 %v1836
    %3084 = vmatprep.subr.mxu0 %v1851
    %3085 = vmatpush1.msra.mxu0 %v1850
    %3086 = vmatprep.subr.mxu0 %v1865
    %3087 = vmatpush1.msra.mxu0 %v1864
    %3088 = vmatprep.subr.mxu0 %v1879
    %3089 = vmatpush1.msra.mxu0 %v1878
    %3090 = vmatprep.subr.mxu0 %v1893
    %3091 = vmatpush1.msra.mxu0 %v1892
    %3092 = vmatprep.subr.mxu0 %v1907
    %3093 = vmatpush1.msra.mxu0 %v1906
    %3094 = vmatprep.subr.mxu0 %v1921
    %3095 = vmatpush1.msra.mxu0 %v1920
    %3096 = vmatprep.subr.mxu0 %v1935
    %3097 = vmatpush1.msra.mxu0 %v1934
    %3098 = vmatprep.subr.mxu0 %v1949
    %3099 = vmatpush1.msra.mxu0 %v1948
    %3100 = vmatprep.subr.mxu0 %v1963
    %3101 = vmatpush1.msra.mxu0 %v1962
    %3102 = vmatprep.subr.mxu0 %v1977
    %3103 = vmatpush1.msra.mxu0 %v1976
    %3104 = vmatprep.subr.mxu0 %v1991
    %3105 = vmatpush1.msra.mxu0 %v1990
    %3106 = vmatprep.subr.mxu0 %v2005
    %3107 = vmatpush1.msra.mxu0 %v2004
    %3108 = vmatprep.subr.mxu0 %v2019
    %3109 = vmatpush1.msra.mxu0 %v2018
    %3110 = vmatprep.subr.mxu0 %v2033
    %3111 = vmatpush1.msra.mxu0 %v2032
    %3112 = vmatprep.subr.mxu0 %v2047
    %3113 = vmatpush1.msra.mxu0 %v2046
    %3114 = vmatprep.subr.mxu0 %v2061
    %3115 = vmatpush1.msra.mxu0 %v2060
    %3116 = vmatprep.subr.mxu0 %v2075
    %3117 = vmatpush1.msra.mxu0 %v2074
    %3118 = vmatprep.subr.mxu0 %v2089
    %3119 = vmatpush1.msra.mxu0 %v2088
    %3120 = vmatprep.subr.mxu0 %v2103
    %3121 = vmatpush1.msra.mxu0 %v2102
    %3122 = vmatprep.subr.mxu0 %v2117
    %3123 = vmatpush1.msra.mxu0 %v2116
    %3124 = vmatprep.subr.mxu0 %v2131
    %3125 = vmatpush1.msra.mxu0 %v2130
    %3126 = vmatprep.subr.mxu0 %v2145
    %3127 = vmatpush1.msra.mxu0 %v2144
    %3128 = vmatprep.subr.mxu0 %v2267
    %3129 = vmatpush1.msra.mxu0 %v2264
    %3130 = vmatprep.subr.mxu0 0.0
    %3131 = vmatpush1.msra.mxu0 0.0
    %3132 = vmatprep.mubr.f32.mxu0 %v2242
    %3133 = vmatmul.mubr.f32.gmra.mrb[0].mxu0 %v168
    %v3134 = vpop.f32.mrb[0].mxu0
    %v3135 = vadd.f32 %v3064, %v3134
    %v3136 = vpop.f32.mrb[0].mxu0
    %v3137 = vadd.f32 %v3066, %v3136
    %3138 = vdwg.mxu0
    %3139 = vmatprep.subr.mxu0 %v845
    %3140 = vmatpush1.msra.mxu0 %v844
    %3141 = vmatprep.subr.mxu0 %v859
    %3142 = vmatpush1.msra.mxu0 %v858
    %3143 = vmatprep.subr.mxu0 %v873
    %3144 = vmatpush1.msra.mxu0 %v872
    %3145 = vmatprep.subr.mxu0 %v887
    %3146 = vmatpush1.msra.mxu0 %v886
    %3147 = vmatprep.subr.mxu0 %v901
    %3148 = vmatpush1.msra.mxu0 %v900
    %3149 = vmatprep.subr.mxu0 %v915
    %3150 = vmatpush1.msra.mxu0 %v914
    %3151 = vmatprep.subr.mxu0 %v929
    %3152 = vmatpush1.msra.mxu0 %v928
    %3153 = vmatprep.subr.mxu0 %v943
    %3154 = vmatpush1.msra.mxu0 %v942
    %3155 = vmatprep.subr.mxu0 %v957
    %3156 = vmatpush1.msra.mxu0 %v956
    %3157 = vmatprep.subr.mxu0 %v971
    %3158 = vmatpush1.msra.mxu0 %v970
    %3159 = vmatprep.subr.mxu0 %v985
    %3160 = vmatpush1.msra.mxu0 %v984
    %3161 = vmatprep.subr.mxu0 %v999
    %3162 = vmatpush1.msra.mxu0 %v998
    %3163 = vmatprep.subr.mxu0 %v1013
    %3164 = vmatpush1.msra.mxu0 %v1012
    %3165 = vmatprep.subr.mxu0 %v1027
    %3166 = vmatpush1.msra.mxu0 %v1026
    %3167 = vmatprep.subr.mxu0 %v1041
    %3168 = vmatpush1.msra.mxu0 %v1040
    %3169 = vmatprep.subr.mxu0 %v1055
    %3170 = vmatpush1.msra.mxu0 %v1054
    %3171 = vmatprep.subr.mxu0 %v1069
    %3172 = vmatpush1.msra.mxu0 %v1068
    %3173 = vmatprep.subr.mxu0 %v1083
    %3174 = vmatpush1.msra.mxu0 %v1082
    %3175 = vmatprep.subr.mxu0 %v1097
    %3176 = vmatpush1.msra.mxu0 %v1096
    %3177 = vmatprep.subr.mxu0 %v1111
    %3178 = vmatpush1.msra.mxu0 %v1110
    %3179 = vmatprep.subr.mxu0 %v1125
    %3180 = vmatpush1.msra.mxu0 %v1124
    %3181 = vmatprep.subr.mxu0 %v1139
    %3182 = vmatpush1.msra.mxu0 %v1138
    %3183 = vmatprep.subr.mxu0 %v1153
    %3184 = vmatpush1.msra.mxu0 %v1152
    %3185 = vmatprep.subr.mxu0 %v1167
    %3186 = vmatpush1.msra.mxu0 %v1166
    %3187 = vmatprep.subr.mxu0 %v1181
    %3188 = vmatpush1.msra.mxu0 %v1180
    %3189 = vmatprep.subr.mxu0 %v1195
    %3190 = vmatpush1.msra.mxu0 %v1194
    %3191 = vmatprep.subr.mxu0 %v1209
    %3192 = vmatpush1.msra.mxu0 %v1208
    %3193 = vmatprep.subr.mxu0 %v1223
    %3194 = vmatpush1.msra.mxu0 %v1222
    %3195 = vmatprep.subr.mxu0 %v1237
    %3196 = vmatpush1.msra.mxu0 %v1236
    %3197 = vmatprep.subr.mxu0 %v1251
    %3198 = vmatpush1.msra.mxu0 %v1250
    %3199 = vmatprep.subr.mxu0 %v1265
    %3200 = vmatpush1.msra.mxu0 %v1264
    %3201 = vmatprep.subr.mxu0 %v1279
    %3202 = vmatpush1.msra.mxu0 %v1278
    %3203 = vmatprep.mubr.f32.mxu0 %v165
    %3204 = vmatmul.mubr.f32.gmra.mrb[0].mxu0 %v164
    %v3205 = vpop.f32.mrb[0].mxu0
    %v3206 = vadd.f32 %v2205, %v3205
    %v3207 = vpop.f32.mrb[0].mxu0
    %v3208 = vadd.f32 %v2209, %v3207
    %3209 = vdwg.mxu0
    %3210 = vmatprep.subr.mxu0 %v1293
    %3211 = vmatpush1.msra.mxu0 %v1292
    %3212 = vmatprep.subr.mxu0 %v1307
    %3213 = vmatpush1.msra.mxu0 %v1306
    %3214 = vmatprep.subr.mxu0 %v1321
    %3215 = vmatpush1.msra.mxu0 %v1320
    %3216 = vmatprep.subr.mxu0 %v1335
    %3217 = vmatpush1.msra.mxu0 %v1334
    %3218 = vmatprep.subr.mxu0 %v1349
    %3219 = vmatpush1.msra.mxu0 %v1348
    %3220 = vmatprep.subr.mxu0 %v1363
    %3221 = vmatpush1.msra.mxu0 %v1362
    %3222 = vmatprep.subr.mxu0 %v1377
    %3223 = vmatpush1.msra.mxu0 %v1376
    %3224 = vmatprep.subr.mxu0 %v1391
    %3225 = vmatpush1.msra.mxu0 %v1390
    %3226 = vmatprep.subr.mxu0 %v1405
    %3227 = vmatpush1.msra.mxu0 %v1404
    %3228 = vmatprep.subr.mxu0 %v1419
    %3229 = vmatpush1.msra.mxu0 %v1418
    %3230 = vmatprep.subr.mxu0 %v1433
    %3231 = vmatpush1.msra.mxu0 %v1432
    %3232 = vmatprep.subr.mxu0 %v1447
    %3233 = vmatpush1.msra.mxu0 %v1446
    %3234 = vmatprep.subr.mxu0 %v1461
    %3235 = vmatpush1.msra.mxu0 %v1460
    %3236 = vmatprep.subr.mxu0 %v1475
    %3237 = vmatpush1.msra.mxu0 %v1474
    %3238 = vmatprep.subr.mxu0 %v1489
    %3239 = vmatpush1.msra.mxu0 %v1488
    %3240 = vmatprep.subr.mxu0 %v1503
    %3241 = vmatpush1.msra.mxu0 %v1502
    %3242 = vmatprep.subr.mxu0 %v1517
    %3243 = vmatpush1.msra.mxu0 %v1516
    %3244 = vmatprep.subr.mxu0 %v1531
    %3245 = vmatpush1.msra.mxu0 %v1530
    %3246 = vmatprep.subr.mxu0 %v1545
    %3247 = vmatpush1.msra.mxu0 %v1544
    %3248 = vmatprep.subr.mxu0 %v1559
    %3249 = vmatpush1.msra.mxu0 %v1558
    %3250 = vmatprep.subr.mxu0 %v1573
    %3251 = vmatpush1.msra.mxu0 %v1572
    %3252 = vmatprep.subr.mxu0 %v1587
    %3253 = vmatpush1.msra.mxu0 %v1586
    %3254 = vmatprep.subr.mxu0 %v1601
    %3255 = vmatpush1.msra.mxu0 %v1600
    %3256 = vmatprep.subr.mxu0 %v1615
    %3257 = vmatpush1.msra.mxu0 %v1614
    %3258 = vmatprep.subr.mxu0 %v1629
    %3259 = vmatpush1.msra.mxu0 %v1628
    %3260 = vmatprep.subr.mxu0 %v1643
    %3261 = vmatpush1.msra.mxu0 %v1642
    %3262 = vmatprep.subr.mxu0 %v1657
    %3263 = vmatpush1.msra.mxu0 %v1656
    %3264 = vmatprep.subr.mxu0 %v1671
    %3265 = vmatpush1.msra.mxu0 %v1670
    %3266 = vmatprep.subr.mxu0 %v1685
    %3267 = vmatpush1.msra.mxu0 %v1684
    %3268 = vmatprep.subr.mxu0 %v1699
    %3269 = vmatpush1.msra.mxu0 %v1698
    %3270 = vmatprep.subr.mxu0 %v1713
    %3271 = vmatpush1.msra.mxu0 %v1712
    %3272 = vmatprep.subr.mxu0 %v1727
    %3273 = vmatpush1.msra.mxu0 %v1726
    %3274 = vmatprep.mubr.f32.mxu0 %v167
    %3275 = vmatmul.mubr.f32.gmra.mrb[0].mxu0 %v166
    %v3276 = vpop.f32.mrb[0].mxu0
    %v3277 = vadd.f32 %v3206, %v3276
    %v3278 = vpop.f32.mrb[0].mxu0
    %v3279 = vadd.f32 %v3208, %v3278
    %3280 = vdwg.mxu0
    %3281 = vmatprep.subr.mxu0 %v1741
    %3282 = vmatpush1.msra.mxu0 %v1740
    %3283 = vmatprep.subr.mxu0 %v1755
    %3284 = vmatpush1.msra.mxu0 %v1754
    %3285 = vmatprep.subr.mxu0 %v1769
    %3286 = vmatpush1.msra.mxu0 %v1768
    %3287 = vmatprep.subr.mxu0 %v1783
    %3288 = vmatpush1.msra.mxu0 %v1782
    %3289 = vmatprep.subr.mxu0 %v1797
    %3290 = vmatpush1.msra.mxu0 %v1796
    %3291 = vmatprep.subr.mxu0 %v1811
    %3292 = vmatpush1.msra.mxu0 %v1810
    %3293 = vmatprep.subr.mxu0 %v1825
    %3294 = vmatpush1.msra.mxu0 %v1824
    %3295 = vmatprep.subr.mxu0 %v1839
    %3296 = vmatpush1.msra.mxu0 %v1838
    %3297 = vmatprep.subr.mxu0 %v1853
    %3298 = vmatpush1.msra.mxu0 %v1852
    %3299 = vmatprep.subr.mxu0 %v1867
    %3300 = vmatpush1.msra.mxu0 %v1866
    %3301 = vmatprep.subr.mxu0 %v1881
    %3302 = vmatpush1.msra.mxu0 %v1880
    %3303 = vmatprep.subr.mxu0 %v1895
    %3304 = vmatpush1.msra.mxu0 %v1894
    %3305 = vmatprep.subr.mxu0 %v1909
    %3306 = vmatpush1.msra.mxu0 %v1908
    %3307 = vmatprep.subr.mxu0 %v1923
    %3308 = vmatpush1.msra.mxu0 %v1922
    %3309 = vmatprep.subr.mxu0 %v1937
    %3310 = vmatpush1.msra.mxu0 %v1936
    %3311 = vmatprep.subr.mxu0 %v1951
    %3312 = vmatpush1.msra.mxu0 %v1950
    %3313 = vmatprep.subr.mxu0 %v1965
    %3314 = vmatpush1.msra.mxu0 %v1964
    %3315 = vmatprep.subr.mxu0 %v1979
    %3316 = vmatpush1.msra.mxu0 %v1978
    %3317 = vmatprep.subr.mxu0 %v1993
    %3318 = vmatpush1.msra.mxu0 %v1992
    %3319 = vmatprep.subr.mxu0 %v2007
    %3320 = vmatpush1.msra.mxu0 %v2006
    %3321 = vmatprep.subr.mxu0 %v2021
    %3322 = vmatpush1.msra.mxu0 %v2020
    %3323 = vmatprep.subr.mxu0 %v2035
    %3324 = vmatpush1.msra.mxu0 %v2034
    %3325 = vmatprep.subr.mxu0 %v2049
    %3326 = vmatpush1.msra.mxu0 %v2048
    %3327 = vmatprep.subr.mxu0 %v2063
    %3328 = vmatpush1.msra.mxu0 %v2062
    %3329 = vmatprep.subr.mxu0 %v2077
    %3330 = vmatpush1.msra.mxu0 %v2076
    %3331 = vmatprep.subr.mxu0 %v2091
    %3332 = vmatpush1.msra.mxu0 %v2090
    %3333 = vmatprep.subr.mxu0 %v2105
    %3334 = vmatpush1.msra.mxu0 %v2104
    %3335 = vmatprep.subr.mxu0 %v2119
    %3336 = vmatpush1.msra.mxu0 %v2118
    %3337 = vmatprep.subr.mxu0 %v2133
    %3338 = vmatpush1.msra.mxu0 %v2132
    %3339 = vmatprep.subr.mxu0 %v2147
    %3340 = vmatpush1.msra.mxu0 %v2146
    %3341 = vmatprep.subr.mxu0 %v2273
    %3342 = vmatpush1.msra.mxu0 %v2270
    %3343 = vmatprep.subr.mxu0 0.0
    %3344 = vmatpush1.msra.mxu0 0.0
    %3345 = vmatprep.mubr.f32.mxu0 %v2242
    %3346 = vmatmul.mubr.f32.gmra.mrb[0].mxu0 %v168
    %v3347 = vpop.f32.mrb[0].mxu0
    %v3348 = vadd.f32 %v3277, %v3347
    %v3349 = vpop.f32.mrb[0].mxu0
    %v3350 = vadd.f32 %v3279, %v3349
    %3351 = vdwg.mxu0
    %3352 = vmatprep.subr.mxu0 %v847
    %3353 = vmatpush1.msra.mxu0 %v846
    %3354 = vmatprep.subr.mxu0 %v861
    %3355 = vmatpush1.msra.mxu0 %v860
    %3356 = vmatprep.subr.mxu0 %v875
    %3357 = vmatpush1.msra.mxu0 %v874
    %3358 = vmatprep.subr.mxu0 %v889
    %3359 = vmatpush1.msra.mxu0 %v888
    %3360 = vmatprep.subr.mxu0 %v903
    %3361 = vmatpush1.msra.mxu0 %v902
    %3362 = vmatprep.subr.mxu0 %v917
    %3363 = vmatpush1.msra.mxu0 %v916
    %3364 = vmatprep.subr.mxu0 %v931
    %3365 = vmatpush1.msra.mxu0 %v930
    %3366 = vmatprep.subr.mxu0 %v945
    %3367 = vmatpush1.msra.mxu0 %v944
    %3368 = vmatprep.subr.mxu0 %v959
    %3369 = vmatpush1.msra.mxu0 %v958
    %3370 = vmatprep.subr.mxu0 %v973
    %3371 = vmatpush1.msra.mxu0 %v972
    %3372 = vmatprep.subr.mxu0 %v987
    %3373 = vmatpush1.msra.mxu0 %v986
    %3374 = vmatprep.subr.mxu0 %v1001
    %3375 = vmatpush1.msra.mxu0 %v1000
    %3376 = vmatprep.subr.mxu0 %v1015
    %3377 = vmatpush1.msra.mxu0 %v1014
    %3378 = vmatprep.subr.mxu0 %v1029
    %3379 = vmatpush1.msra.mxu0 %v1028
    %3380 = vmatprep.subr.mxu0 %v1043
    %3381 = vmatpush1.msra.mxu0 %v1042
    %3382 = vmatprep.subr.mxu0 %v1057
    %3383 = vmatpush1.msra.mxu0 %v1056
    %3384 = vmatprep.subr.mxu0 %v1071
    %3385 = vmatpush1.msra.mxu0 %v1070
    %3386 = vmatprep.subr.mxu0 %v1085
    %3387 = vmatpush1.msra.mxu0 %v1084
    %3388 = vmatprep.subr.mxu0 %v1099
    %3389 = vmatpush1.msra.mxu0 %v1098
    %3390 = vmatprep.subr.mxu0 %v1113
    %3391 = vmatpush1.msra.mxu0 %v1112
    %3392 = vmatprep.subr.mxu0 %v1127
    %3393 = vmatpush1.msra.mxu0 %v1126
    %3394 = vmatprep.subr.mxu0 %v1141
    %3395 = vmatpush1.msra.mxu0 %v1140
    %3396 = vmatprep.subr.mxu0 %v1155
    %3397 = vmatpush1.msra.mxu0 %v1154
    %3398 = vmatprep.subr.mxu0 %v1169
    %3399 = vmatpush1.msra.mxu0 %v1168
    %3400 = vmatprep.subr.mxu0 %v1183
    %3401 = vmatpush1.msra.mxu0 %v1182
    %3402 = vmatprep.subr.mxu0 %v1197
    %3403 = vmatpush1.msra.mxu0 %v1196
    %3404 = vmatprep.subr.mxu0 %v1211
    %3405 = vmatpush1.msra.mxu0 %v1210
    %3406 = vmatprep.subr.mxu0 %v1225
    %3407 = vmatpush1.msra.mxu0 %v1224
    %3408 = vmatprep.subr.mxu0 %v1239
    %3409 = vmatpush1.msra.mxu0 %v1238
    %3410 = vmatprep.subr.mxu0 %v1253
    %3411 = vmatpush1.msra.mxu0 %v1252
    %3412 = vmatprep.subr.mxu0 %v1267
    %3413 = vmatpush1.msra.mxu0 %v1266
    %3414 = vmatprep.subr.mxu0 %v1281
    %3415 = vmatpush1.msra.mxu0 %v1280
    %3416 = vmatprep.mubr.f32.mxu0 %v165
    %3417 = vmatmul.mubr.f32.gmra.mrb[0].mxu0 %v164
    %v3418 = vpop.f32.mrb[0].mxu0
    %v3419 = vadd.f32 %v2213, %v3418
    %v3420 = vpop.f32.mrb[0].mxu0
    %v3421 = vadd.f32 %v2217, %v3420
    %3422 = vdwg.mxu0
    %3423 = vmatprep.subr.mxu0 %v1295
    %3424 = vmatpush1.msra.mxu0 %v1294
    %3425 = vmatprep.subr.mxu0 %v1309
    %3426 = vmatpush1.msra.mxu0 %v1308
    %3427 = vmatprep.subr.mxu0 %v1323
    %3428 = vmatpush1.msra.mxu0 %v1322
    %3429 = vmatprep.subr.mxu0 %v1337
    %3430 = vmatpush1.msra.mxu0 %v1336
    %3431 = vmatprep.subr.mxu0 %v1351
    %3432 = vmatpush1.msra.mxu0 %v1350
    %3433 = vmatprep.subr.mxu0 %v1365
    %3434 = vmatpush1.msra.mxu0 %v1364
    %3435 = vmatprep.subr.mxu0 %v1379
    %3436 = vmatpush1.msra.mxu0 %v1378
    %3437 = vmatprep.subr.mxu0 %v1393
    %3438 = vmatpush1.msra.mxu0 %v1392
    %3439 = vmatprep.subr.mxu0 %v1407
    %3440 = vmatpush1.msra.mxu0 %v1406
    %3441 = vmatprep.subr.mxu0 %v1421
    %3442 = vmatpush1.msra.mxu0 %v1420
    %3443 = vmatprep.subr.mxu0 %v1435
    %3444 = vmatpush1.msra.mxu0 %v1434
    %3445 = vmatprep.subr.mxu0 %v1449
    %3446 = vmatpush1.msra.mxu0 %v1448
    %3447 = vmatprep.subr.mxu0 %v1463
    %3448 = vmatpush1.msra.mxu0 %v1462
    %3449 = vmatprep.subr.mxu0 %v1477
    %3450 = vmatpush1.msra.mxu0 %v1476
    %3451 = vmatprep.subr.mxu0 %v1491
    %3452 = vmatpush1.msra.mxu0 %v1490
    %3453 = vmatprep.subr.mxu0 %v1505
    %3454 = vmatpush1.msra.mxu0 %v1504
    %3455 = vmatprep.subr.mxu0 %v1519
    %3456 = vmatpush1.msra.mxu0 %v1518
    %3457 = vmatprep.subr.mxu0 %v1533
    %3458 = vmatpush1.msra.mxu0 %v1532
    %3459 = vmatprep.subr.mxu0 %v1547
    %3460 = vmatpush1.msra.mxu0 %v1546
    %3461 = vmatprep.subr.mxu0 %v1561
    %3462 = vmatpush1.msra.mxu0 %v1560
    %3463 = vmatprep.subr.mxu0 %v1575
    %3464 = vmatpush1.msra.mxu0 %v1574
    %3465 = vmatprep.subr.mxu0 %v1589
    %3466 = vmatpush1.msra.mxu0 %v1588
    %3467 = vmatprep.subr.mxu0 %v1603
    %3468 = vmatpush1.msra.mxu0 %v1602
    %3469 = vmatprep.subr.mxu0 %v1617
    %3470 = vmatpush1.msra.mxu0 %v1616
    %3471 = vmatprep.subr.mxu0 %v1631
    %3472 = vmatpush1.msra.mxu0 %v1630
    %3473 = vmatprep.subr.mxu0 %v1645
    %3474 = vmatpush1.msra.mxu0 %v1644
    %3475 = vmatprep.subr.mxu0 %v1659
    %3476 = vmatpush1.msra.mxu0 %v1658
    %3477 = vmatprep.subr.mxu0 %v1673
    %3478 = vmatpush1.msra.mxu0 %v1672
    %3479 = vmatprep.subr.mxu0 %v1687
    %3480 = vmatpush1.msra.mxu0 %v1686
    %3481 = vmatprep.subr.mxu0 %v1701
    %3482 = vmatpush1.msra.mxu0 %v1700
    %3483 = vmatprep.subr.mxu0 %v1715
    %3484 = vmatpush1.msra.mxu0 %v1714
    %3485 = vmatprep.subr.mxu0 %v1729
    %3486 = vmatpush1.msra.mxu0 %v1728
    %3487 = vmatprep.mubr.f32.mxu0 %v167
    %3488 = vmatmul.mubr.f32.gmra.mrb[0].mxu0 %v166
    %v3489 = vpop.f32.mrb[0].mxu0
    %v3490 = vadd.f32 %v3419, %v3489
    %v3491 = vpop.f32.mrb[0].mxu0
    %v3492 = vadd.f32 %v3421, %v3491
    %3493 = vdwg.mxu0
    %3494 = vmatprep.subr.mxu0 %v1743
    %3495 = vmatpush1.msra.mxu0 %v1742
    %3496 = vmatprep.subr.mxu0 %v1757
    %3497 = vmatpush1.msra.mxu0 %v1756
    %3498 = vmatprep.subr.mxu0 %v1771
    %3499 = vmatpush1.msra.mxu0 %v1770
    %3500 = vmatprep.subr.mxu0 %v1785
    %3501 = vmatpush1.msra.mxu0 %v1784
    %3502 = vmatprep.subr.mxu0 %v1799
    %3503 = vmatpush1.msra.mxu0 %v1798
    %3504 = vmatprep.subr.mxu0 %v1813
    %3505 = vmatpush1.msra.mxu0 %v1812
    %3506 = vmatprep.subr.mxu0 %v1827
    %3507 = vmatpush1.msra.mxu0 %v1826
    %3508 = vmatprep.subr.mxu0 %v1841
    %3509 = vmatpush1.msra.mxu0 %v1840
    %3510 = vmatprep.subr.mxu0 %v1855
    %3511 = vmatpush1.msra.mxu0 %v1854
    %3512 = vmatprep.subr.mxu0 %v1869
    %3513 = vmatpush1.msra.mxu0 %v1868
    %3514 = vmatprep.subr.mxu0 %v1883
    %3515 = vmatpush1.msra.mxu0 %v1882
    %3516 = vmatprep.subr.mxu0 %v1897
    %3517 = vmatpush1.msra.mxu0 %v1896
    %3518 = vmatprep.subr.mxu0 %v1911
    %3519 = vmatpush1.msra.mxu0 %v1910
    %3520 = vmatprep.subr.mxu0 %v1925
    %3521 = vmatpush1.msra.mxu0 %v1924
    %3522 = vmatprep.subr.mxu0 %v1939
    %3523 = vmatpush1.msra.mxu0 %v1938
    %3524 = vmatprep.subr.mxu0 %v1953
    %3525 = vmatpush1.msra.mxu0 %v1952
    %3526 = vmatprep.subr.mxu0 %v1967
    %3527 = vmatpush1.msra.mxu0 %v1966
    %3528 = vmatprep.subr.mxu0 %v1981
    %3529 = vmatpush1.msra.mxu0 %v1980
    %3530 = vmatprep.subr.mxu0 %v1995
    %3531 = vmatpush1.msra.mxu0 %v1994
    %3532 = vmatprep.subr.mxu0 %v2009
    %3533 = vmatpush1.msra.mxu0 %v2008
    %3534 = vmatprep.subr.mxu0 %v2023
    %3535 = vmatpush1.msra.mxu0 %v2022
    %3536 = vmatprep.subr.mxu0 %v2037
    %3537 = vmatpush1.msra.mxu0 %v2036
    %3538 = vmatprep.subr.mxu0 %v2051
    %3539 = vmatpush1.msra.mxu0 %v2050
    %3540 = vmatprep.subr.mxu0 %v2065
    %3541 = vmatpush1.msra.mxu0 %v2064
    %3542 = vmatprep.subr.mxu0 %v2079
    %3543 = vmatpush1.msra.mxu0 %v2078
    %3544 = vmatprep.subr.mxu0 %v2093
    %3545 = vmatpush1.msra.mxu0 %v2092
    %3546 = vmatprep.subr.mxu0 %v2107
    %3547 = vmatpush1.msra.mxu0 %v2106
    %3548 = vmatprep.subr.mxu0 %v2121
    %3549 = vmatpush1.msra.mxu0 %v2120
    %3550 = vmatprep.subr.mxu0 %v2135
    %3551 = vmatpush1.msra.mxu0 %v2134
    %3552 = vmatprep.subr.mxu0 %v2149
    %3553 = vmatpush1.msra.mxu0 %v2148
    %3554 = vmatprep.subr.mxu0 %v2279
    %3555 = vmatpush1.msra.mxu0 %v2276
    %3556 = vmatprep.subr.mxu0 0.0
    %3557 = vmatpush1.msra.mxu0 0.0
    %3558 = vmatprep.mubr.f32.mxu0 %v2242
    %3559 = vmatmul.mubr.f32.gmra.mrb[0].mxu0 %v168
    %v3560 = vpop.f32.mrb[0].mxu0
    %v3561 = vadd.f32 %v3490, %v3560
    %v3562 = vpop.f32.mrb[0].mxu0
    %v3563 = vadd.f32 %v3492, %v3562
    %3564 = vdwg.mxu0
    %3565 = vmatprep.subr.mxu0 %v849
    %3566 = vmatpush1.msra.mxu0 %v848
    %3567 = vmatprep.subr.mxu0 %v863
    %3568 = vmatpush1.msra.mxu0 %v862
    %3569 = vmatprep.subr.mxu0 %v877
    %3570 = vmatpush1.msra.mxu0 %v876
    %3571 = vmatprep.subr.mxu0 %v891
    %3572 = vmatpush1.msra.mxu0 %v890
    %3573 = vmatprep.subr.mxu0 %v905
    %3574 = vmatpush1.msra.mxu0 %v904
    %3575 = vmatprep.subr.mxu0 %v919
    %3576 = vmatpush1.msra.mxu0 %v918
    %3577 = vmatprep.subr.mxu0 %v933
    %3578 = vmatpush1.msra.mxu0 %v932
    %3579 = vmatprep.subr.mxu0 %v947
    %3580 = vmatpush1.msra.mxu0 %v946
    %3581 = vmatprep.subr.mxu0 %v961
    %3582 = vmatpush1.msra.mxu0 %v960
    %3583 = vmatprep.subr.mxu0 %v975
    %3584 = vmatpush1.msra.mxu0 %v974
    %3585 = vmatprep.subr.mxu0 %v989
    %3586 = vmatpush1.msra.mxu0 %v988
    %3587 = vmatprep.subr.mxu0 %v1003
    %3588 = vmatpush1.msra.mxu0 %v1002
    %3589 = vmatprep.subr.mxu0 %v1017
    %3590 = vmatpush1.msra.mxu0 %v1016
    %3591 = vmatprep.subr.mxu0 %v1031
    %3592 = vmatpush1.msra.mxu0 %v1030
    %3593 = vmatprep.subr.mxu0 %v1045
    %3594 = vmatpush1.msra.mxu0 %v1044
    %3595 = vmatprep.subr.mxu0 %v1059
    %3596 = vmatpush1.msra.mxu0 %v1058
    %3597 = vmatprep.subr.mxu0 %v1073
    %3598 = vmatpush1.msra.mxu0 %v1072
    %3599 = vmatprep.subr.mxu0 %v1087
    %3600 = vmatpush1.msra.mxu0 %v1086
    %3601 = vmatprep.subr.mxu0 %v1101
    %3602 = vmatpush1.msra.mxu0 %v1100
    %3603 = vmatprep.subr.mxu0 %v1115
    %3604 = vmatpush1.msra.mxu0 %v1114
    %3605 = vmatprep.subr.mxu0 %v1129
    %3606 = vmatpush1.msra.mxu0 %v1128
    %3607 = vmatprep.subr.mxu0 %v1143
    %3608 = vmatpush1.msra.mxu0 %v1142
    %3609 = vmatprep.subr.mxu0 %v1157
    %3610 = vmatpush1.msra.mxu0 %v1156
    %3611 = vmatprep.subr.mxu0 %v1171
    %3612 = vmatpush1.msra.mxu0 %v1170
    %3613 = vmatprep.subr.mxu0 %v1185
    %3614 = vmatpush1.msra.mxu0 %v1184
    %3615 = vmatprep.subr.mxu0 %v1199
    %3616 = vmatpush1.msra.mxu0 %v1198
    %3617 = vmatprep.subr.mxu0 %v1213
    %3618 = vmatpush1.msra.mxu0 %v1212
    %3619 = vmatprep.subr.mxu0 %v1227
    %3620 = vmatpush1.msra.mxu0 %v1226
    %3621 = vmatprep.subr.mxu0 %v1241
    %3622 = vmatpush1.msra.mxu0 %v1240
    %3623 = vmatprep.subr.mxu0 %v1255
    %3624 = vmatpush1.msra.mxu0 %v1254
    %3625 = vmatprep.subr.mxu0 %v1269
    %3626 = vmatpush1.msra.mxu0 %v1268
    %3627 = vmatprep.subr.mxu0 %v1283
    %3628 = vmatpush1.msra.mxu0 %v1282
    %3629 = vmatprep.mubr.f32.mxu0 %v165
    %3630 = vmatmul.mubr.f32.gmra.mrb[0].mxu0 %v164
    %v3631 = vpop.f32.mrb[0].mxu0
    %v3632 = vadd.f32 %v2221, %v3631
    %v3633 = vpop.f32.mrb[0].mxu0
    %v3634 = vadd.f32 %v2225, %v3633
    %3635 = vdwg.mxu0
    %3636 = vmatprep.subr.mxu0 %v1297
    %3637 = vmatpush1.msra.mxu0 %v1296
    %3638 = vmatprep.subr.mxu0 %v1311
    %3639 = vmatpush1.msra.mxu0 %v1310
    %3640 = vmatprep.subr.mxu0 %v1325
    %3641 = vmatpush1.msra.mxu0 %v1324
    %3642 = vmatprep.subr.mxu0 %v1339
    %3643 = vmatpush1.msra.mxu0 %v1338
    %3644 = vmatprep.subr.mxu0 %v1353
    %3645 = vmatpush1.msra.mxu0 %v1352
    %3646 = vmatprep.subr.mxu0 %v1367
    %3647 = vmatpush1.msra.mxu0 %v1366
    %3648 = vmatprep.subr.mxu0 %v1381
    %3649 = vmatpush1.msra.mxu0 %v1380
    %3650 = vmatprep.subr.mxu0 %v1395
    %3651 = vmatpush1.msra.mxu0 %v1394
    %3652 = vmatprep.subr.mxu0 %v1409
    %3653 = vmatpush1.msra.mxu0 %v1408
    %3654 = vmatprep.subr.mxu0 %v1423
    %3655 = vmatpush1.msra.mxu0 %v1422
    %3656 = vmatprep.subr.mxu0 %v1437
    %3657 = vmatpush1.msra.mxu0 %v1436
    %3658 = vmatprep.subr.mxu0 %v1451
    %3659 = vmatpush1.msra.mxu0 %v1450
    %3660 = vmatprep.subr.mxu0 %v1465
    %3661 = vmatpush1.msra.mxu0 %v1464
    %3662 = vmatprep.subr.mxu0 %v1479
    %3663 = vmatpush1.msra.mxu0 %v1478
    %3664 = vmatprep.subr.mxu0 %v1493
    %3665 = vmatpush1.msra.mxu0 %v1492
    %3666 = vmatprep.subr.mxu0 %v1507
    %3667 = vmatpush1.msra.mxu0 %v1506
    %3668 = vmatprep.subr.mxu0 %v1521
    %3669 = vmatpush1.msra.mxu0 %v1520
    %3670 = vmatprep.subr.mxu0 %v1535
    %3671 = vmatpush1.msra.mxu0 %v1534
    %3672 = vmatprep.subr.mxu0 %v1549
    %3673 = vmatpush1.msra.mxu0 %v1548
    %3674 = vmatprep.subr.mxu0 %v1563
    %3675 = vmatpush1.msra.mxu0 %v1562
    %3676 = vmatprep.subr.mxu0 %v1577
    %3677 = vmatpush1.msra.mxu0 %v1576
    %3678 = vmatprep.subr.mxu0 %v1591
    %3679 = vmatpush1.msra.mxu0 %v1590
    %3680 = vmatprep.subr.mxu0 %v1605
    %3681 = vmatpush1.msra.mxu0 %v1604
    %3682 = vmatprep.subr.mxu0 %v1619
    %3683 = vmatpush1.msra.mxu0 %v1618
    %3684 = vmatprep.subr.mxu0 %v1633
    %3685 = vmatpush1.msra.mxu0 %v1632
    %3686 = vmatprep.subr.mxu0 %v1647
    %3687 = vmatpush1.msra.mxu0 %v1646
    %3688 = vmatprep.subr.mxu0 %v1661
    %3689 = vmatpush1.msra.mxu0 %v1660
    %3690 = vmatprep.subr.mxu0 %v1675
    %3691 = vmatpush1.msra.mxu0 %v1674
    %3692 = vmatprep.subr.mxu0 %v1689
    %3693 = vmatpush1.msra.mxu0 %v1688
    %3694 = vmatprep.subr.mxu0 %v1703
    %3695 = vmatpush1.msra.mxu0 %v1702
    %3696 = vmatprep.subr.mxu0 %v1717
    %3697 = vmatpush1.msra.mxu0 %v1716
    %3698 = vmatprep.subr.mxu0 %v1731
    %3699 = vmatpush1.msra.mxu0 %v1730
    %3700 = vmatprep.mubr.f32.mxu0 %v167
    %3701 = vmatmul.mubr.f32.gmra.mrb[0].mxu0 %v166
    %v3702 = vpop.f32.mrb[0].mxu0
    %v3703 = vadd.f32 %v3632, %v3702
    %v3704 = vpop.f32.mrb[0].mxu0
    %v3705 = vadd.f32 %v3634, %v3704
    %3706 = vdwg.mxu0
    %3707 = vmatprep.subr.mxu0 %v1745
    %3708 = vmatpush1.msra.mxu0 %v1744
    %3709 = vmatprep.subr.mxu0 %v1759
    %3710 = vmatpush1.msra.mxu0 %v1758
    %3711 = vmatprep.subr.mxu0 %v1773
    %3712 = vmatpush1.msra.mxu0 %v1772
    %3713 = vmatprep.subr.mxu0 %v1787
    %3714 = vmatpush1.msra.mxu0 %v1786
    %3715 = vmatprep.subr.mxu0 %v1801
    %3716 = vmatpush1.msra.mxu0 %v1800
    %3717 = vmatprep.subr.mxu0 %v1815
    %3718 = vmatpush1.msra.mxu0 %v1814
    %3719 = vmatprep.subr.mxu0 %v1829
    %3720 = vmatpush1.msra.mxu0 %v1828
    %3721 = vmatprep.subr.mxu0 %v1843
    %3722 = vmatpush1.msra.mxu0 %v1842
    %3723 = vmatprep.subr.mxu0 %v1857
    %3724 = vmatpush1.msra.mxu0 %v1856
    %3725 = vmatprep.subr.mxu0 %v1871
    %3726 = vmatpush1.msra.mxu0 %v1870
    %3727 = vmatprep.subr.mxu0 %v1885
    %3728 = vmatpush1.msra.mxu0 %v1884
    %3729 = vmatprep.subr.mxu0 %v1899
    %3730 = vmatpush1.msra.mxu0 %v1898
    %3731 = vmatprep.subr.mxu0 %v1913
    %3732 = vmatpush1.msra.mxu0 %v1912
    %3733 = vmatprep.subr.mxu0 %v1927
    %3734 = vmatpush1.msra.mxu0 %v1926
    %3735 = vmatprep.subr.mxu0 %v1941
    %3736 = vmatpush1.msra.mxu0 %v1940
    %3737 = vmatprep.subr.mxu0 %v1955
    %3738 = vmatpush1.msra.mxu0 %v1954
    %3739 = vmatprep.subr.mxu0 %v1969
    %3740 = vmatpush1.msra.mxu0 %v1968
    %3741 = vmatprep.subr.mxu0 %v1983
    %3742 = vmatpush1.msra.mxu0 %v1982
    %3743 = vmatprep.subr.mxu0 %v1997
    %3744 = vmatpush1.msra.mxu0 %v1996
    %3745 = vmatprep.subr.mxu0 %v2011
    %3746 = vmatpush1.msra.mxu0 %v2010
    %3747 = vmatprep.subr.mxu0 %v2025
    %3748 = vmatpush1.msra.mxu0 %v2024
    %3749 = vmatprep.subr.mxu0 %v2039
    %3750 = vmatpush1.msra.mxu0 %v2038
    %3751 = vmatprep.subr.mxu0 %v2053
    %3752 = vmatpush1.msra.mxu0 %v2052
    %3753 = vmatprep.subr.mxu0 %v2067
    %3754 = vmatpush1.msra.mxu0 %v2066
    %3755 = vmatprep.subr.mxu0 %v2081
    %3756 = vmatpush1.msra.mxu0 %v2080
    %3757 = vmatprep.subr.mxu0 %v2095
    %3758 = vmatpush1.msra.mxu0 %v2094
    %3759 = vmatprep.subr.mxu0 %v2109
    %3760 = vmatpush1.msra.mxu0 %v2108
    %3761 = vmatprep.subr.mxu0 %v2123
    %3762 = vmatpush1.msra.mxu0 %v2122
    %3763 = vmatprep.subr.mxu0 %v2137
    %3764 = vmatpush1.msra.mxu0 %v2136
    %3765 = vmatprep.subr.mxu0 %v2151
    %3766 = vmatpush1.msra.mxu0 %v2150
    %3767 = vmatprep.subr.mxu0 %v2285
    %3768 = vmatpush1.msra.mxu0 %v2282
    %3769 = vmatprep.subr.mxu0 0.0
    %3770 = vmatpush1.msra.mxu0 0.0
    %3771 = vmatprep.mubr.f32.mxu0 %v2242
    %3772 = vmatmul.mubr.f32.gmra.mrb[0].mxu0 %v168
    %v3773 = vpop.f32.mrb[0].mxu0
    %v3774 = vadd.f32 %v3703, %v3773
    %v3775 = vpop.f32.mrb[0].mxu0
    %v3776 = vadd.f32 %v3705, %v3775
    %3777 = vdwg.mxu0
    %3784 = vrot.lane.b32.xlu0 %v164, 100
    %v3785 = vpop.permute.xlu0 %3784
    %3786 = vrot.lane.b32.xlu0 %v165, 100
    %v3787 = vpop.permute.xlu0 %3786
    %3788 = vrot.lane.b32.xlu0 %v166, 100
    %v3789 = vpop.permute.xlu0 %3788
    %3790 = vrot.lane.b32.xlu0 %v167, 100
    %v3791 = vpop.permute.xlu0 %3790
    %3792 = vrot.lane.b32.xlu0 %v168, 100
    %v3793 = vpop.permute.xlu0 %3792
    %3794 = vrot.lane.b32.xlu0 %v169, 100
    %v3795 = vpop.permute.xlu0 %3794
    %3796 = vrot.lane.b32.xlu0 %v170, 100
    %v3797 = vpop.permute.xlu0 %3796
    %vm3798 = vcmask 818176
    %v3799 = vsel %vm3798, %v3785, %v3787
    %v3800 = vsel %vm3798, %v3787, %v3789
    %v3801 = vsel %vm3798, %v3789, %v3791
    %v3802 = vsel %vm3798, %v3791, %v3793
    %v3803 = vsel %vm3798, %v3793, %v3795
    %v3804 = vsel %vm3798, %v3795, %v3797
    %v3810 = vsel %vm2240, %v3804, 0
    %3812 = vmatprep.subr.mxu0 %v837
    %3813 = vmatpush1.msra.mxu0 %v836
    %3814 = vmatprep.subr.mxu0 %v851
    %3815 = vmatpush1.msra.mxu0 %v850
    %3816 = vmatprep.subr.mxu0 %v865
    %3817 = vmatpush1.msra.mxu0 %v864
    %3818 = vmatprep.subr.mxu0 %v879
    %3819 = vmatpush1.msra.mxu0 %v878
    %3820 = vmatprep.subr.mxu0 %v893
    %3821 = vmatpush1.msra.mxu0 %v892
    %3822 = vmatprep.subr.mxu0 %v907
    %3823 = vmatpush1.msra.mxu0 %v906
    %3824 = vmatprep.subr.mxu0 %v921
    %3825 = vmatpush1.msra.mxu0 %v920
    %3826 = vmatprep.subr.mxu0 %v935
    %3827 = vmatpush1.msra.mxu0 %v934
    %3828 = vmatprep.subr.mxu0 %v949
    %3829 = vmatpush1.msra.mxu0 %v948
    %3830 = vmatprep.subr.mxu0 %v963
    %3831 = vmatpush1.msra.mxu0 %v962
    %3832 = vmatprep.subr.mxu0 %v977
    %3833 = vmatpush1.msra.mxu0 %v976
    %3834 = vmatprep.subr.mxu0 %v991
    %3835 = vmatpush1.msra.mxu0 %v990
    %3836 = vmatprep.subr.mxu0 %v1005
    %3837 = vmatpush1.msra.mxu0 %v1004
    %3838 = vmatprep.subr.mxu0 %v1019
    %3839 = vmatpush1.msra.mxu0 %v1018
    %3840 = vmatprep.subr.mxu0 %v1033
    %3841 = vmatpush1.msra.mxu0 %v1032
    %3842 = vmatprep.subr.mxu0 %v1047
    %3843 = vmatpush1.msra.mxu0 %v1046
    %3844 = vmatprep.subr.mxu0 %v1061
    %3845 = vmatpush1.msra.mxu0 %v1060
    %3846 = vmatprep.subr.mxu0 %v1075
    %3847 = vmatpush1.msra.mxu0 %v1074
    %3848 = vmatprep.subr.mxu0 %v1089
    %3849 = vmatpush1.msra.mxu0 %v1088
    %3850 = vmatprep.subr.mxu0 %v1103
    %3851 = vmatpush1.msra.mxu0 %v1102
    %3852 = vmatprep.subr.mxu0 %v1117
    %3853 = vmatpush1.msra.mxu0 %v1116
    %3854 = vmatprep.subr.mxu0 %v1131
    %3855 = vmatpush1.msra.mxu0 %v1130
    %3856 = vmatprep.subr.mxu0 %v1145
    %3857 = vmatpush1.msra.mxu0 %v1144
    %3858 = vmatprep.subr.mxu0 %v1159
    %3859 = vmatpush1.msra.mxu0 %v1158
    %3860 = vmatprep.subr.mxu0 %v1173
    %3861 = vmatpush1.msra.mxu0 %v1172
    %3862 = vmatprep.subr.mxu0 %v1187
    %3863 = vmatpush1.msra.mxu0 %v1186
    %3864 = vmatprep.subr.mxu0 %v1201
    %3865 = vmatpush1.msra.mxu0 %v1200
    %3866 = vmatprep.subr.mxu0 %v1215
    %3867 = vmatpush1.msra.mxu0 %v1214
    %3868 = vmatprep.subr.mxu0 %v1229
    %3869 = vmatpush1.msra.mxu0 %v1228
    %3870 = vmatprep.subr.mxu0 %v1243
    %3871 = vmatpush1.msra.mxu0 %v1242
    %3872 = vmatprep.subr.mxu0 %v1257
    %3873 = vmatpush1.msra.mxu0 %v1256
    %3874 = vmatprep.subr.mxu0 %v1271
    %3875 = vmatpush1.msra.mxu0 %v1270
    %3876 = vmatprep.mubr.f32.mxu0 %v3800
    %3877 = vmatmul.mubr.f32.gmra.mrb[0].mxu0 %v3799
    %v3878 = vpop.f32.mrb[0].mxu0
    %v3879 = vadd.f32 %v2173, %v3878
    %v3880 = vpop.f32.mrb[0].mxu0
    %v3881 = vadd.f32 %v2177, %v3880
    %3882 = vdwg.mxu0
    %3883 = vmatprep.subr.mxu0 %v1285
    %3884 = vmatpush1.msra.mxu0 %v1284
    %3885 = vmatprep.subr.mxu0 %v1299
    %3886 = vmatpush1.msra.mxu0 %v1298
    %3887 = vmatprep.subr.mxu0 %v1313
    %3888 = vmatpush1.msra.mxu0 %v1312
    %3889 = vmatprep.subr.mxu0 %v1327
    %3890 = vmatpush1.msra.mxu0 %v1326
    %3891 = vmatprep.subr.mxu0 %v1341
    %3892 = vmatpush1.msra.mxu0 %v1340
    %3893 = vmatprep.subr.mxu0 %v1355
    %3894 = vmatpush1.msra.mxu0 %v1354
    %3895 = vmatprep.subr.mxu0 %v1369
    %3896 = vmatpush1.msra.mxu0 %v1368
    %3897 = vmatprep.subr.mxu0 %v1383
    %3898 = vmatpush1.msra.mxu0 %v1382
    %3899 = vmatprep.subr.mxu0 %v1397
    %3900 = vmatpush1.msra.mxu0 %v1396
    %3901 = vmatprep.subr.mxu0 %v1411
    %3902 = vmatpush1.msra.mxu0 %v1410
    %3903 = vmatprep.subr.mxu0 %v1425
    %3904 = vmatpush1.msra.mxu0 %v1424
    %3905 = vmatprep.subr.mxu0 %v1439
    %3906 = vmatpush1.msra.mxu0 %v1438
    %3907 = vmatprep.subr.mxu0 %v1453
    %3908 = vmatpush1.msra.mxu0 %v1452
    %3909 = vmatprep.subr.mxu0 %v1467
    %3910 = vmatpush1.msra.mxu0 %v1466
    %3911 = vmatprep.subr.mxu0 %v1481
    %3912 = vmatpush1.msra.mxu0 %v1480
    %3913 = vmatprep.subr.mxu0 %v1495
    %3914 = vmatpush1.msra.mxu0 %v1494
    %3915 = vmatprep.subr.mxu0 %v1509
    %3916 = vmatpush1.msra.mxu0 %v1508
    %3917 = vmatprep.subr.mxu0 %v1523
    %3918 = vmatpush1.msra.mxu0 %v1522
    %3919 = vmatprep.subr.mxu0 %v1537
    %3920 = vmatpush1.msra.mxu0 %v1536
    %3921 = vmatprep.subr.mxu0 %v1551
    %3922 = vmatpush1.msra.mxu0 %v1550
    %3923 = vmatprep.subr.mxu0 %v1565
    %3924 = vmatpush1.msra.mxu0 %v1564
    %3925 = vmatprep.subr.mxu0 %v1579
    %3926 = vmatpush1.msra.mxu0 %v1578
    %3927 = vmatprep.subr.mxu0 %v1593
    %3928 = vmatpush1.msra.mxu0 %v1592
    %3929 = vmatprep.subr.mxu0 %v1607
    %3930 = vmatpush1.msra.mxu0 %v1606
    %3931 = vmatprep.subr.mxu0 %v1621
    %3932 = vmatpush1.msra.mxu0 %v1620
    %3933 = vmatprep.subr.mxu0 %v1635
    %3934 = vmatpush1.msra.mxu0 %v1634
    %3935 = vmatprep.subr.mxu0 %v1649
    %3936 = vmatpush1.msra.mxu0 %v1648
    %3937 = vmatprep.subr.mxu0 %v1663
    %3938 = vmatpush1.msra.mxu0 %v1662
    %3939 = vmatprep.subr.mxu0 %v1677
    %3940 = vmatpush1.msra.mxu0 %v1676
    %3941 = vmatprep.subr.mxu0 %v1691
    %3942 = vmatpush1.msra.mxu0 %v1690
    %3943 = vmatprep.subr.mxu0 %v1705
    %3944 = vmatpush1.msra.mxu0 %v1704
    %3945 = vmatprep.subr.mxu0 %v1719
    %3946 = vmatpush1.msra.mxu0 %v1718
    %3947 = vmatprep.mubr.f32.mxu0 %v3802
    %3948 = vmatmul.mubr.f32.gmra.mrb[0].mxu0 %v3801
    %v3949 = vpop.f32.mrb[0].mxu0
    %v3950 = vadd.f32 %v3879, %v3949
    %v3951 = vpop.f32.mrb[0].mxu0
    %v3952 = vadd.f32 %v3881, %v3951
    %3953 = vdwg.mxu0
    %3954 = vmatprep.subr.mxu0 %v1733
    %3955 = vmatpush1.msra.mxu0 %v1732
    %3956 = vmatprep.subr.mxu0 %v1747
    %3957 = vmatpush1.msra.mxu0 %v1746
    %3958 = vmatprep.subr.mxu0 %v1761
    %3959 = vmatpush1.msra.mxu0 %v1760
    %3960 = vmatprep.subr.mxu0 %v1775
    %3961 = vmatpush1.msra.mxu0 %v1774
    %3962 = vmatprep.subr.mxu0 %v1789
    %3963 = vmatpush1.msra.mxu0 %v1788
    %3964 = vmatprep.subr.mxu0 %v1803
    %3965 = vmatpush1.msra.mxu0 %v1802
    %3966 = vmatprep.subr.mxu0 %v1817
    %3967 = vmatpush1.msra.mxu0 %v1816
    %3968 = vmatprep.subr.mxu0 %v1831
    %3969 = vmatpush1.msra.mxu0 %v1830
    %3970 = vmatprep.subr.mxu0 %v1845
    %3971 = vmatpush1.msra.mxu0 %v1844
    %3972 = vmatprep.subr.mxu0 %v1859
    %3973 = vmatpush1.msra.mxu0 %v1858
    %3974 = vmatprep.subr.mxu0 %v1873
    %3975 = vmatpush1.msra.mxu0 %v1872
    %3976 = vmatprep.subr.mxu0 %v1887
    %3977 = vmatpush1.msra.mxu0 %v1886
    %3978 = vmatprep.subr.mxu0 %v1901
    %3979 = vmatpush1.msra.mxu0 %v1900
    %3980 = vmatprep.subr.mxu0 %v1915
    %3981 = vmatpush1.msra.mxu0 %v1914
    %3982 = vmatprep.subr.mxu0 %v1929
    %3983 = vmatpush1.msra.mxu0 %v1928
    %3984 = vmatprep.subr.mxu0 %v1943
    %3985 = vmatpush1.msra.mxu0 %v1942
    %3986 = vmatprep.subr.mxu0 %v1957
    %3987 = vmatpush1.msra.mxu0 %v1956
    %3988 = vmatprep.subr.mxu0 %v1971
    %3989 = vmatpush1.msra.mxu0 %v1970
    %3990 = vmatprep.subr.mxu0 %v1985
    %3991 = vmatpush1.msra.mxu0 %v1984
    %3992 = vmatprep.subr.mxu0 %v1999
    %3993 = vmatpush1.msra.mxu0 %v1998
    %3994 = vmatprep.subr.mxu0 %v2013
    %3995 = vmatpush1.msra.mxu0 %v2012
    %3996 = vmatprep.subr.mxu0 %v2027
    %3997 = vmatpush1.msra.mxu0 %v2026
    %3998 = vmatprep.subr.mxu0 %v2041
    %3999 = vmatpush1.msra.mxu0 %v2040
    %4000 = vmatprep.subr.mxu0 %v2055
    %4001 = vmatpush1.msra.mxu0 %v2054
    %4002 = vmatprep.subr.mxu0 %v2069
    %4003 = vmatpush1.msra.mxu0 %v2068
    %4004 = vmatprep.subr.mxu0 %v2083
    %4005 = vmatpush1.msra.mxu0 %v2082
    %4006 = vmatprep.subr.mxu0 %v2097
    %4007 = vmatpush1.msra.mxu0 %v2096
    %4008 = vmatprep.subr.mxu0 %v2111
    %4009 = vmatpush1.msra.mxu0 %v2110
    %4010 = vmatprep.subr.mxu0 %v2125
    %4011 = vmatpush1.msra.mxu0 %v2124
    %4012 = vmatprep.subr.mxu0 %v2139
    %4013 = vmatpush1.msra.mxu0 %v2138
    %4014 = vmatprep.subr.mxu0 %v2249
    %4015 = vmatpush1.msra.mxu0 %v2246
    %4016 = vmatprep.subr.mxu0 0.0
    %4017 = vmatpush1.msra.mxu0 0.0
    %4018 = vmatprep.mubr.f32.mxu0 %v3810
    %4019 = vmatmul.mubr.f32.gmra.mrb[0].mxu0 %v3803
    %v4020 = vpop.f32.mrb[0].mxu0
    %v4021 = vadd.f32 %v3950, %v4020
    %v4022 = vpop.f32.mrb[0].mxu0
    %v4023 = vadd.f32 %v3952, %v4022
    %4024 = vdwg.mxu0
    %4025 = vmatprep.subr.mxu0 %v839
    %4026 = vmatpush1.msra.mxu0 %v838
    %4027 = vmatprep.subr.mxu0 %v853
    %4028 = vmatpush1.msra.mxu0 %v852
    %4029 = vmatprep.subr.mxu0 %v867
    %4030 = vmatpush1.msra.mxu0 %v866
    %4031 = vmatprep.subr.mxu0 %v881
    %4032 = vmatpush1.msra.mxu0 %v880
    %4033 = vmatprep.subr.mxu0 %v895
    %4034 = vmatpush1.msra.mxu0 %v894
    %4035 = vmatprep.subr.mxu0 %v909
    %4036 = vmatpush1.msra.mxu0 %v908
    %4037 = vmatprep.subr.mxu0 %v923
    %4038 = vmatpush1.msra.mxu0 %v922
    %4039 = vmatprep.subr.mxu0 %v937
    %4040 = vmatpush1.msra.mxu0 %v936
    %4041 = vmatprep.subr.mxu0 %v951
    %4042 = vmatpush1.msra.mxu0 %v950
    %4043 = vmatprep.subr.mxu0 %v965
    %4044 = vmatpush1.msra.mxu0 %v964
    %4045 = vmatprep.subr.mxu0 %v979
    %4046 = vmatpush1.msra.mxu0 %v978
    %4047 = vmatprep.subr.mxu0 %v993
    %4048 = vmatpush1.msra.mxu0 %v992
    %4049 = vmatprep.subr.mxu0 %v1007
    %4050 = vmatpush1.msra.mxu0 %v1006
    %4051 = vmatprep.subr.mxu0 %v1021
    %4052 = vmatpush1.msra.mxu0 %v1020
    %4053 = vmatprep.subr.mxu0 %v1035
    %4054 = vmatpush1.msra.mxu0 %v1034
    %4055 = vmatprep.subr.mxu0 %v1049
    %4056 = vmatpush1.msra.mxu0 %v1048
    %4057 = vmatprep.subr.mxu0 %v1063
    %4058 = vmatpush1.msra.mxu0 %v1062
    %4059 = vmatprep.subr.mxu0 %v1077
    %4060 = vmatpush1.msra.mxu0 %v1076
    %4061 = vmatprep.subr.mxu0 %v1091
    %4062 = vmatpush1.msra.mxu0 %v1090
    %4063 = vmatprep.subr.mxu0 %v1105
    %4064 = vmatpush1.msra.mxu0 %v1104
    %4065 = vmatprep.subr.mxu0 %v1119
    %4066 = vmatpush1.msra.mxu0 %v1118
    %4067 = vmatprep.subr.mxu0 %v1133
    %4068 = vmatpush1.msra.mxu0 %v1132
    %4069 = vmatprep.subr.mxu0 %v1147
    %4070 = vmatpush1.msra.mxu0 %v1146
    %4071 = vmatprep.subr.mxu0 %v1161
    %4072 = vmatpush1.msra.mxu0 %v1160
    %4073 = vmatprep.subr.mxu0 %v1175
    %4074 = vmatpush1.msra.mxu0 %v1174
    %4075 = vmatprep.subr.mxu0 %v1189
    %4076 = vmatpush1.msra.mxu0 %v1188
    %4077 = vmatprep.subr.mxu0 %v1203
    %4078 = vmatpush1.msra.mxu0 %v1202
    %4079 = vmatprep.subr.mxu0 %v1217
    %4080 = vmatpush1.msra.mxu0 %v1216
    %4081 = vmatprep.subr.mxu0 %v1231
    %4082 = vmatpush1.msra.mxu0 %v1230
    %4083 = vmatprep.subr.mxu0 %v1245
    %4084 = vmatpush1.msra.mxu0 %v1244
    %4085 = vmatprep.subr.mxu0 %v1259
    %4086 = vmatpush1.msra.mxu0 %v1258
    %4087 = vmatprep.subr.mxu0 %v1273
    %4088 = vmatpush1.msra.mxu0 %v1272
    %4089 = vmatprep.mubr.f32.mxu0 %v3800
    %4090 = vmatmul.mubr.f32.gmra.mrb[0].mxu0 %v3799
    %v4091 = vpop.f32.mrb[0].mxu0
    %v4092 = vadd.f32 %v2181, %v4091
    %v4093 = vpop.f32.mrb[0].mxu0
    %v4094 = vadd.f32 %v2185, %v4093
    %4095 = vdwg.mxu0
    %4096 = vmatprep.subr.mxu0 %v1287
    %4097 = vmatpush1.msra.mxu0 %v1286
    %4098 = vmatprep.subr.mxu0 %v1301
    %4099 = vmatpush1.msra.mxu0 %v1300
    %4100 = vmatprep.subr.mxu0 %v1315
    %4101 = vmatpush1.msra.mxu0 %v1314
    %4102 = vmatprep.subr.mxu0 %v1329
    %4103 = vmatpush1.msra.mxu0 %v1328
    %4104 = vmatprep.subr.mxu0 %v1343
    %4105 = vmatpush1.msra.mxu0 %v1342
    %4106 = vmatprep.subr.mxu0 %v1357
    %4107 = vmatpush1.msra.mxu0 %v1356
    %4108 = vmatprep.subr.mxu0 %v1371
    %4109 = vmatpush1.msra.mxu0 %v1370
    %4110 = vmatprep.subr.mxu0 %v1385
    %4111 = vmatpush1.msra.mxu0 %v1384
    %4112 = vmatprep.subr.mxu0 %v1399
    %4113 = vmatpush1.msra.mxu0 %v1398
    %4114 = vmatprep.subr.mxu0 %v1413
    %4115 = vmatpush1.msra.mxu0 %v1412
    %4116 = vmatprep.subr.mxu0 %v1427
    %4117 = vmatpush1.msra.mxu0 %v1426
    %4118 = vmatprep.subr.mxu0 %v1441
    %4119 = vmatpush1.msra.mxu0 %v1440
    %4120 = vmatprep.subr.mxu0 %v1455
    %4121 = vmatpush1.msra.mxu0 %v1454
    %4122 = vmatprep.subr.mxu0 %v1469
    %4123 = vmatpush1.msra.mxu0 %v1468
    %4124 = vmatprep.subr.mxu0 %v1483
    %4125 = vmatpush1.msra.mxu0 %v1482
    %4126 = vmatprep.subr.mxu0 %v1497
    %4127 = vmatpush1.msra.mxu0 %v1496
    %4128 = vmatprep.subr.mxu0 %v1511
    %4129 = vmatpush1.msra.mxu0 %v1510
    %4130 = vmatprep.subr.mxu0 %v1525
    %4131 = vmatpush1.msra.mxu0 %v1524
    %4132 = vmatprep.subr.mxu0 %v1539
    %4133 = vmatpush1.msra.mxu0 %v1538
    %4134 = vmatprep.subr.mxu0 %v1553
    %4135 = vmatpush1.msra.mxu0 %v1552
    %4136 = vmatprep.subr.mxu0 %v1567
    %4137 = vmatpush1.msra.mxu0 %v1566
    %4138 = vmatprep.subr.mxu0 %v1581
    %4139 = vmatpush1.msra.mxu0 %v1580
    %4140 = vmatprep.subr.mxu0 %v1595
    %4141 = vmatpush1.msra.mxu0 %v1594
    %4142 = vmatprep.subr.mxu0 %v1609
    %4143 = vmatpush1.msra.mxu0 %v1608
    %4144 = vmatprep.subr.mxu0 %v1623
    %4145 = vmatpush1.msra.mxu0 %v1622
    %4146 = vmatprep.subr.mxu0 %v1637
    %4147 = vmatpush1.msra.mxu0 %v1636
    %4148 = vmatprep.subr.mxu0 %v1651
    %4149 = vmatpush1.msra.mxu0 %v1650
    %4150 = vmatprep.subr.mxu0 %v1665
    %4151 = vmatpush1.msra.mxu0 %v1664
    %4152 = vmatprep.subr.mxu0 %v1679
    %4153 = vmatpush1.msra.mxu0 %v1678
    %4154 = vmatprep.subr.mxu0 %v1693
    %4155 = vmatpush1.msra.mxu0 %v1692
    %4156 = vmatprep.subr.mxu0 %v1707
    %4157 = vmatpush1.msra.mxu0 %v1706
    %4158 = vmatprep.subr.mxu0 %v1721
    %4159 = vmatpush1.msra.mxu0 %v1720
    %4160 = vmatprep.mubr.f32.mxu0 %v3802
    %4161 = vmatmul.mubr.f32.gmra.mrb[0].mxu0 %v3801
    %v4162 = vpop.f32.mrb[0].mxu0
    %v4163 = vadd.f32 %v4092, %v4162
    %v4164 = vpop.f32.mrb[0].mxu0
    %v4165 = vadd.f32 %v4094, %v4164
    %4166 = vdwg.mxu0
    %4167 = vmatprep.subr.mxu0 %v1735
    %4168 = vmatpush1.msra.mxu0 %v1734
    %4169 = vmatprep.subr.mxu0 %v1749
    %4170 = vmatpush1.msra.mxu0 %v1748
    %4171 = vmatprep.subr.mxu0 %v1763
    %4172 = vmatpush1.msra.mxu0 %v1762
    %4173 = vmatprep.subr.mxu0 %v1777
    %4174 = vmatpush1.msra.mxu0 %v1776
    %4175 = vmatprep.subr.mxu0 %v1791
    %4176 = vmatpush1.msra.mxu0 %v1790
    %4177 = vmatprep.subr.mxu0 %v1805
    %4178 = vmatpush1.msra.mxu0 %v1804
    %4179 = vmatprep.subr.mxu0 %v1819
    %4180 = vmatpush1.msra.mxu0 %v1818
    %4181 = vmatprep.subr.mxu0 %v1833
    %4182 = vmatpush1.msra.mxu0 %v1832
    %4183 = vmatprep.subr.mxu0 %v1847
    %4184 = vmatpush1.msra.mxu0 %v1846
    %4185 = vmatprep.subr.mxu0 %v1861
    %4186 = vmatpush1.msra.mxu0 %v1860
    %4187 = vmatprep.subr.mxu0 %v1875
    %4188 = vmatpush1.msra.mxu0 %v1874
    %4189 = vmatprep.subr.mxu0 %v1889
    %4190 = vmatpush1.msra.mxu0 %v1888
    %4191 = vmatprep.subr.mxu0 %v1903
    %4192 = vmatpush1.msra.mxu0 %v1902
    %4193 = vmatprep.subr.mxu0 %v1917
    %4194 = vmatpush1.msra.mxu0 %v1916
    %4195 = vmatprep.subr.mxu0 %v1931
    %4196 = vmatpush1.msra.mxu0 %v1930
    %4197 = vmatprep.subr.mxu0 %v1945
    %4198 = vmatpush1.msra.mxu0 %v1944
    %4199 = vmatprep.subr.mxu0 %v1959
    %4200 = vmatpush1.msra.mxu0 %v1958
    %4201 = vmatprep.subr.mxu0 %v1973
    %4202 = vmatpush1.msra.mxu0 %v1972
    %4203 = vmatprep.subr.mxu0 %v1987
    %4204 = vmatpush1.msra.mxu0 %v1986
    %4205 = vmatprep.subr.mxu0 %v2001
    %4206 = vmatpush1.msra.mxu0 %v2000
    %4207 = vmatprep.subr.mxu0 %v2015
    %4208 = vmatpush1.msra.mxu0 %v2014
    %4209 = vmatprep.subr.mxu0 %v2029
    %4210 = vmatpush1.msra.mxu0 %v2028
    %4211 = vmatprep.subr.mxu0 %v2043
    %4212 = vmatpush1.msra.mxu0 %v2042
    %4213 = vmatprep.subr.mxu0 %v2057
    %4214 = vmatpush1.msra.mxu0 %v2056
    %4215 = vmatprep.subr.mxu0 %v2071
    %4216 = vmatpush1.msra.mxu0 %v2070
    %4217 = vmatprep.subr.mxu0 %v2085
    %4218 = vmatpush1.msra.mxu0 %v2084
    %4219 = vmatprep.subr.mxu0 %v2099
    %4220 = vmatpush1.msra.mxu0 %v2098
    %4221 = vmatprep.subr.mxu0 %v2113
    %4222 = vmatpush1.msra.mxu0 %v2112
    %4223 = vmatprep.subr.mxu0 %v2127
    %4224 = vmatpush1.msra.mxu0 %v2126
    %4225 = vmatprep.subr.mxu0 %v2141
    %4226 = vmatpush1.msra.mxu0 %v2140
    %4227 = vmatprep.subr.mxu0 %v2255
    %4228 = vmatpush1.msra.mxu0 %v2252
    %4229 = vmatprep.subr.mxu0 0.0
    %4230 = vmatpush1.msra.mxu0 0.0
    %4231 = vmatprep.mubr.f32.mxu0 %v3810
    %4232 = vmatmul.mubr.f32.gmra.mrb[0].mxu0 %v3803
    %v4233 = vpop.f32.mrb[0].mxu0
    %v4234 = vadd.f32 %v4163, %v4233
    %v4235 = vpop.f32.mrb[0].mxu0
    %v4236 = vadd.f32 %v4165, %v4235
    %4237 = vdwg.mxu0
    %4238 = vmatprep.subr.mxu0 %v841
    %4239 = vmatpush1.msra.mxu0 %v840
    %4240 = vmatprep.subr.mxu0 %v855
    %4241 = vmatpush1.msra.mxu0 %v854
    %4242 = vmatprep.subr.mxu0 %v869
    %4243 = vmatpush1.msra.mxu0 %v868
    %4244 = vmatprep.subr.mxu0 %v883
    %4245 = vmatpush1.msra.mxu0 %v882
    %4246 = vmatprep.subr.mxu0 %v897
    %4247 = vmatpush1.msra.mxu0 %v896
    %4248 = vmatprep.subr.mxu0 %v911
    %4249 = vmatpush1.msra.mxu0 %v910
    %4250 = vmatprep.subr.mxu0 %v925
    %4251 = vmatpush1.msra.mxu0 %v924
    %4252 = vmatprep.subr.mxu0 %v939
    %4253 = vmatpush1.msra.mxu0 %v938
    %4254 = vmatprep.subr.mxu0 %v953
    %4255 = vmatpush1.msra.mxu0 %v952
    %4256 = vmatprep.subr.mxu0 %v967
    %4257 = vmatpush1.msra.mxu0 %v966
    %4258 = vmatprep.subr.mxu0 %v981
    %4259 = vmatpush1.msra.mxu0 %v980
    %4260 = vmatprep.subr.mxu0 %v995
    %4261 = vmatpush1.msra.mxu0 %v994
    %4262 = vmatprep.subr.mxu0 %v1009
    %4263 = vmatpush1.msra.mxu0 %v1008
    %4264 = vmatprep.subr.mxu0 %v1023
    %4265 = vmatpush1.msra.mxu0 %v1022
    %4266 = vmatprep.subr.mxu0 %v1037
    %4267 = vmatpush1.msra.mxu0 %v1036
    %4268 = vmatprep.subr.mxu0 %v1051
    %4269 = vmatpush1.msra.mxu0 %v1050
    %4270 = vmatprep.subr.mxu0 %v1065
    %4271 = vmatpush1.msra.mxu0 %v1064
    %4272 = vmatprep.subr.mxu0 %v1079
    %4273 = vmatpush1.msra.mxu0 %v1078
    %4274 = vmatprep.subr.mxu0 %v1093
    %4275 = vmatpush1.msra.mxu0 %v1092
    %4276 = vmatprep.subr.mxu0 %v1107
    %4277 = vmatpush1.msra.mxu0 %v1106
    %4278 = vmatprep.subr.mxu0 %v1121
    %4279 = vmatpush1.msra.mxu0 %v1120
    %4280 = vmatprep.subr.mxu0 %v1135
    %4281 = vmatpush1.msra.mxu0 %v1134
    %4282 = vmatprep.subr.mxu0 %v1149
    %4283 = vmatpush1.msra.mxu0 %v1148
    %4284 = vmatprep.subr.mxu0 %v1163
    %4285 = vmatpush1.msra.mxu0 %v1162
    %4286 = vmatprep.subr.mxu0 %v1177
    %4287 = vmatpush1.msra.mxu0 %v1176
    %4288 = vmatprep.subr.mxu0 %v1191
    %4289 = vmatpush1.msra.mxu0 %v1190
    %4290 = vmatprep.subr.mxu0 %v1205
    %4291 = vmatpush1.msra.mxu0 %v1204
    %4292 = vmatprep.subr.mxu0 %v1219
    %4293 = vmatpush1.msra.mxu0 %v1218
    %4294 = vmatprep.subr.mxu0 %v1233
    %4295 = vmatpush1.msra.mxu0 %v1232
    %4296 = vmatprep.subr.mxu0 %v1247
    %4297 = vmatpush1.msra.mxu0 %v1246
    %4298 = vmatprep.subr.mxu0 %v1261
    %4299 = vmatpush1.msra.mxu0 %v1260
    %4300 = vmatprep.subr.mxu0 %v1275
    %4301 = vmatpush1.msra.mxu0 %v1274
    %4302 = vmatprep.mubr.f32.mxu0 %v3800
    %4303 = vmatmul.mubr.f32.gmra.mrb[0].mxu0 %v3799
    %v4304 = vpop.f32.mrb[0].mxu0
    %v4305 = vadd.f32 %v2189, %v4304
    %v4306 = vpop.f32.mrb[0].mxu0
    %v4307 = vadd.f32 %v2193, %v4306
    %4308 = vdwg.mxu0
    %4309 = vmatprep.subr.mxu0 %v1289
    %4310 = vmatpush1.msra.mxu0 %v1288
    %4311 = vmatprep.subr.mxu0 %v1303
    %4312 = vmatpush1.msra.mxu0 %v1302
    %4313 = vmatprep.subr.mxu0 %v1317
    %4314 = vmatpush1.msra.mxu0 %v1316
    %4315 = vmatprep.subr.mxu0 %v1331
    %4316 = vmatpush1.msra.mxu0 %v1330
    %4317 = vmatprep.subr.mxu0 %v1345
    %4318 = vmatpush1.msra.mxu0 %v1344
    %4319 = vmatprep.subr.mxu0 %v1359
    %4320 = vmatpush1.msra.mxu0 %v1358
    %4321 = vmatprep.subr.mxu0 %v1373
    %4322 = vmatpush1.msra.mxu0 %v1372
    %4323 = vmatprep.subr.mxu0 %v1387
    %4324 = vmatpush1.msra.mxu0 %v1386
    %4325 = vmatprep.subr.mxu0 %v1401
    %4326 = vmatpush1.msra.mxu0 %v1400
    %4327 = vmatprep.subr.mxu0 %v1415
    %4328 = vmatpush1.msra.mxu0 %v1414
    %4329 = vmatprep.subr.mxu0 %v1429
    %4330 = vmatpush1.msra.mxu0 %v1428
    %4331 = vmatprep.subr.mxu0 %v1443
    %4332 = vmatpush1.msra.mxu0 %v1442
    %4333 = vmatprep.subr.mxu0 %v1457
    %4334 = vmatpush1.msra.mxu0 %v1456
    %4335 = vmatprep.subr.mxu0 %v1471
    %4336 = vmatpush1.msra.mxu0 %v1470
    %4337 = vmatprep.subr.mxu0 %v1485
    %4338 = vmatpush1.msra.mxu0 %v1484
    %4339 = vmatprep.subr.mxu0 %v1499
    %4340 = vmatpush1.msra.mxu0 %v1498
    %4341 = vmatprep.subr.mxu0 %v1513
    %4342 = vmatpush1.msra.mxu0 %v1512
    %4343 = vmatprep.subr.mxu0 %v1527
    %4344 = vmatpush1.msra.mxu0 %v1526
    %4345 = vmatprep.subr.mxu0 %v1541
    %4346 = vmatpush1.msra.mxu0 %v1540
    %4347 = vmatprep.subr.mxu0 %v1555
    %4348 = vmatpush1.msra.mxu0 %v1554
    %4349 = vmatprep.subr.mxu0 %v1569
    %4350 = vmatpush1.msra.mxu0 %v1568
    %4351 = vmatprep.subr.mxu0 %v1583
    %4352 = vmatpush1.msra.mxu0 %v1582
    %4353 = vmatprep.subr.mxu0 %v1597
    %4354 = vmatpush1.msra.mxu0 %v1596
    %4355 = vmatprep.subr.mxu0 %v1611
    %4356 = vmatpush1.msra.mxu0 %v1610
    %4357 = vmatprep.subr.mxu0 %v1625
    %4358 = vmatpush1.msra.mxu0 %v1624
    %4359 = vmatprep.subr.mxu0 %v1639
    %4360 = vmatpush1.msra.mxu0 %v1638
    %4361 = vmatprep.subr.mxu0 %v1653
    %4362 = vmatpush1.msra.mxu0 %v1652
    %4363 = vmatprep.subr.mxu0 %v1667
    %4364 = vmatpush1.msra.mxu0 %v1666
    %4365 = vmatprep.subr.mxu0 %v1681
    %4366 = vmatpush1.msra.mxu0 %v1680
    %4367 = vmatprep.subr.mxu0 %v1695
    %4368 = vmatpush1.msra.mxu0 %v1694
    %4369 = vmatprep.subr.mxu0 %v1709
    %4370 = vmatpush1.msra.mxu0 %v1708
    %4371 = vmatprep.subr.mxu0 %v1723
    %4372 = vmatpush1.msra.mxu0 %v1722
    %4373 = vmatprep.mubr.f32.mxu0 %v3802
    %4374 = vmatmul.mubr.f32.gmra.mrb[0].mxu0 %v3801
    %v4375 = vpop.f32.mrb[0].mxu0
    %v4376 = vadd.f32 %v4305, %v4375
    %v4377 = vpop.f32.mrb[0].mxu0
    %v4378 = vadd.f32 %v4307, %v4377
    %4379 = vdwg.mxu0
    %4380 = vmatprep.subr.mxu0 %v1737
    %4381 = vmatpush1.msra.mxu0 %v1736
    %4382 = vmatprep.subr.mxu0 %v1751
    %4383 = vmatpush1.msra.mxu0 %v1750
    %4384 = vmatprep.subr.mxu0 %v1765
    %4385 = vmatpush1.msra.mxu0 %v1764
    %4386 = vmatprep.subr.mxu0 %v1779
    %4387 = vmatpush1.msra.mxu0 %v1778
    %4388 = vmatprep.subr.mxu0 %v1793
    %4389 = vmatpush1.msra.mxu0 %v1792
    %4390 = vmatprep.subr.mxu0 %v1807
    %4391 = vmatpush1.msra.mxu0 %v1806
    %4392 = vmatprep.subr.mxu0 %v1821
    %4393 = vmatpush1.msra.mxu0 %v1820
    %4394 = vmatprep.subr.mxu0 %v1835
    %4395 = vmatpush1.msra.mxu0 %v1834
    %4396 = vmatprep.subr.mxu0 %v1849
    %4397 = vmatpush1.msra.mxu0 %v1848
    %4398 = vmatprep.subr.mxu0 %v1863
    %4399 = vmatpush1.msra.mxu0 %v1862
    %4400 = vmatprep.subr.mxu0 %v1877
    %4401 = vmatpush1.msra.mxu0 %v1876
    %4402 = vmatprep.subr.mxu0 %v1891
    %4403 = vmatpush1.msra.mxu0 %v1890
    %4404 = vmatprep.subr.mxu0 %v1905
    %4405 = vmatpush1.msra.mxu0 %v1904
    %4406 = vmatprep.subr.mxu0 %v1919
    %4407 = vmatpush1.msra.mxu0 %v1918
    %4408 = vmatprep.subr.mxu0 %v1933
    %4409 = vmatpush1.msra.mxu0 %v1932
    %4410 = vmatprep.subr.mxu0 %v1947
    %4411 = vmatpush1.msra.mxu0 %v1946
    %4412 = vmatprep.subr.mxu0 %v1961
    %4413 = vmatpush1.msra.mxu0 %v1960
    %4414 = vmatprep.subr.mxu0 %v1975
    %4415 = vmatpush1.msra.mxu0 %v1974
    %4416 = vmatprep.subr.mxu0 %v1989
    %4417 = vmatpush1.msra.mxu0 %v1988
    %4418 = vmatprep.subr.mxu0 %v2003
    %4419 = vmatpush1.msra.mxu0 %v2002
    %4420 = vmatprep.subr.mxu0 %v2017
    %4421 = vmatpush1.msra.mxu0 %v2016
    %4422 = vmatprep.subr.mxu0 %v2031
    %4423 = vmatpush1.msra.mxu0 %v2030
    %4424 = vmatprep.subr.mxu0 %v2045
    %4425 = vmatpush1.msra.mxu0 %v2044
    %4426 = vmatprep.subr.mxu0 %v2059
    %4427 = vmatpush1.msra.mxu0 %v2058
    %4428 = vmatprep.subr.mxu0 %v2073
    %4429 = vmatpush1.msra.mxu0 %v2072
    %4430 = vmatprep.subr.mxu0 %v2087
    %4431 = vmatpush1.msra.mxu0 %v2086
    %4432 = vmatprep.subr.mxu0 %v2101
    %4433 = vmatpush1.msra.mxu0 %v2100
    %4434 = vmatprep.subr.mxu0 %v2115
    %4435 = vmatpush1.msra.mxu0 %v2114
    %4436 = vmatprep.subr.mxu0 %v2129
    %4437 = vmatpush1.msra.mxu0 %v2128
    %4438 = vmatprep.subr.mxu0 %v2143
    %4439 = vmatpush1.msra.mxu0 %v2142
    %4440 = vmatprep.subr.mxu0 %v2261
    %4441 = vmatpush1.msra.mxu0 %v2258
    %4442 = vmatprep.subr.mxu0 0.0
    %4443 = vmatpush1.msra.mxu0 0.0
    %4444 = vmatprep.mubr.f32.mxu0 %v3810
    %4445 = vmatmul.mubr.f32.gmra.mrb[0].mxu0 %v3803
    %v4446 = vpop.f32.mrb[0].mxu0
    %v4447 = vadd.f32 %v4376, %v4446
    %v4448 = vpop.f32.mrb[0].mxu0
    %v4449 = vadd.f32 %v4378, %v4448
    %4450 = vdwg.mxu0
    %4451 = vmatprep.subr.mxu0 %v843
    %4452 = vmatpush1.msra.mxu0 %v842
    %4453 = vmatprep.subr.mxu0 %v857
    %4454 = vmatpush1.msra.mxu0 %v856
    %4455 = vmatprep.subr.mxu0 %v871
    %4456 = vmatpush1.msra.mxu0 %v870
    %4457 = vmatprep.subr.mxu0 %v885
    %4458 = vmatpush1.msra.mxu0 %v884
    %4459 = vmatprep.subr.mxu0 %v899
    %4460 = vmatpush1.msra.mxu0 %v898
    %4461 = vmatprep.subr.mxu0 %v913
    %4462 = vmatpush1.msra.mxu0 %v912
    %4463 = vmatprep.subr.mxu0 %v927
    %4464 = vmatpush1.msra.mxu0 %v926
    %4465 = vmatprep.subr.mxu0 %v941
    %4466 = vmatpush1.msra.mxu0 %v940
    %4467 = vmatprep.subr.mxu0 %v955
    %4468 = vmatpush1.msra.mxu0 %v954
    %4469 = vmatprep.subr.mxu0 %v969
    %4470 = vmatpush1.msra.mxu0 %v968
    %4471 = vmatprep.subr.mxu0 %v983
    %4472 = vmatpush1.msra.mxu0 %v982
    %4473 = vmatprep.subr.mxu0 %v997
    %4474 = vmatpush1.msra.mxu0 %v996
    %4475 = vmatprep.subr.mxu0 %v1011
    %4476 = vmatpush1.msra.mxu0 %v1010
    %4477 = vmatprep.subr.mxu0 %v1025
    %4478 = vmatpush1.msra.mxu0 %v1024
    %4479 = vmatprep.subr.mxu0 %v1039
    %4480 = vmatpush1.msra.mxu0 %v1038
    %4481 = vmatprep.subr.mxu0 %v1053
    %4482 = vmatpush1.msra.mxu0 %v1052
    %4483 = vmatprep.subr.mxu0 %v1067
    %4484 = vmatpush1.msra.mxu0 %v1066
    %4485 = vmatprep.subr.mxu0 %v1081
    %4486 = vmatpush1.msra.mxu0 %v1080
    %4487 = vmatprep.subr.mxu0 %v1095
    %4488 = vmatpush1.msra.mxu0 %v1094
    %4489 = vmatprep.subr.mxu0 %v1109
    %4490 = vmatpush1.msra.mxu0 %v1108
    %4491 = vmatprep.subr.mxu0 %v1123
    %4492 = vmatpush1.msra.mxu0 %v1122
    %4493 = vmatprep.subr.mxu0 %v1137
    %4494 = vmatpush1.msra.mxu0 %v1136
    %4495 = vmatprep.subr.mxu0 %v1151
    %4496 = vmatpush1.msra.mxu0 %v1150
    %4497 = vmatprep.subr.mxu0 %v1165
    %4498 = vmatpush1.msra.mxu0 %v1164
    %4499 = vmatprep.subr.mxu0 %v1179
    %4500 = vmatpush1.msra.mxu0 %v1178
    %4501 = vmatprep.subr.mxu0 %v1193
    %4502 = vmatpush1.msra.mxu0 %v1192
    %4503 = vmatprep.subr.mxu0 %v1207
    %4504 = vmatpush1.msra.mxu0 %v1206
    %4505 = vmatprep.subr.mxu0 %v1221
    %4506 = vmatpush1.msra.mxu0 %v1220
    %4507 = vmatprep.subr.mxu0 %v1235
    %4508 = vmatpush1.msra.mxu0 %v1234
    %4509 = vmatprep.subr.mxu0 %v1249
    %4510 = vmatpush1.msra.mxu0 %v1248
    %4511 = vmatprep.subr.mxu0 %v1263
    %4512 = vmatpush1.msra.mxu0 %v1262
    %4513 = vmatprep.subr.mxu0 %v1277
    %4514 = vmatpush1.msra.mxu0 %v1276
    %4515 = vmatprep.mubr.f32.mxu0 %v3800
    %4516 = vmatmul.mubr.f32.gmra.mrb[0].mxu0 %v3799
    %v4517 = vpop.f32.mrb[0].mxu0
    %v4518 = vadd.f32 %v2197, %v4517
    %v4519 = vpop.f32.mrb[0].mxu0
    %v4520 = vadd.f32 %v2201, %v4519
    %4521 = vdwg.mxu0
    %4522 = vmatprep.subr.mxu0 %v1291
    %4523 = vmatpush1.msra.mxu0 %v1290
    %4524 = vmatprep.subr.mxu0 %v1305
    %4525 = vmatpush1.msra.mxu0 %v1304
    %4526 = vmatprep.subr.mxu0 %v1319
    %4527 = vmatpush1.msra.mxu0 %v1318
    %4528 = vmatprep.subr.mxu0 %v1333
    %4529 = vmatpush1.msra.mxu0 %v1332
    %4530 = vmatprep.subr.mxu0 %v1347
    %4531 = vmatpush1.msra.mxu0 %v1346
    %4532 = vmatprep.subr.mxu0 %v1361
    %4533 = vmatpush1.msra.mxu0 %v1360
    %4534 = vmatprep.subr.mxu0 %v1375
    %4535 = vmatpush1.msra.mxu0 %v1374
    %4536 = vmatprep.subr.mxu0 %v1389
    %4537 = vmatpush1.msra.mxu0 %v1388
    %4538 = vmatprep.subr.mxu0 %v1403
    %4539 = vmatpush1.msra.mxu0 %v1402
    %4540 = vmatprep.subr.mxu0 %v1417
    %4541 = vmatpush1.msra.mxu0 %v1416
    %4542 = vmatprep.subr.mxu0 %v1431
    %4543 = vmatpush1.msra.mxu0 %v1430
    %4544 = vmatprep.subr.mxu0 %v1445
    %4545 = vmatpush1.msra.mxu0 %v1444
    %4546 = vmatprep.subr.mxu0 %v1459
    %4547 = vmatpush1.msra.mxu0 %v1458
    %4548 = vmatprep.subr.mxu0 %v1473
    %4549 = vmatpush1.msra.mxu0 %v1472
    %4550 = vmatprep.subr.mxu0 %v1487
    %4551 = vmatpush1.msra.mxu0 %v1486
    %4552 = vmatprep.subr.mxu0 %v1501
    %4553 = vmatpush1.msra.mxu0 %v1500
    %4554 = vmatprep.subr.mxu0 %v1515
    %4555 = vmatpush1.msra.mxu0 %v1514
    %4556 = vmatprep.subr.mxu0 %v1529
    %4557 = vmatpush1.msra.mxu0 %v1528
    %4558 = vmatprep.subr.mxu0 %v1543
    %4559 = vmatpush1.msra.mxu0 %v1542
    %4560 = vmatprep.subr.mxu0 %v1557
    %4561 = vmatpush1.msra.mxu0 %v1556
    %4562 = vmatprep.subr.mxu0 %v1571
    %4563 = vmatpush1.msra.mxu0 %v1570
    %4564 = vmatprep.subr.mxu0 %v1585
    %4565 = vmatpush1.msra.mxu0 %v1584
    %4566 = vmatprep.subr.mxu0 %v1599
    %4567 = vmatpush1.msra.mxu0 %v1598
    %4568 = vmatprep.subr.mxu0 %v1613
    %4569 = vmatpush1.msra.mxu0 %v1612
    %4570 = vmatprep.subr.mxu0 %v1627
    %4571 = vmatpush1.msra.mxu0 %v1626
    %4572 = vmatprep.subr.mxu0 %v1641
    %4573 = vmatpush1.msra.mxu0 %v1640
    %4574 = vmatprep.subr.mxu0 %v1655
    %4575 = vmatpush1.msra.mxu0 %v1654
    %4576 = vmatprep.subr.mxu0 %v1669
    %4577 = vmatpush1.msra.mxu0 %v1668
    %4578 = vmatprep.subr.mxu0 %v1683
    %4579 = vmatpush1.msra.mxu0 %v1682
    %4580 = vmatprep.subr.mxu0 %v1697
    %4581 = vmatpush1.msra.mxu0 %v1696
    %4582 = vmatprep.subr.mxu0 %v1711
    %4583 = vmatpush1.msra.mxu0 %v1710
    %4584 = vmatprep.subr.mxu0 %v1725
    %4585 = vmatpush1.msra.mxu0 %v1724
    %4586 = vmatprep.mubr.f32.mxu0 %v3802
    %4587 = vmatmul.mubr.f32.gmra.mrb[0].mxu0 %v3801
    %v4588 = vpop.f32.mrb[0].mxu0
    %v4589 = vadd.f32 %v4518, %v4588
    %v4590 = vpop.f32.mrb[0].mxu0
    %v4591 = vadd.f32 %v4520, %v4590
    %4592 = vdwg.mxu0
    %4593 = vmatprep.subr.mxu0 %v1739
    %4594 = vmatpush1.msra.mxu0 %v1738
    %4595 = vmatprep.subr.mxu0 %v1753
    %4596 = vmatpush1.msra.mxu0 %v1752
    %4597 = vmatprep.subr.mxu0 %v1767
    %4598 = vmatpush1.msra.mxu0 %v1766
    %4599 = vmatprep.subr.mxu0 %v1781
    %4600 = vmatpush1.msra.mxu0 %v1780
    %4601 = vmatprep.subr.mxu0 %v1795
    %4602 = vmatpush1.msra.mxu0 %v1794
    %4603 = vmatprep.subr.mxu0 %v1809
    %4604 = vmatpush1.msra.mxu0 %v1808
    %4605 = vmatprep.subr.mxu0 %v1823
    %4606 = vmatpush1.msra.mxu0 %v1822
    %4607 = vmatprep.subr.mxu0 %v1837
    %4608 = vmatpush1.msra.mxu0 %v1836
    %4609 = vmatprep.subr.mxu0 %v1851
    %4610 = vmatpush1.msra.mxu0 %v1850
    %4611 = vmatprep.subr.mxu0 %v1865
    %4612 = vmatpush1.msra.mxu0 %v1864
    %4613 = vmatprep.subr.mxu0 %v1879
    %4614 = vmatpush1.msra.mxu0 %v1878
    %4615 = vmatprep.subr.mxu0 %v1893
    %4616 = vmatpush1.msra.mxu0 %v1892
    %4617 = vmatprep.subr.mxu0 %v1907
    %4618 = vmatpush1.msra.mxu0 %v1906
    %4619 = vmatprep.subr.mxu0 %v1921
    %4620 = vmatpush1.msra.mxu0 %v1920
    %4621 = vmatprep.subr.mxu0 %v1935
    %4622 = vmatpush1.msra.mxu0 %v1934
    %4623 = vmatprep.subr.mxu0 %v1949
    %4624 = vmatpush1.msra.mxu0 %v1948
    %4625 = vmatprep.subr.mxu0 %v1963
    %4626 = vmatpush1.msra.mxu0 %v1962
    %4627 = vmatprep.subr.mxu0 %v1977
    %4628 = vmatpush1.msra.mxu0 %v1976
    %4629 = vmatprep.subr.mxu0 %v1991
    %4630 = vmatpush1.msra.mxu0 %v1990
    %4631 = vmatprep.subr.mxu0 %v2005
    %4632 = vmatpush1.msra.mxu0 %v2004
    %4633 = vmatprep.subr.mxu0 %v2019
    %4634 = vmatpush1.msra.mxu0 %v2018
    %4635 = vmatprep.subr.mxu0 %v2033
    %4636 = vmatpush1.msra.mxu0 %v2032
    %4637 = vmatprep.subr.mxu0 %v2047
    %4638 = vmatpush1.msra.mxu0 %v2046
    %4639 = vmatprep.subr.mxu0 %v2061
    %4640 = vmatpush1.msra.mxu0 %v2060
    %4641 = vmatprep.subr.mxu0 %v2075
    %4642 = vmatpush1.msra.mxu0 %v2074
    %4643 = vmatprep.subr.mxu0 %v2089
    %4644 = vmatpush1.msra.mxu0 %v2088
    %4645 = vmatprep.subr.mxu0 %v2103
    %4646 = vmatpush1.msra.mxu0 %v2102
    %4647 = vmatprep.subr.mxu0 %v2117
    %4648 = vmatpush1.msra.mxu0 %v2116
    %4649 = vmatprep.subr.mxu0 %v2131
    %4650 = vmatpush1.msra.mxu0 %v2130
    %4651 = vmatprep.subr.mxu0 %v2145
    %4652 = vmatpush1.msra.mxu0 %v2144
    %4653 = vmatprep.subr.mxu0 %v2267
    %4654 = vmatpush1.msra.mxu0 %v2264
    %4655 = vmatprep.subr.mxu0 0.0
    %4656 = vmatpush1.msra.mxu0 0.0
    %4657 = vmatprep.mubr.f32.mxu0 %v3810
    %4658 = vmatmul.mubr.f32.gmra.mrb[0].mxu0 %v3803
    %v4659 = vpop.f32.mrb[0].mxu0
    %v4660 = vadd.f32 %v4589, %v4659
    %v4661 = vpop.f32.mrb[0].mxu0
    %v4662 = vadd.f32 %v4591, %v4661
    %4663 = vdwg.mxu0
    %4664 = vmatprep.subr.mxu0 %v845
    %4665 = vmatpush1.msra.mxu0 %v844
    %4666 = vmatprep.subr.mxu0 %v859
    %4667 = vmatpush1.msra.mxu0 %v858
    %4668 = vmatprep.subr.mxu0 %v873
    %4669 = vmatpush1.msra.mxu0 %v872
    %4670 = vmatprep.subr.mxu0 %v887
    %4671 = vmatpush1.msra.mxu0 %v886
    %4672 = vmatprep.subr.mxu0 %v901
    %4673 = vmatpush1.msra.mxu0 %v900
    %4674 = vmatprep.subr.mxu0 %v915
    %4675 = vmatpush1.msra.mxu0 %v914
    %4676 = vmatprep.subr.mxu0 %v929
    %4677 = vmatpush1.msra.mxu0 %v928
    %4678 = vmatprep.subr.mxu0 %v943
    %4679 = vmatpush1.msra.mxu0 %v942
    %4680 = vmatprep.subr.mxu0 %v957
    %4681 = vmatpush1.msra.mxu0 %v956
    %4682 = vmatprep.subr.mxu0 %v971
    %4683 = vmatpush1.msra.mxu0 %v970
    %4684 = vmatprep.subr.mxu0 %v985
    %4685 = vmatpush1.msra.mxu0 %v984
    %4686 = vmatprep.subr.mxu0 %v999
    %4687 = vmatpush1.msra.mxu0 %v998
    %4688 = vmatprep.subr.mxu0 %v1013
    %4689 = vmatpush1.msra.mxu0 %v1012
    %4690 = vmatprep.subr.mxu0 %v1027
    %4691 = vmatpush1.msra.mxu0 %v1026
    %4692 = vmatprep.subr.mxu0 %v1041
    %4693 = vmatpush1.msra.mxu0 %v1040
    %4694 = vmatprep.subr.mxu0 %v1055
    %4695 = vmatpush1.msra.mxu0 %v1054
    %4696 = vmatprep.subr.mxu0 %v1069
    %4697 = vmatpush1.msra.mxu0 %v1068
    %4698 = vmatprep.subr.mxu0 %v1083
    %4699 = vmatpush1.msra.mxu0 %v1082
    %4700 = vmatprep.subr.mxu0 %v1097
    %4701 = vmatpush1.msra.mxu0 %v1096
    %4702 = vmatprep.subr.mxu0 %v1111
    %4703 = vmatpush1.msra.mxu0 %v1110
    %4704 = vmatprep.subr.mxu0 %v1125
    %4705 = vmatpush1.msra.mxu0 %v1124
    %4706 = vmatprep.subr.mxu0 %v1139
    %4707 = vmatpush1.msra.mxu0 %v1138
    %4708 = vmatprep.subr.mxu0 %v1153
    %4709 = vmatpush1.msra.mxu0 %v1152
    %4710 = vmatprep.subr.mxu0 %v1167
    %4711 = vmatpush1.msra.mxu0 %v1166
    %4712 = vmatprep.subr.mxu0 %v1181
    %4713 = vmatpush1.msra.mxu0 %v1180
    %4714 = vmatprep.subr.mxu0 %v1195
    %4715 = vmatpush1.msra.mxu0 %v1194
    %4716 = vmatprep.subr.mxu0 %v1209
    %4717 = vmatpush1.msra.mxu0 %v1208
    %4718 = vmatprep.subr.mxu0 %v1223
    %4719 = vmatpush1.msra.mxu0 %v1222
    %4720 = vmatprep.subr.mxu0 %v1237
    %4721 = vmatpush1.msra.mxu0 %v1236
    %4722 = vmatprep.subr.mxu0 %v1251
    %4723 = vmatpush1.msra.mxu0 %v1250
    %4724 = vmatprep.subr.mxu0 %v1265
    %4725 = vmatpush1.msra.mxu0 %v1264
    %4726 = vmatprep.subr.mxu0 %v1279
    %4727 = vmatpush1.msra.mxu0 %v1278
    %4728 = vmatprep.mubr.f32.mxu0 %v3800
    %4729 = vmatmul.mubr.f32.gmra.mrb[0].mxu0 %v3799
    %v4730 = vpop.f32.mrb[0].mxu0
    %v4731 = vadd.f32 %v2205, %v4730
    %v4732 = vpop.f32.mrb[0].mxu0
    %v4733 = vadd.f32 %v2209, %v4732
    %4734 = vdwg.mxu0
    %4735 = vmatprep.subr.mxu0 %v1293
    %4736 = vmatpush1.msra.mxu0 %v1292
    %4737 = vmatprep.subr.mxu0 %v1307
    %4738 = vmatpush1.msra.mxu0 %v1306
    %4739 = vmatprep.subr.mxu0 %v1321
    %4740 = vmatpush1.msra.mxu0 %v1320
    %4741 = vmatprep.subr.mxu0 %v1335
    %4742 = vmatpush1.msra.mxu0 %v1334
    %4743 = vmatprep.subr.mxu0 %v1349
    %4744 = vmatpush1.msra.mxu0 %v1348
    %4745 = vmatprep.subr.mxu0 %v1363
    %4746 = vmatpush1.msra.mxu0 %v1362
    %4747 = vmatprep.subr.mxu0 %v1377
    %4748 = vmatpush1.msra.mxu0 %v1376
    %4749 = vmatprep.subr.mxu0 %v1391
    %4750 = vmatpush1.msra.mxu0 %v1390
    %4751 = vmatprep.subr.mxu0 %v1405
    %4752 = vmatpush1.msra.mxu0 %v1404
    %4753 = vmatprep.subr.mxu0 %v1419
    %4754 = vmatpush1.msra.mxu0 %v1418
    %4755 = vmatprep.subr.mxu0 %v1433
    %4756 = vmatpush1.msra.mxu0 %v1432
    %4757 = vmatprep.subr.mxu0 %v1447
    %4758 = vmatpush1.msra.mxu0 %v1446
    %4759 = vmatprep.subr.mxu0 %v1461
    %4760 = vmatpush1.msra.mxu0 %v1460
    %4761 = vmatprep.subr.mxu0 %v1475
    %4762 = vmatpush1.msra.mxu0 %v1474
    %4763 = vmatprep.subr.mxu0 %v1489
    %4764 = vmatpush1.msra.mxu0 %v1488
    %4765 = vmatprep.subr.mxu0 %v1503
    %4766 = vmatpush1.msra.mxu0 %v1502
    %4767 = vmatprep.subr.mxu0 %v1517
    %4768 = vmatpush1.msra.mxu0 %v1516
    %4769 = vmatprep.subr.mxu0 %v1531
    %4770 = vmatpush1.msra.mxu0 %v1530
    %4771 = vmatprep.subr.mxu0 %v1545
    %4772 = vmatpush1.msra.mxu0 %v1544
    %4773 = vmatprep.subr.mxu0 %v1559
    %4774 = vmatpush1.msra.mxu0 %v1558
    %4775 = vmatprep.subr.mxu0 %v1573
    %4776 = vmatpush1.msra.mxu0 %v1572
    %4777 = vmatprep.subr.mxu0 %v1587
    %4778 = vmatpush1.msra.mxu0 %v1586
    %4779 = vmatprep.subr.mxu0 %v1601
    %4780 = vmatpush1.msra.mxu0 %v1600
    %4781 = vmatprep.subr.mxu0 %v1615
    %4782 = vmatpush1.msra.mxu0 %v1614
    %4783 = vmatprep.subr.mxu0 %v1629
    %4784 = vmatpush1.msra.mxu0 %v1628
    %4785 = vmatprep.subr.mxu0 %v1643
    %4786 = vmatpush1.msra.mxu0 %v1642
    %4787 = vmatprep.subr.mxu0 %v1657
    %4788 = vmatpush1.msra.mxu0 %v1656
    %4789 = vmatprep.subr.mxu0 %v1671
    %4790 = vmatpush1.msra.mxu0 %v1670
    %4791 = vmatprep.subr.mxu0 %v1685
    %4792 = vmatpush1.msra.mxu0 %v1684
    %4793 = vmatprep.subr.mxu0 %v1699
    %4794 = vmatpush1.msra.mxu0 %v1698
    %4795 = vmatprep.subr.mxu0 %v1713
    %4796 = vmatpush1.msra.mxu0 %v1712
    %4797 = vmatprep.subr.mxu0 %v1727
    %4798 = vmatpush1.msra.mxu0 %v1726
    %4799 = vmatprep.mubr.f32.mxu0 %v3802
    %4800 = vmatmul.mubr.f32.gmra.mrb[0].mxu0 %v3801
    %v4801 = vpop.f32.mrb[0].mxu0
    %v4802 = vadd.f32 %v4731, %v4801
    %v4803 = vpop.f32.mrb[0].mxu0
    %v4804 = vadd.f32 %v4733, %v4803
    %4805 = vdwg.mxu0
    %4806 = vmatprep.subr.mxu0 %v1741
    %4807 = vmatpush1.msra.mxu0 %v1740
    %4808 = vmatprep.subr.mxu0 %v1755
    %4809 = vmatpush1.msra.mxu0 %v1754
    %4810 = vmatprep.subr.mxu0 %v1769
    %4811 = vmatpush1.msra.mxu0 %v1768
    %4812 = vmatprep.subr.mxu0 %v1783
    %4813 = vmatpush1.msra.mxu0 %v1782
    %4814 = vmatprep.subr.mxu0 %v1797
    %4815 = vmatpush1.msra.mxu0 %v1796
    %4816 = vmatprep.subr.mxu0 %v1811
    %4817 = vmatpush1.msra.mxu0 %v1810
    %4818 = vmatprep.subr.mxu0 %v1825
    %4819 = vmatpush1.msra.mxu0 %v1824
    %4820 = vmatprep.subr.mxu0 %v1839
    %4821 = vmatpush1.msra.mxu0 %v1838
    %4822 = vmatprep.subr.mxu0 %v1853
    %4823 = vmatpush1.msra.mxu0 %v1852
    %4824 = vmatprep.subr.mxu0 %v1867
    %4825 = vmatpush1.msra.mxu0 %v1866
    %4826 = vmatprep.subr.mxu0 %v1881
    %4827 = vmatpush1.msra.mxu0 %v1880
    %4828 = vmatprep.subr.mxu0 %v1895
    %4829 = vmatpush1.msra.mxu0 %v1894
    %4830 = vmatprep.subr.mxu0 %v1909
    %4831 = vmatpush1.msra.mxu0 %v1908
    %4832 = vmatprep.subr.mxu0 %v1923
    %4833 = vmatpush1.msra.mxu0 %v1922
    %4834 = vmatprep.subr.mxu0 %v1937
    %4835 = vmatpush1.msra.mxu0 %v1936
    %4836 = vmatprep.subr.mxu0 %v1951
    %4837 = vmatpush1.msra.mxu0 %v1950
    %4838 = vmatprep.subr.mxu0 %v1965
    %4839 = vmatpush1.msra.mxu0 %v1964
    %4840 = vmatprep.subr.mxu0 %v1979
    %4841 = vmatpush1.msra.mxu0 %v1978
    %4842 = vmatprep.subr.mxu0 %v1993
    %4843 = vmatpush1.msra.mxu0 %v1992
    %4844 = vmatprep.subr.mxu0 %v2007
    %4845 = vmatpush1.msra.mxu0 %v2006
    %4846 = vmatprep.subr.mxu0 %v2021
    %4847 = vmatpush1.msra.mxu0 %v2020
    %4848 = vmatprep.subr.mxu0 %v2035
    %4849 = vmatpush1.msra.mxu0 %v2034
    %4850 = vmatprep.subr.mxu0 %v2049
    %4851 = vmatpush1.msra.mxu0 %v2048
    %4852 = vmatprep.subr.mxu0 %v2063
    %4853 = vmatpush1.msra.mxu0 %v2062
    %4854 = vmatprep.subr.mxu0 %v2077
    %4855 = vmatpush1.msra.mxu0 %v2076
    %4856 = vmatprep.subr.mxu0 %v2091
    %4857 = vmatpush1.msra.mxu0 %v2090
    %4858 = vmatprep.subr.mxu0 %v2105
    %4859 = vmatpush1.msra.mxu0 %v2104
    %4860 = vmatprep.subr.mxu0 %v2119
    %4861 = vmatpush1.msra.mxu0 %v2118
    %4862 = vmatprep.subr.mxu0 %v2133
    %4863 = vmatpush1.msra.mxu0 %v2132
    %4864 = vmatprep.subr.mxu0 %v2147
    %4865 = vmatpush1.msra.mxu0 %v2146
    %4866 = vmatprep.subr.mxu0 %v2273
    %4867 = vmatpush1.msra.mxu0 %v2270
    %4868 = vmatprep.subr.mxu0 0.0
    %4869 = vmatpush1.msra.mxu0 0.0
    %4870 = vmatprep.mubr.f32.mxu0 %v3810
    %4871 = vmatmul.mubr.f32.gmra.mrb[0].mxu0 %v3803
    %v4872 = vpop.f32.mrb[0].mxu0
    %v4873 = vadd.f32 %v4802, %v4872
    %v4874 = vpop.f32.mrb[0].mxu0
    %v4875 = vadd.f32 %v4804, %v4874
    %4876 = vdwg.mxu0
    %4877 = vmatprep.subr.mxu0 %v847
    %4878 = vmatpush1.msra.mxu0 %v846
    %4879 = vmatprep.subr.mxu0 %v861
    %4880 = vmatpush1.msra.mxu0 %v860
    %4881 = vmatprep.subr.mxu0 %v875
    %4882 = vmatpush1.msra.mxu0 %v874
    %4883 = vmatprep.subr.mxu0 %v889
    %4884 = vmatpush1.msra.mxu0 %v888
    %4885 = vmatprep.subr.mxu0 %v903
    %4886 = vmatpush1.msra.mxu0 %v902
    %4887 = vmatprep.subr.mxu0 %v917
    %4888 = vmatpush1.msra.mxu0 %v916
    %4889 = vmatprep.subr.mxu0 %v931
    %4890 = vmatpush1.msra.mxu0 %v930
    %4891 = vmatprep.subr.mxu0 %v945
    %4892 = vmatpush1.msra.mxu0 %v944
    %4893 = vmatprep.subr.mxu0 %v959
    %4894 = vmatpush1.msra.mxu0 %v958
    %4895 = vmatprep.subr.mxu0 %v973
    %4896 = vmatpush1.msra.mxu0 %v972
    %4897 = vmatprep.subr.mxu0 %v987
    %4898 = vmatpush1.msra.mxu0 %v986
    %4899 = vmatprep.subr.mxu0 %v1001
    %4900 = vmatpush1.msra.mxu0 %v1000
    %4901 = vmatprep.subr.mxu0 %v1015
    %4902 = vmatpush1.msra.mxu0 %v1014
    %4903 = vmatprep.subr.mxu0 %v1029
    %4904 = vmatpush1.msra.mxu0 %v1028
    %4905 = vmatprep.subr.mxu0 %v1043
    %4906 = vmatpush1.msra.mxu0 %v1042
    %4907 = vmatprep.subr.mxu0 %v1057
    %4908 = vmatpush1.msra.mxu0 %v1056
    %4909 = vmatprep.subr.mxu0 %v1071
    %4910 = vmatpush1.msra.mxu0 %v1070
    %4911 = vmatprep.subr.mxu0 %v1085
    %4912 = vmatpush1.msra.mxu0 %v1084
    %4913 = vmatprep.subr.mxu0 %v1099
    %4914 = vmatpush1.msra.mxu0 %v1098
    %4915 = vmatprep.subr.mxu0 %v1113
    %4916 = vmatpush1.msra.mxu0 %v1112
    %4917 = vmatprep.subr.mxu0 %v1127
    %4918 = vmatpush1.msra.mxu0 %v1126
    %4919 = vmatprep.subr.mxu0 %v1141
    %4920 = vmatpush1.msra.mxu0 %v1140
    %4921 = vmatprep.subr.mxu0 %v1155
    %4922 = vmatpush1.msra.mxu0 %v1154
    %4923 = vmatprep.subr.mxu0 %v1169
    %4924 = vmatpush1.msra.mxu0 %v1168
    %4925 = vmatprep.subr.mxu0 %v1183
    %4926 = vmatpush1.msra.mxu0 %v1182
    %4927 = vmatprep.subr.mxu0 %v1197
    %4928 = vmatpush1.msra.mxu0 %v1196
    %4929 = vmatprep.subr.mxu0 %v1211
    %4930 = vmatpush1.msra.mxu0 %v1210
    %4931 = vmatprep.subr.mxu0 %v1225
    %4932 = vmatpush1.msra.mxu0 %v1224
    %4933 = vmatprep.subr.mxu0 %v1239
    %4934 = vmatpush1.msra.mxu0 %v1238
    %4935 = vmatprep.subr.mxu0 %v1253
    %4936 = vmatpush1.msra.mxu0 %v1252
    %4937 = vmatprep.subr.mxu0 %v1267
    %4938 = vmatpush1.msra.mxu0 %v1266
    %4939 = vmatprep.subr.mxu0 %v1281
    %4940 = vmatpush1.msra.mxu0 %v1280
    %4941 = vmatprep.mubr.f32.mxu0 %v3800
    %4942 = vmatmul.mubr.f32.gmra.mrb[0].mxu0 %v3799
    %v4943 = vpop.f32.mrb[0].mxu0
    %v4944 = vadd.f32 %v2213, %v4943
    %v4945 = vpop.f32.mrb[0].mxu0
    %v4946 = vadd.f32 %v2217, %v4945
    %4947 = vdwg.mxu0
    %4948 = vmatprep.subr.mxu0 %v1295
    %4949 = vmatpush1.msra.mxu0 %v1294
    %4950 = vmatprep.subr.mxu0 %v1309
    %4951 = vmatpush1.msra.mxu0 %v1308
    %4952 = vmatprep.subr.mxu0 %v1323
    %4953 = vmatpush1.msra.mxu0 %v1322
    %4954 = vmatprep.subr.mxu0 %v1337
    %4955 = vmatpush1.msra.mxu0 %v1336
    %4956 = vmatprep.subr.mxu0 %v1351
    %4957 = vmatpush1.msra.mxu0 %v1350
    %4958 = vmatprep.subr.mxu0 %v1365
    %4959 = vmatpush1.msra.mxu0 %v1364
    %4960 = vmatprep.subr.mxu0 %v1379
    %4961 = vmatpush1.msra.mxu0 %v1378
    %4962 = vmatprep.subr.mxu0 %v1393
    %4963 = vmatpush1.msra.mxu0 %v1392
    %4964 = vmatprep.subr.mxu0 %v1407
    %4965 = vmatpush1.msra.mxu0 %v1406
    %4966 = vmatprep.subr.mxu0 %v1421
    %4967 = vmatpush1.msra.mxu0 %v1420
    %4968 = vmatprep.subr.mxu0 %v1435
    %4969 = vmatpush1.msra.mxu0 %v1434
    %4970 = vmatprep.subr.mxu0 %v1449
    %4971 = vmatpush1.msra.mxu0 %v1448
    %4972 = vmatprep.subr.mxu0 %v1463
    %4973 = vmatpush1.msra.mxu0 %v1462
    %4974 = vmatprep.subr.mxu0 %v1477
    %4975 = vmatpush1.msra.mxu0 %v1476
    %4976 = vmatprep.subr.mxu0 %v1491
    %4977 = vmatpush1.msra.mxu0 %v1490
    %4978 = vmatprep.subr.mxu0 %v1505
    %4979 = vmatpush1.msra.mxu0 %v1504
    %4980 = vmatprep.subr.mxu0 %v1519
    %4981 = vmatpush1.msra.mxu0 %v1518
    %4982 = vmatprep.subr.mxu0 %v1533
    %4983 = vmatpush1.msra.mxu0 %v1532
    %4984 = vmatprep.subr.mxu0 %v1547
    %4985 = vmatpush1.msra.mxu0 %v1546
    %4986 = vmatprep.subr.mxu0 %v1561
    %4987 = vmatpush1.msra.mxu0 %v1560
    %4988 = vmatprep.subr.mxu0 %v1575
    %4989 = vmatpush1.msra.mxu0 %v1574
    %4990 = vmatprep.subr.mxu0 %v1589
    %4991 = vmatpush1.msra.mxu0 %v1588
    %4992 = vmatprep.subr.mxu0 %v1603
    %4993 = vmatpush1.msra.mxu0 %v1602
    %4994 = vmatprep.subr.mxu0 %v1617
    %4995 = vmatpush1.msra.mxu0 %v1616
    %4996 = vmatprep.subr.mxu0 %v1631
    %4997 = vmatpush1.msra.mxu0 %v1630
    %4998 = vmatprep.subr.mxu0 %v1645
    %4999 = vmatpush1.msra.mxu0 %v1644
    %5000 = vmatprep.subr.mxu0 %v1659
    %5001 = vmatpush1.msra.mxu0 %v1658
    %5002 = vmatprep.subr.mxu0 %v1673
    %5003 = vmatpush1.msra.mxu0 %v1672
    %5004 = vmatprep.subr.mxu0 %v1687
    %5005 = vmatpush1.msra.mxu0 %v1686
    %5006 = vmatprep.subr.mxu0 %v1701
    %5007 = vmatpush1.msra.mxu0 %v1700
    %5008 = vmatprep.subr.mxu0 %v1715
    %5009 = vmatpush1.msra.mxu0 %v1714
    %5010 = vmatprep.subr.mxu0 %v1729
    %5011 = vmatpush1.msra.mxu0 %v1728
    %5012 = vmatprep.mubr.f32.mxu0 %v3802
    %5013 = vmatmul.mubr.f32.gmra.mrb[0].mxu0 %v3801
    %v5014 = vpop.f32.mrb[0].mxu0
    %v5015 = vadd.f32 %v4944, %v5014
    %v5016 = vpop.f32.mrb[0].mxu0
    %v5017 = vadd.f32 %v4946, %v5016
    %5018 = vdwg.mxu0
    %5019 = vmatprep.subr.mxu0 %v1743
    %5020 = vmatpush1.msra.mxu0 %v1742
    %5021 = vmatprep.subr.mxu0 %v1757
    %5022 = vmatpush1.msra.mxu0 %v1756
    %5023 = vmatprep.subr.mxu0 %v1771
    %5024 = vmatpush1.msra.mxu0 %v1770
    %5025 = vmatprep.subr.mxu0 %v1785
    %5026 = vmatpush1.msra.mxu0 %v1784
    %5027 = vmatprep.subr.mxu0 %v1799
    %5028 = vmatpush1.msra.mxu0 %v1798
    %5029 = vmatprep.subr.mxu0 %v1813
    %5030 = vmatpush1.msra.mxu0 %v1812
    %5031 = vmatprep.subr.mxu0 %v1827
    %5032 = vmatpush1.msra.mxu0 %v1826
    %5033 = vmatprep.subr.mxu0 %v1841
    %5034 = vmatpush1.msra.mxu0 %v1840
    %5035 = vmatprep.subr.mxu0 %v1855
    %5036 = vmatpush1.msra.mxu0 %v1854
    %5037 = vmatprep.subr.mxu0 %v1869
    %5038 = vmatpush1.msra.mxu0 %v1868
    %5039 = vmatprep.subr.mxu0 %v1883
    %5040 = vmatpush1.msra.mxu0 %v1882
    %5041 = vmatprep.subr.mxu0 %v1897
    %5042 = vmatpush1.msra.mxu0 %v1896
    %5043 = vmatprep.subr.mxu0 %v1911
    %5044 = vmatpush1.msra.mxu0 %v1910
    %5045 = vmatprep.subr.mxu0 %v1925
    %5046 = vmatpush1.msra.mxu0 %v1924
    %5047 = vmatprep.subr.mxu0 %v1939
    %5048 = vmatpush1.msra.mxu0 %v1938
    %5049 = vmatprep.subr.mxu0 %v1953
    %5050 = vmatpush1.msra.mxu0 %v1952
    %5051 = vmatprep.subr.mxu0 %v1967
    %5052 = vmatpush1.msra.mxu0 %v1966
    %5053 = vmatprep.subr.mxu0 %v1981
    %5054 = vmatpush1.msra.mxu0 %v1980
    %5055 = vmatprep.subr.mxu0 %v1995
    %5056 = vmatpush1.msra.mxu0 %v1994
    %5057 = vmatprep.subr.mxu0 %v2009
    %5058 = vmatpush1.msra.mxu0 %v2008
    %5059 = vmatprep.subr.mxu0 %v2023
    %5060 = vmatpush1.msra.mxu0 %v2022
    %5061 = vmatprep.subr.mxu0 %v2037
    %5062 = vmatpush1.msra.mxu0 %v2036
    %5063 = vmatprep.subr.mxu0 %v2051
    %5064 = vmatpush1.msra.mxu0 %v2050
    %5065 = vmatprep.subr.mxu0 %v2065
    %5066 = vmatpush1.msra.mxu0 %v2064
    %5067 = vmatprep.subr.mxu0 %v2079
    %5068 = vmatpush1.msra.mxu0 %v2078
    %5069 = vmatprep.subr.mxu0 %v2093
    %5070 = vmatpush1.msra.mxu0 %v2092
    %5071 = vmatprep.subr.mxu0 %v2107
    %5072 = vmatpush1.msra.mxu0 %v2106
    %5073 = vmatprep.subr.mxu0 %v2121
    %5074 = vmatpush1.msra.mxu0 %v2120
    %5075 = vmatprep.subr.mxu0 %v2135
    %5076 = vmatpush1.msra.mxu0 %v2134
    %5077 = vmatprep.subr.mxu0 %v2149
    %5078 = vmatpush1.msra.mxu0 %v2148
    %5079 = vmatprep.subr.mxu0 %v2279
    %5080 = vmatpush1.msra.mxu0 %v2276
    %5081 = vmatprep.subr.mxu0 0.0
    %5082 = vmatpush1.msra.mxu0 0.0
    %5083 = vmatprep.mubr.f32.mxu0 %v3810
    %5084 = vmatmul.mubr.f32.gmra.mrb[0].mxu0 %v3803
    %v5085 = vpop.f32.mrb[0].mxu0
    %v5086 = vadd.f32 %v5015, %v5085
    %v5087 = vpop.f32.mrb[0].mxu0
    %v5088 = vadd.f32 %v5017, %v5087
    %5089 = vdwg.mxu0
    %5090 = vmatprep.subr.mxu0 %v849
    %5091 = vmatpush1.msra.mxu0 %v848
    %5092 = vmatprep.subr.mxu0 %v863
    %5093 = vmatpush1.msra.mxu0 %v862
    %5094 = vmatprep.subr.mxu0 %v877
    %5095 = vmatpush1.msra.mxu0 %v876
    %5096 = vmatprep.subr.mxu0 %v891
    %5097 = vmatpush1.msra.mxu0 %v890
    %5098 = vmatprep.subr.mxu0 %v905
    %5099 = vmatpush1.msra.mxu0 %v904
    %5100 = vmatprep.subr.mxu0 %v919
    %5101 = vmatpush1.msra.mxu0 %v918
    %5102 = vmatprep.subr.mxu0 %v933
    %5103 = vmatpush1.msra.mxu0 %v932
    %5104 = vmatprep.subr.mxu0 %v947
    %5105 = vmatpush1.msra.mxu0 %v946
    %5106 = vmatprep.subr.mxu0 %v961
    %5107 = vmatpush1.msra.mxu0 %v960
    %5108 = vmatprep.subr.mxu0 %v975
    %5109 = vmatpush1.msra.mxu0 %v974
    %5110 = vmatprep.subr.mxu0 %v989
    %5111 = vmatpush1.msra.mxu0 %v988
    %5112 = vmatprep.subr.mxu0 %v1003
    %5113 = vmatpush1.msra.mxu0 %v1002
    %5114 = vmatprep.subr.mxu0 %v1017
    %5115 = vmatpush1.msra.mxu0 %v1016
    %5116 = vmatprep.subr.mxu0 %v1031
    %5117 = vmatpush1.msra.mxu0 %v1030
    %5118 = vmatprep.subr.mxu0 %v1045
    %5119 = vmatpush1.msra.mxu0 %v1044
    %5120 = vmatprep.subr.mxu0 %v1059
    %5121 = vmatpush1.msra.mxu0 %v1058
    %5122 = vmatprep.subr.mxu0 %v1073
    %5123 = vmatpush1.msra.mxu0 %v1072
    %5124 = vmatprep.subr.mxu0 %v1087
    %5125 = vmatpush1.msra.mxu0 %v1086
    %5126 = vmatprep.subr.mxu0 %v1101
    %5127 = vmatpush1.msra.mxu0 %v1100
    %5128 = vmatprep.subr.mxu0 %v1115
    %5129 = vmatpush1.msra.mxu0 %v1114
    %5130 = vmatprep.subr.mxu0 %v1129
    %5131 = vmatpush1.msra.mxu0 %v1128
    %5132 = vmatprep.subr.mxu0 %v1143
    %5133 = vmatpush1.msra.mxu0 %v1142
    %5134 = vmatprep.subr.mxu0 %v1157
    %5135 = vmatpush1.msra.mxu0 %v1156
    %5136 = vmatprep.subr.mxu0 %v1171
    %5137 = vmatpush1.msra.mxu0 %v1170
    %5138 = vmatprep.subr.mxu0 %v1185
    %5139 = vmatpush1.msra.mxu0 %v1184
    %5140 = vmatprep.subr.mxu0 %v1199
    %5141 = vmatpush1.msra.mxu0 %v1198
    %5142 = vmatprep.subr.mxu0 %v1213
    %5143 = vmatpush1.msra.mxu0 %v1212
    %5144 = vmatprep.subr.mxu0 %v1227
    %5145 = vmatpush1.msra.mxu0 %v1226
    %5146 = vmatprep.subr.mxu0 %v1241
    %5147 = vmatpush1.msra.mxu0 %v1240
    %5148 = vmatprep.subr.mxu0 %v1255
    %5149 = vmatpush1.msra.mxu0 %v1254
    %5150 = vmatprep.subr.mxu0 %v1269
    %5151 = vmatpush1.msra.mxu0 %v1268
    %5152 = vmatprep.subr.mxu0 %v1283
    %5153 = vmatpush1.msra.mxu0 %v1282
    %5154 = vmatprep.mubr.f32.mxu0 %v3800
    %5155 = vmatmul.mubr.f32.gmra.mrb[0].mxu0 %v3799
    %v5156 = vpop.f32.mrb[0].mxu0
    %v5157 = vadd.f32 %v2221, %v5156
    %v5158 = vpop.f32.mrb[0].mxu0
    %v5159 = vadd.f32 %v2225, %v5158
    %5160 = vdwg.mxu0
    %5161 = vmatprep.subr.mxu0 %v1297
    %5162 = vmatpush1.msra.mxu0 %v1296
    %5163 = vmatprep.subr.mxu0 %v1311
    %5164 = vmatpush1.msra.mxu0 %v1310
    %5165 = vmatprep.subr.mxu0 %v1325
    %5166 = vmatpush1.msra.mxu0 %v1324
    %5167 = vmatprep.subr.mxu0 %v1339
    %5168 = vmatpush1.msra.mxu0 %v1338
    %5169 = vmatprep.subr.mxu0 %v1353
    %5170 = vmatpush1.msra.mxu0 %v1352
    %5171 = vmatprep.subr.mxu0 %v1367
    %5172 = vmatpush1.msra.mxu0 %v1366
    %5173 = vmatprep.subr.mxu0 %v1381
    %5174 = vmatpush1.msra.mxu0 %v1380
    %5175 = vmatprep.subr.mxu0 %v1395
    %5176 = vmatpush1.msra.mxu0 %v1394
    %5177 = vmatprep.subr.mxu0 %v1409
    %5178 = vmatpush1.msra.mxu0 %v1408
    %5179 = vmatprep.subr.mxu0 %v1423
    %5180 = vmatpush1.msra.mxu0 %v1422
    %5181 = vmatprep.subr.mxu0 %v1437
    %5182 = vmatpush1.msra.mxu0 %v1436
    %5183 = vmatprep.subr.mxu0 %v1451
    %5184 = vmatpush1.msra.mxu0 %v1450
    %5185 = vmatprep.subr.mxu0 %v1465
    %5186 = vmatpush1.msra.mxu0 %v1464
    %5187 = vmatprep.subr.mxu0 %v1479
    %5188 = vmatpush1.msra.mxu0 %v1478
    %5189 = vmatprep.subr.mxu0 %v1493
    %5190 = vmatpush1.msra.mxu0 %v1492
    %5191 = vmatprep.subr.mxu0 %v1507
    %5192 = vmatpush1.msra.mxu0 %v1506
    %5193 = vmatprep.subr.mxu0 %v1521
    %5194 = vmatpush1.msra.mxu0 %v1520
    %5195 = vmatprep.subr.mxu0 %v1535
    %5196 = vmatpush1.msra.mxu0 %v1534
    %5197 = vmatprep.subr.mxu0 %v1549
    %5198 = vmatpush1.msra.mxu0 %v1548
    %5199 = vmatprep.subr.mxu0 %v1563
    %5200 = vmatpush1.msra.mxu0 %v1562
    %5201 = vmatprep.subr.mxu0 %v1577
    %5202 = vmatpush1.msra.mxu0 %v1576
    %5203 = vmatprep.subr.mxu0 %v1591
    %5204 = vmatpush1.msra.mxu0 %v1590
    %5205 = vmatprep.subr.mxu0 %v1605
    %5206 = vmatpush1.msra.mxu0 %v1604
    %5207 = vmatprep.subr.mxu0 %v1619
    %5208 = vmatpush1.msra.mxu0 %v1618
    %5209 = vmatprep.subr.mxu0 %v1633
    %5210 = vmatpush1.msra.mxu0 %v1632
    %5211 = vmatprep.subr.mxu0 %v1647
    %5212 = vmatpush1.msra.mxu0 %v1646
    %5213 = vmatprep.subr.mxu0 %v1661
    %5214 = vmatpush1.msra.mxu0 %v1660
    %5215 = vmatprep.subr.mxu0 %v1675
    %5216 = vmatpush1.msra.mxu0 %v1674
    %5217 = vmatprep.subr.mxu0 %v1689
    %5218 = vmatpush1.msra.mxu0 %v1688
    %5219 = vmatprep.subr.mxu0 %v1703
    %5220 = vmatpush1.msra.mxu0 %v1702
    %5221 = vmatprep.subr.mxu0 %v1717
    %5222 = vmatpush1.msra.mxu0 %v1716
    %5223 = vmatprep.subr.mxu0 %v1731
    %5224 = vmatpush1.msra.mxu0 %v1730
    %5225 = vmatprep.mubr.f32.mxu0 %v3802
    %5226 = vmatmul.mubr.f32.gmra.mrb[0].mxu0 %v3801
    %v5227 = vpop.f32.mrb[0].mxu0
    %v5228 = vadd.f32 %v5157, %v5227
    %v5229 = vpop.f32.mrb[0].mxu0
    %v5230 = vadd.f32 %v5159, %v5229
    %5231 = vdwg.mxu0
    %5232 = vmatprep.subr.mxu0 %v1745
    %5233 = vmatpush1.msra.mxu0 %v1744
    %5234 = vmatprep.subr.mxu0 %v1759
    %5235 = vmatpush1.msra.mxu0 %v1758
    %5236 = vmatprep.subr.mxu0 %v1773
    %5237 = vmatpush1.msra.mxu0 %v1772
    %5238 = vmatprep.subr.mxu0 %v1787
    %5239 = vmatpush1.msra.mxu0 %v1786
    %5240 = vmatprep.subr.mxu0 %v1801
    %5241 = vmatpush1.msra.mxu0 %v1800
    %5242 = vmatprep.subr.mxu0 %v1815
    %5243 = vmatpush1.msra.mxu0 %v1814
    %5244 = vmatprep.subr.mxu0 %v1829
    %5245 = vmatpush1.msra.mxu0 %v1828
    %5246 = vmatprep.subr.mxu0 %v1843
    %5247 = vmatpush1.msra.mxu0 %v1842
    %5248 = vmatprep.subr.mxu0 %v1857
    %5249 = vmatpush1.msra.mxu0 %v1856
    %5250 = vmatprep.subr.mxu0 %v1871
    %5251 = vmatpush1.msra.mxu0 %v1870
    %5252 = vmatprep.subr.mxu0 %v1885
    %5253 = vmatpush1.msra.mxu0 %v1884
    %5254 = vmatprep.subr.mxu0 %v1899
    %5255 = vmatpush1.msra.mxu0 %v1898
    %5256 = vmatprep.subr.mxu0 %v1913
    %5257 = vmatpush1.msra.mxu0 %v1912
    %5258 = vmatprep.subr.mxu0 %v1927
    %5259 = vmatpush1.msra.mxu0 %v1926
    %5260 = vmatprep.subr.mxu0 %v1941
    %5261 = vmatpush1.msra.mxu0 %v1940
    %5262 = vmatprep.subr.mxu0 %v1955
    %5263 = vmatpush1.msra.mxu0 %v1954
    %5264 = vmatprep.subr.mxu0 %v1969
    %5265 = vmatpush1.msra.mxu0 %v1968
    %5266 = vmatprep.subr.mxu0 %v1983
    %5267 = vmatpush1.msra.mxu0 %v1982
    %5268 = vmatprep.subr.mxu0 %v1997
    %5269 = vmatpush1.msra.mxu0 %v1996
    %5270 = vmatprep.subr.mxu0 %v2011
    %5271 = vmatpush1.msra.mxu0 %v2010
    %5272 = vmatprep.subr.mxu0 %v2025
    %5273 = vmatpush1.msra.mxu0 %v2024
    %5274 = vmatprep.subr.mxu0 %v2039
    %5275 = vmatpush1.msra.mxu0 %v2038
    %5276 = vmatprep.subr.mxu0 %v2053
    %5277 = vmatpush1.msra.mxu0 %v2052
    %5278 = vmatprep.subr.mxu0 %v2067
    %5279 = vmatpush1.msra.mxu0 %v2066
    %5280 = vmatprep.subr.mxu0 %v2081
    %5281 = vmatpush1.msra.mxu0 %v2080
    %5282 = vmatprep.subr.mxu0 %v2095
    %5283 = vmatpush1.msra.mxu0 %v2094
    %5284 = vmatprep.subr.mxu0 %v2109
    %5285 = vmatpush1.msra.mxu0 %v2108
    %5286 = vmatprep.subr.mxu0 %v2123
    %5287 = vmatpush1.msra.mxu0 %v2122
    %5288 = vmatprep.subr.mxu0 %v2137
    %5289 = vmatpush1.msra.mxu0 %v2136
    %5290 = vmatprep.subr.mxu0 %v2151
    %5291 = vmatpush1.msra.mxu0 %v2150
    %5292 = vmatprep.subr.mxu0 %v2285
    %5293 = vmatpush1.msra.mxu0 %v2282
    %5294 = vmatprep.subr.mxu0 0.0
    %5295 = vmatpush1.msra.mxu0 0.0
    %5296 = vmatprep.mubr.f32.mxu0 %v3810
    %5297 = vmatmul.mubr.f32.gmra.mrb[0].mxu0 %v3803
    %v5298 = vpop.f32.mrb[0].mxu0
    %v5299 = vadd.f32 %v5228, %v5298
    %v5300 = vpop.f32.mrb[0].mxu0
    %v5301 = vadd.f32 %v5230, %v5300
    %5302 = vdwg.mxu0
    %v5303 = vmax.f32 %v2496, 0.0
    %v5304 = vmax.f32 %v2498, 0.0
    %v5305 = vmax.f32 %v2709, 0.0
    %v5306 = vmax.f32 %v2711, 0.0
    %v5307 = vmax.f32 %v2922, 0.0
    %v5308 = vmax.f32 %v2924, 0.0
    %v5309 = vmax.f32 %v3135, 0.0
    %v5310 = vmax.f32 %v3137, 0.0
    %v5311 = vmax.f32 %v3348, 0.0
    %v5312 = vmax.f32 %v3350, 0.0
    %v5313 = vmax.f32 %v3561, 0.0
    %v5314 = vmax.f32 %v3563, 0.0
    %v5315 = vmax.f32 %v3774, 0.0
    %v5316 = vmax.f32 %v3776, 0.0
    %v5317 = vmax.f32 %v4021, 0.0
    %v5318 = vmax.f32 %v4023, 0.0
    %v5319 = vmax.f32 %v4234, 0.0
    %v5320 = vmax.f32 %v4236, 0.0
    %v5321 = vmax.f32 %v4447, 0.0
    %v5322 = vmax.f32 %v4449, 0.0
    %v5323 = vmax.f32 %v4660, 0.0
    %v5324 = vmax.f32 %v4662, 0.0
    %v5325 = vmax.f32 %v4873, 0.0
    %v5326 = vmax.f32 %v4875, 0.0
    %v5327 = vmax.f32 %v5086, 0.0
    %v5328 = vmax.f32 %v5088, 0.0
    %v5329 = vmax.f32 %v5299, 0.0
    %v5330 = vmax.f32 %v5301, 0.0
    %v5331 = vmax.f32 %v5303, %v5310
    %v5332 = vmax.f32 %v5304, %v5311
    %v5333 = vmax.f32 %v5305, %v5312
    %v5334 = vmax.f32 %v5306, %v5313
    %v5335 = vmax.f32 %v5307, %v5314
    %v5336 = vmax.f32 %v5308, %v5315
    %v5337 = vmax.f32 %v5309, %v5316
    %v5338 = vmax.f32 %v5317, %v5324
    %v5339 = vmax.f32 %v5318, %v5325
    %v5340 = vmax.f32 %v5319, %v5326
    %v5341 = vmax.f32 %v5320, %v5327
    %v5342 = vmax.f32 %v5321, %v5328
    %v5343 = vmax.f32 %v5322, %v5329
    %v5344 = vmax.f32 %v5323, %v5330
    %v5345 = vmax.f32 %v5331, %v5338
    %v5346 = vmax.f32 %v5332, %v5339
    %v5347 = vmax.f32 %v5333, %v5340
    %v5348 = vmax.f32 %v5334, %v5341
    %v5349 = vmax.f32 %v5335, %v5342
    %v5350 = vmax.f32 %v5336, %v5343
    %v5351 = vmax.f32 %v5337, %v5344
    %v5352 = vld [vmem:[#allocation6] sm:$0xff]
    %v5353 = vld [vmem:[#allocation6 + $0x8] sm:$0xff]
    %v5354 = vld [vmem:[#allocation6 + $0x10] sm:$0xff]
    %v5355 = vld [vmem:[#allocation6 + $0x18] sm:$0xff]
    %v5356 = vld [vmem:[#allocation6 + $0x20] sm:$0xff]
    %v5357 = vld [vmem:[#allocation6 + $0x28] sm:$0xff]
    %v5358 = vld [vmem:[#allocation6 + $0x30] sm:$0xff]
    %v5359 = vld [vmem:[#allocation6 + $0x38] sm:$0xff]
    %v5360 = vld [vmem:[#allocation6 + $0x40] sm:$0xff]
    %v5361 = vld [vmem:[#allocation6 + $0x48] sm:$0xff]
    %v5362 = vld [vmem:[#allocation6 + $0x50] sm:$0xff]
    %v5363 = vld [vmem:[#allocation6 + $0x58] sm:$0xff]
    %v5364 = vld [vmem:[#allocation6 + $0x60] sm:$0xff]
    %v5365 = vld [vmem:[#allocation6 + $0x68] sm:$0xff]
    %v5366 = vld [vmem:[#allocation6 + $0x70] sm:$0xff]
    %v5367 = vld [vmem:[#allocation6 + $0x78] sm:$0xff]
    %v5368 = vld [vmem:[#allocation6 + $0x80] sm:$0xff]
    %v5369 = vld [vmem:[#allocation6 + $0x88] sm:$0xff]
    %v5370 = vld [vmem:[#allocation6 + $0x90] sm:$0xff]
    %v5371 = vld [vmem:[#allocation6 + $0x98] sm:$0xff]
    %v5372 = vld [vmem:[#allocation6 + $0xa0] sm:$0xff]
    %v5373 = vld [vmem:[#allocation6 + $0xa8] sm:$0xff]
    %v5374 = vld [vmem:[#allocation6 + $0xb0] sm:$0xff]
    %v5375 = vld [vmem:[#allocation6 + $0xb8] sm:$0xff]
    %v5376 = vld [vmem:[#allocation6 + $0xc0] sm:$0xff]
    %v5377 = vld [vmem:[#allocation6 + $0xc8] sm:$0xff]
    %v5378 = vld [vmem:[#allocation6 + $0xd0] sm:$0xff]
    %v5379 = vld [vmem:[#allocation6 + $0xd8] sm:$0xff]
    %v5380 = vld [vmem:[#allocation6 + $0xe0] sm:$0xff]
    %v5381 = vld [vmem:[#allocation6 + $0xe8] sm:$0xff]
    %v5382 = vld [vmem:[#allocation6 + $0xf0] sm:$0xff]
    %v5383 = vld [vmem:[#allocation6 + $0xf8] sm:$0xff]
    %v5384 = vld [vmem:[#allocation6 + $0x100] sm:$0xff]
    %v5385 = vld [vmem:[#allocation6 + $0x108] sm:$0xff]
    %v5386 = vld [vmem:[#allocation6 + $0x110] sm:$0xff]
    %v5387 = vld [vmem:[#allocation6 + $0x118] sm:$0xff]
    %v5388 = vld [vmem:[#allocation6 + $0x120] sm:$0xff]
    %v5389 = vld [vmem:[#allocation6 + $0x128] sm:$0xff]
    %v5390 = vld [vmem:[#allocation6 + $0x130] sm:$0xff]
    %v5391 = vld [vmem:[#allocation6 + $0x138] sm:$0xff]
    %v5392 = vld [vmem:[#allocation6 + $0x140] sm:$0xff]
    %v5393 = vld [vmem:[#allocation6 + $0x148] sm:$0xff]
    %v5394 = vld [vmem:[#allocation6 + $0x150] sm:$0xff]
    %v5395 = vld [vmem:[#allocation6 + $0x158] sm:$0xff]
    %v5396 = vld [vmem:[#allocation6 + $0x160] sm:$0xff]
    %v5397 = vld [vmem:[#allocation6 + $0x168] sm:$0xff]
    %v5398 = vld [vmem:[#allocation6 + $0x170] sm:$0xff]
    %v5399 = vld [vmem:[#allocation6 + $0x178] sm:$0xff]
    %v5400 = vld [vmem:[#allocation6 + $0x180] sm:$0xff]
    %v5401 = vld [vmem:[#allocation6 + $0x188] sm:$0xff]
    %v5402 = vld [vmem:[#allocation6 + $0x190] sm:$0xff]
    %v5403 = vld [vmem:[#allocation6 + $0x198] sm:$0xff]
    %v5404 = vld [vmem:[#allocation6 + $0x1a0] sm:$0xff]
    %v5405 = vld [vmem:[#allocation6 + $0x1a8] sm:$0xff]
    %v5406 = vld [vmem:[#allocation6 + $0x1b0] sm:$0xff]
    %v5407 = vld [vmem:[#allocation6 + $0x1b8] sm:$0xff]
    %v5408 = vld [vmem:[#allocation6 + $0x1c0] sm:$0xff]
    %v5409 = vld [vmem:[#allocation6 + $0x1c8] sm:$0xff]
    %v5410 = vld [vmem:[#allocation6 + $0x1d0] sm:$0xff]
    %v5411 = vld [vmem:[#allocation6 + $0x1d8] sm:$0xff]
    %v5412 = vld [vmem:[#allocation6 + $0x1e0] sm:$0xff]
    %v5413 = vld [vmem:[#allocation6 + $0x1e8] sm:$0xff]
    %v5414 = vld [vmem:[#allocation6 + $0x1f0] sm:$0xff]
    %v5415 = vld [vmem:[#allocation6 + $0x1f8] sm:$0xff]
    %v5416 = vld [vmem:[#allocation6 + $0x200] sm:$0xff]
    %v5417 = vld [vmem:[#allocation6 + $0x208] sm:$0xff]
    %v5418 = vld [vmem:[#allocation6 + $0x210] sm:$0xff]
    %v5419 = vld [vmem:[#allocation6 + $0x218] sm:$0xff]
    %v5420 = vld [vmem:[#allocation6 + $0x220] sm:$0xff]
    %v5421 = vld [vmem:[#allocation6 + $0x228] sm:$0xff]
    %v5422 = vld [vmem:[#allocation6 + $0x230] sm:$0xff]
    %v5423 = vld [vmem:[#allocation6 + $0x238] sm:$0xff]
    %v5424 = vld [vmem:[#allocation6 + $0x240] sm:$0xff]
    %v5425 = vld [vmem:[#allocation6 + $0x248] sm:$0xff]
    %v5426 = vld [vmem:[#allocation6 + $0x250] sm:$0xff]
    %v5427 = vld [vmem:[#allocation6 + $0x258] sm:$0xff]
    %v5428 = vld [vmem:[#allocation6 + $0x260] sm:$0xff]
    %v5429 = vld [vmem:[#allocation6 + $0x268] sm:$0xff]
    %v5430 = vld [vmem:[#allocation6 + $0x270] sm:$0xff]
    %v5431 = vld [vmem:[#allocation6 + $0x278] sm:$0xff]
    %v5432 = vld [vmem:[#allocation6 + $0x280] sm:$0xff]
    %v5433 = vld [vmem:[#allocation6 + $0x288] sm:$0xff]
    %v5434 = vld [vmem:[#allocation6 + $0x290] sm:$0xff]
    %v5435 = vld [vmem:[#allocation6 + $0x298] sm:$0xff]
    %v5436 = vld [vmem:[#allocation6 + $0x2a0] sm:$0xff]
    %v5437 = vld [vmem:[#allocation6 + $0x2a8] sm:$0xff]
    %v5438 = vld [vmem:[#allocation6 + $0x2b0] sm:$0xff]
    %v5439 = vld [vmem:[#allocation6 + $0x2b8] sm:$0xff]
    %v5440 = vld [vmem:[#allocation6 + $0x2c0] sm:$0xff]
    %v5441 = vld [vmem:[#allocation6 + $0x2c8] sm:$0xff]
    %v5442 = vld [vmem:[#allocation6 + $0x2d0] sm:$0xff]
    %v5443 = vld [vmem:[#allocation6 + $0x2d8] sm:$0xff]
    %v5444 = vld [vmem:[#allocation6 + $0x2e0] sm:$0xff]
    %v5445 = vld [vmem:[#allocation6 + $0x2e8] sm:$0xff]
    %v5446 = vld [vmem:[#allocation6 + $0x2f0] sm:$0xff]
    %v5447 = vld [vmem:[#allocation6 + $0x2f8] sm:$0xff]
    %v5448 = vld [vmem:[#allocation6 + $0x300] sm:$0xff]
    %v5449 = vld [vmem:[#allocation6 + $0x308] sm:$0xff]
    %v5450 = vld [vmem:[#allocation6 + $0x310] sm:$0xff]
    %v5451 = vld [vmem:[#allocation6 + $0x318] sm:$0xff]
    %v5452 = vld [vmem:[#allocation6 + $0x320] sm:$0xff]
    %v5453 = vld [vmem:[#allocation6 + $0x328] sm:$0xff]
    %v5454 = vld [vmem:[#allocation6 + $0x330] sm:$0xff]
    %v5455 = vld [vmem:[#allocation6 + $0x338] sm:$0xff]
    %v5456 = vld [vmem:[#allocation6 + $0x340] sm:$0xff]
    %v5457 = vld [vmem:[#allocation6 + $0x348] sm:$0xff]
    %v5458 = vld [vmem:[#allocation6 + $0x350] sm:$0xff]
    %v5459 = vld [vmem:[#allocation6 + $0x358] sm:$0xff]
    %v5460 = vld [vmem:[#allocation6 + $0x360] sm:$0xff]
    %v5461 = vld [vmem:[#allocation6 + $0x368] sm:$0xff]
    %v5462 = vld [vmem:[#allocation6 + $0x370] sm:$0xff]
    %v5463 = vld [vmem:[#allocation6 + $0x378] sm:$0xff]
    %v5464 = vld [vmem:[#allocation6 + $0x380] sm:$0xff]
    %v5465 = vld [vmem:[#allocation6 + $0x388] sm:$0xff]
    %v5466 = vld [vmem:[#allocation6 + $0x390] sm:$0xff]
    %v5467 = vld [vmem:[#allocation6 + $0x398] sm:$0xff]
    %v5468 = vld [vmem:[#allocation6 + $0x3a0] sm:$0xff]
    %v5469 = vld [vmem:[#allocation6 + $0x3a8] sm:$0xff]
    %v5470 = vld [vmem:[#allocation6 + $0x3b0] sm:$0xff]
    %v5471 = vld [vmem:[#allocation6 + $0x3b8] sm:$0xff]
    %v5472 = vld [vmem:[#allocation6 + $0x3c0] sm:$0xff]
    %v5473 = vld [vmem:[#allocation6 + $0x3c8] sm:$0xff]
    %v5474 = vld [vmem:[#allocation6 + $0x3d0] sm:$0xff]
    %v5475 = vld [vmem:[#allocation6 + $0x3d8] sm:$0xff]
    %v5476 = vld [vmem:[#allocation6 + $0x3e0] sm:$0xff]
    %v5477 = vld [vmem:[#allocation6 + $0x3e8] sm:$0xff]
    %v5478 = vld [vmem:[#allocation6 + $0x3f0] sm:$0xff]
    %v5479 = vld [vmem:[#allocation6 + $0x3f8] sm:$0xff]
    %v5480 = vld [vmem:[#allocation6 + $0x400] sm:$0xff]
    %v5481 = vld [vmem:[#allocation6 + $0x408] sm:$0xff]
    %v5482 = vld [vmem:[#allocation6 + $0x410] sm:$0xff]
    %v5483 = vld [vmem:[#allocation6 + $0x418] sm:$0xff]
    %v5484 = vld [vmem:[#allocation6 + $0x420] sm:$0xff]
    %v5485 = vld [vmem:[#allocation6 + $0x428] sm:$0xff]
    %v5486 = vld [vmem:[#allocation6 + $0x430] sm:$0xff]
    %v5487 = vld [vmem:[#allocation6 + $0x438] sm:$0xff]
    %v5488 = vld [vmem:[#allocation6 + $0x440] sm:$0xff]
    %v5489 = vld [vmem:[#allocation6 + $0x448] sm:$0xff]
    %v5490 = vld [vmem:[#allocation6 + $0x450] sm:$0xff]
    %v5491 = vld [vmem:[#allocation6 + $0x458] sm:$0xff]
    %v5492 = vld [vmem:[#allocation6 + $0x460] sm:$0xff]
    %v5493 = vld [vmem:[#allocation6 + $0x468] sm:$0xff]
    %v5494 = vld [vmem:[#allocation6 + $0x470] sm:$0xff]
    %v5495 = vld [vmem:[#allocation6 + $0x478] sm:$0xff]
    %v5496 = vld [vmem:[#allocation6 + $0x480] sm:$0xff]
    %v5497 = vld [vmem:[#allocation6 + $0x488] sm:$0xff]
    %v5498 = vld [vmem:[#allocation6 + $0x490] sm:$0xff]
    %v5499 = vld [vmem:[#allocation6 + $0x498] sm:$0xff]
    %v5500 = vld [vmem:[#allocation6 + $0x4a0] sm:$0xff]
    %v5501 = vld [vmem:[#allocation6 + $0x4a8] sm:$0xff]
    %v5502 = vld [vmem:[#allocation6 + $0x4b0] sm:$0xff]
    %v5503 = vld [vmem:[#allocation6 + $0x4b8] sm:$0xff]
    %v5504 = vld [vmem:[#allocation6 + $0x4c0] sm:$0xff]
    %v5505 = vld [vmem:[#allocation6 + $0x4c8] sm:$0xff]
    %v5506 = vld [vmem:[#allocation6 + $0x4d0] sm:$0xff]
    %v5507 = vld [vmem:[#allocation6 + $0x4d8] sm:$0xff]
    %v5508 = vld [vmem:[#allocation6 + $0x4e0] sm:$0xff]
    %v5509 = vld [vmem:[#allocation6 + $0x4e8] sm:$0xff]
    %v5510 = vld [vmem:[#allocation6 + $0x4f0] sm:$0xff]
    %v5511 = vld [vmem:[#allocation6 + $0x4f8] sm:$0xff]
    %v5512 = vld [vmem:[#allocation6 + $0x500] sm:$0xff]
    %v5513 = vld [vmem:[#allocation6 + $0x508] sm:$0xff]
    %v5514 = vld [vmem:[#allocation6 + $0x510] sm:$0xff]
    %v5515 = vld [vmem:[#allocation6 + $0x518] sm:$0xff]
    %v5516 = vld [vmem:[#allocation6 + $0x520] sm:$0xff]
    %v5517 = vld [vmem:[#allocation6 + $0x528] sm:$0xff]
    %v5518 = vld [vmem:[#allocation6 + $0x530] sm:$0xff]
    %v5519 = vld [vmem:[#allocation6 + $0x538] sm:$0xff]
    %v5520 = vld [vmem:[#allocation6 + $0x540] sm:$0xff]
    %v5521 = vld [vmem:[#allocation6 + $0x548] sm:$0xff]
    %v5522 = vld [vmem:[#allocation6 + $0x550] sm:$0xff]
    %v5523 = vld [vmem:[#allocation6 + $0x558] sm:$0xff]
    %v5524 = vld [vmem:[#allocation6 + $0x560] sm:$0xff]
    %v5525 = vld [vmem:[#allocation6 + $0x568] sm:$0xff]
    %v5526 = vld [vmem:[#allocation6 + $0x570] sm:$0xff]
    %v5527 = vld [vmem:[#allocation6 + $0x578] sm:$0xff]
    %v5528 = vld [vmem:[#allocation6 + $0x580] sm:$0xff]
    %v5529 = vld [vmem:[#allocation6 + $0x588] sm:$0xff]
    %v5530 = vld [vmem:[#allocation6 + $0x590] sm:$0xff]
    %v5531 = vld [vmem:[#allocation6 + $0x598] sm:$0xff]
    %v5532 = vld [vmem:[#allocation6 + $0x5a0] sm:$0xff]
    %v5533 = vld [vmem:[#allocation6 + $0x5a8] sm:$0xff]
    %v5534 = vld [vmem:[#allocation6 + $0x5b0] sm:$0xff]
    %v5535 = vld [vmem:[#allocation6 + $0x5b8] sm:$0xff]
    %v5536 = vld [vmem:[#allocation6 + $0x5c0] sm:$0xff]
    %v5537 = vld [vmem:[#allocation6 + $0x5c8] sm:$0xff]
    %v5538 = vld [vmem:[#allocation6 + $0x5d0] sm:$0xff]
    %v5539 = vld [vmem:[#allocation6 + $0x5d8] sm:$0xff]
    %v5540 = vld [vmem:[#allocation6 + $0x5e0] sm:$0xff]
    %v5541 = vld [vmem:[#allocation6 + $0x5e8] sm:$0xff]
    %v5542 = vld [vmem:[#allocation6 + $0x5f0] sm:$0xff]
    %v5543 = vld [vmem:[#allocation6 + $0x5f8] sm:$0xff]
    %v5544 = vld [vmem:[#allocation6 + $0x600] sm:$0xff]
    %v5545 = vld [vmem:[#allocation6 + $0x608] sm:$0xff]
    %v5546 = vld [vmem:[#allocation6 + $0x610] sm:$0xff]
    %v5547 = vld [vmem:[#allocation6 + $0x618] sm:$0xff]
    %v5548 = vld [vmem:[#allocation6 + $0x620] sm:$0xff]
    %v5549 = vld [vmem:[#allocation6 + $0x628] sm:$0xff]
    %v5550 = vld [vmem:[#allocation6 + $0x630] sm:$0xff]
    %v5551 = vld [vmem:[#allocation6 + $0x638] sm:$0xff]
    %v5552 = vld [vmem:[#allocation6 + $0x640] sm:$0xff]
    %v5553 = vld [vmem:[#allocation6 + $0x648] sm:$0xff]
    %v5554 = vld [vmem:[#allocation6 + $0x650] sm:$0xff]
    %v5555 = vld [vmem:[#allocation6 + $0x658] sm:$0xff]
    %v5556 = vld [vmem:[#allocation6 + $0x660] sm:$0xff]
    %v5557 = vld [vmem:[#allocation6 + $0x668] sm:$0xff]
    %v5558 = vld [vmem:[#allocation6 + $0x670] sm:$0xff]
    %v5559 = vld [vmem:[#allocation6 + $0x678] sm:$0xff]
    %v5560 = vld [vmem:[#allocation6 + $0x680] sm:$0xff]
    %v5561 = vld [vmem:[#allocation6 + $0x688] sm:$0xff]
    %v5562 = vld [vmem:[#allocation6 + $0x690] sm:$0xff]
    %v5563 = vld [vmem:[#allocation6 + $0x698] sm:$0xff]
    %v5564 = vld [vmem:[#allocation6 + $0x6a0] sm:$0xff]
    %v5565 = vld [vmem:[#allocation6 + $0x6a8] sm:$0xff]
    %v5566 = vld [vmem:[#allocation6 + $0x6b0] sm:$0xff]
    %v5567 = vld [vmem:[#allocation6 + $0x6b8] sm:$0xff]
    %v5568 = vld [vmem:[#allocation6 + $0x6c0] sm:$0xff]
    %v5569 = vld [vmem:[#allocation6 + $0x6c8] sm:$0xff]
    %v5570 = vld [vmem:[#allocation6 + $0x6d0] sm:$0xff]
    %v5571 = vld [vmem:[#allocation6 + $0x6d8] sm:$0xff]
    %v5572 = vld [vmem:[#allocation6 + $0x6e0] sm:$0xff]
    %v5573 = vld [vmem:[#allocation6 + $0x6e8] sm:$0xff]
    %v5574 = vld [vmem:[#allocation6 + $0x6f0] sm:$0xff]
    %v5575 = vld [vmem:[#allocation6 + $0x6f8] sm:$0xff]
    %v5576 = vld [vmem:[#allocation6 + $0x700] sm:$0xff]
    %v5577 = vld [vmem:[#allocation6 + $0x708] sm:$0xff]
    %v5578 = vld [vmem:[#allocation6 + $0x710] sm:$0xff]
    %v5579 = vld [vmem:[#allocation6 + $0x718] sm:$0xff]
    %v5580 = vld [vmem:[#allocation6 + $0x720] sm:$0xff]
    %v5581 = vld [vmem:[#allocation6 + $0x728] sm:$0xff]
    %v5582 = vld [vmem:[#allocation6 + $0x730] sm:$0xff]
    %v5583 = vld [vmem:[#allocation6 + $0x738] sm:$0xff]
    %v5584 = vld [vmem:[#allocation6 + $0x740] sm:$0xff]
    %v5585 = vld [vmem:[#allocation6 + $0x748] sm:$0xff]
    %v5586 = vld [vmem:[#allocation6 + $0x750] sm:$0xff]
    %v5587 = vld [vmem:[#allocation6 + $0x758] sm:$0xff]
    %v5588 = vld [vmem:[#allocation6 + $0x760] sm:$0xff]
    %v5589 = vld [vmem:[#allocation6 + $0x768] sm:$0xff]
    %v5590 = vld [vmem:[#allocation6 + $0x770] sm:$0xff]
    %v5591 = vld [vmem:[#allocation6 + $0x778] sm:$0xff]
    %v5592 = vld [vmem:[#allocation6 + $0x780] sm:$0xff]
    %v5593 = vld [vmem:[#allocation6 + $0x788] sm:$0xff]
    %v5594 = vld [vmem:[#allocation6 + $0x790] sm:$0xff]
    %v5595 = vld [vmem:[#allocation6 + $0x798] sm:$0xff]
    %v5596 = vld [vmem:[#allocation6 + $0x7a0] sm:$0xff]
    %v5597 = vld [vmem:[#allocation6 + $0x7a8] sm:$0xff]
    %v5598 = vld [vmem:[#allocation6 + $0x7b0] sm:$0xff]
    %v5599 = vld [vmem:[#allocation6 + $0x7b8] sm:$0xff]
    %v5600 = vld [vmem:[#allocation6 + $0x7c0] sm:$0xff]
    %v5601 = vld [vmem:[#allocation6 + $0x7c8] sm:$0xff]
    %v5602 = vld [vmem:[#allocation6 + $0x7d0] sm:$0xff]
    %v5603 = vld [vmem:[#allocation6 + $0x7d8] sm:$0xff]
    %v5604 = vld [vmem:[#allocation6 + $0x7e0] sm:$0xff]
    %v5605 = vld [vmem:[#allocation6 + $0x7e8] sm:$0xff]
    %v5606 = vld [vmem:[#allocation6 + $0x7f0] sm:$0xff]
    %v5607 = vld [vmem:[#allocation6 + $0x7f8] sm:$0xff]
    %v5608 = vld [vmem:[#allocation6 + $0x800] sm:$0xff]
    %v5609 = vld [vmem:[#allocation6 + $0x808] sm:$0xff]
    %v5610 = vld [vmem:[#allocation6 + $0x810] sm:$0xff]
    %v5611 = vld [vmem:[#allocation6 + $0x818] sm:$0xff]
    %v5612 = vld [vmem:[#allocation6 + $0x820] sm:$0xff]
    %v5613 = vld [vmem:[#allocation6 + $0x828] sm:$0xff]
    %v5614 = vld [vmem:[#allocation6 + $0x830] sm:$0xff]
    %v5615 = vld [vmem:[#allocation6 + $0x838] sm:$0xff]
    %v5616 = vld [vmem:[#allocation6 + $0x840] sm:$0xff]
    %v5617 = vld [vmem:[#allocation6 + $0x848] sm:$0xff]
    %v5618 = vld [vmem:[#allocation6 + $0x850] sm:$0xff]
    %v5619 = vld [vmem:[#allocation6 + $0x858] sm:$0xff]
    %v5620 = vld [vmem:[#allocation6 + $0x860] sm:$0xff]
    %v5621 = vld [vmem:[#allocation6 + $0x868] sm:$0xff]
    %v5622 = vld [vmem:[#allocation6 + $0x870] sm:$0xff]
    %v5623 = vld [vmem:[#allocation6 + $0x878] sm:$0xff]
    %v5624 = vld [vmem:[#allocation6 + $0x880] sm:$0xff]
    %v5625 = vld [vmem:[#allocation6 + $0x888] sm:$0xff]
    %v5626 = vld [vmem:[#allocation6 + $0x890] sm:$0xff]
    %v5627 = vld [vmem:[#allocation6 + $0x898] sm:$0xff]
    %v5628 = vld [vmem:[#allocation6 + $0x8a0] sm:$0xff]
    %v5629 = vld [vmem:[#allocation6 + $0x8a8] sm:$0xff]
    %v5630 = vld [vmem:[#allocation6 + $0x8b0] sm:$0xff]
    %v5631 = vld [vmem:[#allocation6 + $0x8b8] sm:$0xff]
    %v5632 = vld [vmem:[#allocation6 + $0x8c0] sm:$0xff]
    %v5633 = vld [vmem:[#allocation6 + $0x8c8] sm:$0xff]
    %v5634 = vld [vmem:[#allocation6 + $0x8d0] sm:$0xff]
    %v5635 = vld [vmem:[#allocation6 + $0x8d8] sm:$0xff]
    %v5636 = vld [vmem:[#allocation6 + $0x8e0] sm:$0xff]
    %v5637 = vld [vmem:[#allocation6 + $0x8e8] sm:$0xff]
    %v5638 = vld [vmem:[#allocation6 + $0x8f0] sm:$0xff]
    %v5639 = vld [vmem:[#allocation6 + $0x8f8] sm:$0xff]
    %v5640 = vld [vmem:[#allocation6 + $0x900] sm:$0xff]
    %v5641 = vld [vmem:[#allocation6 + $0x908] sm:$0xff]
    %v5642 = vld [vmem:[#allocation6 + $0x910] sm:$0xff]
    %v5643 = vld [vmem:[#allocation6 + $0x918] sm:$0xff]
    %v5644 = vld [vmem:[#allocation6 + $0x920] sm:$0xff]
    %v5645 = vld [vmem:[#allocation6 + $0x928] sm:$0xff]
    %v5646 = vld [vmem:[#allocation6 + $0x930] sm:$0xff]
    %v5647 = vld [vmem:[#allocation6 + $0x938] sm:$0xff]
    %v5648 = vld [vmem:[#allocation6 + $0x940] sm:$0xff]
    %v5649 = vld [vmem:[#allocation6 + $0x948] sm:$0xff]
    %v5650 = vld [vmem:[#allocation6 + $0x950] sm:$0xff]
    %v5651 = vld [vmem:[#allocation6 + $0x958] sm:$0xff]
    %v5652 = vld [vmem:[#allocation6 + $0x960] sm:$0xff]
    %v5653 = vld [vmem:[#allocation6 + $0x968] sm:$0xff]
    %v5654 = vld [vmem:[#allocation6 + $0x970] sm:$0xff]
    %v5655 = vld [vmem:[#allocation6 + $0x978] sm:$0xff]
    %v5656 = vld [vmem:[#allocation6 + $0x980] sm:$0xff]
    %v5657 = vld [vmem:[#allocation6 + $0x988] sm:$0xff]
    %v5658 = vld [vmem:[#allocation6 + $0x990] sm:$0xff]
    %v5659 = vld [vmem:[#allocation6 + $0x998] sm:$0xff]
    %v5660 = vld [vmem:[#allocation6 + $0x9a0] sm:$0xff]
    %v5661 = vld [vmem:[#allocation6 + $0x9a8] sm:$0xff]
    %v5662 = vld [vmem:[#allocation6 + $0x9b0] sm:$0xff]
    %v5663 = vld [vmem:[#allocation6 + $0x9b8] sm:$0xff]
    %v5664 = vld [vmem:[#allocation6 + $0x9c0] sm:$0xff]
    %v5665 = vld [vmem:[#allocation6 + $0x9c8] sm:$0xff]
    %v5666 = vld [vmem:[#allocation6 + $0x9d0] sm:$0xff]
    %v5667 = vld [vmem:[#allocation6 + $0x9d8] sm:$0xff]
    %v5668 = vld [vmem:[#allocation6 + $0x9e0] sm:$0xff]
    %v5669 = vld [vmem:[#allocation6 + $0x9e8] sm:$0xff]
    %v5670 = vld [vmem:[#allocation6 + $0x9f0] sm:$0xff]
    %v5671 = vld [vmem:[#allocation6 + $0x9f8] sm:$0xff]
    %v5672 = vld [vmem:[#allocation6 + $0xa00] sm:$0xff]
    %v5673 = vld [vmem:[#allocation6 + $0xa08] sm:$0xff]
    %v5674 = vld [vmem:[#allocation6 + $0xa10] sm:$0xff]
    %v5675 = vld [vmem:[#allocation6 + $0xa18] sm:$0xff]
    %v5676 = vld [vmem:[#allocation6 + $0xa20] sm:$0xff]
    %v5677 = vld [vmem:[#allocation6 + $0xa28] sm:$0xff]
    %v5678 = vld [vmem:[#allocation6 + $0xa30] sm:$0xff]
    %v5679 = vld [vmem:[#allocation6 + $0xa38] sm:$0xff]
    %v5680 = vld [vmem:[#allocation6 + $0xa40] sm:$0xff]
    %v5681 = vld [vmem:[#allocation6 + $0xa48] sm:$0xff]
    %v5682 = vld [vmem:[#allocation6 + $0xa50] sm:$0xff]
    %v5683 = vld [vmem:[#allocation6 + $0xa58] sm:$0xff]
    %v5684 = vld [vmem:[#allocation6 + $0xa60] sm:$0xff]
    %v5685 = vld [vmem:[#allocation6 + $0xa68] sm:$0xff]
    %v5686 = vld [vmem:[#allocation6 + $0xa70] sm:$0xff]
    %v5687 = vld [vmem:[#allocation6 + $0xa78] sm:$0xff]
    %v5688 = vld [vmem:[#allocation6 + $0xa80] sm:$0xff]
    %v5689 = vld [vmem:[#allocation6 + $0xa88] sm:$0xff]
    %v5690 = vld [vmem:[#allocation6 + $0xa90] sm:$0xff]
    %v5691 = vld [vmem:[#allocation6 + $0xa98] sm:$0xff]
    %v5692 = vld [vmem:[#allocation6 + $0xaa0] sm:$0xff]
    %v5693 = vld [vmem:[#allocation6 + $0xaa8] sm:$0xff]
    %v5694 = vld [vmem:[#allocation6 + $0xab0] sm:$0xff]
    %v5695 = vld [vmem:[#allocation6 + $0xab8] sm:$0xff]
    %v5696 = vld [vmem:[#allocation6 + $0xac0] sm:$0xff]
    %v5697 = vld [vmem:[#allocation6 + $0xac8] sm:$0xff]
    %v5698 = vld [vmem:[#allocation6 + $0xad0] sm:$0xff]
    %v5699 = vld [vmem:[#allocation6 + $0xad8] sm:$0xff]
    %v5700 = vld [vmem:[#allocation6 + $0xae0] sm:$0xff]
    %v5701 = vld [vmem:[#allocation6 + $0xae8] sm:$0xff]
    %v5702 = vld [vmem:[#allocation6 + $0xaf0] sm:$0xff]
    %v5703 = vld [vmem:[#allocation6 + $0xaf8] sm:$0xff]
    %v5704 = vld [vmem:[#allocation6 + $0xb00] sm:$0xff]
    %v5705 = vld [vmem:[#allocation6 + $0xb08] sm:$0xff]
    %v5706 = vld [vmem:[#allocation6 + $0xb10] sm:$0xff]
    %v5707 = vld [vmem:[#allocation6 + $0xb18] sm:$0xff]
    %v5708 = vld [vmem:[#allocation6 + $0xb20] sm:$0xff]
    %v5709 = vld [vmem:[#allocation6 + $0xb28] sm:$0xff]
    %v5710 = vld [vmem:[#allocation6 + $0xb30] sm:$0xff]
    %v5711 = vld [vmem:[#allocation6 + $0xb38] sm:$0xff]
    %v5712 = vld [vmem:[#allocation6 + $0xb40] sm:$0xff]
    %v5713 = vld [vmem:[#allocation6 + $0xb48] sm:$0xff]
    %v5714 = vld [vmem:[#allocation6 + $0xb50] sm:$0xff]
    %v5715 = vld [vmem:[#allocation6 + $0xb58] sm:$0xff]
    %v5716 = vld [vmem:[#allocation6 + $0xb60] sm:$0xff]
    %v5717 = vld [vmem:[#allocation6 + $0xb68] sm:$0xff]
    %v5718 = vld [vmem:[#allocation6 + $0xb70] sm:$0xff]
    %v5719 = vld [vmem:[#allocation6 + $0xb78] sm:$0xff]
    %v5720 = vld [vmem:[#allocation6 + $0xb80] sm:$0xff]
    %v5721 = vld [vmem:[#allocation6 + $0xb88] sm:$0xff]
    %v5722 = vld [vmem:[#allocation6 + $0xb90] sm:$0xff]
    %v5723 = vld [vmem:[#allocation6 + $0xb98] sm:$0xff]
    %v5724 = vld [vmem:[#allocation6 + $0xba0] sm:$0xff]
    %v5725 = vld [vmem:[#allocation6 + $0xba8] sm:$0xff]
    %v5726 = vld [vmem:[#allocation6 + $0xbb0] sm:$0xff]
    %v5727 = vld [vmem:[#allocation6 + $0xbb8] sm:$0xff]
    %v5728 = vld [vmem:[#allocation6 + $0xbc0] sm:$0xff]
    %v5729 = vld [vmem:[#allocation6 + $0xbc8] sm:$0xff]
    %v5730 = vld [vmem:[#allocation6 + $0xbd0] sm:$0xff]
    %v5731 = vld [vmem:[#allocation6 + $0xbd8] sm:$0xff]
    %v5732 = vld [vmem:[#allocation6 + $0xbe0] sm:$0xff]
    %v5733 = vld [vmem:[#allocation6 + $0xbe8] sm:$0xff]
    %v5734 = vld [vmem:[#allocation6 + $0xbf0] sm:$0xff]
    %v5735 = vld [vmem:[#allocation6 + $0xbf8] sm:$0xff]
    %v5736 = vld [vmem:[#allocation6 + $0xc00] sm:$0xff]
    %v5737 = vld [vmem:[#allocation6 + $0xc08] sm:$0xff]
    %v5738 = vld [vmem:[#allocation6 + $0xc10] sm:$0xff]
    %v5739 = vld [vmem:[#allocation6 + $0xc18] sm:$0xff]
    %v5740 = vld [vmem:[#allocation6 + $0xc20] sm:$0xff]
    %v5741 = vld [vmem:[#allocation6 + $0xc28] sm:$0xff]
    %v5742 = vld [vmem:[#allocation6 + $0xc30] sm:$0xff]
    %v5743 = vld [vmem:[#allocation6 + $0xc38] sm:$0xff]
    %v5744 = vld [vmem:[#allocation6 + $0xc40] sm:$0xff]
    %v5745 = vld [vmem:[#allocation6 + $0xc48] sm:$0xff]
    %v5746 = vld [vmem:[#allocation6 + $0xc50] sm:$0xff]
    %v5747 = vld [vmem:[#allocation6 + $0xc58] sm:$0xff]
    %v5748 = vld [vmem:[#allocation6 + $0xc60] sm:$0xff]
    %v5749 = vld [vmem:[#allocation6 + $0xc68] sm:$0xff]
    %v5750 = vld [vmem:[#allocation6 + $0xc70] sm:$0xff]
    %v5751 = vld [vmem:[#allocation6 + $0xc78] sm:$0xff]
    %v5752 = vld [vmem:[#allocation6 + $0xc80] sm:$0xff]
    %v5753 = vld [vmem:[#allocation6 + $0xc88] sm:$0xff]
    %v5754 = vld [vmem:[#allocation6 + $0xc90] sm:$0xff]
    %v5755 = vld [vmem:[#allocation6 + $0xc98] sm:$0xff]
    %v5756 = vld [vmem:[#allocation6 + $0xca0] sm:$0xff]
    %v5757 = vld [vmem:[#allocation6 + $0xca8] sm:$0xff]
    %v5758 = vld [vmem:[#allocation6 + $0xcb0] sm:$0xff]
    %v5759 = vld [vmem:[#allocation6 + $0xcb8] sm:$0xff]
    %v5760 = vld [vmem:[#allocation6 + $0xcc0] sm:$0xff]
    %v5761 = vld [vmem:[#allocation6 + $0xcc8] sm:$0xff]
    %v5762 = vld [vmem:[#allocation6 + $0xcd0] sm:$0xff]
    %v5763 = vld [vmem:[#allocation6 + $0xcd8] sm:$0xff]
    %v5764 = vld [vmem:[#allocation6 + $0xce0] sm:$0xff]
    %v5765 = vld [vmem:[#allocation6 + $0xce8] sm:$0xff]
    %v5766 = vld [vmem:[#allocation6 + $0xcf0] sm:$0xff]
    %v5767 = vld [vmem:[#allocation6 + $0xcf8] sm:$0xff]
    %v5768 = vld [vmem:[#allocation6 + $0xd00] sm:$0xff]
    %v5769 = vld [vmem:[#allocation6 + $0xd08] sm:$0xff]
    %v5770 = vld [vmem:[#allocation6 + $0xd10] sm:$0xff]
    %v5771 = vld [vmem:[#allocation6 + $0xd18] sm:$0xff]
    %v5772 = vld [vmem:[#allocation6 + $0xd20] sm:$0xff]
    %v5773 = vld [vmem:[#allocation6 + $0xd28] sm:$0xff]
    %v5774 = vld [vmem:[#allocation6 + $0xd30] sm:$0xff]
    %v5775 = vld [vmem:[#allocation6 + $0xd38] sm:$0xff]
    %v5776 = vld [vmem:[#allocation6 + $0xd40] sm:$0xff]
    %v5777 = vld [vmem:[#allocation6 + $0xd48] sm:$0xff]
    %v5778 = vld [vmem:[#allocation6 + $0xd50] sm:$0xff]
    %v5779 = vld [vmem:[#allocation6 + $0xd58] sm:$0xff]
    %v5780 = vld [vmem:[#allocation6 + $0xd60] sm:$0xff]
    %v5781 = vld [vmem:[#allocation6 + $0xd68] sm:$0xff]
    %v5782 = vld [vmem:[#allocation6 + $0xd70] sm:$0xff]
    %v5783 = vld [vmem:[#allocation6 + $0xd78] sm:$0xff]
    %v5784 = vld [vmem:[#allocation6 + $0xd80] sm:$0xff]
    %v5785 = vld [vmem:[#allocation6 + $0xd88] sm:$0xff]
    %v5786 = vld [vmem:[#allocation6 + $0xd90] sm:$0xff]
    %v5787 = vld [vmem:[#allocation6 + $0xd98] sm:$0xff]
    %v5788 = vld [vmem:[#allocation6 + $0xda0] sm:$0xff]
    %v5789 = vld [vmem:[#allocation6 + $0xda8] sm:$0xff]
    %v5790 = vld [vmem:[#allocation6 + $0xdb0] sm:$0xff]
    %v5791 = vld [vmem:[#allocation6 + $0xdb8] sm:$0xff]
    %v5792 = vld [vmem:[#allocation6 + $0xdc0] sm:$0xff]
    %v5793 = vld [vmem:[#allocation6 + $0xdc8] sm:$0xff]
    %v5794 = vld [vmem:[#allocation6 + $0xdd0] sm:$0xff]
    %v5795 = vld [vmem:[#allocation6 + $0xdd8] sm:$0xff]
    %v5796 = vld [vmem:[#allocation6 + $0xde0] sm:$0xff]
    %v5797 = vld [vmem:[#allocation6 + $0xde8] sm:$0xff]
    %v5798 = vld [vmem:[#allocation6 + $0xdf0] sm:$0xff]
    %v5799 = vld [vmem:[#allocation6 + $0xdf8] sm:$0xff]
    %v5800 = vunpack.c.l.bf16 %v5352
    %v5801 = vunpack.c.h.bf16 %v5352
    %v5802 = vunpack.c.l.bf16 %v5353
    %v5803 = vunpack.c.h.bf16 %v5353
    %v5804 = vunpack.c.l.bf16 %v5354
    %v5805 = vunpack.c.h.bf16 %v5354
    %v5806 = vunpack.c.l.bf16 %v5355
    %v5807 = vunpack.c.h.bf16 %v5355
    %v5808 = vunpack.c.l.bf16 %v5356
    %v5809 = vunpack.c.h.bf16 %v5356
    %v5810 = vunpack.c.l.bf16 %v5357
    %v5811 = vunpack.c.h.bf16 %v5357
    %v5812 = vunpack.c.l.bf16 %v5358
    %v5813 = vunpack.c.h.bf16 %v5358
    %v5814 = vunpack.c.l.bf16 %v5359
    %v5815 = vunpack.c.h.bf16 %v5359
    %v5816 = vunpack.c.l.bf16 %v5360
    %v5817 = vunpack.c.h.bf16 %v5360
    %v5818 = vunpack.c.l.bf16 %v5361
    %v5819 = vunpack.c.h.bf16 %v5361
    %v5820 = vunpack.c.l.bf16 %v5362
    %v5821 = vunpack.c.h.bf16 %v5362
    %v5822 = vunpack.c.l.bf16 %v5363
    %v5823 = vunpack.c.h.bf16 %v5363
    %v5824 = vunpack.c.l.bf16 %v5364
    %v5825 = vunpack.c.h.bf16 %v5364
    %v5826 = vunpack.c.l.bf16 %v5365
    %v5827 = vunpack.c.h.bf16 %v5365
    %v5828 = vunpack.c.l.bf16 %v5366
    %v5829 = vunpack.c.h.bf16 %v5366
    %v5830 = vunpack.c.l.bf16 %v5367
    %v5831 = vunpack.c.h.bf16 %v5367
    %v5832 = vunpack.c.l.bf16 %v5368
    %v5833 = vunpack.c.h.bf16 %v5368
    %v5834 = vunpack.c.l.bf16 %v5369
    %v5835 = vunpack.c.h.bf16 %v5369
    %v5836 = vunpack.c.l.bf16 %v5370
    %v5837 = vunpack.c.h.bf16 %v5370
    %v5838 = vunpack.c.l.bf16 %v5371
    %v5839 = vunpack.c.h.bf16 %v5371
    %v5840 = vunpack.c.l.bf16 %v5372
    %v5841 = vunpack.c.h.bf16 %v5372
    %v5842 = vunpack.c.l.bf16 %v5373
    %v5843 = vunpack.c.h.bf16 %v5373
    %v5844 = vunpack.c.l.bf16 %v5374
    %v5845 = vunpack.c.h.bf16 %v5374
    %v5846 = vunpack.c.l.bf16 %v5375
    %v5847 = vunpack.c.h.bf16 %v5375
    %v5848 = vunpack.c.l.bf16 %v5376
    %v5849 = vunpack.c.h.bf16 %v5376
    %v5850 = vunpack.c.l.bf16 %v5377
    %v5851 = vunpack.c.h.bf16 %v5377
    %v5852 = vunpack.c.l.bf16 %v5378
    %v5853 = vunpack.c.h.bf16 %v5378
    %v5854 = vunpack.c.l.bf16 %v5379
    %v5855 = vunpack.c.h.bf16 %v5379
    %v5856 = vunpack.c.l.bf16 %v5380
    %v5857 = vunpack.c.h.bf16 %v5380
    %v5858 = vunpack.c.l.bf16 %v5381
    %v5859 = vunpack.c.h.bf16 %v5381
    %v5860 = vunpack.c.l.bf16 %v5382
    %v5861 = vunpack.c.h.bf16 %v5382
    %v5862 = vunpack.c.l.bf16 %v5383
    %v5863 = vunpack.c.h.bf16 %v5383
    %v5864 = vunpack.c.l.bf16 %v5384
    %v5865 = vunpack.c.h.bf16 %v5384
    %v5866 = vunpack.c.l.bf16 %v5385
    %v5867 = vunpack.c.h.bf16 %v5385
    %v5868 = vunpack.c.l.bf16 %v5386
    %v5869 = vunpack.c.h.bf16 %v5386
    %v5870 = vunpack.c.l.bf16 %v5387
    %v5871 = vunpack.c.h.bf16 %v5387
    %v5872 = vunpack.c.l.bf16 %v5388
    %v5873 = vunpack.c.h.bf16 %v5388
    %v5874 = vunpack.c.l.bf16 %v5389
    %v5875 = vunpack.c.h.bf16 %v5389
    %v5876 = vunpack.c.l.bf16 %v5390
    %v5877 = vunpack.c.h.bf16 %v5390
    %v5878 = vunpack.c.l.bf16 %v5391
    %v5879 = vunpack.c.h.bf16 %v5391
    %v5880 = vunpack.c.l.bf16 %v5392
    %v5881 = vunpack.c.h.bf16 %v5392
    %v5882 = vunpack.c.l.bf16 %v5393
    %v5883 = vunpack.c.h.bf16 %v5393
    %v5884 = vunpack.c.l.bf16 %v5394
    %v5885 = vunpack.c.h.bf16 %v5394
    %v5886 = vunpack.c.l.bf16 %v5395
    %v5887 = vunpack.c.h.bf16 %v5395
    %v5888 = vunpack.c.l.bf16 %v5396
    %v5889 = vunpack.c.h.bf16 %v5396
    %v5890 = vunpack.c.l.bf16 %v5397
    %v5891 = vunpack.c.h.bf16 %v5397
    %v5892 = vunpack.c.l.bf16 %v5398
    %v5893 = vunpack.c.h.bf16 %v5398
    %v5894 = vunpack.c.l.bf16 %v5399
    %v5895 = vunpack.c.h.bf16 %v5399
    %v5896 = vunpack.c.l.bf16 %v5400
    %v5897 = vunpack.c.h.bf16 %v5400
    %v5898 = vunpack.c.l.bf16 %v5401
    %v5899 = vunpack.c.h.bf16 %v5401
    %v5900 = vunpack.c.l.bf16 %v5402
    %v5901 = vunpack.c.h.bf16 %v5402
    %v5902 = vunpack.c.l.bf16 %v5403
    %v5903 = vunpack.c.h.bf16 %v5403
    %v5904 = vunpack.c.l.bf16 %v5404
    %v5905 = vunpack.c.h.bf16 %v5404
    %v5906 = vunpack.c.l.bf16 %v5405
    %v5907 = vunpack.c.h.bf16 %v5405
    %v5908 = vunpack.c.l.bf16 %v5406
    %v5909 = vunpack.c.h.bf16 %v5406
    %v5910 = vunpack.c.l.bf16 %v5407
    %v5911 = vunpack.c.h.bf16 %v5407
    %v5912 = vunpack.c.l.bf16 %v5408
    %v5913 = vunpack.c.h.bf16 %v5408
    %v5914 = vunpack.c.l.bf16 %v5409
    %v5915 = vunpack.c.h.bf16 %v5409
    %v5916 = vunpack.c.l.bf16 %v5410
    %v5917 = vunpack.c.h.bf16 %v5410
    %v5918 = vunpack.c.l.bf16 %v5411
    %v5919 = vunpack.c.h.bf16 %v5411
    %v5920 = vunpack.c.l.bf16 %v5412
    %v5921 = vunpack.c.h.bf16 %v5412
    %v5922 = vunpack.c.l.bf16 %v5413
    %v5923 = vunpack.c.h.bf16 %v5413
    %v5924 = vunpack.c.l.bf16 %v5414
    %v5925 = vunpack.c.h.bf16 %v5414
    %v5926 = vunpack.c.l.bf16 %v5415
    %v5927 = vunpack.c.h.bf16 %v5415
    %v5928 = vunpack.c.l.bf16 %v5416
    %v5929 = vunpack.c.h.bf16 %v5416
    %v5930 = vunpack.c.l.bf16 %v5417
    %v5931 = vunpack.c.h.bf16 %v5417
    %v5932 = vunpack.c.l.bf16 %v5418
    %v5933 = vunpack.c.h.bf16 %v5418
    %v5934 = vunpack.c.l.bf16 %v5419
    %v5935 = vunpack.c.h.bf16 %v5419
    %v5936 = vunpack.c.l.bf16 %v5420
    %v5937 = vunpack.c.h.bf16 %v5420
    %v5938 = vunpack.c.l.bf16 %v5421
    %v5939 = vunpack.c.h.bf16 %v5421
    %v5940 = vunpack.c.l.bf16 %v5422
    %v5941 = vunpack.c.h.bf16 %v5422
    %v5942 = vunpack.c.l.bf16 %v5423
    %v5943 = vunpack.c.h.bf16 %v5423
    %v5944 = vunpack.c.l.bf16 %v5424
    %v5945 = vunpack.c.h.bf16 %v5424
    %v5946 = vunpack.c.l.bf16 %v5425
    %v5947 = vunpack.c.h.bf16 %v5425
    %v5948 = vunpack.c.l.bf16 %v5426
    %v5949 = vunpack.c.h.bf16 %v5426
    %v5950 = vunpack.c.l.bf16 %v5427
    %v5951 = vunpack.c.h.bf16 %v5427
    %v5952 = vunpack.c.l.bf16 %v5428
    %v5953 = vunpack.c.h.bf16 %v5428
    %v5954 = vunpack.c.l.bf16 %v5429
    %v5955 = vunpack.c.h.bf16 %v5429
    %v5956 = vunpack.c.l.bf16 %v5430
    %v5957 = vunpack.c.h.bf16 %v5430
    %v5958 = vunpack.c.l.bf16 %v5431
    %v5959 = vunpack.c.h.bf16 %v5431
    %v5960 = vunpack.c.l.bf16 %v5432
    %v5961 = vunpack.c.h.bf16 %v5432
    %v5962 = vunpack.c.l.bf16 %v5433
    %v5963 = vunpack.c.h.bf16 %v5433
    %v5964 = vunpack.c.l.bf16 %v5434
    %v5965 = vunpack.c.h.bf16 %v5434
    %v5966 = vunpack.c.l.bf16 %v5435
    %v5967 = vunpack.c.h.bf16 %v5435
    %v5968 = vunpack.c.l.bf16 %v5436
    %v5969 = vunpack.c.h.bf16 %v5436
    %v5970 = vunpack.c.l.bf16 %v5437
    %v5971 = vunpack.c.h.bf16 %v5437
    %v5972 = vunpack.c.l.bf16 %v5438
    %v5973 = vunpack.c.h.bf16 %v5438
    %v5974 = vunpack.c.l.bf16 %v5439
    %v5975 = vunpack.c.h.bf16 %v5439
    %v5976 = vunpack.c.l.bf16 %v5440
    %v5977 = vunpack.c.h.bf16 %v5440
    %v5978 = vunpack.c.l.bf16 %v5441
    %v5979 = vunpack.c.h.bf16 %v5441
    %v5980 = vunpack.c.l.bf16 %v5442
    %v5981 = vunpack.c.h.bf16 %v5442
    %v5982 = vunpack.c.l.bf16 %v5443
    %v5983 = vunpack.c.h.bf16 %v5443
    %v5984 = vunpack.c.l.bf16 %v5444
    %v5985 = vunpack.c.h.bf16 %v5444
    %v5986 = vunpack.c.l.bf16 %v5445
    %v5987 = vunpack.c.h.bf16 %v5445
    %v5988 = vunpack.c.l.bf16 %v5446
    %v5989 = vunpack.c.h.bf16 %v5446
    %v5990 = vunpack.c.l.bf16 %v5447
    %v5991 = vunpack.c.h.bf16 %v5447
    %v5992 = vunpack.c.l.bf16 %v5448
    %v5993 = vunpack.c.h.bf16 %v5448
    %v5994 = vunpack.c.l.bf16 %v5449
    %v5995 = vunpack.c.h.bf16 %v5449
    %v5996 = vunpack.c.l.bf16 %v5450
    %v5997 = vunpack.c.h.bf16 %v5450
    %v5998 = vunpack.c.l.bf16 %v5451
    %v5999 = vunpack.c.h.bf16 %v5451
    %v6000 = vunpack.c.l.bf16 %v5452
    %v6001 = vunpack.c.h.bf16 %v5452
    %v6002 = vunpack.c.l.bf16 %v5453
    %v6003 = vunpack.c.h.bf16 %v5453
    %v6004 = vunpack.c.l.bf16 %v5454
    %v6005 = vunpack.c.h.bf16 %v5454
    %v6006 = vunpack.c.l.bf16 %v5455
    %v6007 = vunpack.c.h.bf16 %v5455
    %v6008 = vunpack.c.l.bf16 %v5456
    %v6009 = vunpack.c.h.bf16 %v5456
    %v6010 = vunpack.c.l.bf16 %v5457
    %v6011 = vunpack.c.h.bf16 %v5457
    %v6012 = vunpack.c.l.bf16 %v5458
    %v6013 = vunpack.c.h.bf16 %v5458
    %v6014 = vunpack.c.l.bf16 %v5459
    %v6015 = vunpack.c.h.bf16 %v5459
    %v6016 = vunpack.c.l.bf16 %v5460
    %v6017 = vunpack.c.h.bf16 %v5460
    %v6018 = vunpack.c.l.bf16 %v5461
    %v6019 = vunpack.c.h.bf16 %v5461
    %v6020 = vunpack.c.l.bf16 %v5462
    %v6021 = vunpack.c.h.bf16 %v5462
    %v6022 = vunpack.c.l.bf16 %v5463
    %v6023 = vunpack.c.h.bf16 %v5463
    %v6024 = vunpack.c.l.bf16 %v5464
    %v6025 = vunpack.c.h.bf16 %v5464
    %v6026 = vunpack.c.l.bf16 %v5465
    %v6027 = vunpack.c.h.bf16 %v5465
    %v6028 = vunpack.c.l.bf16 %v5466
    %v6029 = vunpack.c.h.bf16 %v5466
    %v6030 = vunpack.c.l.bf16 %v5467
    %v6031 = vunpack.c.h.bf16 %v5467
    %v6032 = vunpack.c.l.bf16 %v5468
    %v6033 = vunpack.c.h.bf16 %v5468
    %v6034 = vunpack.c.l.bf16 %v5469
    %v6035 = vunpack.c.h.bf16 %v5469
    %v6036 = vunpack.c.l.bf16 %v5470
    %v6037 = vunpack.c.h.bf16 %v5470
    %v6038 = vunpack.c.l.bf16 %v5471
    %v6039 = vunpack.c.h.bf16 %v5471
    %v6040 = vunpack.c.l.bf16 %v5472
    %v6041 = vunpack.c.h.bf16 %v5472
    %v6042 = vunpack.c.l.bf16 %v5473
    %v6043 = vunpack.c.h.bf16 %v5473
    %v6044 = vunpack.c.l.bf16 %v5474
    %v6045 = vunpack.c.h.bf16 %v5474
    %v6046 = vunpack.c.l.bf16 %v5475
    %v6047 = vunpack.c.h.bf16 %v5475
    %v6048 = vunpack.c.l.bf16 %v5476
    %v6049 = vunpack.c.h.bf16 %v5476
    %v6050 = vunpack.c.l.bf16 %v5477
    %v6051 = vunpack.c.h.bf16 %v5477
    %v6052 = vunpack.c.l.bf16 %v5478
    %v6053 = vunpack.c.h.bf16 %v5478
    %v6054 = vunpack.c.l.bf16 %v5479
    %v6055 = vunpack.c.h.bf16 %v5479
    %v6056 = vunpack.c.l.bf16 %v5480
    %v6057 = vunpack.c.h.bf16 %v5480
    %v6058 = vunpack.c.l.bf16 %v5481
    %v6059 = vunpack.c.h.bf16 %v5481
    %v6060 = vunpack.c.l.bf16 %v5482
    %v6061 = vunpack.c.h.bf16 %v5482
    %v6062 = vunpack.c.l.bf16 %v5483
    %v6063 = vunpack.c.h.bf16 %v5483
    %v6064 = vunpack.c.l.bf16 %v5484
    %v6065 = vunpack.c.h.bf16 %v5484
    %v6066 = vunpack.c.l.bf16 %v5485
    %v6067 = vunpack.c.h.bf16 %v5485
    %v6068 = vunpack.c.l.bf16 %v5486
    %v6069 = vunpack.c.h.bf16 %v5486
    %v6070 = vunpack.c.l.bf16 %v5487
    %v6071 = vunpack.c.h.bf16 %v5487
    %v6072 = vunpack.c.l.bf16 %v5488
    %v6073 = vunpack.c.h.bf16 %v5488
    %v6074 = vunpack.c.l.bf16 %v5489
    %v6075 = vunpack.c.h.bf16 %v5489
    %v6076 = vunpack.c.l.bf16 %v5490
    %v6077 = vunpack.c.h.bf16 %v5490
    %v6078 = vunpack.c.l.bf16 %v5491
    %v6079 = vunpack.c.h.bf16 %v5491
    %v6080 = vunpack.c.l.bf16 %v5492
    %v6081 = vunpack.c.h.bf16 %v5492
    %v6082 = vunpack.c.l.bf16 %v5493
    %v6083 = vunpack.c.h.bf16 %v5493
    %v6084 = vunpack.c.l.bf16 %v5494
    %v6085 = vunpack.c.h.bf16 %v5494
    %v6086 = vunpack.c.l.bf16 %v5495
    %v6087 = vunpack.c.h.bf16 %v5495
    %v6088 = vunpack.c.l.bf16 %v5496
    %v6089 = vunpack.c.h.bf16 %v5496
    %v6090 = vunpack.c.l.bf16 %v5497
    %v6091 = vunpack.c.h.bf16 %v5497
    %v6092 = vunpack.c.l.bf16 %v5498
    %v6093 = vunpack.c.h.bf16 %v5498
    %v6094 = vunpack.c.l.bf16 %v5499
    %v6095 = vunpack.c.h.bf16 %v5499
    %v6096 = vunpack.c.l.bf16 %v5500
    %v6097 = vunpack.c.h.bf16 %v5500
    %v6098 = vunpack.c.l.bf16 %v5501
    %v6099 = vunpack.c.h.bf16 %v5501
    %v6100 = vunpack.c.l.bf16 %v5502
    %v6101 = vunpack.c.h.bf16 %v5502
    %v6102 = vunpack.c.l.bf16 %v5503
    %v6103 = vunpack.c.h.bf16 %v5503
    %v6104 = vunpack.c.l.bf16 %v5504
    %v6105 = vunpack.c.h.bf16 %v5504
    %v6106 = vunpack.c.l.bf16 %v5505
    %v6107 = vunpack.c.h.bf16 %v5505
    %v6108 = vunpack.c.l.bf16 %v5506
    %v6109 = vunpack.c.h.bf16 %v5506
    %v6110 = vunpack.c.l.bf16 %v5507
    %v6111 = vunpack.c.h.bf16 %v5507
    %v6112 = vunpack.c.l.bf16 %v5508
    %v6113 = vunpack.c.h.bf16 %v5508
    %v6114 = vunpack.c.l.bf16 %v5509
    %v6115 = vunpack.c.h.bf16 %v5509
    %v6116 = vunpack.c.l.bf16 %v5510
    %v6117 = vunpack.c.h.bf16 %v5510
    %v6118 = vunpack.c.l.bf16 %v5511
    %v6119 = vunpack.c.h.bf16 %v5511
    %v6120 = vunpack.c.l.bf16 %v5512
    %v6121 = vunpack.c.h.bf16 %v5512
    %v6122 = vunpack.c.l.bf16 %v5513
    %v6123 = vunpack.c.h.bf16 %v5513
    %v6124 = vunpack.c.l.bf16 %v5514
    %v6125 = vunpack.c.h.bf16 %v5514
    %v6126 = vunpack.c.l.bf16 %v5515
    %v6127 = vunpack.c.h.bf16 %v5515
    %v6128 = vunpack.c.l.bf16 %v5516
    %v6129 = vunpack.c.h.bf16 %v5516
    %v6130 = vunpack.c.l.bf16 %v5517
    %v6131 = vunpack.c.h.bf16 %v5517
    %v6132 = vunpack.c.l.bf16 %v5518
    %v6133 = vunpack.c.h.bf16 %v5518
    %v6134 = vunpack.c.l.bf16 %v5519
    %v6135 = vunpack.c.h.bf16 %v5519
    %v6136 = vunpack.c.l.bf16 %v5520
    %v6137 = vunpack.c.h.bf16 %v5520
    %v6138 = vunpack.c.l.bf16 %v5521
    %v6139 = vunpack.c.h.bf16 %v5521
    %v6140 = vunpack.c.l.bf16 %v5522
    %v6141 = vunpack.c.h.bf16 %v5522
    %v6142 = vunpack.c.l.bf16 %v5523
    %v6143 = vunpack.c.h.bf16 %v5523
    %v6144 = vunpack.c.l.bf16 %v5524
    %v6145 = vunpack.c.h.bf16 %v5524
    %v6146 = vunpack.c.l.bf16 %v5525
    %v6147 = vunpack.c.h.bf16 %v5525
    %v6148 = vunpack.c.l.bf16 %v5526
    %v6149 = vunpack.c.h.bf16 %v5526
    %v6150 = vunpack.c.l.bf16 %v5527
    %v6151 = vunpack.c.h.bf16 %v5527
    %v6152 = vunpack.c.l.bf16 %v5528
    %v6153 = vunpack.c.h.bf16 %v5528
    %v6154 = vunpack.c.l.bf16 %v5529
    %v6155 = vunpack.c.h.bf16 %v5529
    %v6156 = vunpack.c.l.bf16 %v5530
    %v6157 = vunpack.c.h.bf16 %v5530
    %v6158 = vunpack.c.l.bf16 %v5531
    %v6159 = vunpack.c.h.bf16 %v5531
    %v6160 = vunpack.c.l.bf16 %v5532
    %v6161 = vunpack.c.h.bf16 %v5532
    %v6162 = vunpack.c.l.bf16 %v5533
    %v6163 = vunpack.c.h.bf16 %v5533
    %v6164 = vunpack.c.l.bf16 %v5534
    %v6165 = vunpack.c.h.bf16 %v5534
    %v6166 = vunpack.c.l.bf16 %v5535
    %v6167 = vunpack.c.h.bf16 %v5535
    %v6168 = vunpack.c.l.bf16 %v5536
    %v6169 = vunpack.c.h.bf16 %v5536
    %v6170 = vunpack.c.l.bf16 %v5537
    %v6171 = vunpack.c.h.bf16 %v5537
    %v6172 = vunpack.c.l.bf16 %v5538
    %v6173 = vunpack.c.h.bf16 %v5538
    %v6174 = vunpack.c.l.bf16 %v5539
    %v6175 = vunpack.c.h.bf16 %v5539
    %v6176 = vunpack.c.l.bf16 %v5540
    %v6177 = vunpack.c.h.bf16 %v5540
    %v6178 = vunpack.c.l.bf16 %v5541
    %v6179 = vunpack.c.h.bf16 %v5541
    %v6180 = vunpack.c.l.bf16 %v5542
    %v6181 = vunpack.c.h.bf16 %v5542
    %v6182 = vunpack.c.l.bf16 %v5543
    %v6183 = vunpack.c.h.bf16 %v5543
    %v6184 = vunpack.c.l.bf16 %v5544
    %v6185 = vunpack.c.h.bf16 %v5544
    %v6186 = vunpack.c.l.bf16 %v5545
    %v6187 = vunpack.c.h.bf16 %v5545
    %v6188 = vunpack.c.l.bf16 %v5546
    %v6189 = vunpack.c.h.bf16 %v5546
    %v6190 = vunpack.c.l.bf16 %v5547
    %v6191 = vunpack.c.h.bf16 %v5547
    %v6192 = vunpack.c.l.bf16 %v5548
    %v6193 = vunpack.c.h.bf16 %v5548
    %v6194 = vunpack.c.l.bf16 %v5549
    %v6195 = vunpack.c.h.bf16 %v5549
    %v6196 = vunpack.c.l.bf16 %v5550
    %v6197 = vunpack.c.h.bf16 %v5550
    %v6198 = vunpack.c.l.bf16 %v5551
    %v6199 = vunpack.c.h.bf16 %v5551
    %v6200 = vunpack.c.l.bf16 %v5552
    %v6201 = vunpack.c.h.bf16 %v5552
    %v6202 = vunpack.c.l.bf16 %v5553
    %v6203 = vunpack.c.h.bf16 %v5553
    %v6204 = vunpack.c.l.bf16 %v5554
    %v6205 = vunpack.c.h.bf16 %v5554
    %v6206 = vunpack.c.l.bf16 %v5555
    %v6207 = vunpack.c.h.bf16 %v5555
    %v6208 = vunpack.c.l.bf16 %v5556
    %v6209 = vunpack.c.h.bf16 %v5556
    %v6210 = vunpack.c.l.bf16 %v5557
    %v6211 = vunpack.c.h.bf16 %v5557
    %v6212 = vunpack.c.l.bf16 %v5558
    %v6213 = vunpack.c.h.bf16 %v5558
    %v6214 = vunpack.c.l.bf16 %v5559
    %v6215 = vunpack.c.h.bf16 %v5559
    %v6216 = vunpack.c.l.bf16 %v5560
    %v6217 = vunpack.c.h.bf16 %v5560
    %v6218 = vunpack.c.l.bf16 %v5561
    %v6219 = vunpack.c.h.bf16 %v5561
    %v6220 = vunpack.c.l.bf16 %v5562
    %v6221 = vunpack.c.h.bf16 %v5562
    %v6222 = vunpack.c.l.bf16 %v5563
    %v6223 = vunpack.c.h.bf16 %v5563
    %v6224 = vunpack.c.l.bf16 %v5564
    %v6225 = vunpack.c.h.bf16 %v5564
    %v6226 = vunpack.c.l.bf16 %v5565
    %v6227 = vunpack.c.h.bf16 %v5565
    %v6228 = vunpack.c.l.bf16 %v5566
    %v6229 = vunpack.c.h.bf16 %v5566
    %v6230 = vunpack.c.l.bf16 %v5567
    %v6231 = vunpack.c.h.bf16 %v5567
    %v6232 = vunpack.c.l.bf16 %v5568
    %v6233 = vunpack.c.h.bf16 %v5568
    %v6234 = vunpack.c.l.bf16 %v5569
    %v6235 = vunpack.c.h.bf16 %v5569
    %v6236 = vunpack.c.l.bf16 %v5570
    %v6237 = vunpack.c.h.bf16 %v5570
    %v6238 = vunpack.c.l.bf16 %v5571
    %v6239 = vunpack.c.h.bf16 %v5571
    %v6240 = vunpack.c.l.bf16 %v5572
    %v6241 = vunpack.c.h.bf16 %v5572
    %v6242 = vunpack.c.l.bf16 %v5573
    %v6243 = vunpack.c.h.bf16 %v5573
    %v6244 = vunpack.c.l.bf16 %v5574
    %v6245 = vunpack.c.h.bf16 %v5574
    %v6246 = vunpack.c.l.bf16 %v5575
    %v6247 = vunpack.c.h.bf16 %v5575
    %v6248 = vunpack.c.l.bf16 %v5576
    %v6249 = vunpack.c.h.bf16 %v5576
    %v6250 = vunpack.c.l.bf16 %v5577
    %v6251 = vunpack.c.h.bf16 %v5577
    %v6252 = vunpack.c.l.bf16 %v5578
    %v6253 = vunpack.c.h.bf16 %v5578
    %v6254 = vunpack.c.l.bf16 %v5579
    %v6255 = vunpack.c.h.bf16 %v5579
    %v6256 = vunpack.c.l.bf16 %v5580
    %v6257 = vunpack.c.h.bf16 %v5580
    %v6258 = vunpack.c.l.bf16 %v5581
    %v6259 = vunpack.c.h.bf16 %v5581
    %v6260 = vunpack.c.l.bf16 %v5582
    %v6261 = vunpack.c.h.bf16 %v5582
    %v6262 = vunpack.c.l.bf16 %v5583
    %v6263 = vunpack.c.h.bf16 %v5583
    %v6264 = vunpack.c.l.bf16 %v5584
    %v6265 = vunpack.c.h.bf16 %v5584
    %v6266 = vunpack.c.l.bf16 %v5585
    %v6267 = vunpack.c.h.bf16 %v5585
    %v6268 = vunpack.c.l.bf16 %v5586
    %v6269 = vunpack.c.h.bf16 %v5586
    %v6270 = vunpack.c.l.bf16 %v5587
    %v6271 = vunpack.c.h.bf16 %v5587
    %v6272 = vunpack.c.l.bf16 %v5588
    %v6273 = vunpack.c.h.bf16 %v5588
    %v6274 = vunpack.c.l.bf16 %v5589
    %v6275 = vunpack.c.h.bf16 %v5589
    %v6276 = vunpack.c.l.bf16 %v5590
    %v6277 = vunpack.c.h.bf16 %v5590
    %v6278 = vunpack.c.l.bf16 %v5591
    %v6279 = vunpack.c.h.bf16 %v5591
    %v6280 = vunpack.c.l.bf16 %v5592
    %v6281 = vunpack.c.h.bf16 %v5592
    %v6282 = vunpack.c.l.bf16 %v5593
    %v6283 = vunpack.c.h.bf16 %v5593
    %v6284 = vunpack.c.l.bf16 %v5594
    %v6285 = vunpack.c.h.bf16 %v5594
    %v6286 = vunpack.c.l.bf16 %v5595
    %v6287 = vunpack.c.h.bf16 %v5595
    %v6288 = vunpack.c.l.bf16 %v5596
    %v6289 = vunpack.c.h.bf16 %v5596
    %v6290 = vunpack.c.l.bf16 %v5597
    %v6291 = vunpack.c.h.bf16 %v5597
    %v6292 = vunpack.c.l.bf16 %v5598
    %v6293 = vunpack.c.h.bf16 %v5598
    %v6294 = vunpack.c.l.bf16 %v5599
    %v6295 = vunpack.c.h.bf16 %v5599
    %v6296 = vunpack.c.l.bf16 %v5600
    %v6297 = vunpack.c.h.bf16 %v5600
    %v6298 = vunpack.c.l.bf16 %v5601
    %v6299 = vunpack.c.h.bf16 %v5601
    %v6300 = vunpack.c.l.bf16 %v5602
    %v6301 = vunpack.c.h.bf16 %v5602
    %v6302 = vunpack.c.l.bf16 %v5603
    %v6303 = vunpack.c.h.bf16 %v5603
    %v6304 = vunpack.c.l.bf16 %v5604
    %v6305 = vunpack.c.h.bf16 %v5604
    %v6306 = vunpack.c.l.bf16 %v5605
    %v6307 = vunpack.c.h.bf16 %v5605
    %v6308 = vunpack.c.l.bf16 %v5606
    %v6309 = vunpack.c.h.bf16 %v5606
    %v6310 = vunpack.c.l.bf16 %v5607
    %v6311 = vunpack.c.h.bf16 %v5607
    %v6312 = vunpack.c.l.bf16 %v5608
    %v6313 = vunpack.c.h.bf16 %v5608
    %v6314 = vunpack.c.l.bf16 %v5609
    %v6315 = vunpack.c.h.bf16 %v5609
    %v6316 = vunpack.c.l.bf16 %v5610
    %v6317 = vunpack.c.h.bf16 %v5610
    %v6318 = vunpack.c.l.bf16 %v5611
    %v6319 = vunpack.c.h.bf16 %v5611
    %v6320 = vunpack.c.l.bf16 %v5612
    %v6321 = vunpack.c.h.bf16 %v5612
    %v6322 = vunpack.c.l.bf16 %v5613
    %v6323 = vunpack.c.h.bf16 %v5613
    %v6324 = vunpack.c.l.bf16 %v5614
    %v6325 = vunpack.c.h.bf16 %v5614
    %v6326 = vunpack.c.l.bf16 %v5615
    %v6327 = vunpack.c.h.bf16 %v5615
    %v6328 = vunpack.c.l.bf16 %v5616
    %v6329 = vunpack.c.h.bf16 %v5616
    %v6330 = vunpack.c.l.bf16 %v5617
    %v6331 = vunpack.c.h.bf16 %v5617
    %v6332 = vunpack.c.l.bf16 %v5618
    %v6333 = vunpack.c.h.bf16 %v5618
    %v6334 = vunpack.c.l.bf16 %v5619
    %v6335 = vunpack.c.h.bf16 %v5619
    %v6336 = vunpack.c.l.bf16 %v5620
    %v6337 = vunpack.c.h.bf16 %v5620
    %v6338 = vunpack.c.l.bf16 %v5621
    %v6339 = vunpack.c.h.bf16 %v5621
    %v6340 = vunpack.c.l.bf16 %v5622
    %v6341 = vunpack.c.h.bf16 %v5622
    %v6342 = vunpack.c.l.bf16 %v5623
    %v6343 = vunpack.c.h.bf16 %v5623
    %v6344 = vunpack.c.l.bf16 %v5624
    %v6345 = vunpack.c.h.bf16 %v5624
    %v6346 = vunpack.c.l.bf16 %v5625
    %v6347 = vunpack.c.h.bf16 %v5625
    %v6348 = vunpack.c.l.bf16 %v5626
    %v6349 = vunpack.c.h.bf16 %v5626
    %v6350 = vunpack.c.l.bf16 %v5627
    %v6351 = vunpack.c.h.bf16 %v5627
    %v6352 = vunpack.c.l.bf16 %v5628
    %v6353 = vunpack.c.h.bf16 %v5628
    %v6354 = vunpack.c.l.bf16 %v5629
    %v6355 = vunpack.c.h.bf16 %v5629
    %v6356 = vunpack.c.l.bf16 %v5630
    %v6357 = vunpack.c.h.bf16 %v5630
    %v6358 = vunpack.c.l.bf16 %v5631
    %v6359 = vunpack.c.h.bf16 %v5631
    %v6360 = vunpack.c.l.bf16 %v5632
    %v6361 = vunpack.c.h.bf16 %v5632
    %v6362 = vunpack.c.l.bf16 %v5633
    %v6363 = vunpack.c.h.bf16 %v5633
    %v6364 = vunpack.c.l.bf16 %v5634
    %v6365 = vunpack.c.h.bf16 %v5634
    %v6366 = vunpack.c.l.bf16 %v5635
    %v6367 = vunpack.c.h.bf16 %v5635
    %v6368 = vunpack.c.l.bf16 %v5636
    %v6369 = vunpack.c.h.bf16 %v5636
    %v6370 = vunpack.c.l.bf16 %v5637
    %v6371 = vunpack.c.h.bf16 %v5637
    %v6372 = vunpack.c.l.bf16 %v5638
    %v6373 = vunpack.c.h.bf16 %v5638
    %v6374 = vunpack.c.l.bf16 %v5639
    %v6375 = vunpack.c.h.bf16 %v5639
    %v6376 = vunpack.c.l.bf16 %v5640
    %v6377 = vunpack.c.h.bf16 %v5640
    %v6378 = vunpack.c.l.bf16 %v5641
    %v6379 = vunpack.c.h.bf16 %v5641
    %v6380 = vunpack.c.l.bf16 %v5642
    %v6381 = vunpack.c.h.bf16 %v5642
    %v6382 = vunpack.c.l.bf16 %v5643
    %v6383 = vunpack.c.h.bf16 %v5643
    %v6384 = vunpack.c.l.bf16 %v5644
    %v6385 = vunpack.c.h.bf16 %v5644
    %v6386 = vunpack.c.l.bf16 %v5645
    %v6387 = vunpack.c.h.bf16 %v5645
    %v6388 = vunpack.c.l.bf16 %v5646
    %v6389 = vunpack.c.h.bf16 %v5646
    %v6390 = vunpack.c.l.bf16 %v5647
    %v6391 = vunpack.c.h.bf16 %v5647
    %v6392 = vunpack.c.l.bf16 %v5648
    %v6393 = vunpack.c.h.bf16 %v5648
    %v6394 = vunpack.c.l.bf16 %v5649
    %v6395 = vunpack.c.h.bf16 %v5649
    %v6396 = vunpack.c.l.bf16 %v5650
    %v6397 = vunpack.c.h.bf16 %v5650
    %v6398 = vunpack.c.l.bf16 %v5651
    %v6399 = vunpack.c.h.bf16 %v5651
    %v6400 = vunpack.c.l.bf16 %v5652
    %v6401 = vunpack.c.h.bf16 %v5652
    %v6402 = vunpack.c.l.bf16 %v5653
    %v6403 = vunpack.c.h.bf16 %v5653
    %v6404 = vunpack.c.l.bf16 %v5654
    %v6405 = vunpack.c.h.bf16 %v5654
    %v6406 = vunpack.c.l.bf16 %v5655
    %v6407 = vunpack.c.h.bf16 %v5655
    %v6408 = vunpack.c.l.bf16 %v5656
    %v6409 = vunpack.c.h.bf16 %v5656
    %v6410 = vunpack.c.l.bf16 %v5657
    %v6411 = vunpack.c.h.bf16 %v5657
    %v6412 = vunpack.c.l.bf16 %v5658
    %v6413 = vunpack.c.h.bf16 %v5658
    %v6414 = vunpack.c.l.bf16 %v5659
    %v6415 = vunpack.c.h.bf16 %v5659
    %v6416 = vunpack.c.l.bf16 %v5660
    %v6417 = vunpack.c.h.bf16 %v5660
    %v6418 = vunpack.c.l.bf16 %v5661
    %v6419 = vunpack.c.h.bf16 %v5661
    %v6420 = vunpack.c.l.bf16 %v5662
    %v6421 = vunpack.c.h.bf16 %v5662
    %v6422 = vunpack.c.l.bf16 %v5663
    %v6423 = vunpack.c.h.bf16 %v5663
    %v6424 = vunpack.c.l.bf16 %v5664
    %v6425 = vunpack.c.h.bf16 %v5664
    %v6426 = vunpack.c.l.bf16 %v5665
    %v6427 = vunpack.c.h.bf16 %v5665
    %v6428 = vunpack.c.l.bf16 %v5666
    %v6429 = vunpack.c.h.bf16 %v5666
    %v6430 = vunpack.c.l.bf16 %v5667
    %v6431 = vunpack.c.h.bf16 %v5667
    %v6432 = vunpack.c.l.bf16 %v5668
    %v6433 = vunpack.c.h.bf16 %v5668
    %v6434 = vunpack.c.l.bf16 %v5669
    %v6435 = vunpack.c.h.bf16 %v5669
    %v6436 = vunpack.c.l.bf16 %v5670
    %v6437 = vunpack.c.h.bf16 %v5670
    %v6438 = vunpack.c.l.bf16 %v5671
    %v6439 = vunpack.c.h.bf16 %v5671
    %v6440 = vunpack.c.l.bf16 %v5672
    %v6441 = vunpack.c.h.bf16 %v5672
    %v6442 = vunpack.c.l.bf16 %v5673
    %v6443 = vunpack.c.h.bf16 %v5673
    %v6444 = vunpack.c.l.bf16 %v5674
    %v6445 = vunpack.c.h.bf16 %v5674
    %v6446 = vunpack.c.l.bf16 %v5675
    %v6447 = vunpack.c.h.bf16 %v5675
    %v6448 = vunpack.c.l.bf16 %v5676
    %v6449 = vunpack.c.h.bf16 %v5676
    %v6450 = vunpack.c.l.bf16 %v5677
    %v6451 = vunpack.c.h.bf16 %v5677
    %v6452 = vunpack.c.l.bf16 %v5678
    %v6453 = vunpack.c.h.bf16 %v5678
    %v6454 = vunpack.c.l.bf16 %v5679
    %v6455 = vunpack.c.h.bf16 %v5679
    %v6456 = vunpack.c.l.bf16 %v5680
    %v6457 = vunpack.c.h.bf16 %v5680
    %v6458 = vunpack.c.l.bf16 %v5681
    %v6459 = vunpack.c.h.bf16 %v5681
    %v6460 = vunpack.c.l.bf16 %v5682
    %v6461 = vunpack.c.h.bf16 %v5682
    %v6462 = vunpack.c.l.bf16 %v5683
    %v6463 = vunpack.c.h.bf16 %v5683
    %v6464 = vunpack.c.l.bf16 %v5684
    %v6465 = vunpack.c.h.bf16 %v5684
    %v6466 = vunpack.c.l.bf16 %v5685
    %v6467 = vunpack.c.h.bf16 %v5685
    %v6468 = vunpack.c.l.bf16 %v5686
    %v6469 = vunpack.c.h.bf16 %v5686
    %v6470 = vunpack.c.l.bf16 %v5687
    %v6471 = vunpack.c.h.bf16 %v5687
    %v6472 = vunpack.c.l.bf16 %v5688
    %v6473 = vunpack.c.h.bf16 %v5688
    %v6474 = vunpack.c.l.bf16 %v5689
    %v6475 = vunpack.c.h.bf16 %v5689
    %v6476 = vunpack.c.l.bf16 %v5690
    %v6477 = vunpack.c.h.bf16 %v5690
    %v6478 = vunpack.c.l.bf16 %v5691
    %v6479 = vunpack.c.h.bf16 %v5691
    %v6480 = vunpack.c.l.bf16 %v5692
    %v6481 = vunpack.c.h.bf16 %v5692
    %v6482 = vunpack.c.l.bf16 %v5693
    %v6483 = vunpack.c.h.bf16 %v5693
    %v6484 = vunpack.c.l.bf16 %v5694
    %v6485 = vunpack.c.h.bf16 %v5694
    %v6486 = vunpack.c.l.bf16 %v5695
    %v6487 = vunpack.c.h.bf16 %v5695
    %v6488 = vunpack.c.l.bf16 %v5696
    %v6489 = vunpack.c.h.bf16 %v5696
    %v6490 = vunpack.c.l.bf16 %v5697
    %v6491 = vunpack.c.h.bf16 %v5697
    %v6492 = vunpack.c.l.bf16 %v5698
    %v6493 = vunpack.c.h.bf16 %v5698
    %v6494 = vunpack.c.l.bf16 %v5699
    %v6495 = vunpack.c.h.bf16 %v5699
    %v6496 = vunpack.c.l.bf16 %v5700
    %v6497 = vunpack.c.h.bf16 %v5700
    %v6498 = vunpack.c.l.bf16 %v5701
    %v6499 = vunpack.c.h.bf16 %v5701
    %v6500 = vunpack.c.l.bf16 %v5702
    %v6501 = vunpack.c.h.bf16 %v5702
    %v6502 = vunpack.c.l.bf16 %v5703
    %v6503 = vunpack.c.h.bf16 %v5703
    %v6504 = vunpack.c.l.bf16 %v5704
    %v6505 = vunpack.c.h.bf16 %v5704
    %v6506 = vunpack.c.l.bf16 %v5705
    %v6507 = vunpack.c.h.bf16 %v5705
    %v6508 = vunpack.c.l.bf16 %v5706
    %v6509 = vunpack.c.h.bf16 %v5706
    %v6510 = vunpack.c.l.bf16 %v5707
    %v6511 = vunpack.c.h.bf16 %v5707
    %v6512 = vunpack.c.l.bf16 %v5708
    %v6513 = vunpack.c.h.bf16 %v5708
    %v6514 = vunpack.c.l.bf16 %v5709
    %v6515 = vunpack.c.h.bf16 %v5709
    %v6516 = vunpack.c.l.bf16 %v5710
    %v6517 = vunpack.c.h.bf16 %v5710
    %v6518 = vunpack.c.l.bf16 %v5711
    %v6519 = vunpack.c.h.bf16 %v5711
    %v6520 = vunpack.c.l.bf16 %v5712
    %v6521 = vunpack.c.h.bf16 %v5712
    %v6522 = vunpack.c.l.bf16 %v5713
    %v6523 = vunpack.c.h.bf16 %v5713
    %v6524 = vunpack.c.l.bf16 %v5714
    %v6525 = vunpack.c.h.bf16 %v5714
    %v6526 = vunpack.c.l.bf16 %v5715
    %v6527 = vunpack.c.h.bf16 %v5715
    %v6528 = vunpack.c.l.bf16 %v5716
    %v6529 = vunpack.c.h.bf16 %v5716
    %v6530 = vunpack.c.l.bf16 %v5717
    %v6531 = vunpack.c.h.bf16 %v5717
    %v6532 = vunpack.c.l.bf16 %v5718
    %v6533 = vunpack.c.h.bf16 %v5718
    %v6534 = vunpack.c.l.bf16 %v5719
    %v6535 = vunpack.c.h.bf16 %v5719
    %v6536 = vunpack.c.l.bf16 %v5720
    %v6537 = vunpack.c.h.bf16 %v5720
    %v6538 = vunpack.c.l.bf16 %v5721
    %v6539 = vunpack.c.h.bf16 %v5721
    %v6540 = vunpack.c.l.bf16 %v5722
    %v6541 = vunpack.c.h.bf16 %v5722
    %v6542 = vunpack.c.l.bf16 %v5723
    %v6543 = vunpack.c.h.bf16 %v5723
    %v6544 = vunpack.c.l.bf16 %v5724
    %v6545 = vunpack.c.h.bf16 %v5724
    %v6546 = vunpack.c.l.bf16 %v5725
    %v6547 = vunpack.c.h.bf16 %v5725
    %v6548 = vunpack.c.l.bf16 %v5726
    %v6549 = vunpack.c.h.bf16 %v5726
    %v6550 = vunpack.c.l.bf16 %v5727
    %v6551 = vunpack.c.h.bf16 %v5727
    %v6552 = vunpack.c.l.bf16 %v5728
    %v6553 = vunpack.c.h.bf16 %v5728
    %v6554 = vunpack.c.l.bf16 %v5729
    %v6555 = vunpack.c.h.bf16 %v5729
    %v6556 = vunpack.c.l.bf16 %v5730
    %v6557 = vunpack.c.h.bf16 %v5730
    %v6558 = vunpack.c.l.bf16 %v5731
    %v6559 = vunpack.c.h.bf16 %v5731
    %v6560 = vunpack.c.l.bf16 %v5732
    %v6561 = vunpack.c.h.bf16 %v5732
    %v6562 = vunpack.c.l.bf16 %v5733
    %v6563 = vunpack.c.h.bf16 %v5733
    %v6564 = vunpack.c.l.bf16 %v5734
    %v6565 = vunpack.c.h.bf16 %v5734
    %v6566 = vunpack.c.l.bf16 %v5735
    %v6567 = vunpack.c.h.bf16 %v5735
    %v6568 = vunpack.c.l.bf16 %v5736
    %v6569 = vunpack.c.h.bf16 %v5736
    %v6570 = vunpack.c.l.bf16 %v5737
    %v6571 = vunpack.c.h.bf16 %v5737
    %v6572 = vunpack.c.l.bf16 %v5738
    %v6573 = vunpack.c.h.bf16 %v5738
    %v6574 = vunpack.c.l.bf16 %v5739
    %v6575 = vunpack.c.h.bf16 %v5739
    %v6576 = vunpack.c.l.bf16 %v5740
    %v6577 = vunpack.c.h.bf16 %v5740
    %v6578 = vunpack.c.l.bf16 %v5741
    %v6579 = vunpack.c.h.bf16 %v5741
    %v6580 = vunpack.c.l.bf16 %v5742
    %v6581 = vunpack.c.h.bf16 %v5742
    %v6582 = vunpack.c.l.bf16 %v5743
    %v6583 = vunpack.c.h.bf16 %v5743
    %v6584 = vunpack.c.l.bf16 %v5744
    %v6585 = vunpack.c.h.bf16 %v5744
    %v6586 = vunpack.c.l.bf16 %v5745
    %v6587 = vunpack.c.h.bf16 %v5745
    %v6588 = vunpack.c.l.bf16 %v5746
    %v6589 = vunpack.c.h.bf16 %v5746
    %v6590 = vunpack.c.l.bf16 %v5747
    %v6591 = vunpack.c.h.bf16 %v5747
    %v6592 = vunpack.c.l.bf16 %v5748
    %v6593 = vunpack.c.h.bf16 %v5748
    %v6594 = vunpack.c.l.bf16 %v5749
    %v6595 = vunpack.c.h.bf16 %v5749
    %v6596 = vunpack.c.l.bf16 %v5750
    %v6597 = vunpack.c.h.bf16 %v5750
    %v6598 = vunpack.c.l.bf16 %v5751
    %v6599 = vunpack.c.h.bf16 %v5751
    %v6600 = vunpack.c.l.bf16 %v5752
    %v6601 = vunpack.c.h.bf16 %v5752
    %v6602 = vunpack.c.l.bf16 %v5753
    %v6603 = vunpack.c.h.bf16 %v5753
    %v6604 = vunpack.c.l.bf16 %v5754
    %v6605 = vunpack.c.h.bf16 %v5754
    %v6606 = vunpack.c.l.bf16 %v5755
    %v6607 = vunpack.c.h.bf16 %v5755
    %v6608 = vunpack.c.l.bf16 %v5756
    %v6609 = vunpack.c.h.bf16 %v5756
    %v6610 = vunpack.c.l.bf16 %v5757
    %v6611 = vunpack.c.h.bf16 %v5757
    %v6612 = vunpack.c.l.bf16 %v5758
    %v6613 = vunpack.c.h.bf16 %v5758
    %v6614 = vunpack.c.l.bf16 %v5759
    %v6615 = vunpack.c.h.bf16 %v5759
    %v6616 = vunpack.c.l.bf16 %v5760
    %v6617 = vunpack.c.h.bf16 %v5760
    %v6618 = vunpack.c.l.bf16 %v5761
    %v6619 = vunpack.c.h.bf16 %v5761
    %v6620 = vunpack.c.l.bf16 %v5762
    %v6621 = vunpack.c.h.bf16 %v5762
    %v6622 = vunpack.c.l.bf16 %v5763
    %v6623 = vunpack.c.h.bf16 %v5763
    %v6624 = vunpack.c.l.bf16 %v5764
    %v6625 = vunpack.c.h.bf16 %v5764
    %v6626 = vunpack.c.l.bf16 %v5765
    %v6627 = vunpack.c.h.bf16 %v5765
    %v6628 = vunpack.c.l.bf16 %v5766
    %v6629 = vunpack.c.h.bf16 %v5766
    %v6630 = vunpack.c.l.bf16 %v5767
    %v6631 = vunpack.c.h.bf16 %v5767
    %v6632 = vunpack.c.l.bf16 %v5768
    %v6633 = vunpack.c.h.bf16 %v5768
    %v6634 = vunpack.c.l.bf16 %v5769
    %v6635 = vunpack.c.h.bf16 %v5769
    %v6636 = vunpack.c.l.bf16 %v5770
    %v6637 = vunpack.c.h.bf16 %v5770
    %v6638 = vunpack.c.l.bf16 %v5771
    %v6639 = vunpack.c.h.bf16 %v5771
    %v6640 = vunpack.c.l.bf16 %v5772
    %v6641 = vunpack.c.h.bf16 %v5772
    %v6642 = vunpack.c.l.bf16 %v5773
    %v6643 = vunpack.c.h.bf16 %v5773
    %v6644 = vunpack.c.l.bf16 %v5774
    %v6645 = vunpack.c.h.bf16 %v5774
    %v6646 = vunpack.c.l.bf16 %v5775
    %v6647 = vunpack.c.h.bf16 %v5775
    %v6648 = vunpack.c.l.bf16 %v5776
    %v6649 = vunpack.c.h.bf16 %v5776
    %v6650 = vunpack.c.l.bf16 %v5777
    %v6651 = vunpack.c.h.bf16 %v5777
    %v6652 = vunpack.c.l.bf16 %v5778
    %v6653 = vunpack.c.h.bf16 %v5778
    %v6654 = vunpack.c.l.bf16 %v5779
    %v6655 = vunpack.c.h.bf16 %v5779
    %v6656 = vunpack.c.l.bf16 %v5780
    %v6657 = vunpack.c.h.bf16 %v5780
    %v6658 = vunpack.c.l.bf16 %v5781
    %v6659 = vunpack.c.h.bf16 %v5781
    %v6660 = vunpack.c.l.bf16 %v5782
    %v6661 = vunpack.c.h.bf16 %v5782
    %v6662 = vunpack.c.l.bf16 %v5783
    %v6663 = vunpack.c.h.bf16 %v5783
    %v6664 = vunpack.c.l.bf16 %v5784
    %v6665 = vunpack.c.h.bf16 %v5784
    %v6666 = vunpack.c.l.bf16 %v5785
    %v6667 = vunpack.c.h.bf16 %v5785
    %v6668 = vunpack.c.l.bf16 %v5786
    %v6669 = vunpack.c.h.bf16 %v5786
    %v6670 = vunpack.c.l.bf16 %v5787
    %v6671 = vunpack.c.h.bf16 %v5787
    %v6672 = vunpack.c.l.bf16 %v5788
    %v6673 = vunpack.c.h.bf16 %v5788
    %v6674 = vunpack.c.l.bf16 %v5789
    %v6675 = vunpack.c.h.bf16 %v5789
    %v6676 = vunpack.c.l.bf16 %v5790
    %v6677 = vunpack.c.h.bf16 %v5790
    %v6678 = vunpack.c.l.bf16 %v5791
    %v6679 = vunpack.c.h.bf16 %v5791
    %v6680 = vunpack.c.l.bf16 %v5792
    %v6681 = vunpack.c.h.bf16 %v5792
    %v6682 = vunpack.c.l.bf16 %v5793
    %v6683 = vunpack.c.h.bf16 %v5793
    %v6684 = vunpack.c.l.bf16 %v5794
    %v6685 = vunpack.c.h.bf16 %v5794
    %v6686 = vunpack.c.l.bf16 %v5795
    %v6687 = vunpack.c.h.bf16 %v5795
    %v6688 = vunpack.c.l.bf16 %v5796
    %v6689 = vunpack.c.h.bf16 %v5796
    %v6690 = vunpack.c.l.bf16 %v5797
    %v6691 = vunpack.c.h.bf16 %v5797
    %v6692 = vunpack.c.l.bf16 %v5798
    %v6693 = vunpack.c.h.bf16 %v5798
    %v6694 = vunpack.c.l.bf16 %v5799
    %v6695 = vunpack.c.h.bf16 %v5799
    %v6696 = vld [vmem:[#allocation7] sm:$0xff]
    %v6698 = vlaneseq
    %v6699 = vshrl.u32 %v6698, 7
    %v6700 = vsub.s32 0, %v6699
    %v6701 = vrot.slane %v6696, %v6700
    %v6702 = vlaneseq
    %v6703 = vshrl.u32 %v6702, 7
    %v6704 = vsub.s32 1, %v6703
    %v6705 = vrot.slane %v6696, %v6704
    %v6706 = vlaneseq
    %v6707 = vshrl.u32 %v6706, 7
    %v6708 = vsub.s32 2, %v6707
    %v6709 = vrot.slane %v6696, %v6708
    %v6710 = vlaneseq
    %v6711 = vshrl.u32 %v6710, 7
    %v6712 = vsub.s32 3, %v6711
    %v6713 = vrot.slane %v6696, %v6712
    %v6714 = vlaneseq
    %v6715 = vshrl.u32 %v6714, 7
    %v6716 = vsub.s32 4, %v6715
    %v6717 = vrot.slane %v6696, %v6716
    %v6718 = vlaneseq
    %v6719 = vshrl.u32 %v6718, 7
    %v6720 = vsub.s32 5, %v6719
    %v6721 = vrot.slane %v6696, %v6720
    %v6722 = vlaneseq
    %v6723 = vshrl.u32 %v6722, 7
    %v6724 = vsub.s32 6, %v6723
    %v6725 = vrot.slane %v6696, %v6724
    %v6726 = vlaneseq
    %v6727 = vshrl.u32 %v6726, 7
    %v6728 = vsub.s32 7, %v6727
    %v6729 = vrot.slane %v6696, %v6728
    %6738 = vmatprep.subr.mxu0 %v5801
    %6739 = vmatpush1.msra.mxu0 %v5800
    %6740 = vmatprep.subr.mxu0 %v5809
    %6741 = vmatpush1.msra.mxu0 %v5808
    %6742 = vmatprep.subr.mxu0 %v5817
    %6743 = vmatpush1.msra.mxu0 %v5816
    %6744 = vmatprep.subr.mxu0 %v5825
    %6745 = vmatpush1.msra.mxu0 %v5824
    %6746 = vmatprep.subr.mxu0 %v5833
    %6747 = vmatpush1.msra.mxu0 %v5832
    %6748 = vmatprep.subr.mxu0 %v5841
    %6749 = vmatpush1.msra.mxu0 %v5840
    %6750 = vmatprep.subr.mxu0 %v5849
    %6751 = vmatpush1.msra.mxu0 %v5848
    %6752 = vmatprep.subr.mxu0 %v5857
    %6753 = vmatpush1.msra.mxu0 %v5856
    %6754 = vmatprep.subr.mxu0 %v5865
    %6755 = vmatpush1.msra.mxu0 %v5864
    %6756 = vmatprep.subr.mxu0 %v5873
    %6757 = vmatpush1.msra.mxu0 %v5872
    %6758 = vmatprep.subr.mxu0 %v5881
    %6759 = vmatpush1.msra.mxu0 %v5880
    %6760 = vmatprep.subr.mxu0 %v5889
    %6761 = vmatpush1.msra.mxu0 %v5888
    %6762 = vmatprep.subr.mxu0 %v5897
    %6763 = vmatpush1.msra.mxu0 %v5896
    %6764 = vmatprep.subr.mxu0 %v5905
    %6765 = vmatpush1.msra.mxu0 %v5904
    %6766 = vmatprep.subr.mxu0 %v5913
    %6767 = vmatpush1.msra.mxu0 %v5912
    %6768 = vmatprep.subr.mxu0 %v5921
    %6769 = vmatpush1.msra.mxu0 %v5920
    %6770 = vmatprep.subr.mxu0 %v5929
    %6771 = vmatpush1.msra.mxu0 %v5928
    %6772 = vmatprep.subr.mxu0 %v5937
    %6773 = vmatpush1.msra.mxu0 %v5936
    %6774 = vmatprep.subr.mxu0 %v5945
    %6775 = vmatpush1.msra.mxu0 %v5944
    %6776 = vmatprep.subr.mxu0 %v5953
    %6777 = vmatpush1.msra.mxu0 %v5952
    %6778 = vmatprep.subr.mxu0 %v5961
    %6779 = vmatpush1.msra.mxu0 %v5960
    %6780 = vmatprep.subr.mxu0 %v5969
    %6781 = vmatpush1.msra.mxu0 %v5968
    %6782 = vmatprep.subr.mxu0 %v5977
    %6783 = vmatpush1.msra.mxu0 %v5976
    %6784 = vmatprep.subr.mxu0 %v5985
    %6785 = vmatpush1.msra.mxu0 %v5984
    %6786 = vmatprep.subr.mxu0 %v5993
    %6787 = vmatpush1.msra.mxu0 %v5992
    %6788 = vmatprep.subr.mxu0 %v6001
    %6789 = vmatpush1.msra.mxu0 %v6000
    %6790 = vmatprep.subr.mxu0 %v6009
    %6791 = vmatpush1.msra.mxu0 %v6008
    %6792 = vmatprep.subr.mxu0 %v6017
    %6793 = vmatpush1.msra.mxu0 %v6016
    %6794 = vmatprep.subr.mxu0 %v6025
    %6795 = vmatpush1.msra.mxu0 %v6024
    %6796 = vmatprep.subr.mxu0 %v6033
    %6797 = vmatpush1.msra.mxu0 %v6032
    %6798 = vmatprep.subr.mxu0 %v6041
    %6799 = vmatpush1.msra.mxu0 %v6040
    %6800 = vmatprep.subr.mxu0 %v6049
    %6801 = vmatpush1.msra.mxu0 %v6048
    %6802 = vmatprep.mubr.f32.mxu0 %v5346
    %6803 = vmatmul.mubr.f32.gmra.mrb[0].mxu0 %v5345
    %v6804 = vpop.f32.mrb[0].mxu0
    %v6805 = vadd.f32 %v6701, %v6804
    %v6806 = vpop.f32.mrb[0].mxu0
    %v6807 = vadd.f32 %v6705, %v6806
    %6808 = vdwg.mxu0
    %6809 = vmatprep.subr.mxu0 %v6057
    %6810 = vmatpush1.msra.mxu0 %v6056
    %6811 = vmatprep.subr.mxu0 %v6065
    %6812 = vmatpush1.msra.mxu0 %v6064
    %6813 = vmatprep.subr.mxu0 %v6073
    %6814 = vmatpush1.msra.mxu0 %v6072
    %6815 = vmatprep.subr.mxu0 %v6081
    %6816 = vmatpush1.msra.mxu0 %v6080
    %6817 = vmatprep.subr.mxu0 %v6089
    %6818 = vmatpush1.msra.mxu0 %v6088
    %6819 = vmatprep.subr.mxu0 %v6097
    %6820 = vmatpush1.msra.mxu0 %v6096
    %6821 = vmatprep.subr.mxu0 %v6105
    %6822 = vmatpush1.msra.mxu0 %v6104
    %6823 = vmatprep.subr.mxu0 %v6113
    %6824 = vmatpush1.msra.mxu0 %v6112
    %6825 = vmatprep.subr.mxu0 %v6121
    %6826 = vmatpush1.msra.mxu0 %v6120
    %6827 = vmatprep.subr.mxu0 %v6129
    %6828 = vmatpush1.msra.mxu0 %v6128
    %6829 = vmatprep.subr.mxu0 %v6137
    %6830 = vmatpush1.msra.mxu0 %v6136
    %6831 = vmatprep.subr.mxu0 %v6145
    %6832 = vmatpush1.msra.mxu0 %v6144
    %6833 = vmatprep.subr.mxu0 %v6153
    %6834 = vmatpush1.msra.mxu0 %v6152
    %6835 = vmatprep.subr.mxu0 %v6161
    %6836 = vmatpush1.msra.mxu0 %v6160
    %6837 = vmatprep.subr.mxu0 %v6169
    %6838 = vmatpush1.msra.mxu0 %v6168
    %6839 = vmatprep.subr.mxu0 %v6177
    %6840 = vmatpush1.msra.mxu0 %v6176
    %6841 = vmatprep.subr.mxu0 %v6185
    %6842 = vmatpush1.msra.mxu0 %v6184
    %6843 = vmatprep.subr.mxu0 %v6193
    %6844 = vmatpush1.msra.mxu0 %v6192
    %6845 = vmatprep.subr.mxu0 %v6201
    %6846 = vmatpush1.msra.mxu0 %v6200
    %6847 = vmatprep.subr.mxu0 %v6209
    %6848 = vmatpush1.msra.mxu0 %v6208
    %6849 = vmatprep.subr.mxu0 %v6217
    %6850 = vmatpush1.msra.mxu0 %v6216
    %6851 = vmatprep.subr.mxu0 %v6225
    %6852 = vmatpush1.msra.mxu0 %v6224
    %6853 = vmatprep.subr.mxu0 %v6233
    %6854 = vmatpush1.msra.mxu0 %v6232
    %6855 = vmatprep.subr.mxu0 %v6241
    %6856 = vmatpush1.msra.mxu0 %v6240
    %6857 = vmatprep.subr.mxu0 %v6249
    %6858 = vmatpush1.msra.mxu0 %v6248
    %6859 = vmatprep.subr.mxu0 %v6257
    %6860 = vmatpush1.msra.mxu0 %v6256
    %6861 = vmatprep.subr.mxu0 %v6265
    %6862 = vmatpush1.msra.mxu0 %v6264
    %6863 = vmatprep.subr.mxu0 %v6273
    %6864 = vmatpush1.msra.mxu0 %v6272
    %6865 = vmatprep.subr.mxu0 %v6281
    %6866 = vmatpush1.msra.mxu0 %v6280
    %6867 = vmatprep.subr.mxu0 %v6289
    %6868 = vmatpush1.msra.mxu0 %v6288
    %6869 = vmatprep.subr.mxu0 %v6297
    %6870 = vmatpush1.msra.mxu0 %v6296
    %6871 = vmatprep.subr.mxu0 %v6305
    %6872 = vmatpush1.msra.mxu0 %v6304
    %6873 = vmatprep.mubr.f32.mxu0 %v5348
    %6874 = vmatmul.mubr.f32.gmra.mrb[0].mxu0 %v5347
    %v6875 = vpop.f32.mrb[0].mxu0
    %v6876 = vadd.f32 %v6805, %v6875
    %v6877 = vpop.f32.mrb[0].mxu0
    %v6878 = vadd.f32 %v6807, %v6877
    %6879 = vdwg.mxu0
    %6880 = vmatprep.subr.mxu0 %v6313
    %6881 = vmatpush1.msra.mxu0 %v6312
    %6882 = vmatprep.subr.mxu0 %v6321
    %6883 = vmatpush1.msra.mxu0 %v6320
    %6884 = vmatprep.subr.mxu0 %v6329
    %6885 = vmatpush1.msra.mxu0 %v6328
    %6886 = vmatprep.subr.mxu0 %v6337
    %6887 = vmatpush1.msra.mxu0 %v6336
    %6888 = vmatprep.subr.mxu0 %v6345
    %6889 = vmatpush1.msra.mxu0 %v6344
    %6890 = vmatprep.subr.mxu0 %v6353
    %6891 = vmatpush1.msra.mxu0 %v6352
    %6892 = vmatprep.subr.mxu0 %v6361
    %6893 = vmatpush1.msra.mxu0 %v6360
    %6894 = vmatprep.subr.mxu0 %v6369
    %6895 = vmatpush1.msra.mxu0 %v6368
    %6896 = vmatprep.subr.mxu0 %v6377
    %6897 = vmatpush1.msra.mxu0 %v6376
    %6898 = vmatprep.subr.mxu0 %v6385
    %6899 = vmatpush1.msra.mxu0 %v6384
    %6900 = vmatprep.subr.mxu0 %v6393
    %6901 = vmatpush1.msra.mxu0 %v6392
    %6902 = vmatprep.subr.mxu0 %v6401
    %6903 = vmatpush1.msra.mxu0 %v6400
    %6904 = vmatprep.subr.mxu0 %v6409
    %6905 = vmatpush1.msra.mxu0 %v6408
    %6906 = vmatprep.subr.mxu0 %v6417
    %6907 = vmatpush1.msra.mxu0 %v6416
    %6908 = vmatprep.subr.mxu0 %v6425
    %6909 = vmatpush1.msra.mxu0 %v6424
    %6910 = vmatprep.subr.mxu0 %v6433
    %6911 = vmatpush1.msra.mxu0 %v6432
    %6912 = vmatprep.subr.mxu0 %v6441
    %6913 = vmatpush1.msra.mxu0 %v6440
    %6914 = vmatprep.subr.mxu0 %v6449
    %6915 = vmatpush1.msra.mxu0 %v6448
    %6916 = vmatprep.subr.mxu0 %v6457
    %6917 = vmatpush1.msra.mxu0 %v6456
    %6918 = vmatprep.subr.mxu0 %v6465
    %6919 = vmatpush1.msra.mxu0 %v6464
    %6920 = vmatprep.subr.mxu0 %v6473
    %6921 = vmatpush1.msra.mxu0 %v6472
    %6922 = vmatprep.subr.mxu0 %v6481
    %6923 = vmatpush1.msra.mxu0 %v6480
    %6924 = vmatprep.subr.mxu0 %v6489
    %6925 = vmatpush1.msra.mxu0 %v6488
    %6926 = vmatprep.subr.mxu0 %v6497
    %6927 = vmatpush1.msra.mxu0 %v6496
    %6928 = vmatprep.subr.mxu0 %v6505
    %6929 = vmatpush1.msra.mxu0 %v6504
    %6930 = vmatprep.subr.mxu0 %v6513
    %6931 = vmatpush1.msra.mxu0 %v6512
    %6932 = vmatprep.subr.mxu0 %v6521
    %6933 = vmatpush1.msra.mxu0 %v6520
    %6934 = vmatprep.subr.mxu0 %v6529
    %6935 = vmatpush1.msra.mxu0 %v6528
    %6936 = vmatprep.subr.mxu0 %v6537
    %6937 = vmatpush1.msra.mxu0 %v6536
    %6938 = vmatprep.subr.mxu0 %v6545
    %6939 = vmatpush1.msra.mxu0 %v6544
    %6940 = vmatprep.subr.mxu0 %v6553
    %6941 = vmatpush1.msra.mxu0 %v6552
    %6942 = vmatprep.subr.mxu0 %v6561
    %6943 = vmatpush1.msra.mxu0 %v6560
    %6944 = vmatprep.mubr.f32.mxu0 %v5350
    %6945 = vmatmul.mubr.f32.gmra.mrb[0].mxu0 %v5349
    %v6946 = vpop.f32.mrb[0].mxu0
    %v6947 = vadd.f32 %v6876, %v6946
    %v6948 = vpop.f32.mrb[0].mxu0
    %v6949 = vadd.f32 %v6878, %v6948
    %6950 = vdwg.mxu0
    %6951 = vmatprep.subr.mxu0 %v6569
    %6952 = vmatpush1.msra.mxu0 %v6568
    %6953 = vmatprep.subr.mxu0 %v6577
    %6954 = vmatpush1.msra.mxu0 %v6576
    %6955 = vmatprep.subr.mxu0 %v6585
    %6956 = vmatpush1.msra.mxu0 %v6584
    %6957 = vmatprep.subr.mxu0 %v6593
    %6958 = vmatpush1.msra.mxu0 %v6592
    %6959 = vmatprep.subr.mxu0 %v6601
    %6960 = vmatpush1.msra.mxu0 %v6600
    %6961 = vmatprep.subr.mxu0 %v6609
    %6962 = vmatpush1.msra.mxu0 %v6608
    %6963 = vmatprep.subr.mxu0 %v6617
    %6964 = vmatpush1.msra.mxu0 %v6616
    %6965 = vmatprep.subr.mxu0 %v6625
    %6966 = vmatpush1.msra.mxu0 %v6624
    %6967 = vmatprep.subr.mxu0 %v6633
    %6968 = vmatpush1.msra.mxu0 %v6632
    %6969 = vmatprep.subr.mxu0 %v6641
    %6970 = vmatpush1.msra.mxu0 %v6640
    %6971 = vmatprep.subr.mxu0 %v6649
    %6972 = vmatpush1.msra.mxu0 %v6648
    %6973 = vmatprep.subr.mxu0 %v6657
    %6974 = vmatpush1.msra.mxu0 %v6656
    %6975 = vmatprep.subr.mxu0 %v6665
    %6976 = vmatpush1.msra.mxu0 %v6664
    %6977 = vmatprep.subr.mxu0 %v6673
    %6978 = vmatpush1.msra.mxu0 %v6672
    %6979 = vmatprep.subr.mxu0 %v6681
    %6980 = vmatpush1.msra.mxu0 %v6680
    %6981 = vmatprep.subr.mxu0 %v6689
    %6982 = vmatpush1.msra.mxu0 %v6688
    %6983 = vmatprep.subr.mxu0 0.0
    %6984 = vmatpush1.msra.mxu0 0.0
    %6985 = vmatprep.subr.mxu0 0.0
    %6986 = vmatpush1.msra.mxu0 0.0
    %6987 = vmatprep.subr.mxu0 0.0
    %6988 = vmatpush1.msra.mxu0 0.0
    %6989 = vmatprep.subr.mxu0 0.0
    %6990 = vmatpush1.msra.mxu0 0.0
    %6991 = vmatprep.subr.mxu0 0.0
    %6992 = vmatpush1.msra.mxu0 0.0
    %6993 = vmatprep.subr.mxu0 0.0
    %6994 = vmatpush1.msra.mxu0 0.0
    %6995 = vmatprep.subr.mxu0 0.0
    %6996 = vmatpush1.msra.mxu0 0.0
    %6997 = vmatprep.subr.mxu0 0.0
    %6998 = vmatpush1.msra.mxu0 0.0
    %6999 = vmatprep.subr.mxu0 0.0
    %7000 = vmatpush1.msra.mxu0 0.0
    %7001 = vmatprep.subr.mxu0 0.0
    %7002 = vmatpush1.msra.mxu0 0.0
    %7003 = vmatprep.subr.mxu0 0.0
    %7004 = vmatpush1.msra.mxu0 0.0
    %7005 = vmatprep.subr.mxu0 0.0
    %7006 = vmatpush1.msra.mxu0 0.0
    %7007 = vmatprep.subr.mxu0 0.0
    %7008 = vmatpush1.msra.mxu0 0.0
    %7009 = vmatprep.subr.mxu0 0.0
    %7010 = vmatpush1.msra.mxu0 0.0
    %7011 = vmatprep.subr.mxu0 0.0
    %7012 = vmatpush1.msra.mxu0 0.0
    %7013 = vmatprep.subr.mxu0 0.0
    %7014 = vmatpush1.msra.mxu0 0.0
    %7015 = vmatprep.mubr.f32.mxu0 0.0
    %7016 = vmatmul.mubr.f32.gmra.mrb[0].mxu0 %v5351
    %v7017 = vpop.f32.mrb[0].mxu0
    %v7018 = vadd.f32 %v6947, %v7017
    %v7019 = vpop.f32.mrb[0].mxu0
    %v7020 = vadd.f32 %v6949, %v7019
    %7021 = vdwg.mxu0
    %7022 = vmatprep.subr.mxu0 %v5803
    %7023 = vmatpush1.msra.mxu0 %v5802
    %7024 = vmatprep.subr.mxu0 %v5811
    %7025 = vmatpush1.msra.mxu0 %v5810
    %7026 = vmatprep.subr.mxu0 %v5819
    %7027 = vmatpush1.msra.mxu0 %v5818
    %7028 = vmatprep.subr.mxu0 %v5827
    %7029 = vmatpush1.msra.mxu0 %v5826
    %7030 = vmatprep.subr.mxu0 %v5835
    %7031 = vmatpush1.msra.mxu0 %v5834
    %7032 = vmatprep.subr.mxu0 %v5843
    %7033 = vmatpush1.msra.mxu0 %v5842
    %7034 = vmatprep.subr.mxu0 %v5851
    %7035 = vmatpush1.msra.mxu0 %v5850
    %7036 = vmatprep.subr.mxu0 %v5859
    %7037 = vmatpush1.msra.mxu0 %v5858
    %7038 = vmatprep.subr.mxu0 %v5867
    %7039 = vmatpush1.msra.mxu0 %v5866
    %7040 = vmatprep.subr.mxu0 %v5875
    %7041 = vmatpush1.msra.mxu0 %v5874
    %7042 = vmatprep.subr.mxu0 %v5883
    %7043 = vmatpush1.msra.mxu0 %v5882
    %7044 = vmatprep.subr.mxu0 %v5891
    %7045 = vmatpush1.msra.mxu0 %v5890
    %7046 = vmatprep.subr.mxu0 %v5899
    %7047 = vmatpush1.msra.mxu0 %v5898
    %7048 = vmatprep.subr.mxu0 %v5907
    %7049 = vmatpush1.msra.mxu0 %v5906
    %7050 = vmatprep.subr.mxu0 %v5915
    %7051 = vmatpush1.msra.mxu0 %v5914
    %7052 = vmatprep.subr.mxu0 %v5923
    %7053 = vmatpush1.msra.mxu0 %v5922
    %7054 = vmatprep.subr.mxu0 %v5931
    %7055 = vmatpush1.msra.mxu0 %v5930
    %7056 = vmatprep.subr.mxu0 %v5939
    %7057 = vmatpush1.msra.mxu0 %v5938
    %7058 = vmatprep.subr.mxu0 %v5947
    %7059 = vmatpush1.msra.mxu0 %v5946
    %7060 = vmatprep.subr.mxu0 %v5955
    %7061 = vmatpush1.msra.mxu0 %v5954
    %7062 = vmatprep.subr.mxu0 %v5963
    %7063 = vmatpush1.msra.mxu0 %v5962
    %7064 = vmatprep.subr.mxu0 %v5971
    %7065 = vmatpush1.msra.mxu0 %v5970
    %7066 = vmatprep.subr.mxu0 %v5979
    %7067 = vmatpush1.msra.mxu0 %v5978
    %7068 = vmatprep.subr.mxu0 %v5987
    %7069 = vmatpush1.msra.mxu0 %v5986
    %7070 = vmatprep.subr.mxu0 %v5995
    %7071 = vmatpush1.msra.mxu0 %v5994
    %7072 = vmatprep.subr.mxu0 %v6003
    %7073 = vmatpush1.msra.mxu0 %v6002
    %7074 = vmatprep.subr.mxu0 %v6011
    %7075 = vmatpush1.msra.mxu0 %v6010
    %7076 = vmatprep.subr.mxu0 %v6019
    %7077 = vmatpush1.msra.mxu0 %v6018
    %7078 = vmatprep.subr.mxu0 %v6027
    %7079 = vmatpush1.msra.mxu0 %v6026
    %7080 = vmatprep.subr.mxu0 %v6035
    %7081 = vmatpush1.msra.mxu0 %v6034
    %7082 = vmatprep.subr.mxu0 %v6043
    %7083 = vmatpush1.msra.mxu0 %v6042
    %7084 = vmatprep.subr.mxu0 %v6051
    %7085 = vmatpush1.msra.mxu0 %v6050
    %7086 = vmatprep.mubr.f32.mxu0 %v5346
    %7087 = vmatmul.mubr.f32.gmra.mrb[0].mxu0 %v5345
    %v7088 = vpop.f32.mrb[0].mxu0
    %v7089 = vadd.f32 %v6709, %v7088
    %v7090 = vpop.f32.mrb[0].mxu0
    %v7091 = vadd.f32 %v6713, %v7090
    %7092 = vdwg.mxu0
    %7093 = vmatprep.subr.mxu0 %v6059
    %7094 = vmatpush1.msra.mxu0 %v6058
    %7095 = vmatprep.subr.mxu0 %v6067
    %7096 = vmatpush1.msra.mxu0 %v6066
    %7097 = vmatprep.subr.mxu0 %v6075
    %7098 = vmatpush1.msra.mxu0 %v6074
    %7099 = vmatprep.subr.mxu0 %v6083
    %7100 = vmatpush1.msra.mxu0 %v6082
    %7101 = vmatprep.subr.mxu0 %v6091
    %7102 = vmatpush1.msra.mxu0 %v6090
    %7103 = vmatprep.subr.mxu0 %v6099
    %7104 = vmatpush1.msra.mxu0 %v6098
    %7105 = vmatprep.subr.mxu0 %v6107
    %7106 = vmatpush1.msra.mxu0 %v6106
    %7107 = vmatprep.subr.mxu0 %v6115
    %7108 = vmatpush1.msra.mxu0 %v6114
    %7109 = vmatprep.subr.mxu0 %v6123
    %7110 = vmatpush1.msra.mxu0 %v6122
    %7111 = vmatprep.subr.mxu0 %v6131
    %7112 = vmatpush1.msra.mxu0 %v6130
    %7113 = vmatprep.subr.mxu0 %v6139
    %7114 = vmatpush1.msra.mxu0 %v6138
    %7115 = vmatprep.subr.mxu0 %v6147
    %7116 = vmatpush1.msra.mxu0 %v6146
    %7117 = vmatprep.subr.mxu0 %v6155
    %7118 = vmatpush1.msra.mxu0 %v6154
    %7119 = vmatprep.subr.mxu0 %v6163
    %7120 = vmatpush1.msra.mxu0 %v6162
    %7121 = vmatprep.subr.mxu0 %v6171
    %7122 = vmatpush1.msra.mxu0 %v6170
    %7123 = vmatprep.subr.mxu0 %v6179
    %7124 = vmatpush1.msra.mxu0 %v6178
    %7125 = vmatprep.subr.mxu0 %v6187
    %7126 = vmatpush1.msra.mxu0 %v6186
    %7127 = vmatprep.subr.mxu0 %v6195
    %7128 = vmatpush1.msra.mxu0 %v6194
    %7129 = vmatprep.subr.mxu0 %v6203
    %7130 = vmatpush1.msra.mxu0 %v6202
    %7131 = vmatprep.subr.mxu0 %v6211
    %7132 = vmatpush1.msra.mxu0 %v6210
    %7133 = vmatprep.subr.mxu0 %v6219
    %7134 = vmatpush1.msra.mxu0 %v6218
    %7135 = vmatprep.subr.mxu0 %v6227
    %7136 = vmatpush1.msra.mxu0 %v6226
    %7137 = vmatprep.subr.mxu0 %v6235
    %7138 = vmatpush1.msra.mxu0 %v6234
    %7139 = vmatprep.subr.mxu0 %v6243
    %7140 = vmatpush1.msra.mxu0 %v6242
    %7141 = vmatprep.subr.mxu0 %v6251
    %7142 = vmatpush1.msra.mxu0 %v6250
    %7143 = vmatprep.subr.mxu0 %v6259
    %7144 = vmatpush1.msra.mxu0 %v6258
    %7145 = vmatprep.subr.mxu0 %v6267
    %7146 = vmatpush1.msra.mxu0 %v6266
    %7147 = vmatprep.subr.mxu0 %v6275
    %7148 = vmatpush1.msra.mxu0 %v6274
    %7149 = vmatprep.subr.mxu0 %v6283
    %7150 = vmatpush1.msra.mxu0 %v6282
    %7151 = vmatprep.subr.mxu0 %v6291
    %7152 = vmatpush1.msra.mxu0 %v6290
    %7153 = vmatprep.subr.mxu0 %v6299
    %7154 = vmatpush1.msra.mxu0 %v6298
    %7155 = vmatprep.subr.mxu0 %v6307
    %7156 = vmatpush1.msra.mxu0 %v6306
    %7157 = vmatprep.mubr.f32.mxu0 %v5348
    %7158 = vmatmul.mubr.f32.gmra.mrb[0].mxu0 %v5347
    %v7159 = vpop.f32.mrb[0].mxu0
    %v7160 = vadd.f32 %v7089, %v7159
    %v7161 = vpop.f32.mrb[0].mxu0
    %v7162 = vadd.f32 %v7091, %v7161
    %7163 = vdwg.mxu0
    %7164 = vmatprep.subr.mxu0 %v6315
    %7165 = vmatpush1.msra.mxu0 %v6314
    %7166 = vmatprep.subr.mxu0 %v6323
    %7167 = vmatpush1.msra.mxu0 %v6322
    %7168 = vmatprep.subr.mxu0 %v6331
    %7169 = vmatpush1.msra.mxu0 %v6330
    %7170 = vmatprep.subr.mxu0 %v6339
    %7171 = vmatpush1.msra.mxu0 %v6338
    %7172 = vmatprep.subr.mxu0 %v6347
    %7173 = vmatpush1.msra.mxu0 %v6346
    %7174 = vmatprep.subr.mxu0 %v6355
    %7175 = vmatpush1.msra.mxu0 %v6354
    %7176 = vmatprep.subr.mxu0 %v6363
    %7177 = vmatpush1.msra.mxu0 %v6362
    %7178 = vmatprep.subr.mxu0 %v6371
    %7179 = vmatpush1.msra.mxu0 %v6370
    %7180 = vmatprep.subr.mxu0 %v6379
    %7181 = vmatpush1.msra.mxu0 %v6378
    %7182 = vmatprep.subr.mxu0 %v6387
    %7183 = vmatpush1.msra.mxu0 %v6386
    %7184 = vmatprep.subr.mxu0 %v6395
    %7185 = vmatpush1.msra.mxu0 %v6394
    %7186 = vmatprep.subr.mxu0 %v6403
    %7187 = vmatpush1.msra.mxu0 %v6402
    %7188 = vmatprep.subr.mxu0 %v6411
    %7189 = vmatpush1.msra.mxu0 %v6410
    %7190 = vmatprep.subr.mxu0 %v6419
    %7191 = vmatpush1.msra.mxu0 %v6418
    %7192 = vmatprep.subr.mxu0 %v6427
    %7193 = vmatpush1.msra.mxu0 %v6426
    %7194 = vmatprep.subr.mxu0 %v6435
    %7195 = vmatpush1.msra.mxu0 %v6434
    %7196 = vmatprep.subr.mxu0 %v6443
    %7197 = vmatpush1.msra.mxu0 %v6442
    %7198 = vmatprep.subr.mxu0 %v6451
    %7199 = vmatpush1.msra.mxu0 %v6450
    %7200 = vmatprep.subr.mxu0 %v6459
    %7201 = vmatpush1.msra.mxu0 %v6458
    %7202 = vmatprep.subr.mxu0 %v6467
    %7203 = vmatpush1.msra.mxu0 %v6466
    %7204 = vmatprep.subr.mxu0 %v6475
    %7205 = vmatpush1.msra.mxu0 %v6474
    %7206 = vmatprep.subr.mxu0 %v6483
    %7207 = vmatpush1.msra.mxu0 %v6482
    %7208 = vmatprep.subr.mxu0 %v6491
    %7209 = vmatpush1.msra.mxu0 %v6490
    %7210 = vmatprep.subr.mxu0 %v6499
    %7211 = vmatpush1.msra.mxu0 %v6498
    %7212 = vmatprep.subr.mxu0 %v6507
    %7213 = vmatpush1.msra.mxu0 %v6506
    %7214 = vmatprep.subr.mxu0 %v6515
    %7215 = vmatpush1.msra.mxu0 %v6514
    %7216 = vmatprep.subr.mxu0 %v6523
    %7217 = vmatpush1.msra.mxu0 %v6522
    %7218 = vmatprep.subr.mxu0 %v6531
    %7219 = vmatpush1.msra.mxu0 %v6530
    %7220 = vmatprep.subr.mxu0 %v6539
    %7221 = vmatpush1.msra.mxu0 %v6538
    %7222 = vmatprep.subr.mxu0 %v6547
    %7223 = vmatpush1.msra.mxu0 %v6546
    %7224 = vmatprep.subr.mxu0 %v6555
    %7225 = vmatpush1.msra.mxu0 %v6554
    %7226 = vmatprep.subr.mxu0 %v6563
    %7227 = vmatpush1.msra.mxu0 %v6562
    %7228 = vmatprep.mubr.f32.mxu0 %v5350
    %7229 = vmatmul.mubr.f32.gmra.mrb[0].mxu0 %v5349
    %v7230 = vpop.f32.mrb[0].mxu0
    %v7231 = vadd.f32 %v7160, %v7230
    %v7232 = vpop.f32.mrb[0].mxu0
    %v7233 = vadd.f32 %v7162, %v7232
    %7234 = vdwg.mxu0
    %7235 = vmatprep.subr.mxu0 %v6571
    %7236 = vmatpush1.msra.mxu0 %v6570
    %7237 = vmatprep.subr.mxu0 %v6579
    %7238 = vmatpush1.msra.mxu0 %v6578
    %7239 = vmatprep.subr.mxu0 %v6587
    %7240 = vmatpush1.msra.mxu0 %v6586
    %7241 = vmatprep.subr.mxu0 %v6595
    %7242 = vmatpush1.msra.mxu0 %v6594
    %7243 = vmatprep.subr.mxu0 %v6603
    %7244 = vmatpush1.msra.mxu0 %v6602
    %7245 = vmatprep.subr.mxu0 %v6611
    %7246 = vmatpush1.msra.mxu0 %v6610
    %7247 = vmatprep.subr.mxu0 %v6619
    %7248 = vmatpush1.msra.mxu0 %v6618
    %7249 = vmatprep.subr.mxu0 %v6627
    %7250 = vmatpush1.msra.mxu0 %v6626
    %7251 = vmatprep.subr.mxu0 %v6635
    %7252 = vmatpush1.msra.mxu0 %v6634
    %7253 = vmatprep.subr.mxu0 %v6643
    %7254 = vmatpush1.msra.mxu0 %v6642
    %7255 = vmatprep.subr.mxu0 %v6651
    %7256 = vmatpush1.msra.mxu0 %v6650
    %7257 = vmatprep.subr.mxu0 %v6659
    %7258 = vmatpush1.msra.mxu0 %v6658
    %7259 = vmatprep.subr.mxu0 %v6667
    %7260 = vmatpush1.msra.mxu0 %v6666
    %7261 = vmatprep.subr.mxu0 %v6675
    %7262 = vmatpush1.msra.mxu0 %v6674
    %7263 = vmatprep.subr.mxu0 %v6683
    %7264 = vmatpush1.msra.mxu0 %v6682
    %7265 = vmatprep.subr.mxu0 %v6691
    %7266 = vmatpush1.msra.mxu0 %v6690
    %7267 = vmatprep.subr.mxu0 0.0
    %7268 = vmatpush1.msra.mxu0 0.0
    %7269 = vmatprep.subr.mxu0 0.0
    %7270 = vmatpush1.msra.mxu0 0.0
    %7271 = vmatprep.subr.mxu0 0.0
    %7272 = vmatpush1.msra.mxu0 0.0
    %7273 = vmatprep.subr.mxu0 0.0
    %7274 = vmatpush1.msra.mxu0 0.0
    %7275 = vmatprep.subr.mxu0 0.0
    %7276 = vmatpush1.msra.mxu0 0.0
    %7277 = vmatprep.subr.mxu0 0.0
    %7278 = vmatpush1.msra.mxu0 0.0
    %7279 = vmatprep.subr.mxu0 0.0
    %7280 = vmatpush1.msra.mxu0 0.0
    %7281 = vmatprep.subr.mxu0 0.0
    %7282 = vmatpush1.msra.mxu0 0.0
    %7283 = vmatprep.subr.mxu0 0.0
    %7284 = vmatpush1.msra.mxu0 0.0
    %7285 = vmatprep.subr.mxu0 0.0
    %7286 = vmatpush1.msra.mxu0 0.0
    %7287 = vmatprep.subr.mxu0 0.0
    %7288 = vmatpush1.msra.mxu0 0.0
    %7289 = vmatprep.subr.mxu0 0.0
    %7290 = vmatpush1.msra.mxu0 0.0
    %7291 = vmatprep.subr.mxu0 0.0
    %7292 = vmatpush1.msra.mxu0 0.0
    %7293 = vmatprep.subr.mxu0 0.0
    %7294 = vmatpush1.msra.mxu0 0.0
    %7295 = vmatprep.subr.mxu0 0.0
    %7296 = vmatpush1.msra.mxu0 0.0
    %7297 = vmatprep.subr.mxu0 0.0
    %7298 = vmatpush1.msra.mxu0 0.0
    %7299 = vmatprep.mubr.f32.mxu0 0.0
    %7300 = vmatmul.mubr.f32.gmra.mrb[0].mxu0 %v5351
    %v7301 = vpop.f32.mrb[0].mxu0
    %v7302 = vadd.f32 %v7231, %v7301
    %v7303 = vpop.f32.mrb[0].mxu0
    %v7304 = vadd.f32 %v7233, %v7303
    %7305 = vdwg.mxu0
    %7306 = vmatprep.subr.mxu0 %v5805
    %7307 = vmatpush1.msra.mxu0 %v5804
    %7308 = vmatprep.subr.mxu0 %v5813
    %7309 = vmatpush1.msra.mxu0 %v5812
    %7310 = vmatprep.subr.mxu0 %v5821
    %7311 = vmatpush1.msra.mxu0 %v5820
    %7312 = vmatprep.subr.mxu0 %v5829
    %7313 = vmatpush1.msra.mxu0 %v5828
    %7314 = vmatprep.subr.mxu0 %v5837
    %7315 = vmatpush1.msra.mxu0 %v5836
    %7316 = vmatprep.subr.mxu0 %v5845
    %7317 = vmatpush1.msra.mxu0 %v5844
    %7318 = vmatprep.subr.mxu0 %v5853
    %7319 = vmatpush1.msra.mxu0 %v5852
    %7320 = vmatprep.subr.mxu0 %v5861
    %7321 = vmatpush1.msra.mxu0 %v5860
    %7322 = vmatprep.subr.mxu0 %v5869
    %7323 = vmatpush1.msra.mxu0 %v5868
    %7324 = vmatprep.subr.mxu0 %v5877
    %7325 = vmatpush1.msra.mxu0 %v5876
    %7326 = vmatprep.subr.mxu0 %v5885
    %7327 = vmatpush1.msra.mxu0 %v5884
    %7328 = vmatprep.subr.mxu0 %v5893
    %7329 = vmatpush1.msra.mxu0 %v5892
    %7330 = vmatprep.subr.mxu0 %v5901
    %7331 = vmatpush1.msra.mxu0 %v5900
    %7332 = vmatprep.subr.mxu0 %v5909
    %7333 = vmatpush1.msra.mxu0 %v5908
    %7334 = vmatprep.subr.mxu0 %v5917
    %7335 = vmatpush1.msra.mxu0 %v5916
    %7336 = vmatprep.subr.mxu0 %v5925
    %7337 = vmatpush1.msra.mxu0 %v5924
    %7338 = vmatprep.subr.mxu0 %v5933
    %7339 = vmatpush1.msra.mxu0 %v5932
    %7340 = vmatprep.subr.mxu0 %v5941
    %7341 = vmatpush1.msra.mxu0 %v5940
    %7342 = vmatprep.subr.mxu0 %v5949
    %7343 = vmatpush1.msra.mxu0 %v5948
    %7344 = vmatprep.subr.mxu0 %v5957
    %7345 = vmatpush1.msra.mxu0 %v5956
    %7346 = vmatprep.subr.mxu0 %v5965
    %7347 = vmatpush1.msra.mxu0 %v5964
    %7348 = vmatprep.subr.mxu0 %v5973
    %7349 = vmatpush1.msra.mxu0 %v5972
    %7350 = vmatprep.subr.mxu0 %v5981
    %7351 = vmatpush1.msra.mxu0 %v5980
    %7352 = vmatprep.subr.mxu0 %v5989
    %7353 = vmatpush1.msra.mxu0 %v5988
    %7354 = vmatprep.subr.mxu0 %v5997
    %7355 = vmatpush1.msra.mxu0 %v5996
    %7356 = vmatprep.subr.mxu0 %v6005
    %7357 = vmatpush1.msra.mxu0 %v6004
    %7358 = vmatprep.subr.mxu0 %v6013
    %7359 = vmatpush1.msra.mxu0 %v6012
    %7360 = vmatprep.subr.mxu0 %v6021
    %7361 = vmatpush1.msra.mxu0 %v6020
    %7362 = vmatprep.subr.mxu0 %v6029
    %7363 = vmatpush1.msra.mxu0 %v6028
    %7364 = vmatprep.subr.mxu0 %v6037
    %7365 = vmatpush1.msra.mxu0 %v6036
    %7366 = vmatprep.subr.mxu0 %v6045
    %7367 = vmatpush1.msra.mxu0 %v6044
    %7368 = vmatprep.subr.mxu0 %v6053
    %7369 = vmatpush1.msra.mxu0 %v6052
    %7370 = vmatprep.mubr.f32.mxu0 %v5346
    %7371 = vmatmul.mubr.f32.gmra.mrb[0].mxu0 %v5345
    %v7372 = vpop.f32.mrb[0].mxu0
    %v7373 = vadd.f32 %v6717, %v7372
    %v7374 = vpop.f32.mrb[0].mxu0
    %v7375 = vadd.f32 %v6721, %v7374
    %7376 = vdwg.mxu0
    %7377 = vmatprep.subr.mxu0 %v6061
    %7378 = vmatpush1.msra.mxu0 %v6060
    %7379 = vmatprep.subr.mxu0 %v6069
    %7380 = vmatpush1.msra.mxu0 %v6068
    %7381 = vmatprep.subr.mxu0 %v6077
    %7382 = vmatpush1.msra.mxu0 %v6076
    %7383 = vmatprep.subr.mxu0 %v6085
    %7384 = vmatpush1.msra.mxu0 %v6084
    %7385 = vmatprep.subr.mxu0 %v6093
    %7386 = vmatpush1.msra.mxu0 %v6092
    %7387 = vmatprep.subr.mxu0 %v6101
    %7388 = vmatpush1.msra.mxu0 %v6100
    %7389 = vmatprep.subr.mxu0 %v6109
    %7390 = vmatpush1.msra.mxu0 %v6108
    %7391 = vmatprep.subr.mxu0 %v6117
    %7392 = vmatpush1.msra.mxu0 %v6116
    %7393 = vmatprep.subr.mxu0 %v6125
    %7394 = vmatpush1.msra.mxu0 %v6124
    %7395 = vmatprep.subr.mxu0 %v6133
    %7396 = vmatpush1.msra.mxu0 %v6132
    %7397 = vmatprep.subr.mxu0 %v6141
    %7398 = vmatpush1.msra.mxu0 %v6140
    %7399 = vmatprep.subr.mxu0 %v6149
    %7400 = vmatpush1.msra.mxu0 %v6148
    %7401 = vmatprep.subr.mxu0 %v6157
    %7402 = vmatpush1.msra.mxu0 %v6156
    %7403 = vmatprep.subr.mxu0 %v6165
    %7404 = vmatpush1.msra.mxu0 %v6164
    %7405 = vmatprep.subr.mxu0 %v6173
    %7406 = vmatpush1.msra.mxu0 %v6172
    %7407 = vmatprep.subr.mxu0 %v6181
    %7408 = vmatpush1.msra.mxu0 %v6180
    %7409 = vmatprep.subr.mxu0 %v6189
    %7410 = vmatpush1.msra.mxu0 %v6188
    %7411 = vmatprep.subr.mxu0 %v6197
    %7412 = vmatpush1.msra.mxu0 %v6196
    %7413 = vmatprep.subr.mxu0 %v6205
    %7414 = vmatpush1.msra.mxu0 %v6204
    %7415 = vmatprep.subr.mxu0 %v6213
    %7416 = vmatpush1.msra.mxu0 %v6212
    %7417 = vmatprep.subr.mxu0 %v6221
    %7418 = vmatpush1.msra.mxu0 %v6220
    %7419 = vmatprep.subr.mxu0 %v6229
    %7420 = vmatpush1.msra.mxu0 %v6228
    %7421 = vmatprep.subr.mxu0 %v6237
    %7422 = vmatpush1.msra.mxu0 %v6236
    %7423 = vmatprep.subr.mxu0 %v6245
    %7424 = vmatpush1.msra.mxu0 %v6244
    %7425 = vmatprep.subr.mxu0 %v6253
    %7426 = vmatpush1.msra.mxu0 %v6252
    %7427 = vmatprep.subr.mxu0 %v6261
    %7428 = vmatpush1.msra.mxu0 %v6260
    %7429 = vmatprep.subr.mxu0 %v6269
    %7430 = vmatpush1.msra.mxu0 %v6268
    %7431 = vmatprep.subr.mxu0 %v6277
    %7432 = vmatpush1.msra.mxu0 %v6276
    %7433 = vmatprep.subr.mxu0 %v6285
    %7434 = vmatpush1.msra.mxu0 %v6284
    %7435 = vmatprep.subr.mxu0 %v6293
    %7436 = vmatpush1.msra.mxu0 %v6292
    %7437 = vmatprep.subr.mxu0 %v6301
    %7438 = vmatpush1.msra.mxu0 %v6300
    %7439 = vmatprep.subr.mxu0 %v6309
    %7440 = vmatpush1.msra.mxu0 %v6308
    %7441 = vmatprep.mubr.f32.mxu0 %v5348
    %7442 = vmatmul.mubr.f32.gmra.mrb[0].mxu0 %v5347
    %v7443 = vpop.f32.mrb[0].mxu0
    %v7444 = vadd.f32 %v7373, %v7443
    %v7445 = vpop.f32.mrb[0].mxu0
    %v7446 = vadd.f32 %v7375, %v7445
    %7447 = vdwg.mxu0
    %7448 = vmatprep.subr.mxu0 %v6317
    %7449 = vmatpush1.msra.mxu0 %v6316
    %7450 = vmatprep.subr.mxu0 %v6325
    %7451 = vmatpush1.msra.mxu0 %v6324
    %7452 = vmatprep.subr.mxu0 %v6333
    %7453 = vmatpush1.msra.mxu0 %v6332
    %7454 = vmatprep.subr.mxu0 %v6341
    %7455 = vmatpush1.msra.mxu0 %v6340
    %7456 = vmatprep.subr.mxu0 %v6349
    %7457 = vmatpush1.msra.mxu0 %v6348
    %7458 = vmatprep.subr.mxu0 %v6357
    %7459 = vmatpush1.msra.mxu0 %v6356
    %7460 = vmatprep.subr.mxu0 %v6365
    %7461 = vmatpush1.msra.mxu0 %v6364
    %7462 = vmatprep.subr.mxu0 %v6373
    %7463 = vmatpush1.msra.mxu0 %v6372
    %7464 = vmatprep.subr.mxu0 %v6381
    %7465 = vmatpush1.msra.mxu0 %v6380
    %7466 = vmatprep.subr.mxu0 %v6389
    %7467 = vmatpush1.msra.mxu0 %v6388
    %7468 = vmatprep.subr.mxu0 %v6397
    %7469 = vmatpush1.msra.mxu0 %v6396
    %7470 = vmatprep.subr.mxu0 %v6405
    %7471 = vmatpush1.msra.mxu0 %v6404
    %7472 = vmatprep.subr.mxu0 %v6413
    %7473 = vmatpush1.msra.mxu0 %v6412
    %7474 = vmatprep.subr.mxu0 %v6421
    %7475 = vmatpush1.msra.mxu0 %v6420
    %7476 = vmatprep.subr.mxu0 %v6429
    %7477 = vmatpush1.msra.mxu0 %v6428
    %7478 = vmatprep.subr.mxu0 %v6437
    %7479 = vmatpush1.msra.mxu0 %v6436
    %7480 = vmatprep.subr.mxu0 %v6445
    %7481 = vmatpush1.msra.mxu0 %v6444
    %7482 = vmatprep.subr.mxu0 %v6453
    %7483 = vmatpush1.msra.mxu0 %v6452
    %7484 = vmatprep.subr.mxu0 %v6461
    %7485 = vmatpush1.msra.mxu0 %v6460
    %7486 = vmatprep.subr.mxu0 %v6469
    %7487 = vmatpush1.msra.mxu0 %v6468
    %7488 = vmatprep.subr.mxu0 %v6477
    %7489 = vmatpush1.msra.mxu0 %v6476
    %7490 = vmatprep.subr.mxu0 %v6485
    %7491 = vmatpush1.msra.mxu0 %v6484
    %7492 = vmatprep.subr.mxu0 %v6493
    %7493 = vmatpush1.msra.mxu0 %v6492
    %7494 = vmatprep.subr.mxu0 %v6501
    %7495 = vmatpush1.msra.mxu0 %v6500
    %7496 = vmatprep.subr.mxu0 %v6509
    %7497 = vmatpush1.msra.mxu0 %v6508
    %7498 = vmatprep.subr.mxu0 %v6517
    %7499 = vmatpush1.msra.mxu0 %v6516
    %7500 = vmatprep.subr.mxu0 %v6525
    %7501 = vmatpush1.msra.mxu0 %v6524
    %7502 = vmatprep.subr.mxu0 %v6533
    %7503 = vmatpush1.msra.mxu0 %v6532
    %7504 = vmatprep.subr.mxu0 %v6541
    %7505 = vmatpush1.msra.mxu0 %v6540
    %7506 = vmatprep.subr.mxu0 %v6549
    %7507 = vmatpush1.msra.mxu0 %v6548
    %7508 = vmatprep.subr.mxu0 %v6557
    %7509 = vmatpush1.msra.mxu0 %v6556
    %7510 = vmatprep.subr.mxu0 %v6565
    %7511 = vmatpush1.msra.mxu0 %v6564
    %7512 = vmatprep.mubr.f32.mxu0 %v5350
    %7513 = vmatmul.mubr.f32.gmra.mrb[0].mxu0 %v5349
    %v7514 = vpop.f32.mrb[0].mxu0
    %v7515 = vadd.f32 %v7444, %v7514
    %v7516 = vpop.f32.mrb[0].mxu0
    %v7517 = vadd.f32 %v7446, %v7516
    %7518 = vdwg.mxu0
    %7519 = vmatprep.subr.mxu0 %v6573
    %7520 = vmatpush1.msra.mxu0 %v6572
    %7521 = vmatprep.subr.mxu0 %v6581
    %7522 = vmatpush1.msra.mxu0 %v6580
    %7523 = vmatprep.subr.mxu0 %v6589
    %7524 = vmatpush1.msra.mxu0 %v6588
    %7525 = vmatprep.subr.mxu0 %v6597
    %7526 = vmatpush1.msra.mxu0 %v6596
    %7527 = vmatprep.subr.mxu0 %v6605
    %7528 = vmatpush1.msra.mxu0 %v6604
    %7529 = vmatprep.subr.mxu0 %v6613
    %7530 = vmatpush1.msra.mxu0 %v6612
    %7531 = vmatprep.subr.mxu0 %v6621
    %7532 = vmatpush1.msra.mxu0 %v6620
    %7533 = vmatprep.subr.mxu0 %v6629
    %7534 = vmatpush1.msra.mxu0 %v6628
    %7535 = vmatprep.subr.mxu0 %v6637
    %7536 = vmatpush1.msra.mxu0 %v6636
    %7537 = vmatprep.subr.mxu0 %v6645
    %7538 = vmatpush1.msra.mxu0 %v6644
    %7539 = vmatprep.subr.mxu0 %v6653
    %7540 = vmatpush1.msra.mxu0 %v6652
    %7541 = vmatprep.subr.mxu0 %v6661
    %7542 = vmatpush1.msra.mxu0 %v6660
    %7543 = vmatprep.subr.mxu0 %v6669
    %7544 = vmatpush1.msra.mxu0 %v6668
    %7545 = vmatprep.subr.mxu0 %v6677
    %7546 = vmatpush1.msra.mxu0 %v6676
    %7547 = vmatprep.subr.mxu0 %v6685
    %7548 = vmatpush1.msra.mxu0 %v6684
    %7549 = vmatprep.subr.mxu0 %v6693
    %7550 = vmatpush1.msra.mxu0 %v6692
    %7551 = vmatprep.subr.mxu0 0.0
    %7552 = vmatpush1.msra.mxu0 0.0
    %7553 = vmatprep.subr.mxu0 0.0
    %7554 = vmatpush1.msra.mxu0 0.0
    %7555 = vmatprep.subr.mxu0 0.0
    %7556 = vmatpush1.msra.mxu0 0.0
    %7557 = vmatprep.subr.mxu0 0.0
    %7558 = vmatpush1.msra.mxu0 0.0
    %7559 = vmatprep.subr.mxu0 0.0
    %7560 = vmatpush1.msra.mxu0 0.0
    %7561 = vmatprep.subr.mxu0 0.0
    %7562 = vmatpush1.msra.mxu0 0.0
    %7563 = vmatprep.subr.mxu0 0.0
    %7564 = vmatpush1.msra.mxu0 0.0
    %7565 = vmatprep.subr.mxu0 0.0
    %7566 = vmatpush1.msra.mxu0 0.0
    %7567 = vmatprep.subr.mxu0 0.0
    %7568 = vmatpush1.msra.mxu0 0.0
    %7569 = vmatprep.subr.mxu0 0.0
    %7570 = vmatpush1.msra.mxu0 0.0
    %7571 = vmatprep.subr.mxu0 0.0
    %7572 = vmatpush1.msra.mxu0 0.0
    %7573 = vmatprep.subr.mxu0 0.0
    %7574 = vmatpush1.msra.mxu0 0.0
    %7575 = vmatprep.subr.mxu0 0.0
    %7576 = vmatpush1.msra.mxu0 0.0
    %7577 = vmatprep.subr.mxu0 0.0
    %7578 = vmatpush1.msra.mxu0 0.0
    %7579 = vmatprep.subr.mxu0 0.0
    %7580 = vmatpush1.msra.mxu0 0.0
    %7581 = vmatprep.subr.mxu0 0.0
    %7582 = vmatpush1.msra.mxu0 0.0
    %7583 = vmatprep.mubr.f32.mxu0 0.0
    %7584 = vmatmul.mubr.f32.gmra.mrb[0].mxu0 %v5351
    %v7585 = vpop.f32.mrb[0].mxu0
    %v7586 = vadd.f32 %v7515, %v7585
    %v7587 = vpop.f32.mrb[0].mxu0
    %v7588 = vadd.f32 %v7517, %v7587
    %7589 = vdwg.mxu0
    %7590 = vmatprep.subr.mxu0 %v5807
    %7591 = vmatpush1.msra.mxu0 %v5806
    %7592 = vmatprep.subr.mxu0 %v5815
    %7593 = vmatpush1.msra.mxu0 %v5814
    %7594 = vmatprep.subr.mxu0 %v5823
    %7595 = vmatpush1.msra.mxu0 %v5822
    %7596 = vmatprep.subr.mxu0 %v5831
    %7597 = vmatpush1.msra.mxu0 %v5830
    %7598 = vmatprep.subr.mxu0 %v5839
    %7599 = vmatpush1.msra.mxu0 %v5838
    %7600 = vmatprep.subr.mxu0 %v5847
    %7601 = vmatpush1.msra.mxu0 %v5846
    %7602 = vmatprep.subr.mxu0 %v5855
    %7603 = vmatpush1.msra.mxu0 %v5854
    %7604 = vmatprep.subr.mxu0 %v5863
    %7605 = vmatpush1.msra.mxu0 %v5862
    %7606 = vmatprep.subr.mxu0 %v5871
    %7607 = vmatpush1.msra.mxu0 %v5870
    %7608 = vmatprep.subr.mxu0 %v5879
    %7609 = vmatpush1.msra.mxu0 %v5878
    %7610 = vmatprep.subr.mxu0 %v5887
    %7611 = vmatpush1.msra.mxu0 %v5886
    %7612 = vmatprep.subr.mxu0 %v5895
    %7613 = vmatpush1.msra.mxu0 %v5894
    %7614 = vmatprep.subr.mxu0 %v5903
    %7615 = vmatpush1.msra.mxu0 %v5902
    %7616 = vmatprep.subr.mxu0 %v5911
    %7617 = vmatpush1.msra.mxu0 %v5910
    %7618 = vmatprep.subr.mxu0 %v5919
    %7619 = vmatpush1.msra.mxu0 %v5918
    %7620 = vmatprep.subr.mxu0 %v5927
    %7621 = vmatpush1.msra.mxu0 %v5926
    %7622 = vmatprep.subr.mxu0 %v5935
    %7623 = vmatpush1.msra.mxu0 %v5934
    %7624 = vmatprep.subr.mxu0 %v5943
    %7625 = vmatpush1.msra.mxu0 %v5942
    %7626 = vmatprep.subr.mxu0 %v5951
    %7627 = vmatpush1.msra.mxu0 %v5950
    %7628 = vmatprep.subr.mxu0 %v5959
    %7629 = vmatpush1.msra.mxu0 %v5958
    %7630 = vmatprep.subr.mxu0 %v5967
    %7631 = vmatpush1.msra.mxu0 %v5966
    %7632 = vmatprep.subr.mxu0 %v5975
    %7633 = vmatpush1.msra.mxu0 %v5974
    %7634 = vmatprep.subr.mxu0 %v5983
    %7635 = vmatpush1.msra.mxu0 %v5982
    %7636 = vmatprep.subr.mxu0 %v5991
    %7637 = vmatpush1.msra.mxu0 %v5990
    %7638 = vmatprep.subr.mxu0 %v5999
    %7639 = vmatpush1.msra.mxu0 %v5998
    %7640 = vmatprep.subr.mxu0 %v6007
    %7641 = vmatpush1.msra.mxu0 %v6006
    %7642 = vmatprep.subr.mxu0 %v6015
    %7643 = vmatpush1.msra.mxu0 %v6014
    %7644 = vmatprep.subr.mxu0 %v6023
    %7645 = vmatpush1.msra.mxu0 %v6022
    %7646 = vmatprep.subr.mxu0 %v6031
    %7647 = vmatpush1.msra.mxu0 %v6030
    %7648 = vmatprep.subr.mxu0 %v6039
    %7649 = vmatpush1.msra.mxu0 %v6038
    %7650 = vmatprep.subr.mxu0 %v6047
    %7651 = vmatpush1.msra.mxu0 %v6046
    %7652 = vmatprep.subr.mxu0 %v6055
    %7653 = vmatpush1.msra.mxu0 %v6054
    %7654 = vmatprep.mubr.f32.mxu0 %v5346
    %7655 = vmatmul.mubr.f32.gmra.mrb[0].mxu0 %v5345
    %v7656 = vpop.f32.mrb[0].mxu0
    %v7657 = vadd.f32 %v6725, %v7656
    %v7658 = vpop.f32.mrb[0].mxu0
    %v7659 = vadd.f32 %v6729, %v7658
    %7660 = vdwg.mxu0
    %7661 = vmatprep.subr.mxu0 %v6063
    %7662 = vmatpush1.msra.mxu0 %v6062
    %7663 = vmatprep.subr.mxu0 %v6071
    %7664 = vmatpush1.msra.mxu0 %v6070
    %7665 = vmatprep.subr.mxu0 %v6079
    %7666 = vmatpush1.msra.mxu0 %v6078
    %7667 = vmatprep.subr.mxu0 %v6087
    %7668 = vmatpush1.msra.mxu0 %v6086
    %7669 = vmatprep.subr.mxu0 %v6095
    %7670 = vmatpush1.msra.mxu0 %v6094
    %7671 = vmatprep.subr.mxu0 %v6103
    %7672 = vmatpush1.msra.mxu0 %v6102
    %7673 = vmatprep.subr.mxu0 %v6111
    %7674 = vmatpush1.msra.mxu0 %v6110
    %7675 = vmatprep.subr.mxu0 %v6119
    %7676 = vmatpush1.msra.mxu0 %v6118
    %7677 = vmatprep.subr.mxu0 %v6127
    %7678 = vmatpush1.msra.mxu0 %v6126
    %7679 = vmatprep.subr.mxu0 %v6135
    %7680 = vmatpush1.msra.mxu0 %v6134
    %7681 = vmatprep.subr.mxu0 %v6143
    %7682 = vmatpush1.msra.mxu0 %v6142
    %7683 = vmatprep.subr.mxu0 %v6151
    %7684 = vmatpush1.msra.mxu0 %v6150
    %7685 = vmatprep.subr.mxu0 %v6159
    %7686 = vmatpush1.msra.mxu0 %v6158
    %7687 = vmatprep.subr.mxu0 %v6167
    %7688 = vmatpush1.msra.mxu0 %v6166
    %7689 = vmatprep.subr.mxu0 %v6175
    %7690 = vmatpush1.msra.mxu0 %v6174
    %7691 = vmatprep.subr.mxu0 %v6183
    %7692 = vmatpush1.msra.mxu0 %v6182
    %7693 = vmatprep.subr.mxu0 %v6191
    %7694 = vmatpush1.msra.mxu0 %v6190
    %7695 = vmatprep.subr.mxu0 %v6199
    %7696 = vmatpush1.msra.mxu0 %v6198
    %7697 = vmatprep.subr.mxu0 %v6207
    %7698 = vmatpush1.msra.mxu0 %v6206
    %7699 = vmatprep.subr.mxu0 %v6215
    %7700 = vmatpush1.msra.mxu0 %v6214
    %7701 = vmatprep.subr.mxu0 %v6223
    %7702 = vmatpush1.msra.mxu0 %v6222
    %7703 = vmatprep.subr.mxu0 %v6231
    %7704 = vmatpush1.msra.mxu0 %v6230
    %7705 = vmatprep.subr.mxu0 %v6239
    %7706 = vmatpush1.msra.mxu0 %v6238
    %7707 = vmatprep.subr.mxu0 %v6247
    %7708 = vmatpush1.msra.mxu0 %v6246
    %7709 = vmatprep.subr.mxu0 %v6255
    %7710 = vmatpush1.msra.mxu0 %v6254
    %7711 = vmatprep.subr.mxu0 %v6263
    %7712 = vmatpush1.msra.mxu0 %v6262
    %7713 = vmatprep.subr.mxu0 %v6271
    %7714 = vmatpush1.msra.mxu0 %v6270
    %7715 = vmatprep.subr.mxu0 %v6279
    %7716 = vmatpush1.msra.mxu0 %v6278
    %7717 = vmatprep.subr.mxu0 %v6287
    %7718 = vmatpush1.msra.mxu0 %v6286
    %7719 = vmatprep.subr.mxu0 %v6295
    %7720 = vmatpush1.msra.mxu0 %v6294
    %7721 = vmatprep.subr.mxu0 %v6303
    %7722 = vmatpush1.msra.mxu0 %v6302
    %7723 = vmatprep.subr.mxu0 %v6311
    %7724 = vmatpush1.msra.mxu0 %v6310
    %7725 = vmatprep.mubr.f32.mxu0 %v5348
    %7726 = vmatmul.mubr.f32.gmra.mrb[0].mxu0 %v5347
    %v7727 = vpop.f32.mrb[0].mxu0
    %v7728 = vadd.f32 %v7657, %v7727
    %v7729 = vpop.f32.mrb[0].mxu0
    %v7730 = vadd.f32 %v7659, %v7729
    %7731 = vdwg.mxu0
    %7732 = vmatprep.subr.mxu0 %v6319
    %7733 = vmatpush1.msra.mxu0 %v6318
    %7734 = vmatprep.subr.mxu0 %v6327
    %7735 = vmatpush1.msra.mxu0 %v6326
    %7736 = vmatprep.subr.mxu0 %v6335
    %7737 = vmatpush1.msra.mxu0 %v6334
    %7738 = vmatprep.subr.mxu0 %v6343
    %7739 = vmatpush1.msra.mxu0 %v6342
    %7740 = vmatprep.subr.mxu0 %v6351
    %7741 = vmatpush1.msra.mxu0 %v6350
    %7742 = vmatprep.subr.mxu0 %v6359
    %7743 = vmatpush1.msra.mxu0 %v6358
    %7744 = vmatprep.subr.mxu0 %v6367
    %7745 = vmatpush1.msra.mxu0 %v6366
    %7746 = vmatprep.subr.mxu0 %v6375
    %7747 = vmatpush1.msra.mxu0 %v6374
    %7748 = vmatprep.subr.mxu0 %v6383
    %7749 = vmatpush1.msra.mxu0 %v6382
    %7750 = vmatprep.subr.mxu0 %v6391
    %7751 = vmatpush1.msra.mxu0 %v6390
    %7752 = vmatprep.subr.mxu0 %v6399
    %7753 = vmatpush1.msra.mxu0 %v6398
    %7754 = vmatprep.subr.mxu0 %v6407
    %7755 = vmatpush1.msra.mxu0 %v6406
    %7756 = vmatprep.subr.mxu0 %v6415
    %7757 = vmatpush1.msra.mxu0 %v6414
    %7758 = vmatprep.subr.mxu0 %v6423
    %7759 = vmatpush1.msra.mxu0 %v6422
    %7760 = vmatprep.subr.mxu0 %v6431
    %7761 = vmatpush1.msra.mxu0 %v6430
    %7762 = vmatprep.subr.mxu0 %v6439
    %7763 = vmatpush1.msra.mxu0 %v6438
    %7764 = vmatprep.subr.mxu0 %v6447
    %7765 = vmatpush1.msra.mxu0 %v6446
    %7766 = vmatprep.subr.mxu0 %v6455
    %7767 = vmatpush1.msra.mxu0 %v6454
    %7768 = vmatprep.subr.mxu0 %v6463
    %7769 = vmatpush1.msra.mxu0 %v6462
    %7770 = vmatprep.subr.mxu0 %v6471
    %7771 = vmatpush1.msra.mxu0 %v6470
    %7772 = vmatprep.subr.mxu0 %v6479
    %7773 = vmatpush1.msra.mxu0 %v6478
    %7774 = vmatprep.subr.mxu0 %v6487
    %7775 = vmatpush1.msra.mxu0 %v6486
    %7776 = vmatprep.subr.mxu0 %v6495
    %7777 = vmatpush1.msra.mxu0 %v6494
    %7778 = vmatprep.subr.mxu0 %v6503
    %7779 = vmatpush1.msra.mxu0 %v6502
    %7780 = vmatprep.subr.mxu0 %v6511
    %7781 = vmatpush1.msra.mxu0 %v6510
    %7782 = vmatprep.subr.mxu0 %v6519
    %7783 = vmatpush1.msra.mxu0 %v6518
    %7784 = vmatprep.subr.mxu0 %v6527
    %7785 = vmatpush1.msra.mxu0 %v6526
    %7786 = vmatprep.subr.mxu0 %v6535
    %7787 = vmatpush1.msra.mxu0 %v6534
    %7788 = vmatprep.subr.mxu0 %v6543
    %7789 = vmatpush1.msra.mxu0 %v6542
    %7790 = vmatprep.subr.mxu0 %v6551
    %7791 = vmatpush1.msra.mxu0 %v6550
    %7792 = vmatprep.subr.mxu0 %v6559
    %7793 = vmatpush1.msra.mxu0 %v6558
    %7794 = vmatprep.subr.mxu0 %v6567
    %7795 = vmatpush1.msra.mxu0 %v6566
    %7796 = vmatprep.mubr.f32.mxu0 %v5350
    %7797 = vmatmul.mubr.f32.gmra.mrb[0].mxu0 %v5349
    %v7798 = vpop.f32.mrb[0].mxu0
    %v7799 = vadd.f32 %v7728, %v7798
    %v7800 = vpop.f32.mrb[0].mxu0
    %v7801 = vadd.f32 %v7730, %v7800
    %7802 = vdwg.mxu0
    %7803 = vmatprep.subr.mxu0 %v6575
    %7804 = vmatpush1.msra.mxu0 %v6574
    %7805 = vmatprep.subr.mxu0 %v6583
    %7806 = vmatpush1.msra.mxu0 %v6582
    %7807 = vmatprep.subr.mxu0 %v6591
    %7808 = vmatpush1.msra.mxu0 %v6590
    %7809 = vmatprep.subr.mxu0 %v6599
    %7810 = vmatpush1.msra.mxu0 %v6598
    %7811 = vmatprep.subr.mxu0 %v6607
    %7812 = vmatpush1.msra.mxu0 %v6606
    %7813 = vmatprep.subr.mxu0 %v6615
    %7814 = vmatpush1.msra.mxu0 %v6614
    %7815 = vmatprep.subr.mxu0 %v6623
    %7816 = vmatpush1.msra.mxu0 %v6622
    %7817 = vmatprep.subr.mxu0 %v6631
    %7818 = vmatpush1.msra.mxu0 %v6630
    %7819 = vmatprep.subr.mxu0 %v6639
    %7820 = vmatpush1.msra.mxu0 %v6638
    %7821 = vmatprep.subr.mxu0 %v6647
    %7822 = vmatpush1.msra.mxu0 %v6646
    %7823 = vmatprep.subr.mxu0 %v6655
    %7824 = vmatpush1.msra.mxu0 %v6654
    %7825 = vmatprep.subr.mxu0 %v6663
    %7826 = vmatpush1.msra.mxu0 %v6662
    %7827 = vmatprep.subr.mxu0 %v6671
    %7828 = vmatpush1.msra.mxu0 %v6670
    %7829 = vmatprep.subr.mxu0 %v6679
    %7830 = vmatpush1.msra.mxu0 %v6678
    %7831 = vmatprep.subr.mxu0 %v6687
    %7832 = vmatpush1.msra.mxu0 %v6686
    %7833 = vmatprep.subr.mxu0 %v6695
    %7834 = vmatpush1.msra.mxu0 %v6694
    %7835 = vmatprep.subr.mxu0 0.0
    %7836 = vmatpush1.msra.mxu0 0.0
    %7837 = vmatprep.subr.mxu0 0.0
    %7838 = vmatpush1.msra.mxu0 0.0
    %7839 = vmatprep.subr.mxu0 0.0
    %7840 = vmatpush1.msra.mxu0 0.0
    %7841 = vmatprep.subr.mxu0 0.0
    %7842 = vmatpush1.msra.mxu0 0.0
    %7843 = vmatprep.subr.mxu0 0.0
    %7844 = vmatpush1.msra.mxu0 0.0
    %7845 = vmatprep.subr.mxu0 0.0
    %7846 = vmatpush1.msra.mxu0 0.0
    %7847 = vmatprep.subr.mxu0 0.0
    %7848 = vmatpush1.msra.mxu0 0.0
    %7849 = vmatprep.subr.mxu0 0.0
    %7850 = vmatpush1.msra.mxu0 0.0
    %7851 = vmatprep.subr.mxu0 0.0
    %7852 = vmatpush1.msra.mxu0 0.0
    %7853 = vmatprep.subr.mxu0 0.0
    %7854 = vmatpush1.msra.mxu0 0.0
    %7855 = vmatprep.subr.mxu0 0.0
    %7856 = vmatpush1.msra.mxu0 0.0
    %7857 = vmatprep.subr.mxu0 0.0
    %7858 = vmatpush1.msra.mxu0 0.0
    %7859 = vmatprep.subr.mxu0 0.0
    %7860 = vmatpush1.msra.mxu0 0.0
    %7861 = vmatprep.subr.mxu0 0.0
    %7862 = vmatpush1.msra.mxu0 0.0
    %7863 = vmatprep.subr.mxu0 0.0
    %7864 = vmatpush1.msra.mxu0 0.0
    %7865 = vmatprep.subr.mxu0 0.0
    %7866 = vmatpush1.msra.mxu0 0.0
    %7867 = vmatprep.mubr.f32.mxu0 0.0
    %7868 = vmatmul.mubr.f32.gmra.mrb[0].mxu0 %v5351
    %v7869 = vpop.f32.mrb[0].mxu0
    %v7870 = vadd.f32 %v7799, %v7869
    %v7871 = vpop.f32.mrb[0].mxu0
    %v7872 = vadd.f32 %v7801, %v7871
    %7873 = vdwg.mxu0
    %v7874 = vmax.f32 %v7018, 0.0
    %v7875 = vmax.f32 %v7020, 0.0
    %v7876 = vmax.f32 %v7302, 0.0
    %v7877 = vmax.f32 %v7304, 0.0
    %v7878 = vmax.f32 %v7586, 0.0
    %v7879 = vmax.f32 %v7588, 0.0
    %v7880 = vmax.f32 %v7870, 0.0
    %v7881 = vmax.f32 %v7872, 0.0
    %v7882 = vmax.f32 %v7874, %v7876
    %v7883 = vmax.f32 %v7875, %v7877
    %v7884 = vmax.f32 %v7878, %v7880
    %v7885 = vmax.f32 %v7879, %v7881
    %v7886 = vmax.f32 %v7882, %v7884
    %v7887 = vmax.f32 %v7883, %v7885
    %v7888 = vld [vmem:[#allocation9] sm:$0xff]
    %v7889 = vld [vmem:[#allocation9 + $0x8] sm:$0xff]
    %v7890 = vld [vmem:[#allocation9 + $0x10] sm:$0xff]
    %v7891 = vld [vmem:[#allocation9 + $0x18] sm:$0xff]
    %v7892 = vld [vmem:[#allocation9 + $0x20] sm:$0xff]
    %v7893 = vld [vmem:[#allocation9 + $0x28] sm:$0xff]
    %v7894 = vld [vmem:[#allocation9 + $0x30] sm:$0xff]
    %v7895 = vld [vmem:[#allocation9 + $0x38] sm:$0xff]
    %v7896 = vld [vmem:[#allocation9 + $0x40] sm:$0xff]
    %v7897 = vld [vmem:[#allocation9 + $0x48] sm:$0xff]
    %v7898 = vld [vmem:[#allocation9 + $0x50] sm:$0xff]
    %v7899 = vld [vmem:[#allocation9 + $0x58] sm:$0xff]
    %v7900 = vld [vmem:[#allocation9 + $0x60] sm:$0xff]
    %v7901 = vld [vmem:[#allocation9 + $0x68] sm:$0xff]
    %v7902 = vld [vmem:[#allocation9 + $0x70] sm:$0xff]
    %v7903 = vld [vmem:[#allocation9 + $0x78] sm:$0xff]
    %v7904 = vld [vmem:[#allocation9 + $0x80] sm:$0xff]
    %v7905 = vld [vmem:[#allocation9 + $0x88] sm:$0xff]
    %v7906 = vld [vmem:[#allocation9 + $0x90] sm:$0xff]
    %v7907 = vld [vmem:[#allocation9 + $0x98] sm:$0xff]
    %v7908 = vld [vmem:[#allocation9 + $0xa0] sm:$0xff]
    %v7909 = vld [vmem:[#allocation9 + $0xa8] sm:$0xff]
    %v7910 = vld [vmem:[#allocation9 + $0xb0] sm:$0xff]
    %v7911 = vld [vmem:[#allocation9 + $0xb8] sm:$0xff]
    %v7912 = vld [vmem:[#allocation9 + $0xc0] sm:$0xff]
    %v7913 = vld [vmem:[#allocation9 + $0xc8] sm:$0xff]
    %v7914 = vld [vmem:[#allocation9 + $0xd0] sm:$0xff]
    %v7915 = vld [vmem:[#allocation9 + $0xd8] sm:$0xff]
    %v7916 = vld [vmem:[#allocation9 + $0xe0] sm:$0xff]
    %v7917 = vld [vmem:[#allocation9 + $0xe8] sm:$0xff]
    %v7918 = vld [vmem:[#allocation9 + $0xf0] sm:$0xff]
    %v7919 = vld [vmem:[#allocation9 + $0xf8] sm:$0xff]
    %v7920 = vld [vmem:[#allocation10] sm:$0x1]
    %v7922 = vlaneseq
    %v7923 = vshrl.u32 %v7922, 7
    %v7924 = vsub.s32 0, %v7923
    %v7925 = vrot.slane %v7920, %v7924
    %7927 = vmatprep.subr.mxu0 0.0
    %7928 = vmatpush1.msra.mxu0 %v7888
    %7929 = vmatprep.subr.mxu0 0.0
    %7930 = vmatpush1.msra.mxu0 %v7889
    %7931 = vmatprep.subr.mxu0 0.0
    %7932 = vmatpush1.msra.mxu0 %v7890
    %7933 = vmatprep.subr.mxu0 0.0
    %7934 = vmatpush1.msra.mxu0 %v7891
    %7935 = vmatprep.subr.mxu0 0.0
    %7936 = vmatpush1.msra.mxu0 %v7892
    %7937 = vmatprep.subr.mxu0 0.0
    %7938 = vmatpush1.msra.mxu0 %v7893
    %7939 = vmatprep.subr.mxu0 0.0
    %7940 = vmatpush1.msra.mxu0 %v7894
    %7941 = vmatprep.subr.mxu0 0.0
    %7942 = vmatpush1.msra.mxu0 %v7895
    %7943 = vmatprep.subr.mxu0 0.0
    %7944 = vmatpush1.msra.mxu0 %v7896
    %7945 = vmatprep.subr.mxu0 0.0
    %7946 = vmatpush1.msra.mxu0 %v7897
    %7947 = vmatprep.subr.mxu0 0.0
    %7948 = vmatpush1.msra.mxu0 %v7898
    %7949 = vmatprep.subr.mxu0 0.0
    %7950 = vmatpush1.msra.mxu0 %v7899
    %7951 = vmatprep.subr.mxu0 0.0
    %7952 = vmatpush1.msra.mxu0 %v7900
    %7953 = vmatprep.subr.mxu0 0.0
    %7954 = vmatpush1.msra.mxu0 %v7901
    %7955 = vmatprep.subr.mxu0 0.0
    %7956 = vmatpush1.msra.mxu0 %v7902
    %7957 = vmatprep.subr.mxu0 0.0
    %7958 = vmatpush1.msra.mxu0 %v7903
    %7959 = vmatprep.subr.mxu0 0.0
    %7960 = vmatpush1.msra.mxu0 %v7904
    %7961 = vmatprep.subr.mxu0 0.0
    %7962 = vmatpush1.msra.mxu0 %v7905
    %7963 = vmatprep.subr.mxu0 0.0
    %7964 = vmatpush1.msra.mxu0 %v7906
    %7965 = vmatprep.subr.mxu0 0.0
    %7966 = vmatpush1.msra.mxu0 %v7907
    %7967 = vmatprep.subr.mxu0 0.0
    %7968 = vmatpush1.msra.mxu0 %v7908
    %7969 = vmatprep.subr.mxu0 0.0
    %7970 = vmatpush1.msra.mxu0 %v7909
    %7971 = vmatprep.subr.mxu0 0.0
    %7972 = vmatpush1.msra.mxu0 %v7910
    %7973 = vmatprep.subr.mxu0 0.0
    %7974 = vmatpush1.msra.mxu0 %v7911
    %7975 = vmatprep.subr.mxu0 0.0
    %7976 = vmatpush1.msra.mxu0 %v7912
    %7977 = vmatprep.subr.mxu0 0.0
    %7978 = vmatpush1.msra.mxu0 %v7913
    %7979 = vmatprep.subr.mxu0 0.0
    %7980 = vmatpush1.msra.mxu0 %v7914
    %7981 = vmatprep.subr.mxu0 0.0
    %7982 = vmatpush1.msra.mxu0 %v7915
    %7983 = vmatprep.subr.mxu0 0.0
    %7984 = vmatpush1.msra.mxu0 %v7916
    %7985 = vmatprep.subr.mxu0 0.0
    %7986 = vmatpush1.msra.mxu0 %v7917
    %7987 = vmatprep.subr.mxu0 0.0
    %7988 = vmatpush1.msra.mxu0 %v7918
    %7989 = vmatprep.subr.mxu0 0.0
    %7990 = vmatpush1.msra.mxu0 %v7919
    %7991 = vmatprep.mubr.f32.mxu0 %v7887
    %7992 = vmatmul.mubr.f32.gmra.mrb[0].mxu0 %v7886
    %v7993 = vpop.f32.mrb[0].mxu0
    %v7994 = vadd.f32 %v7925, %v7993
    %v7995 = vpop.f32.mrb[0].mxu0
    %7996 = vdwg.mxu0
    %v7997 = vmax.f32 %v7994, 0.0
    %v7998 = vld [vmem:[#allocation12] sm:$0xff]
    %v7999 = vld [vmem:[#allocation12 + $0x8] sm:$0xff]
    %v8000 = vld [vmem:[#allocation12 + $0x10] sm:$0xff]
    %v8001 = vld [vmem:[#allocation12 + $0x18] sm:$0xff]
    %v8002 = vld [vmem:[#allocation12 + $0x20] sm:$0xff]
    %v8003 = vld [vmem:[#allocation12 + $0x28] sm:$0xff]
    %v8004 = vld [vmem:[#allocation12 + $0x30] sm:$0xff]
    %v8005 = vld [vmem:[#allocation12 + $0x38] sm:$0xff]
    %v8006 = vld [vmem:[#allocation12 + $0x40] sm:$0xff]
    %v8007 = vld [vmem:[#allocation12 + $0x48] sm:$0xff]
    %v8008 = vld [vmem:[#allocation12 + $0x50] sm:$0xff]
    %v8009 = vld [vmem:[#allocation12 + $0x58] sm:$0xff]
    %v8010 = vld [vmem:[#allocation12 + $0x60] sm:$0xff]
    %v8011 = vld [vmem:[#allocation12 + $0x68] sm:$0xff]
    %v8012 = vld [vmem:[#allocation12 + $0x70] sm:$0xff]
    %v8013 = vld [vmem:[#allocation12 + $0x78] sm:$0xff]
    %v8014 = vld [vmem:[#allocation13] sm:$0x1]
    %v8016 = vlaneseq
    %v8017 = vshrl.u32 %v8016, 7
    %v8018 = vsub.s32 0, %v8017
    %v8019 = vrot.slane %v8014, %v8018
    %8021 = vmatprep.subr.mxu0 0.0
    %8022 = vmatpush1.msra.mxu0 %v7998
    %8023 = vmatprep.subr.mxu0 0.0
    %8024 = vmatpush1.msra.mxu0 %v7999
    %8025 = vmatprep.subr.mxu0 0.0
    %8026 = vmatpush1.msra.mxu0 %v8000
    %8027 = vmatprep.subr.mxu0 0.0
    %8028 = vmatpush1.msra.mxu0 %v8001
    %8029 = vmatprep.subr.mxu0 0.0
    %8030 = vmatpush1.msra.mxu0 %v8002
    %8031 = vmatprep.subr.mxu0 0.0
    %8032 = vmatpush1.msra.mxu0 %v8003
    %8033 = vmatprep.subr.mxu0 0.0
    %8034 = vmatpush1.msra.mxu0 %v8004
    %8035 = vmatprep.subr.mxu0 0.0
    %8036 = vmatpush1.msra.mxu0 %v8005
    %8037 = vmatprep.subr.mxu0 0.0
    %8038 = vmatpush1.msra.mxu0 %v8006
    %8039 = vmatprep.subr.mxu0 0.0
    %8040 = vmatpush1.msra.mxu0 %v8007
    %8041 = vmatprep.subr.mxu0 0.0
    %8042 = vmatpush1.msra.mxu0 %v8008
    %8043 = vmatprep.subr.mxu0 0.0
    %8044 = vmatpush1.msra.mxu0 %v8009
    %8045 = vmatprep.subr.mxu0 0.0
    %8046 = vmatpush1.msra.mxu0 %v8010
    %8047 = vmatprep.subr.mxu0 0.0
    %8048 = vmatpush1.msra.mxu0 %v8011
    %8049 = vmatprep.subr.mxu0 0.0
    %8050 = vmatpush1.msra.mxu0 %v8012
    %8051 = vmatprep.subr.mxu0 0.0
    %8052 = vmatpush1.msra.mxu0 %v8013
    %8053 = vmatprep.subr.mxu0 0.0
    %8054 = vmatpush1.msra.mxu0 0.0
    %8055 = vmatprep.subr.mxu0 0.0
    %8056 = vmatpush1.msra.mxu0 0.0
    %8057 = vmatprep.subr.mxu0 0.0
    %8058 = vmatpush1.msra.mxu0 0.0
    %8059 = vmatprep.subr.mxu0 0.0
    %8060 = vmatpush1.msra.mxu0 0.0
    %8061 = vmatprep.subr.mxu0 0.0
    %8062 = vmatpush1.msra.mxu0 0.0
    %8063 = vmatprep.subr.mxu0 0.0
    %8064 = vmatpush1.msra.mxu0 0.0
    %8065 = vmatprep.subr.mxu0 0.0
    %8066 = vmatpush1.msra.mxu0 0.0
    %8067 = vmatprep.subr.mxu0 0.0
    %8068 = vmatpush1.msra.mxu0 0.0
    %8069 = vmatprep.subr.mxu0 0.0
    %8070 = vmatpush1.msra.mxu0 0.0
    %8071 = vmatprep.subr.mxu0 0.0
    %8072 = vmatpush1.msra.mxu0 0.0
    %8073 = vmatprep.subr.mxu0 0.0
    %8074 = vmatpush1.msra.mxu0 0.0
    %8075 = vmatprep.subr.mxu0 0.0
    %8076 = vmatpush1.msra.mxu0 0.0
    %8077 = vmatprep.subr.mxu0 0.0
    %8078 = vmatpush1.msra.mxu0 0.0
    %8079 = vmatprep.subr.mxu0 0.0
    %8080 = vmatpush1.msra.mxu0 0.0
    %8081 = vmatprep.subr.mxu0 0.0
    %8082 = vmatpush1.msra.mxu0 0.0
    %8083 = vmatprep.subr.mxu0 0.0
    %8084 = vmatpush1.msra.mxu0 0.0
    %8085 = vmatprep.mubr.f32.mxu0 0.0
    %8086 = vmatmul.mubr.f32.gmra.mrb[0].mxu0 %v7997
    %v8087 = vpop.f32.mrb[0].mxu0
    %v8088 = vadd.f32 %v8019, %v8087
    %v8089 = vpop.f32.mrb[0].mxu0
    %8090 = vdwg.mxu0
    %v8091 = vmax.f32 %v8088, 0.0
    %v8092 = vld [vmem:[#allocation15] sm:$0xff]
    %v8093 = vld [vmem:[#allocation15 + $0x8] sm:$0xff]
    %v8094 = vld [vmem:[#allocation15 + $0x10] sm:$0xff]
    %v8095 = vld [vmem:[#allocation15 + $0x18] sm:$0xff]
    %v8096 = vld [vmem:[#allocation15 + $0x20] sm:$0xff]
    %v8097 = vld [vmem:[#allocation15 + $0x28] sm:$0xff]
    %v8098 = vld [vmem:[#allocation15 + $0x30] sm:$0xff]
    %v8099 = vld [vmem:[#allocation15 + $0x38] sm:$0xff]
    %v8100 = vld [vmem:[#allocation15 + $0x40] sm:$0xff]
    %v8101 = vld [vmem:[#allocation15 + $0x48] sm:$0xff]
    %v8102 = vld [vmem:[#allocation15 + $0x50] sm:$0xff]
    %v8103 = vld [vmem:[#allocation15 + $0x58] sm:$0xff]
    %v8104 = vld [vmem:[#allocation15 + $0x60] sm:$0xff]
    %v8105 = vld [vmem:[#allocation15 + $0x68] sm:$0xff]
    %v8106 = vld [vmem:[#allocation15 + $0x70] sm:$0xff]
    %v8107 = vld [vmem:[#allocation15 + $0x78] sm:$0xff]
    %v8108 = vld [vmem:[#allocation16] sm:$0x1]
    %v8110 = vlaneseq
    %v8111 = vshrl.u32 %v8110, 7
    %v8112 = vsub.s32 0, %v8111
    %v8113 = vrot.slane %v8108, %v8112
    %8115 = vmatprep.subr.mxu0 0.0
    %8116 = vmatpush1.msra.mxu0 %v8092
    %8117 = vmatprep.subr.mxu0 0.0
    %8118 = vmatpush1.msra.mxu0 %v8093
    %8119 = vmatprep.subr.mxu0 0.0
    %8120 = vmatpush1.msra.mxu0 %v8094
    %8121 = vmatprep.subr.mxu0 0.0
    %8122 = vmatpush1.msra.mxu0 %v8095
    %8123 = vmatprep.subr.mxu0 0.0
    %8124 = vmatpush1.msra.mxu0 %v8096
    %8125 = vmatprep.subr.mxu0 0.0
    %8126 = vmatpush1.msra.mxu0 %v8097
    %8127 = vmatprep.subr.mxu0 0.0
    %8128 = vmatpush1.msra.mxu0 %v8098
    %8129 = vmatprep.subr.mxu0 0.0
    %8130 = vmatpush1.msra.mxu0 %v8099
    %8131 = vmatprep.subr.mxu0 0.0
    %8132 = vmatpush1.msra.mxu0 %v8100
    %8133 = vmatprep.subr.mxu0 0.0
    %8134 = vmatpush1.msra.mxu0 %v8101
    %8135 = vmatprep.subr.mxu0 0.0
    %8136 = vmatpush1.msra.mxu0 %v8102
    %8137 = vmatprep.subr.mxu0 0.0
    %8138 = vmatpush1.msra.mxu0 %v8103
    %8139 = vmatprep.subr.mxu0 0.0
    %8140 = vmatpush1.msra.mxu0 %v8104
    %8141 = vmatprep.subr.mxu0 0.0
    %8142 = vmatpush1.msra.mxu0 %v8105
    %8143 = vmatprep.subr.mxu0 0.0
    %8144 = vmatpush1.msra.mxu0 %v8106
    %8145 = vmatprep.subr.mxu0 0.0
    %8146 = vmatpush1.msra.mxu0 %v8107
    %8147 = vmatprep.subr.mxu0 0.0
    %8148 = vmatpush1.msra.mxu0 0.0
    %8149 = vmatprep.subr.mxu0 0.0
    %8150 = vmatpush1.msra.mxu0 0.0
    %8151 = vmatprep.subr.mxu0 0.0
    %8152 = vmatpush1.msra.mxu0 0.0
    %8153 = vmatprep.subr.mxu0 0.0
    %8154 = vmatpush1.msra.mxu0 0.0
    %8155 = vmatprep.subr.mxu0 0.0
    %8156 = vmatpush1.msra.mxu0 0.0
    %8157 = vmatprep.subr.mxu0 0.0
    %8158 = vmatpush1.msra.mxu0 0.0
    %8159 = vmatprep.subr.mxu0 0.0
    %8160 = vmatpush1.msra.mxu0 0.0
    %8161 = vmatprep.subr.mxu0 0.0
    %8162 = vmatpush1.msra.mxu0 0.0
    %8163 = vmatprep.subr.mxu0 0.0
    %8164 = vmatpush1.msra.mxu0 0.0
    %8165 = vmatprep.subr.mxu0 0.0
    %8166 = vmatpush1.msra.mxu0 0.0
    %8167 = vmatprep.subr.mxu0 0.0
    %8168 = vmatpush1.msra.mxu0 0.0
    %8169 = vmatprep.subr.mxu0 0.0
    %8170 = vmatpush1.msra.mxu0 0.0
    %8171 = vmatprep.subr.mxu0 0.0
    %8172 = vmatpush1.msra.mxu0 0.0
    %8173 = vmatprep.subr.mxu0 0.0
    %8174 = vmatpush1.msra.mxu0 0.0
    %8175 = vmatprep.subr.mxu0 0.0
    %8176 = vmatpush1.msra.mxu0 0.0
    %8177 = vmatprep.subr.mxu0 0.0
    %8178 = vmatpush1.msra.mxu0 0.0
    %8179 = vmatprep.mubr.f32.mxu0 0.0
    %8180 = vmatmul.mubr.f32.gmra.mrb[0].mxu0 %v8091
    %v8181 = vpop.f32.mrb[0].mxu0
    %v8182 = vadd.f32 %v8113, %v8181
    %v8183 = vpop.f32.mrb[0].mxu0
    %8184 = vdwg.mxu0
    %8185 = vst [vmem:[%s11] sm:$0xff] %v8182
    // Predicated region
    $region86: #{lenet_forward.1} parent=1 // pred_check
      _
    $region87: #{lenet_forward.1} parent=1 // pred_check_branch
      %8187 = sbr.rel (0) target = $region89
    $region88: #{lenet_forward.1} parent=1 // pred_region
      _
    $region89: #{lenet_forward.1} parent=1 // pred_fallthru
      _
    // Predicated region
    $region90: #{lenet_forward.1} parent=1 // pred_check
      _
    $region91: #{lenet_forward.1} parent=1 // pred_check_branch
      %8189 = sbr.rel (0) target = $region93
    $region92: #{lenet_forward.1} parent=1 // pred_region
      _
    $region93: #{lenet_forward.1} parent=1 // pred_fallthru
      _
    %8190 = vsyncpa [#allocation3], 1
    %8191 = vsyncpa [#allocation5], 1
    %8192 = vsyncpa [#allocation8], 1
    %8193 = vsyncpa [#allocation11], 1
    %8194 = vsyncpa [#allocation14], 1
    %8195 = vsyncpa [#allocation17], 1

</llo_original>
